<compile_context>
chip_gen: v7x
topology: tpu7x:2x2x1
jax: 0.10.0
libtpu: 0.0.40
codegen_flags: <defaults>
</compile_context>

<pallas_src>
import math

import jax
import jax.numpy as jnp
from jax.experimental import pallas as pl
from jax.experimental.pallas import tpu as pltpu

BN_EPS = 1e-5
COMPUTE_DTYPE = jnp.bfloat16   # MXU operand dtype; accumulation & all VPU math stay f32


# ---------------------------------------------------------------------------
# Fused kernel: BN1 -> ReLU -> conv1 -> BN2 -> ReLU -> conv2 -> + residual
# ---------------------------------------------------------------------------
def _make_fused_block_kernel(M, H, W, C):
    """M = N*H flattened rows; activations are lane-dense (M, W*C)."""
    WC = W * C
    inv_count = 1.0 / float(M * W)          # samples per channel = N*H*W

    def group_fold(v):
        """Sum a (1, WC) per-lane vector over its W channel groups and broadcast the
        per-channel totals back to every lane group.  Exact f32; uses only lane
        rotations, so the result is independent of the rotate direction convention."""
        if W == 1:
            return v
        if W & (W - 1) == 0:                 # log2(W) doubling steps
            r, s = v, C
            while s < WC:
                r = r + pltpu.roll(r, s, axis=1)
                s *= 2
            return r
        r = v                                 # generic fallback (W-1 rotations)
        for k in range(1, W):
            r = r + pltpu.roll(v, k * C, axis=1)
        return r

    def kernel(x_ref, g1_ref, be1_ref, g2_ref, be2_ref, w1_ref, w2_ref, o_ref):
        # ---- hoisted loop-invariants ----
        row = jax.lax.broadcasted_iota(jnp.int32, (M, WC), 0)
        h_idx = (row & (H - 1)) if (H & (H - 1) == 0) else (row % H)
        top = h_idx == 0            # output row h uses y[h-1]  -> zero at h == 0
        bot = h_idx == H - 1        # output row h uses y[h+1]  -> zero at h == H-1

        x = x_ref[...]              # (M, WC) f32; loaded once, reused as the residual

        def bn_relu(v, gamma, beta):
            # Training-mode BatchNorm: per-channel batch mean / biased variance, in f32.
            # Single-pass E[v^2] - E[v]^2 (exact f32 sums); fine at these magnitudes --
            # switch to a shifted two-pass variance if accuracy requirements tighten.
            mean = group_fold(jnp.sum(v, axis=0, keepdims=True)) * inv_count
            ex2 = group_fold(jnp.sum(v * v, axis=0, keepdims=True)) * inv_count
            var = ex2 - mean * mean
            scale = gamma * jax.lax.rsqrt(var + BN_EPS)        # EUP rsqrt
            shift = beta - mean * scale
            return jnp.maximum(v * scale + shift, 0.0)         # f32 VPU math

        def conv3x3(y, w_ref):
            # 3x3 "SAME" conv as 3 dense MXU matmuls with banded (WC, WC) weights
            # (dx taps + W zero-padding folded into the band).  The dy=+-1 operands are
            # sublane rotations of y with the image-boundary rows masked to zero (H
            # zero-padding) -- no padded scratch, no misaligned slice/reshape relayouts.
            up = jnp.where(top, 0.0, pltpu.roll(y, 1, axis=0))        # y[h-1]
            dn = jnp.where(bot, 0.0, pltpu.roll(y, M - 1, axis=0))    # y[h+1]
            acc = jnp.dot(up.astype(COMPUTE_DTYPE), w_ref[0],
                          preferred_element_type=jnp.float32)
            acc = acc + jnp.dot(y.astype(COMPUTE_DTYPE), w_ref[1],
                                preferred_element_type=jnp.float32)
            acc = acc + jnp.dot(dn.astype(COMPUTE_DTYPE), w_ref[2],
                                preferred_element_type=jnp.float32)
            return acc                                                # (M, WC) f32

        out1 = conv3x3(bn_relu(x, g1_ref[...], be1_ref[...]), w1_ref)
        out2 = conv3x3(bn_relu(out1, g2_ref[...], be2_ref[...]), w2_ref)
        o_ref[...] = (out2 + x).astype(o_ref.dtype)

    return kernel


# ---------------------------------------------------------------------------
# pallas_call wrapper
# ---------------------------------------------------------------------------
def _fused_basic_block(x_dense, g1, be1, g2, be2, w1_banded, w2_banded, *, H, W, C):
    M, WC = x_dense.shape
    assert WC == W * C
    assert M % 8 == 0 and WC % 128 == 0, "need lane-dense layout (WC % 128 == 0)"
    # Whole-batch fusion: everything must fit comfortably in VMEM.
    # TODO(synk): fall back to a tiled two-call (conv1+stats, conv2+residual) variant for
    # problem sizes whose working set does not fit VMEM.
    act_bytes = M * WC * 4
    wt_bytes = 3 * WC * WC * 2
    assert 6 * act_bytes + 4 * wt_bytes < 24 * 1024 * 1024, "working set too large for fused kernel"

    def lane(v):   # per-channel (C,) -> per-lane (1, W*C), value at lane w*C+c == v[c]
        return jnp.tile(v.astype(jnp.float32), W).reshape(1, WC)

    act_spec = pl.BlockSpec((M, WC), lambda i: (0, 0))
    vec_spec = pl.BlockSpec((1, WC), lambda i: (0, 0))
    wt_spec = pl.BlockSpec((3, WC, WC), lambda i: (0, 0, 0))

    cost = pl.CostEstimate(
        flops=12 * M * WC * WC,                       # 2 convs x 3 matmuls x 2*M*K*N
        transcendentals=2 * WC,                       # rsqrt per lane per BN
        bytes_accessed=2 * act_bytes + 2 * wt_bytes + 4 * WC * 4)

    return pl.pallas_call(
        _make_fused_block_kernel(M, H, W, C),
        out_shape=jax.ShapeDtypeStruct((M, WC), jnp.float32),
        grid_spec=pltpu.PrefetchScalarGridSpec(
            num_scalar_prefetch=0,
            grid=(1,),
            in_specs=[act_spec, vec_spec, vec_spec, vec_spec, vec_spec, wt_spec, wt_spec],
            out_specs=act_spec),
        compiler_params=pltpu.CompilerParams(
            dimension_semantics=("arbitrary",),
            vmem_limit_bytes=32 * 1024 * 1024),
        cost_estimate=cost,
    )(x_dense.astype(jnp.float32), lane(g1), lane(be1), lane(g2), lane(be2),
      w1_banded.astype(COMPUTE_DTYPE), w2_banded.astype(COMPUTE_DTYPE))


# ---------------------------------------------------------------------------
# Parameter folding helpers (plain JAX, trace-time cheap)
# ---------------------------------------------------------------------------
def _band_conv3x3_weights(w_hwio, width):
    """Fold the dx taps of a 3x3 conv into banded (W*Cin, W*Cout) matrices, one per dy.

    B[dy][wi*Cin + ci, wo*Cout + co] = w_hwio[dy, wi - wo + 1, ci, co] for |wi - wo| <= 1,
    zero otherwise (the missing border bands implement conv zero-padding along W).
    NOTE: dense banded matmuls waste ~(1 - 3/W) of the MXU FLOPs on the zero band --
    negligible at C=16 (bandwidth/latency-bound), but switch to per-dx K=C matmuls if
    the channel count grows (matters first on v5e's lower MXU throughput).
    """
    rows = []
    for dy in range(3):
        band = sum(
            jnp.kron(jnp.eye(width, width, k=1 - dx, dtype=w_hwio.dtype), w_hwio[dy, dx])
            for dx in range(3))
        rows.append(band)
    return jnp.stack(rows)                           # (3, W*Cin, W*Cout)


def _interp(coeffs_t, p):
    """curves.* parameter at curve point t: sum_i coeffs_t[i] * parameter_bend_i."""
    return jnp.tensordot(coeffs_t, p, axes=1)


def _bn_fold(mean, var, gamma, beta):
    scale = gamma / jnp.sqrt(var + BN_EPS)
    return scale, beta - mean * scale


# ---------------------------------------------------------------------------
# BasicBlockCurve forward
# ---------------------------------------------------------------------------
@jax.jit
def basic_block_curve_forward(x_nchw, params, coeffs_t):
    """BasicBlockCurve.forward(x, coeffs_t) with stride=1, downsample=None (fully fused)."""
    # TODO(synk): stride>1 / downsample (1x1 conv) blocks, BottleneckCurve, and the
    # PreResNetCurve stem conv / final BN / avgpool / fc head are not implemented here.
    N, C, H, W = x_nchw.shape
    x_dense = jnp.transpose(x_nchw, (0, 2, 3, 1)).reshape(N * H, W * C)   # lane-dense

    g1 = _interp(coeffs_t, params["bn1_gamma"])
    be1 = _interp(coeffs_t, params["bn1_beta"])
    g2 = _interp(coeffs_t, params["bn2_gamma"])
    be2 = _interp(coeffs_t, params["bn2_beta"])
    w1b = _band_conv3x3_weights(_interp(coeffs_t, params["w1"]), W)       # HWIO taps
    w2b = _band_conv3x3_weights(_interp(coeffs_t, params["w2"]), W)

    out = _fused_basic_block(x_dense, g1, be1, g2, be2, w1b, w2b, H=H, W=W, C=C)
    return jnp.transpose(out.reshape(N, H, W, C), (0, 3, 1, 2))           # NHWC -> NCHW


# ---------------------------------------------------------------------------
# Pure-JAX reference (same dtype policy: bf16 conv operands, f32 accumulation)
# ---------------------------------------------------------------------------
def _reference_forward(x_nchw, params, coeffs_t):
    x = jnp.transpose(x_nchw, (0, 2, 3, 1))

    def conv(y, w):
        return jax.lax.conv_general_dilated(
            y.astype(COMPUTE_DTYPE), w.astype(COMPUTE_DTYPE), (1, 1), "SAME",
            dimension_numbers=("NHWC", "HWIO", "NHWC"),
            preferred_element_type=jnp.float32)

    g1 = _interp(coeffs_t, params["bn1_gamma"]); be1 = _interp(coeffs_t, params["bn1_beta"])
    g2 = _interp(coeffs_t, params["bn2_gamma"]); be2 = _interp(coeffs_t, params["bn2_beta"])
    w1 = _interp(coeffs_t, params["w1"]); w2 = _interp(coeffs_t, params["w2"])

    s1, b1 = _bn_fold(jnp.mean(x, axis=(0, 1, 2)), jnp.var(x, axis=(0, 1, 2)), g1, be1)
    out1 = conv(jnp.maximum(x * s1 + b1, 0.0), w1)
    s2, b2 = _bn_fold(jnp.mean(out1, axis=(0, 1, 2)), jnp.var(out1, axis=(0, 1, 2)), g2, be2)
    out = conv(jnp.maximum(out1 * s2 + b2, 0.0), w2) + x
    return jnp.transpose(out, (0, 3, 1, 2))


if __name__ == "__main__":
    key = jax.random.PRNGKey(0)
    # Stage-1-like BasicBlock: inplanes == planes == 16, stride=1, downsample=None.
    N, C, H, W = 32, 16, 16, 16
    num_bends = 3
    k = jax.random.split(key, 7)
    x = jax.random.normal(k[0], (N, C, H, W), jnp.float32)
    coeffs_t = jnp.array([0.25, 0.5, 0.25], jnp.float32)       # curve-point weights
    std = math.sqrt(2.0 / (9 * C))
    params = dict(
        bn1_gamma=1.0 + 0.1 * jax.random.normal(k[1], (num_bends, C), jnp.float32),
        bn1_beta=0.1 * jax.random.normal(k[2], (num_bends, C), jnp.float32),
        w1=std * jax.random.normal(k[3], (num_bends, 3, 3, C, C), jnp.float32),
        bn2_gamma=1.0 + 0.1 * jax.random.normal(k[4], (num_bends, C), jnp.float32),
        bn2_beta=0.1 * jax.random.normal(k[5], (num_bends, C), jnp.float32),
        w2=std * jax.random.normal(k[6], (num_bends, 3, 3, C, C), jnp.float32),
    )

    out = basic_block_curve_forward(x, params, coeffs_t)
    jax.block_until_ready(out)
    assert out.shape == (N, C, H, W)

    ref = _reference_forward(x, params, coeffs_t)
    max_err = float(jnp.max(jnp.abs(out - ref)))
    assert jnp.allclose(out, ref, atol=5e-3, rtol=5e-3), (
        f"mismatch vs JAX reference (max |err| = {max_err:.2e})")
    print("KERNEL_OK")
</pallas_src>

<mosaic_0001>
module attributes {stable_mosaic.version = 11 : i64} {
  func.func @kernel(%arg0: i32, %arg1: memref<512x256xf32, #tpu.memory_space<vmem>>, %arg2: memref<1x256xf32, #tpu.memory_space<vmem>>, %arg3: memref<1x256xf32, #tpu.memory_space<vmem>>, %arg4: memref<1x256xf32, #tpu.memory_space<vmem>>, %arg5: memref<1x256xf32, #tpu.memory_space<vmem>>, %arg6: memref<3x256x256xbf16, #tpu.memory_space<vmem>>, %arg7: memref<3x256x256xbf16, #tpu.memory_space<vmem>>, %arg8: memref<512x256xf32, #tpu.memory_space<vmem>>) attributes {dimension_semantics = [#tpu.dimension_semantics<arbitrary>], iteration_bounds = array<i64: 1>, scalar_prefetch = 0 : i64, scratch_operands = 0 : i64, tpu.core_type = #tpu.core_type<tc>, window_params = [{pipeline_mode = #tpu.pipeline_mode<synchronous>, transform_indices = @transform_0, window_bounds = array<i64: 512, 256>}, {pipeline_mode = #tpu.pipeline_mode<synchronous>, transform_indices = @transform_1, window_bounds = array<i64: 1, 256>}, {pipeline_mode = #tpu.pipeline_mode<synchronous>, transform_indices = @transform_2, window_bounds = array<i64: 1, 256>}, {pipeline_mode = #tpu.pipeline_mode<synchronous>, transform_indices = @transform_3, window_bounds = array<i64: 1, 256>}, {pipeline_mode = #tpu.pipeline_mode<synchronous>, transform_indices = @transform_4, window_bounds = array<i64: 1, 256>}, {pipeline_mode = #tpu.pipeline_mode<synchronous>, transform_indices = @transform_5, window_bounds = array<i64: 3, 256, 256>}, {pipeline_mode = #tpu.pipeline_mode<synchronous>, transform_indices = @transform_6, window_bounds = array<i64: 3, 256, 256>}, {pipeline_mode = #tpu.pipeline_mode<synchronous>, transform_indices = @transform_7, window_bounds = array<i64: 512, 256>}]} {
    %0 = tpu.iota {dimensions = array<i32: 0>} : vector<512x256xi32>
    %c15_i32 = arith.constant 15 : i32
    %1 = vector.broadcast %c15_i32 : i32 to vector<512x256xi32>
    %2 = arith.andi %0, %1 : vector<512x256xi32>
    %c0_i32 = arith.constant 0 : i32
    %3 = vector.broadcast %c0_i32 : i32 to vector<512x256xi32>
    %4 = arith.cmpi eq, %2, %3 : vector<512x256xi32>
    %c15_i32_0 = arith.constant 15 : i32
    %5 = vector.broadcast %c15_i32_0 : i32 to vector<512x256xi32>
    %6 = arith.cmpi eq, %2, %5 : vector<512x256xi32>
    %c0 = arith.constant 0 : index
    %c0_1 = arith.constant 0 : index
    %7 = vector.load %arg1[%c0, %c0_1] : memref<512x256xf32, #tpu.memory_space<vmem>>, vector<512x256xf32>
    %c0_2 = arith.constant 0 : index
    %c0_3 = arith.constant 0 : index
    %8 = vector.load %arg2[%c0_2, %c0_3] : memref<1x256xf32, #tpu.memory_space<vmem>>, vector<1x256xf32>
    %c0_4 = arith.constant 0 : index
    %c0_5 = arith.constant 0 : index
    %9 = vector.load %arg3[%c0_4, %c0_5] : memref<1x256xf32, #tpu.memory_space<vmem>>, vector<1x256xf32>
    %cst = arith.constant dense<0.000000e+00> : vector<256xf32>
    %10 = vector.multi_reduction <add>, %7, %cst [0] : vector<512x256xf32> to vector<256xf32>
    %11 = vector.shape_cast %10 : vector<256xf32> to vector<1x256xf32>
    %c16_i32 = arith.constant 16 : i32
    %12 = tpu.dynamic_rotate %11 by %c16_i32 dim 1 : vector<1x256xf32>, i32 -> vector<1x256xf32>
    %13 = arith.addf %11, %12 : vector<1x256xf32>
    %c32_i32 = arith.constant 32 : i32
    %14 = tpu.dynamic_rotate %13 by %c32_i32 dim 1 : vector<1x256xf32>, i32 -> vector<1x256xf32>
    %15 = arith.addf %13, %14 : vector<1x256xf32>
    %c64_i32 = arith.constant 64 : i32
    %16 = tpu.dynamic_rotate %15 by %c64_i32 dim 1 : vector<1x256xf32>, i32 -> vector<1x256xf32>
    %17 = arith.addf %15, %16 : vector<1x256xf32>
    %c128_i32 = arith.constant 128 : i32
    %18 = tpu.dynamic_rotate %17 by %c128_i32 dim 1 : vector<1x256xf32>, i32 -> vector<1x256xf32>
    %19 = arith.addf %17, %18 : vector<1x256xf32>
    %cst_6 = arith.constant 1.22070313E-4 : f32
    %20 = vector.broadcast %cst_6 : f32 to vector<1x256xf32>
    %21 = arith.mulf %19, %20 : vector<1x256xf32>
    %22 = arith.mulf %7, %7 : vector<512x256xf32>
    %cst_7 = arith.constant dense<0.000000e+00> : vector<256xf32>
    %23 = vector.multi_reduction <add>, %22, %cst_7 [0] : vector<512x256xf32> to vector<256xf32>
    %24 = vector.shape_cast %23 : vector<256xf32> to vector<1x256xf32>
    %c16_i32_8 = arith.constant 16 : i32
    %25 = tpu.dynamic_rotate %24 by %c16_i32_8 dim 1 : vector<1x256xf32>, i32 -> vector<1x256xf32>
    %26 = arith.addf %24, %25 : vector<1x256xf32>
    %c32_i32_9 = arith.constant 32 : i32
    %27 = tpu.dynamic_rotate %26 by %c32_i32_9 dim 1 : vector<1x256xf32>, i32 -> vector<1x256xf32>
    %28 = arith.addf %26, %27 : vector<1x256xf32>
    %c64_i32_10 = arith.constant 64 : i32
    %29 = tpu.dynamic_rotate %28 by %c64_i32_10 dim 1 : vector<1x256xf32>, i32 -> vector<1x256xf32>
    %30 = arith.addf %28, %29 : vector<1x256xf32>
    %c128_i32_11 = arith.constant 128 : i32
    %31 = tpu.dynamic_rotate %30 by %c128_i32_11 dim 1 : vector<1x256xf32>, i32 -> vector<1x256xf32>
    %32 = arith.addf %30, %31 : vector<1x256xf32>
    %cst_12 = arith.constant 1.22070313E-4 : f32
    %33 = vector.broadcast %cst_12 : f32 to vector<1x256xf32>
    %34 = arith.mulf %32, %33 : vector<1x256xf32>
    %35 = arith.mulf %21, %21 : vector<1x256xf32>
    %36 = arith.subf %34, %35 : vector<1x256xf32>
    %cst_13 = arith.constant 9.99999974E-6 : f32
    %37 = vector.broadcast %cst_13 : f32 to vector<1x256xf32>
    %38 = arith.addf %36, %37 : vector<1x256xf32>
    %39 = math.rsqrt %38 : vector<1x256xf32>
    %40 = arith.mulf %8, %39 : vector<1x256xf32>
    %41 = arith.mulf %21, %40 : vector<1x256xf32>
    %42 = arith.subf %9, %41 : vector<1x256xf32>
    %43 = vector.broadcast %40 : vector<1x256xf32> to vector<512x256xf32>
    %44 = arith.mulf %7, %43 : vector<512x256xf32>
    %45 = vector.broadcast %42 : vector<1x256xf32> to vector<512x256xf32>
    %46 = arith.addf %44, %45 : vector<512x256xf32>
    %cst_14 = arith.constant 0.000000e+00 : f32
    %47 = vector.broadcast %cst_14 : f32 to vector<512x256xf32>
    %48 = arith.maximumf %46, %47 : vector<512x256xf32>
    %c1_i32 = arith.constant 1 : i32
    %49 = tpu.dynamic_rotate %48 by %c1_i32 dim 0 : vector<512x256xf32>, i32 -> vector<512x256xf32>
    %cst_15 = arith.constant 0.000000e+00 : f32
    %50 = vector.broadcast %cst_15 : f32 to vector<512x256xf32>
    %51 = arith.select %4, %50, %49 : vector<512x256xi1>, vector<512x256xf32>
    %c511_i32 = arith.constant 511 : i32
    %52 = tpu.dynamic_rotate %48 by %c511_i32 dim 0 : vector<512x256xf32>, i32 -> vector<512x256xf32>
    %cst_16 = arith.constant 0.000000e+00 : f32
    %53 = vector.broadcast %cst_16 : f32 to vector<512x256xf32>
    %54 = arith.select %6, %53, %52 : vector<512x256xi1>, vector<512x256xf32>
    %55 = arith.truncf %51 : vector<512x256xf32> to vector<512x256xbf16>
    %c0_17 = arith.constant 0 : index
    %c0_18 = arith.constant 0 : index
    %c0_19 = arith.constant 0 : index
    %56 = vector.load %arg6[%c0_17, %c0_18, %c0_19] : memref<3x256x256xbf16, #tpu.memory_space<vmem>>, vector<1x256x256xbf16>
    %57 = vector.shape_cast %56 : vector<1x256x256xbf16> to vector<256x256xbf16>
    %cst_20 = arith.constant dense<0.000000e+00> : vector<512x256xf32>
    %58 = tpu.matmul %55, %57, %cst_20 {dimension_numbers = #tpu.dot_dimension_numbers<[1], [0], [0], [1], [0, 0, 1, 1], [], []>} : vector<512x256xbf16>, vector<256x256xbf16>, vector<512x256xf32> -> vector<512x256xf32>
    %59 = arith.truncf %48 : vector<512x256xf32> to vector<512x256xbf16>
    %c1 = arith.constant 1 : index
    %c0_21 = arith.constant 0 : index
    %c0_22 = arith.constant 0 : index
    %60 = vector.load %arg6[%c1, %c0_21, %c0_22] : memref<3x256x256xbf16, #tpu.memory_space<vmem>>, vector<1x256x256xbf16>
    %61 = vector.shape_cast %60 : vector<1x256x256xbf16> to vector<256x256xbf16>
    %cst_23 = arith.constant dense<0.000000e+00> : vector<512x256xf32>
    %62 = tpu.matmul %59, %61, %cst_23 {dimension_numbers = #tpu.dot_dimension_numbers<[1], [0], [0], [1], [0, 0, 1, 1], [], []>} : vector<512x256xbf16>, vector<256x256xbf16>, vector<512x256xf32> -> vector<512x256xf32>
    %63 = arith.addf %58, %62 : vector<512x256xf32>
    %64 = arith.truncf %54 : vector<512x256xf32> to vector<512x256xbf16>
    %c2 = arith.constant 2 : index
    %c0_24 = arith.constant 0 : index
    %c0_25 = arith.constant 0 : index
    %65 = vector.load %arg6[%c2, %c0_24, %c0_25] : memref<3x256x256xbf16, #tpu.memory_space<vmem>>, vector<1x256x256xbf16>
    %66 = vector.shape_cast %65 : vector<1x256x256xbf16> to vector<256x256xbf16>
    %cst_26 = arith.constant dense<0.000000e+00> : vector<512x256xf32>
    %67 = tpu.matmul %64, %66, %cst_26 {dimension_numbers = #tpu.dot_dimension_numbers<[1], [0], [0], [1], [0, 0, 1, 1], [], []>} : vector<512x256xbf16>, vector<256x256xbf16>, vector<512x256xf32> -> vector<512x256xf32>
    %68 = arith.addf %63, %67 : vector<512x256xf32>
    %c0_27 = arith.constant 0 : index
    %c0_28 = arith.constant 0 : index
    %69 = vector.load %arg4[%c0_27, %c0_28] : memref<1x256xf32, #tpu.memory_space<vmem>>, vector<1x256xf32>
    %c0_29 = arith.constant 0 : index
    %c0_30 = arith.constant 0 : index
    %70 = vector.load %arg5[%c0_29, %c0_30] : memref<1x256xf32, #tpu.memory_space<vmem>>, vector<1x256xf32>
    %cst_31 = arith.constant dense<0.000000e+00> : vector<256xf32>
    %71 = vector.multi_reduction <add>, %68, %cst_31 [0] : vector<512x256xf32> to vector<256xf32>
    %72 = vector.shape_cast %71 : vector<256xf32> to vector<1x256xf32>
    %c16_i32_32 = arith.constant 16 : i32
    %73 = tpu.dynamic_rotate %72 by %c16_i32_32 dim 1 : vector<1x256xf32>, i32 -> vector<1x256xf32>
    %74 = arith.addf %72, %73 : vector<1x256xf32>
    %c32_i32_33 = arith.constant 32 : i32
    %75 = tpu.dynamic_rotate %74 by %c32_i32_33 dim 1 : vector<1x256xf32>, i32 -> vector<1x256xf32>
    %76 = arith.addf %74, %75 : vector<1x256xf32>
    %c64_i32_34 = arith.constant 64 : i32
    %77 = tpu.dynamic_rotate %76 by %c64_i32_34 dim 1 : vector<1x256xf32>, i32 -> vector<1x256xf32>
    %78 = arith.addf %76, %77 : vector<1x256xf32>
    %c128_i32_35 = arith.constant 128 : i32
    %79 = tpu.dynamic_rotate %78 by %c128_i32_35 dim 1 : vector<1x256xf32>, i32 -> vector<1x256xf32>
    %80 = arith.addf %78, %79 : vector<1x256xf32>
    %cst_36 = arith.constant 1.22070313E-4 : f32
    %81 = vector.broadcast %cst_36 : f32 to vector<1x256xf32>
    %82 = arith.mulf %80, %81 : vector<1x256xf32>
    %83 = arith.mulf %68, %68 : vector<512x256xf32>
    %cst_37 = arith.constant dense<0.000000e+00> : vector<256xf32>
    %84 = vector.multi_reduction <add>, %83, %cst_37 [0] : vector<512x256xf32> to vector<256xf32>
    %85 = vector.shape_cast %84 : vector<256xf32> to vector<1x256xf32>
    %c16_i32_38 = arith.constant 16 : i32
    %86 = tpu.dynamic_rotate %85 by %c16_i32_38 dim 1 : vector<1x256xf32>, i32 -> vector<1x256xf32>
    %87 = arith.addf %85, %86 : vector<1x256xf32>
    %c32_i32_39 = arith.constant 32 : i32
    %88 = tpu.dynamic_rotate %87 by %c32_i32_39 dim 1 : vector<1x256xf32>, i32 -> vector<1x256xf32>
    %89 = arith.addf %87, %88 : vector<1x256xf32>
    %c64_i32_40 = arith.constant 64 : i32
    %90 = tpu.dynamic_rotate %89 by %c64_i32_40 dim 1 : vector<1x256xf32>, i32 -> vector<1x256xf32>
    %91 = arith.addf %89, %90 : vector<1x256xf32>
    %c128_i32_41 = arith.constant 128 : i32
    %92 = tpu.dynamic_rotate %91 by %c128_i32_41 dim 1 : vector<1x256xf32>, i32 -> vector<1x256xf32>
    %93 = arith.addf %91, %92 : vector<1x256xf32>
    %cst_42 = arith.constant 1.22070313E-4 : f32
    %94 = vector.broadcast %cst_42 : f32 to vector<1x256xf32>
    %95 = arith.mulf %93, %94 : vector<1x256xf32>
    %96 = arith.mulf %82, %82 : vector<1x256xf32>
    %97 = arith.subf %95, %96 : vector<1x256xf32>
    %cst_43 = arith.constant 9.99999974E-6 : f32
    %98 = vector.broadcast %cst_43 : f32 to vector<1x256xf32>
    %99 = arith.addf %97, %98 : vector<1x256xf32>
    %100 = math.rsqrt %99 : vector<1x256xf32>
    %101 = arith.mulf %69, %100 : vector<1x256xf32>
    %102 = arith.mulf %82, %101 : vector<1x256xf32>
    %103 = arith.subf %70, %102 : vector<1x256xf32>
    %104 = vector.broadcast %101 : vector<1x256xf32> to vector<512x256xf32>
    %105 = arith.mulf %68, %104 : vector<512x256xf32>
    %106 = vector.broadcast %103 : vector<1x256xf32> to vector<512x256xf32>
    %107 = arith.addf %105, %106 : vector<512x256xf32>
    %cst_44 = arith.constant 0.000000e+00 : f32
    %108 = vector.broadcast %cst_44 : f32 to vector<512x256xf32>
    %109 = arith.maximumf %107, %108 : vector<512x256xf32>
    %c1_i32_45 = arith.constant 1 : i32
    %110 = tpu.dynamic_rotate %109 by %c1_i32_45 dim 0 : vector<512x256xf32>, i32 -> vector<512x256xf32>
    %cst_46 = arith.constant 0.000000e+00 : f32
    %111 = vector.broadcast %cst_46 : f32 to vector<512x256xf32>
    %112 = arith.select %4, %111, %110 : vector<512x256xi1>, vector<512x256xf32>
    %c511_i32_47 = arith.constant 511 : i32
    %113 = tpu.dynamic_rotate %109 by %c511_i32_47 dim 0 : vector<512x256xf32>, i32 -> vector<512x256xf32>
    %cst_48 = arith.constant 0.000000e+00 : f32
    %114 = vector.broadcast %cst_48 : f32 to vector<512x256xf32>
    %115 = arith.select %6, %114, %113 : vector<512x256xi1>, vector<512x256xf32>
    %116 = arith.truncf %112 : vector<512x256xf32> to vector<512x256xbf16>
    %c0_49 = arith.constant 0 : index
    %c0_50 = arith.constant 0 : index
    %c0_51 = arith.constant 0 : index
    %117 = vector.load %arg7[%c0_49, %c0_50, %c0_51] : memref<3x256x256xbf16, #tpu.memory_space<vmem>>, vector<1x256x256xbf16>
    %118 = vector.shape_cast %117 : vector<1x256x256xbf16> to vector<256x256xbf16>
    %cst_52 = arith.constant dense<0.000000e+00> : vector<512x256xf32>
    %119 = tpu.matmul %116, %118, %cst_52 {dimension_numbers = #tpu.dot_dimension_numbers<[1], [0], [0], [1], [0, 0, 1, 1], [], []>} : vector<512x256xbf16>, vector<256x256xbf16>, vector<512x256xf32> -> vector<512x256xf32>
    %120 = arith.truncf %109 : vector<512x256xf32> to vector<512x256xbf16>
    %c1_53 = arith.constant 1 : index
    %c0_54 = arith.constant 0 : index
    %c0_55 = arith.constant 0 : index
    %121 = vector.load %arg7[%c1_53, %c0_54, %c0_55] : memref<3x256x256xbf16, #tpu.memory_space<vmem>>, vector<1x256x256xbf16>
    %122 = vector.shape_cast %121 : vector<1x256x256xbf16> to vector<256x256xbf16>
    %cst_56 = arith.constant dense<0.000000e+00> : vector<512x256xf32>
    %123 = tpu.matmul %120, %122, %cst_56 {dimension_numbers = #tpu.dot_dimension_numbers<[1], [0], [0], [1], [0, 0, 1, 1], [], []>} : vector<512x256xbf16>, vector<256x256xbf16>, vector<512x256xf32> -> vector<512x256xf32>
    %124 = arith.addf %119, %123 : vector<512x256xf32>
    %125 = arith.truncf %115 : vector<512x256xf32> to vector<512x256xbf16>
    %c2_57 = arith.constant 2 : index
    %c0_58 = arith.constant 0 : index
    %c0_59 = arith.constant 0 : index
    %126 = vector.load %arg7[%c2_57, %c0_58, %c0_59] : memref<3x256x256xbf16, #tpu.memory_space<vmem>>, vector<1x256x256xbf16>
    %127 = vector.shape_cast %126 : vector<1x256x256xbf16> to vector<256x256xbf16>
    %cst_60 = arith.constant dense<0.000000e+00> : vector<512x256xf32>
    %128 = tpu.matmul %125, %127, %cst_60 {dimension_numbers = #tpu.dot_dimension_numbers<[1], [0], [0], [1], [0, 0, 1, 1], [], []>} : vector<512x256xbf16>, vector<256x256xbf16>, vector<512x256xf32> -> vector<512x256xf32>
    %129 = arith.addf %124, %128 : vector<512x256xf32>
    %130 = arith.addf %129, %7 : vector<512x256xf32>
    %c0_61 = arith.constant 0 : index
    %c0_62 = arith.constant 0 : index
    %131 = vector.load %arg8[%c0_61, %c0_62] : memref<512x256xf32, #tpu.memory_space<vmem>>, vector<512x256xf32>
    tpu.vector_store %arg8[%c0_61, %c0_62], %130 {strides = array<i32>} : memref<512x256xf32, #tpu.memory_space<vmem>>, vector<512x256xf32>,
    return
  }
  func.func @transform_0(%arg0: i32) -> (i32, i32) {
    %c0_i32 = arith.constant 0 : i32
    %c0_i32_0 = arith.constant 0 : i32
    %c0_i32_1 = arith.constant 0 : i32
    return %c0_i32, %c0_i32_0 : i32, i32
  }
  func.func @transform_1(%arg0: i32) -> (i32, i32) {
    %c0_i32 = arith.constant 0 : i32
    %c0_i32_0 = arith.constant 0 : i32
    %c0_i32_1 = arith.constant 0 : i32
    return %c0_i32, %c0_i32_0 : i32, i32
  }
  func.func @transform_2(%arg0: i32) -> (i32, i32) {
    %c0_i32 = arith.constant 0 : i32
    %c0_i32_0 = arith.constant 0 : i32
    %c0_i32_1 = arith.constant 0 : i32
    return %c0_i32, %c0_i32_0 : i32, i32
  }
  func.func @transform_3(%arg0: i32) -> (i32, i32) {
    %c0_i32 = arith.constant 0 : i32
    %c0_i32_0 = arith.constant 0 : i32
    %c0_i32_1 = arith.constant 0 : i32
    return %c0_i32, %c0_i32_0 : i32, i32
  }
  func.func @transform_4(%arg0: i32) -> (i32, i32) {
    %c0_i32 = arith.constant 0 : i32
    %c0_i32_0 = arith.constant 0 : i32
    %c0_i32_1 = arith.constant 0 : i32
    return %c0_i32, %c0_i32_0 : i32, i32
  }
  func.func @transform_5(%arg0: i32) -> (i32, i32, i32) {
    %c0_i32 = arith.constant 0 : i32
    %c0_i32_0 = arith.constant 0 : i32
    %c0_i32_1 = arith.constant 0 : i32
    %c0_i32_2 = arith.constant 0 : i32
    return %c0_i32, %c0_i32_0, %c0_i32_1 : i32, i32, i32
  }
  func.func @transform_6(%arg0: i32) -> (i32, i32, i32) {
    %c0_i32 = arith.constant 0 : i32
    %c0_i32_0 = arith.constant 0 : i32
    %c0_i32_1 = arith.constant 0 : i32
    %c0_i32_2 = arith.constant 0 : i32
    return %c0_i32, %c0_i32_0, %c0_i32_1 : i32, i32, i32
  }
  func.func @transform_7(%arg0: i32) -> (i32, i32) {
    %c0_i32 = arith.constant 0 : i32
    %c0_i32_0 = arith.constant 0 : i32
    %c0_i32_1 = arith.constant 0 : i32
    return %c0_i32, %c0_i32_0 : i32, i32
  }
}

</mosaic_0001>

<llo_original>
// kernel: tile.38
$region0: #{tile.38}
  #allocation0 [shape = 's32[1]{0}', space=sflag, size = 0x4, scoped, tag = 'scoped memory for tile.38']
  %s0 = inlined_call_operand.vmem [shape: f32[16], index: 0, kind: input, shape index: {}]
  %s1 = inlined_call_operand.vmem [shape: f32[16,16], index: 1, kind: output, shape index: {}]
  // Predicated region
  $region2: #{tile.38} parent=0 // pred_check
    _
  $region3: #{tile.38} parent=0 // pred_check_branch
    %3 = sbr.rel (0) target = $region5
  $region4: #{tile.38} parent=0 // pred_region
    _
  $region5: #{tile.38} parent=0 // pred_fallthru
    _
  %v4 = vld [vmem:[%s0] ss:$0 sm:$0xff]
  %5 = vst [vmem:[%s1] sm:$0xff] %v4
  %s6 = scalar_lea.vmem %s1, 8
  %7 = vst [vmem:[%s6] sm:$0xff] %v4

// kernel: tile.39
$region0: #{tile.39}
  %s0 = inlined_call_operand.vmem [shape: f32[16,16], index: 0, kind: input, shape index: {}]
  %s1 = inlined_call_operand.vmem [shape: f32[1,256], index: 1, kind: output, shape index: {}]
  $region1: #{tile.39} parent=0
    #allocation0 [shape = 'u8[8192]{0}', space=vmem, size = 0x2000, scoped, tag = 'scoped mem for output reshape']
    %s2 = smov 3
    %v3 = vld [vmem:[%s0] ss:$8 sm:%s2]
    %vm4 = vcmask 130048
    %5 = vst.msk [vmem:[#allocation0] ss:$8 sm:$0x3] %vm4, %v3
    %s6 = scalar_lea.vmem %s0, 7
    %s7 = smov 3
    %v8 = vld [vmem:[%s6] ss:$8 sm:%s7]
    %9 = vrot.lane.b32.xlu0 %v8, 112
    %v10 = vpop.permute.xlu0 %9
    %vm11 = vcmask 1048448
    %12 = vst.msk [vmem:[#allocation0] ss:$8 sm:$0x3] %vm11, %v10
    %s13 = scalar_lea.vmem %s0, 6
    %s14 = smov 3
    %v15 = vld [vmem:[%s13] ss:$8 sm:%s14]
    %16 = vrot.lane.b32.xlu0 %v15, 96
    %v17 = vpop.permute.xlu0 %16
    %vm18 = vcmask 917248
    %19 = vst.msk [vmem:[#allocation0] ss:$8 sm:$0x3] %vm18, %v17
    %s20 = scalar_lea.vmem %s0, 5
    %s21 = smov 3
    %v22 = vld [vmem:[%s20] ss:$8 sm:%s21]
    %23 = vrot.lane.b32.xlu0 %v22, 80
    %v24 = vpop.permute.xlu0 %23
    %vm25 = vcmask 786048
    %26 = vst.msk [vmem:[#allocation0] ss:$8 sm:$0x3] %vm25, %v24
    %s27 = scalar_lea.vmem %s0, 4
    %s28 = smov 3
    %v29 = vld [vmem:[%s27] ss:$8 sm:%s28]
    %30 = vrot.lane.b32.xlu0 %v29, 64
    %v31 = vpop.permute.xlu0 %30
    %vm32 = vcmask 654848
    %33 = vst.msk [vmem:[#allocation0] ss:$8 sm:$0x3] %vm32, %v31
    %s34 = scalar_lea.vmem %s0, 3
    %s35 = smov 3
    %v36 = vld [vmem:[%s34] ss:$8 sm:%s35]
    %37 = vrot.lane.b32.xlu0 %v36, 48
    %v38 = vpop.permute.xlu0 %37
    %vm39 = vcmask 523648
    %40 = vst.msk [vmem:[#allocation0] ss:$8 sm:$0x3] %vm39, %v38
    %s41 = scalar_lea.vmem %s0, 2
    %s42 = smov 3
    %v43 = vld [vmem:[%s41] ss:$8 sm:%s42]
    %44 = vrot.lane.b32.xlu0 %v43, 32
    %v45 = vpop.permute.xlu0 %44
    %vm46 = vcmask 392448
    %47 = vst.msk [vmem:[#allocation0] ss:$8 sm:$0x3] %vm46, %v45
    %s48 = scalar_lea.vmem %s0, 1
    %s49 = smov 3
    %v50 = vld [vmem:[%s48] ss:$8 sm:%s49]
    %51 = vrot.lane.b32.xlu0 %v50, 16
    %v52 = vpop.permute.xlu0 %51
    %vm53 = vcmask 261248
    %54 = vst.msk [vmem:[#allocation0] ss:$8 sm:$0x3] %vm53, %v52
    %s56 = sshllo.u32 0, 1
    %v58 = vld [vmem:[#allocation0] sm:%s56]
    %s59 = sshllo.u32 0, 1
    %60 = vst [vmem:[%s1] sm:%s59] %v58
    %s61 = scalar_lea.vmem [#allocation0], 8
    %v62 = vld [vmem:[%s61] sm:%s56]
    %s63 = sshllo.u32 0, 1
    %s64 = scalar_lea.vmem %s1, 1
    %65 = vst [vmem:[%s64] sm:%s63] %v62

// kernel: basic_block_curve_forward.1
$region0: #{basic_block_curve_forward.1}
  #allocation0 [shape = 'u32[]', space=smem, size = 0x4, offset = 0x4, fixed_abs, tag = 'smem constant byte address 0x4 - core index']
  #allocation1 [shape = 'u32[144,128]{1,0:T(1,128)}', space=vmem, size = 0x12000, scoped, tag = 'internal scratch']
  %s0 = inlined_call_operand.vmem [shape: f32[512,256], index: 0, kind: input, shape index: {}]
  %s1 = inlined_call_operand.vmem [shape: f32[1,256], index: 1, kind: input, shape index: {}]
  %s2 = inlined_call_operand.vmem [shape: f32[1,256], index: 2, kind: input, shape index: {}]
  %s3 = inlined_call_operand.vmem [shape: f32[1,256], index: 3, kind: input, shape index: {}]
  %s4 = inlined_call_operand.vmem [shape: f32[1,256], index: 4, kind: input, shape index: {}]
  %s5 = inlined_call_operand.vmem [shape: bf16[3,256,256], index: 5, kind: input, shape index: {}]
  %s6 = inlined_call_operand.vmem [shape: bf16[3,256,256], index: 6, kind: input, shape index: {}]
  %s7 = inlined_call_operand.vmem [shape: f32[512,256], index: 7, kind: output, shape index: {}]
  %s8 = sld [smem:[#allocation0]]
  $region38: #{basic_block_curve_forward.1} parent=0
    _
  %s10 = ssub.s32 1, %s8
  %s11 = scalar_select 0, %s10, %s8
  // Predicated region
  $region2: #{basic_block_curve_forward.1} parent=0 // pred_check
    _
  $region3: #{basic_block_curve_forward.1} parent=0 // pred_check_branch
    %13 = sbr.rel (0) target = $region5
  $region4: #{basic_block_curve_forward.1} parent=0 // pred_region
    _
  $region5: #{basic_block_curve_forward.1} parent=0 // pred_fallthru
    _
  // Predicated region
  $region6: #{basic_block_curve_forward.1} parent=0 // pred_check
    _
  $region7: #{basic_block_curve_forward.1} parent=0 // pred_check_branch
    %15 = sbr.rel (0) target = $region9
  $region8: #{basic_block_curve_forward.1} parent=0 // pred_region
    _
  $region9: #{basic_block_curve_forward.1} parent=0 // pred_fallthru
    _
  // Predicated region
  $region10: #{basic_block_curve_forward.1} parent=0 // pred_check
    _
  $region11: #{basic_block_curve_forward.1} parent=0 // pred_check_branch
    %17 = sbr.rel (0) target = $region13
  $region12: #{basic_block_curve_forward.1} parent=0 // pred_region
    _
  $region13: #{basic_block_curve_forward.1} parent=0 // pred_fallthru
    _
  // Predicated region
  $region14: #{basic_block_curve_forward.1} parent=0 // pred_check
    _
  $region15: #{basic_block_curve_forward.1} parent=0 // pred_check_branch
    %19 = sbr.rel (0) target = $region17
  $region16: #{basic_block_curve_forward.1} parent=0 // pred_region
    _
  $region17: #{basic_block_curve_forward.1} parent=0 // pred_fallthru
    _
  // Predicated region
  $region18: #{basic_block_curve_forward.1} parent=0 // pred_check
    _
  $region19: #{basic_block_curve_forward.1} parent=0 // pred_check_branch
    %21 = sbr.rel (0) target = $region21
  $region20: #{basic_block_curve_forward.1} parent=0 // pred_region
    _
  $region21: #{basic_block_curve_forward.1} parent=0 // pred_fallthru
    _
  // Predicated region
  $region22: #{basic_block_curve_forward.1} parent=0 // pred_check
    _
  $region23: #{basic_block_curve_forward.1} parent=0 // pred_check_branch
    %23 = sbr.rel (0) target = $region25
  $region24: #{basic_block_curve_forward.1} parent=0 // pred_region
    _
  $region25: #{basic_block_curve_forward.1} parent=0 // pred_fallthru
    _
  // Predicated region
  $region26: #{basic_block_curve_forward.1} parent=0 // pred_check
    _
  $region27: #{basic_block_curve_forward.1} parent=0 // pred_check_branch
    %25 = sbr.rel (0) target = $region29
  $region28: #{basic_block_curve_forward.1} parent=0 // pred_region
    _
  $region29: #{basic_block_curve_forward.1} parent=0 // pred_fallthru
    _
  %v26 = vlaneseq
  %v27 = vshrl.u32 %v26, 7
  %v28 = vadd.s32 %v27, 8
  %v29 = vadd.s32 %v27, 16
  %v30 = vadd.s32 %v27, 24
  %v31 = vadd.s32 %v27, 32
  %v32 = vadd.s32 %v27, 40
  %v33 = vadd.s32 %v27, 48
  %v34 = vadd.s32 %v27, 56
  %v35 = vadd.s32 %v27, 64
  %v36 = vadd.s32 %v27, 72
  %v37 = vadd.s32 %v27, 80
  %v38 = vadd.s32 %v27, 88
  %v39 = vadd.s32 %v27, 96
  %v40 = vadd.s32 %v27, 104
  %v41 = vadd.s32 %v27, 112
  %v42 = vadd.s32 %v27, 120
  %v43 = vadd.s32 %v27, 128
  %v44 = vadd.s32 %v27, 136
  %v45 = vadd.s32 %v27, 144
  %v46 = vadd.s32 %v27, 152
  %v47 = vadd.s32 %v27, 160
  %v48 = vadd.s32 %v27, 168
  %v49 = vadd.s32 %v27, 176
  %v50 = vadd.s32 %v27, 184
  %v51 = vadd.s32 %v27, 192
  %v52 = vadd.s32 %v27, 200
  %v53 = vadd.s32 %v27, 208
  %v54 = vadd.s32 %v27, 216
  %v55 = vadd.s32 %v27, 224
  %v56 = vadd.s32 %v27, 232
  %v57 = vadd.s32 %v27, 240
  %v58 = vadd.s32 %v27, 248
  %v59 = vadd.s32 %v27, 256
  %v60 = vadd.s32 %v27, 264
  %v61 = vadd.s32 %v27, 272
  %v62 = vadd.s32 %v27, 280
  %v63 = vadd.s32 %v27, 288
  %v64 = vadd.s32 %v27, 296
  %v65 = vadd.s32 %v27, 304
  %v66 = vadd.s32 %v27, 312
  %v67 = vadd.s32 %v27, 320
  %v68 = vadd.s32 %v27, 328
  %v69 = vadd.s32 %v27, 336
  %v70 = vadd.s32 %v27, 344
  %v71 = vadd.s32 %v27, 352
  %v72 = vadd.s32 %v27, 360
  %v73 = vadd.s32 %v27, 368
  %v74 = vadd.s32 %v27, 376
  %v75 = vadd.s32 %v27, 384
  %v76 = vadd.s32 %v27, 392
  %v77 = vadd.s32 %v27, 400
  %v78 = vadd.s32 %v27, 408
  %v79 = vadd.s32 %v27, 416
  %v80 = vadd.s32 %v27, 424
  %v81 = vadd.s32 %v27, 432
  %v82 = vadd.s32 %v27, 440
  %v83 = vadd.s32 %v27, 448
  %v84 = vadd.s32 %v27, 456
  %v85 = vadd.s32 %v27, 464
  %v86 = vadd.s32 %v27, 472
  %v87 = vadd.s32 %v27, 480
  %v88 = vadd.s32 %v27, 488
  %v89 = vadd.s32 %v27, 496
  %v90 = vadd.s32 %v27, 504
  %v91 = vand.u32 %v27, 15
  %v92 = vand.u32 %v28, 15
  %v93 = vand.u32 %v29, 15
  %v94 = vand.u32 %v30, 15
  %v95 = vand.u32 %v31, 15
  %v96 = vand.u32 %v32, 15
  %v97 = vand.u32 %v33, 15
  %v98 = vand.u32 %v34, 15
  %v99 = vand.u32 %v35, 15
  %v100 = vand.u32 %v36, 15
  %v101 = vand.u32 %v37, 15
  %v102 = vand.u32 %v38, 15
  %v103 = vand.u32 %v39, 15
  %v104 = vand.u32 %v40, 15
  %v105 = vand.u32 %v41, 15
  %v106 = vand.u32 %v42, 15
  %v107 = vand.u32 %v43, 15
  %v108 = vand.u32 %v44, 15
  %v109 = vand.u32 %v45, 15
  %v110 = vand.u32 %v46, 15
  %v111 = vand.u32 %v47, 15
  %v112 = vand.u32 %v48, 15
  %v113 = vand.u32 %v49, 15
  %v114 = vand.u32 %v50, 15
  %v115 = vand.u32 %v51, 15
  %v116 = vand.u32 %v52, 15
  %v117 = vand.u32 %v53, 15
  %v118 = vand.u32 %v54, 15
  %v119 = vand.u32 %v55, 15
  %v120 = vand.u32 %v56, 15
  %v121 = vand.u32 %v57, 15
  %v122 = vand.u32 %v58, 15
  %v123 = vand.u32 %v59, 15
  %v124 = vand.u32 %v60, 15
  %v125 = vand.u32 %v61, 15
  %v126 = vand.u32 %v62, 15
  %v127 = vand.u32 %v63, 15
  %v128 = vand.u32 %v64, 15
  %v129 = vand.u32 %v65, 15
  %v130 = vand.u32 %v66, 15
  %v131 = vand.u32 %v67, 15
  %v132 = vand.u32 %v68, 15
  %v133 = vand.u32 %v69, 15
  %v134 = vand.u32 %v70, 15
  %v135 = vand.u32 %v71, 15
  %v136 = vand.u32 %v72, 15
  %v137 = vand.u32 %v73, 15
  %v138 = vand.u32 %v74, 15
  %v139 = vand.u32 %v75, 15
  %v140 = vand.u32 %v76, 15
  %v141 = vand.u32 %v77, 15
  %v142 = vand.u32 %v78, 15
  %v143 = vand.u32 %v79, 15
  %v144 = vand.u32 %v80, 15
  %v145 = vand.u32 %v81, 15
  %v146 = vand.u32 %v82, 15
  %v147 = vand.u32 %v83, 15
  %v148 = vand.u32 %v84, 15
  %v149 = vand.u32 %v85, 15
  %v150 = vand.u32 %v86, 15
  %v151 = vand.u32 %v87, 15
  %v152 = vand.u32 %v88, 15
  %v153 = vand.u32 %v89, 15
  %v154 = vand.u32 %v90, 15
  %vm155 = vcmp.eq.s32.totalorder %v91, 0
  %vm156 = vcmp.eq.s32.totalorder %v92, 0
  %vm157 = vcmp.eq.s32.totalorder %v93, 0
  %vm158 = vcmp.eq.s32.totalorder %v94, 0
  %vm159 = vcmp.eq.s32.totalorder %v95, 0
  %vm160 = vcmp.eq.s32.totalorder %v96, 0
  %vm161 = vcmp.eq.s32.totalorder %v97, 0
  %vm162 = vcmp.eq.s32.totalorder %v98, 0
  %vm163 = vcmp.eq.s32.totalorder %v99, 0
  %vm164 = vcmp.eq.s32.totalorder %v100, 0
  %vm165 = vcmp.eq.s32.totalorder %v101, 0
  %vm166 = vcmp.eq.s32.totalorder %v102, 0
  %vm167 = vcmp.eq.s32.totalorder %v103, 0
  %vm168 = vcmp.eq.s32.totalorder %v104, 0
  %vm169 = vcmp.eq.s32.totalorder %v105, 0
  %vm170 = vcmp.eq.s32.totalorder %v106, 0
  %vm171 = vcmp.eq.s32.totalorder %v107, 0
  %vm172 = vcmp.eq.s32.totalorder %v108, 0
  %vm173 = vcmp.eq.s32.totalorder %v109, 0
  %vm174 = vcmp.eq.s32.totalorder %v110, 0
  %vm175 = vcmp.eq.s32.totalorder %v111, 0
  %vm176 = vcmp.eq.s32.totalorder %v112, 0
  %vm177 = vcmp.eq.s32.totalorder %v113, 0
  %vm178 = vcmp.eq.s32.totalorder %v114, 0
  %vm179 = vcmp.eq.s32.totalorder %v115, 0
  %vm180 = vcmp.eq.s32.totalorder %v116, 0
  %vm181 = vcmp.eq.s32.totalorder %v117, 0
  %vm182 = vcmp.eq.s32.totalorder %v118, 0
  %vm183 = vcmp.eq.s32.totalorder %v119, 0
  %vm184 = vcmp.eq.s32.totalorder %v120, 0
  %vm185 = vcmp.eq.s32.totalorder %v121, 0
  %vm186 = vcmp.eq.s32.totalorder %v122, 0
  %vm187 = vcmp.eq.s32.totalorder %v123, 0
  %vm188 = vcmp.eq.s32.totalorder %v124, 0
  %vm189 = vcmp.eq.s32.totalorder %v125, 0
  %vm190 = vcmp.eq.s32.totalorder %v126, 0
  %vm191 = vcmp.eq.s32.totalorder %v127, 0
  %vm192 = vcmp.eq.s32.totalorder %v128, 0
  %vm193 = vcmp.eq.s32.totalorder %v129, 0
  %vm194 = vcmp.eq.s32.totalorder %v130, 0
  %vm195 = vcmp.eq.s32.totalorder %v131, 0
  %vm196 = vcmp.eq.s32.totalorder %v132, 0
  %vm197 = vcmp.eq.s32.totalorder %v133, 0
  %vm198 = vcmp.eq.s32.totalorder %v134, 0
  %vm199 = vcmp.eq.s32.totalorder %v135, 0
  %vm200 = vcmp.eq.s32.totalorder %v136, 0
  %vm201 = vcmp.eq.s32.totalorder %v137, 0
  %vm202 = vcmp.eq.s32.totalorder %v138, 0
  %vm203 = vcmp.eq.s32.totalorder %v139, 0
  %vm204 = vcmp.eq.s32.totalorder %v140, 0
  %vm205 = vcmp.eq.s32.totalorder %v141, 0
  %vm206 = vcmp.eq.s32.totalorder %v142, 0
  %vm207 = vcmp.eq.s32.totalorder %v143, 0
  %vm208 = vcmp.eq.s32.totalorder %v144, 0
  %vm209 = vcmp.eq.s32.totalorder %v145, 0
  %vm210 = vcmp.eq.s32.totalorder %v146, 0
  %vm211 = vcmp.eq.s32.totalorder %v147, 0
  %vm212 = vcmp.eq.s32.totalorder %v148, 0
  %vm213 = vcmp.eq.s32.totalorder %v149, 0
  %vm214 = vcmp.eq.s32.totalorder %v150, 0
  %vm215 = vcmp.eq.s32.totalorder %v151, 0
  %vm216 = vcmp.eq.s32.totalorder %v152, 0
  %vm217 = vcmp.eq.s32.totalorder %v153, 0
  %vm218 = vcmp.eq.s32.totalorder %v154, 0
  %vm219 = vcmp.eq.s32.totalorder %v91, 15
  %vm220 = vcmp.eq.s32.totalorder %v92, 15
  %vm221 = vcmp.eq.s32.totalorder %v93, 15
  %vm222 = vcmp.eq.s32.totalorder %v94, 15
  %vm223 = vcmp.eq.s32.totalorder %v95, 15
  %vm224 = vcmp.eq.s32.totalorder %v96, 15
  %vm225 = vcmp.eq.s32.totalorder %v97, 15
  %vm226 = vcmp.eq.s32.totalorder %v98, 15
  %vm227 = vcmp.eq.s32.totalorder %v99, 15
  %vm228 = vcmp.eq.s32.totalorder %v100, 15
  %vm229 = vcmp.eq.s32.totalorder %v101, 15
  %vm230 = vcmp.eq.s32.totalorder %v102, 15
  %vm231 = vcmp.eq.s32.totalorder %v103, 15
  %vm232 = vcmp.eq.s32.totalorder %v104, 15
  %vm233 = vcmp.eq.s32.totalorder %v105, 15
  %vm234 = vcmp.eq.s32.totalorder %v106, 15
  %vm235 = vcmp.eq.s32.totalorder %v107, 15
  %vm236 = vcmp.eq.s32.totalorder %v108, 15
  %vm237 = vcmp.eq.s32.totalorder %v109, 15
  %vm238 = vcmp.eq.s32.totalorder %v110, 15
  %vm239 = vcmp.eq.s32.totalorder %v111, 15
  %vm240 = vcmp.eq.s32.totalorder %v112, 15
  %vm241 = vcmp.eq.s32.totalorder %v113, 15
  %vm242 = vcmp.eq.s32.totalorder %v114, 15
  %vm243 = vcmp.eq.s32.totalorder %v115, 15
  %vm244 = vcmp.eq.s32.totalorder %v116, 15
  %vm245 = vcmp.eq.s32.totalorder %v117, 15
  %vm246 = vcmp.eq.s32.totalorder %v118, 15
  %vm247 = vcmp.eq.s32.totalorder %v119, 15
  %vm248 = vcmp.eq.s32.totalorder %v120, 15
  %vm249 = vcmp.eq.s32.totalorder %v121, 15
  %vm250 = vcmp.eq.s32.totalorder %v122, 15
  %vm251 = vcmp.eq.s32.totalorder %v123, 15
  %vm252 = vcmp.eq.s32.totalorder %v124, 15
  %vm253 = vcmp.eq.s32.totalorder %v125, 15
  %vm254 = vcmp.eq.s32.totalorder %v126, 15
  %vm255 = vcmp.eq.s32.totalorder %v127, 15
  %vm256 = vcmp.eq.s32.totalorder %v128, 15
  %vm257 = vcmp.eq.s32.totalorder %v129, 15
  %vm258 = vcmp.eq.s32.totalorder %v130, 15
  %vm259 = vcmp.eq.s32.totalorder %v131, 15
  %vm260 = vcmp.eq.s32.totalorder %v132, 15
  %vm261 = vcmp.eq.s32.totalorder %v133, 15
  %vm262 = vcmp.eq.s32.totalorder %v134, 15
  %vm263 = vcmp.eq.s32.totalorder %v135, 15
  %vm264 = vcmp.eq.s32.totalorder %v136, 15
  %vm265 = vcmp.eq.s32.totalorder %v137, 15
  %vm266 = vcmp.eq.s32.totalorder %v138, 15
  %vm267 = vcmp.eq.s32.totalorder %v139, 15
  %vm268 = vcmp.eq.s32.totalorder %v140, 15
  %vm269 = vcmp.eq.s32.totalorder %v141, 15
  %vm270 = vcmp.eq.s32.totalorder %v142, 15
  %vm271 = vcmp.eq.s32.totalorder %v143, 15
  %vm272 = vcmp.eq.s32.totalorder %v144, 15
  %vm273 = vcmp.eq.s32.totalorder %v145, 15
  %vm274 = vcmp.eq.s32.totalorder %v146, 15
  %vm275 = vcmp.eq.s32.totalorder %v147, 15
  %vm276 = vcmp.eq.s32.totalorder %v148, 15
  %vm277 = vcmp.eq.s32.totalorder %v149, 15
  %vm278 = vcmp.eq.s32.totalorder %v150, 15
  %vm279 = vcmp.eq.s32.totalorder %v151, 15
  %vm280 = vcmp.eq.s32.totalorder %v152, 15
  %vm281 = vcmp.eq.s32.totalorder %v153, 15
  %vm282 = vcmp.eq.s32.totalorder %v154, 15
  %v283 = vld [vmem:[%s0] sm:$0xff]
  %v284 = vld [vmem:[%s0 + $0x8] sm:$0xff]
  %v285 = vld [vmem:[%s0 + $0x10] sm:$0xff]
  %v286 = vld [vmem:[%s0 + $0x18] sm:$0xff]
  %v287 = vld [vmem:[%s0 + $0x20] sm:$0xff]
  %v288 = vld [vmem:[%s0 + $0x28] sm:$0xff]
  %v289 = vld [vmem:[%s0 + $0x30] sm:$0xff]
  %v290 = vld [vmem:[%s0 + $0x38] sm:$0xff]
  %v291 = vld [vmem:[%s0 + $0x40] sm:$0xff]
  %v292 = vld [vmem:[%s0 + $0x48] sm:$0xff]
  %v293 = vld [vmem:[%s0 + $0x50] sm:$0xff]
  %v294 = vld [vmem:[%s0 + $0x58] sm:$0xff]
  %v295 = vld [vmem:[%s0 + $0x60] sm:$0xff]
  %v296 = vld [vmem:[%s0 + $0x68] sm:$0xff]
  %v297 = vld [vmem:[%s0 + $0x70] sm:$0xff]
  %v298 = vld [vmem:[%s0 + $0x78] sm:$0xff]
  %v299 = vld [vmem:[%s0 + $0x80] sm:$0xff]
  %v300 = vld [vmem:[%s0 + $0x88] sm:$0xff]
  %v301 = vld [vmem:[%s0 + $0x90] sm:$0xff]
  %v302 = vld [vmem:[%s0 + $0x98] sm:$0xff]
  %v303 = vld [vmem:[%s0 + $0xa0] sm:$0xff]
  %v304 = vld [vmem:[%s0 + $0xa8] sm:$0xff]
  %v305 = vld [vmem:[%s0 + $0xb0] sm:$0xff]
  %v306 = vld [vmem:[%s0 + $0xb8] sm:$0xff]
  %v307 = vld [vmem:[%s0 + $0xc0] sm:$0xff]
  %v308 = vld [vmem:[%s0 + $0xc8] sm:$0xff]
  %v309 = vld [vmem:[%s0 + $0xd0] sm:$0xff]
  %v310 = vld [vmem:[%s0 + $0xd8] sm:$0xff]
  %v311 = vld [vmem:[%s0 + $0xe0] sm:$0xff]
  %v312 = vld [vmem:[%s0 + $0xe8] sm:$0xff]
  %v313 = vld [vmem:[%s0 + $0xf0] sm:$0xff]
  %v314 = vld [vmem:[%s0 + $0xf8] sm:$0xff]
  %v315 = vld [vmem:[%s0 + $0x100] sm:$0xff]
  %v316 = vld [vmem:[%s0 + $0x108] sm:$0xff]
  %v317 = vld [vmem:[%s0 + $0x110] sm:$0xff]
  %v318 = vld [vmem:[%s0 + $0x118] sm:$0xff]
  %v319 = vld [vmem:[%s0 + $0x120] sm:$0xff]
  %v320 = vld [vmem:[%s0 + $0x128] sm:$0xff]
  %v321 = vld [vmem:[%s0 + $0x130] sm:$0xff]
  %v322 = vld [vmem:[%s0 + $0x138] sm:$0xff]
  %v323 = vld [vmem:[%s0 + $0x140] sm:$0xff]
  %v324 = vld [vmem:[%s0 + $0x148] sm:$0xff]
  %v325 = vld [vmem:[%s0 + $0x150] sm:$0xff]
  %v326 = vld [vmem:[%s0 + $0x158] sm:$0xff]
  %v327 = vld [vmem:[%s0 + $0x160] sm:$0xff]
  %v328 = vld [vmem:[%s0 + $0x168] sm:$0xff]
  %v329 = vld [vmem:[%s0 + $0x170] sm:$0xff]
  %v330 = vld [vmem:[%s0 + $0x178] sm:$0xff]
  %v331 = vld [vmem:[%s0 + $0x180] sm:$0xff]
  %v332 = vld [vmem:[%s0 + $0x188] sm:$0xff]
  %v333 = vld [vmem:[%s0 + $0x190] sm:$0xff]
  %v334 = vld [vmem:[%s0 + $0x198] sm:$0xff]
  %v335 = vld [vmem:[%s0 + $0x1a0] sm:$0xff]
  %v336 = vld [vmem:[%s0 + $0x1a8] sm:$0xff]
  %v337 = vld [vmem:[%s0 + $0x1b0] sm:$0xff]
  %v338 = vld [vmem:[%s0 + $0x1b8] sm:$0xff]
  %v339 = vld [vmem:[%s0 + $0x1c0] sm:$0xff]
  %v340 = vld [vmem:[%s0 + $0x1c8] sm:$0xff]
  %v341 = vld [vmem:[%s0 + $0x1d0] sm:$0xff]
  %v342 = vld [vmem:[%s0 + $0x1d8] sm:$0xff]
  %v343 = vld [vmem:[%s0 + $0x1e0] sm:$0xff]
  %v344 = vld [vmem:[%s0 + $0x1e8] sm:$0xff]
  %v345 = vld [vmem:[%s0 + $0x1f0] sm:$0xff]
  %v346 = vld [vmem:[%s0 + $0x1f8] sm:$0xff]
  %v347 = vld [vmem:[%s0 + $0x200] sm:$0xff]
  %v348 = vld [vmem:[%s0 + $0x208] sm:$0xff]
  %v349 = vld [vmem:[%s0 + $0x210] sm:$0xff]
  %v350 = vld [vmem:[%s0 + $0x218] sm:$0xff]
  %v351 = vld [vmem:[%s0 + $0x220] sm:$0xff]
  %v352 = vld [vmem:[%s0 + $0x228] sm:$0xff]
  %v353 = vld [vmem:[%s0 + $0x230] sm:$0xff]
  %v354 = vld [vmem:[%s0 + $0x238] sm:$0xff]
  %v355 = vld [vmem:[%s0 + $0x240] sm:$0xff]
  %v356 = vld [vmem:[%s0 + $0x248] sm:$0xff]
  %v357 = vld [vmem:[%s0 + $0x250] sm:$0xff]
  %v358 = vld [vmem:[%s0 + $0x258] sm:$0xff]
  %v359 = vld [vmem:[%s0 + $0x260] sm:$0xff]
  %v360 = vld [vmem:[%s0 + $0x268] sm:$0xff]
  %v361 = vld [vmem:[%s0 + $0x270] sm:$0xff]
  %v362 = vld [vmem:[%s0 + $0x278] sm:$0xff]
  %v363 = vld [vmem:[%s0 + $0x280] sm:$0xff]
  %v364 = vld [vmem:[%s0 + $0x288] sm:$0xff]
  %v365 = vld [vmem:[%s0 + $0x290] sm:$0xff]
  %v366 = vld [vmem:[%s0 + $0x298] sm:$0xff]
  %v367 = vld [vmem:[%s0 + $0x2a0] sm:$0xff]
  %v368 = vld [vmem:[%s0 + $0x2a8] sm:$0xff]
  %v369 = vld [vmem:[%s0 + $0x2b0] sm:$0xff]
  %v370 = vld [vmem:[%s0 + $0x2b8] sm:$0xff]
  %v371 = vld [vmem:[%s0 + $0x2c0] sm:$0xff]
  %v372 = vld [vmem:[%s0 + $0x2c8] sm:$0xff]
  %v373 = vld [vmem:[%s0 + $0x2d0] sm:$0xff]
  %v374 = vld [vmem:[%s0 + $0x2d8] sm:$0xff]
  %v375 = vld [vmem:[%s0 + $0x2e0] sm:$0xff]
  %v376 = vld [vmem:[%s0 + $0x2e8] sm:$0xff]
  %v377 = vld [vmem:[%s0 + $0x2f0] sm:$0xff]
  %v378 = vld [vmem:[%s0 + $0x2f8] sm:$0xff]
  %v379 = vld [vmem:[%s0 + $0x300] sm:$0xff]
  %v380 = vld [vmem:[%s0 + $0x308] sm:$0xff]
  %v381 = vld [vmem:[%s0 + $0x310] sm:$0xff]
  %v382 = vld [vmem:[%s0 + $0x318] sm:$0xff]
  %v383 = vld [vmem:[%s0 + $0x320] sm:$0xff]
  %v384 = vld [vmem:[%s0 + $0x328] sm:$0xff]
  %v385 = vld [vmem:[%s0 + $0x330] sm:$0xff]
  %v386 = vld [vmem:[%s0 + $0x338] sm:$0xff]
  %v387 = vld [vmem:[%s0 + $0x340] sm:$0xff]
  %v388 = vld [vmem:[%s0 + $0x348] sm:$0xff]
  %v389 = vld [vmem:[%s0 + $0x350] sm:$0xff]
  %v390 = vld [vmem:[%s0 + $0x358] sm:$0xff]
  %v391 = vld [vmem:[%s0 + $0x360] sm:$0xff]
  %v392 = vld [vmem:[%s0 + $0x368] sm:$0xff]
  %v393 = vld [vmem:[%s0 + $0x370] sm:$0xff]
  %v394 = vld [vmem:[%s0 + $0x378] sm:$0xff]
  %v395 = vld [vmem:[%s0 + $0x380] sm:$0xff]
  %v396 = vld [vmem:[%s0 + $0x388] sm:$0xff]
  %v397 = vld [vmem:[%s0 + $0x390] sm:$0xff]
  %v398 = vld [vmem:[%s0 + $0x398] sm:$0xff]
  %v399 = vld [vmem:[%s0 + $0x3a0] sm:$0xff]
  %v400 = vld [vmem:[%s0 + $0x3a8] sm:$0xff]
  %v401 = vld [vmem:[%s0 + $0x3b0] sm:$0xff]
  %v402 = vld [vmem:[%s0 + $0x3b8] sm:$0xff]
  %v403 = vld [vmem:[%s0 + $0x3c0] sm:$0xff]
  %v404 = vld [vmem:[%s0 + $0x3c8] sm:$0xff]
  %v405 = vld [vmem:[%s0 + $0x3d0] sm:$0xff]
  %v406 = vld [vmem:[%s0 + $0x3d8] sm:$0xff]
  %v407 = vld [vmem:[%s0 + $0x3e0] sm:$0xff]
  %v408 = vld [vmem:[%s0 + $0x3e8] sm:$0xff]
  %v409 = vld [vmem:[%s0 + $0x3f0] sm:$0xff]
  %v410 = vld [vmem:[%s0 + $0x3f8] sm:$0xff]
  %v411 = vld [vmem:[%s1] sm:$0x3]
  %v412 = vld [vmem:[%s2] sm:$0x3]
  %v413 = vadd.f32 %v283, %v285
  %v414 = vadd.f32 %v413, %v287
  %v415 = vadd.f32 %v414, %v289
  %v416 = vadd.f32 %v415, %v291
  %v417 = vadd.f32 %v416, %v293
  %v418 = vadd.f32 %v417, %v295
  %v419 = vadd.f32 %v418, %v297
  %v420 = vadd.f32 %v419, %v299
  %v421 = vadd.f32 %v420, %v301
  %v422 = vadd.f32 %v421, %v303
  %v423 = vadd.f32 %v422, %v305
  %v424 = vadd.f32 %v423, %v307
  %v425 = vadd.f32 %v424, %v309
  %v426 = vadd.f32 %v425, %v311
  %v427 = vadd.f32 %v426, %v313
  %v428 = vadd.f32 %v427, %v315
  %v429 = vadd.f32 %v428, %v317
  %v430 = vadd.f32 %v429, %v319
  %v431 = vadd.f32 %v430, %v321
  %v432 = vadd.f32 %v431, %v323
  %v433 = vadd.f32 %v432, %v325
  %v434 = vadd.f32 %v433, %v327
  %v435 = vadd.f32 %v434, %v329
  %v436 = vadd.f32 %v435, %v331
  %v437 = vadd.f32 %v436, %v333
  %v438 = vadd.f32 %v437, %v335
  %v439 = vadd.f32 %v438, %v337
  %v440 = vadd.f32 %v439, %v339
  %v441 = vadd.f32 %v440, %v341
  %v442 = vadd.f32 %v441, %v343
  %v443 = vadd.f32 %v442, %v345
  %v444 = vadd.f32 %v443, %v347
  %v445 = vadd.f32 %v444, %v349
  %v446 = vadd.f32 %v445, %v351
  %v447 = vadd.f32 %v446, %v353
  %v448 = vadd.f32 %v447, %v355
  %v449 = vadd.f32 %v448, %v357
  %v450 = vadd.f32 %v449, %v359
  %v451 = vadd.f32 %v450, %v361
  %v452 = vadd.f32 %v451, %v363
  %v453 = vadd.f32 %v452, %v365
  %v454 = vadd.f32 %v453, %v367
  %v455 = vadd.f32 %v454, %v369
  %v456 = vadd.f32 %v455, %v371
  %v457 = vadd.f32 %v456, %v373
  %v458 = vadd.f32 %v457, %v375
  %v459 = vadd.f32 %v458, %v377
  %v460 = vadd.f32 %v459, %v379
  %v461 = vadd.f32 %v460, %v381
  %v462 = vadd.f32 %v461, %v383
  %v463 = vadd.f32 %v462, %v385
  %v464 = vadd.f32 %v463, %v387
  %v465 = vadd.f32 %v464, %v389
  %v466 = vadd.f32 %v465, %v391
  %v467 = vadd.f32 %v466, %v393
  %v468 = vadd.f32 %v467, %v395
  %v469 = vadd.f32 %v468, %v397
  %v470 = vadd.f32 %v469, %v399
  %v471 = vadd.f32 %v470, %v401
  %v472 = vadd.f32 %v471, %v403
  %v473 = vadd.f32 %v472, %v405
  %v474 = vadd.f32 %v473, %v407
  %v475 = vadd.f32 %v474, %v409
  %v476 = vrot.slane %v475, 4
  %v477 = vadd.f32 %v475, %v476
  %v478 = vrot.slane %v477, 2
  %v479 = vadd.f32 %v477, %v478
  %v480 = vrot.slane %v479, 1
  %v481 = vadd.f32 %v479, %v480
  %v482 = vadd.f32 %v284, %v286
  %v483 = vadd.f32 %v482, %v288
  %v484 = vadd.f32 %v483, %v290
  %v485 = vadd.f32 %v484, %v292
  %v486 = vadd.f32 %v485, %v294
  %v487 = vadd.f32 %v486, %v296
  %v488 = vadd.f32 %v487, %v298
  %v489 = vadd.f32 %v488, %v300
  %v490 = vadd.f32 %v489, %v302
  %v491 = vadd.f32 %v490, %v304
  %v492 = vadd.f32 %v491, %v306
  %v493 = vadd.f32 %v492, %v308
  %v494 = vadd.f32 %v493, %v310
  %v495 = vadd.f32 %v494, %v312
  %v496 = vadd.f32 %v495, %v314
  %v497 = vadd.f32 %v496, %v316
  %v498 = vadd.f32 %v497, %v318
  %v499 = vadd.f32 %v498, %v320
  %v500 = vadd.f32 %v499, %v322
  %v501 = vadd.f32 %v500, %v324
  %v502 = vadd.f32 %v501, %v326
  %v503 = vadd.f32 %v502, %v328
  %v504 = vadd.f32 %v503, %v330
  %v505 = vadd.f32 %v504, %v332
  %v506 = vadd.f32 %v505, %v334
  %v507 = vadd.f32 %v506, %v336
  %v508 = vadd.f32 %v507, %v338
  %v509 = vadd.f32 %v508, %v340
  %v510 = vadd.f32 %v509, %v342
  %v511 = vadd.f32 %v510, %v344
  %v512 = vadd.f32 %v511, %v346
  %v513 = vadd.f32 %v512, %v348
  %v514 = vadd.f32 %v513, %v350
  %v515 = vadd.f32 %v514, %v352
  %v516 = vadd.f32 %v515, %v354
  %v517 = vadd.f32 %v516, %v356
  %v518 = vadd.f32 %v517, %v358
  %v519 = vadd.f32 %v518, %v360
  %v520 = vadd.f32 %v519, %v362
  %v521 = vadd.f32 %v520, %v364
  %v522 = vadd.f32 %v521, %v366
  %v523 = vadd.f32 %v522, %v368
  %v524 = vadd.f32 %v523, %v370
  %v525 = vadd.f32 %v524, %v372
  %v526 = vadd.f32 %v525, %v374
  %v527 = vadd.f32 %v526, %v376
  %v528 = vadd.f32 %v527, %v378
  %v529 = vadd.f32 %v528, %v380
  %v530 = vadd.f32 %v529, %v382
  %v531 = vadd.f32 %v530, %v384
  %v532 = vadd.f32 %v531, %v386
  %v533 = vadd.f32 %v532, %v388
  %v534 = vadd.f32 %v533, %v390
  %v535 = vadd.f32 %v534, %v392
  %v536 = vadd.f32 %v535, %v394
  %v537 = vadd.f32 %v536, %v396
  %v538 = vadd.f32 %v537, %v398
  %v539 = vadd.f32 %v538, %v400
  %v540 = vadd.f32 %v539, %v402
  %v541 = vadd.f32 %v540, %v404
  %v542 = vadd.f32 %v541, %v406
  %v543 = vadd.f32 %v542, %v408
  %v544 = vadd.f32 %v543, %v410
  %v545 = vrot.slane %v544, 4
  %v546 = vadd.f32 %v544, %v545
  %v547 = vrot.slane %v546, 2
  %v548 = vadd.f32 %v546, %v547
  %v549 = vrot.slane %v548, 1
  %v550 = vadd.f32 %v548, %v549
  %551 = vrot.lane.b32.xlu0 %v481, 16
  %v552 = vpop.permute.xlu0 %551
  %553 = vrot.lane.b32.xlu0 %v550, 16
  %v554 = vpop.permute.xlu0 %553
  %v555 = vlaneseq
  %v556 = vand.u32 %v555, 127
  %vm557 = vcmp.lt.s32.totalorder %v556, 16
  %v558 = vsel %vm557, %v552, %v554
  %v559 = vsel %vm557, %v554, %v552
  %v560 = vadd.f32 %v481, %v559
  %v561 = vadd.f32 %v550, %v558
  %562 = vrot.lane.b32.xlu0 %v560, 32
  %v563 = vpop.permute.xlu0 %562
  %564 = vrot.lane.b32.xlu0 %v561, 32
  %v565 = vpop.permute.xlu0 %564
  %vm566 = vcmp.lt.s32.totalorder %v556, 32
  %v567 = vsel %vm566, %v563, %v565
  %v568 = vsel %vm566, %v565, %v563
  %v569 = vadd.f32 %v560, %v568
  %v570 = vadd.f32 %v561, %v567
  %571 = vrot.lane.b32.xlu0 %v569, 64
  %v572 = vpop.permute.xlu0 %571
  %573 = vrot.lane.b32.xlu0 %v570, 64
  %v574 = vpop.permute.xlu0 %573
  %vm575 = vcmp.lt.s32.totalorder %v556, 64
  %v576 = vsel %vm575, %v572, %v574
  %v577 = vsel %vm575, %v574, %v572
  %v578 = vadd.f32 %v569, %v577
  %v579 = vadd.f32 %v570, %v576
  %v580 = vadd.f32 %v578, %v579
  %v581 = vmul.f32 %v580, 0.00012207031
  %v582 = vmul.f32 %v283, %v283
  %v583 = vmul.f32 %v284, %v284
  %v584 = vmul.f32 %v285, %v285
  %v585 = vmul.f32 %v286, %v286
  %v586 = vmul.f32 %v287, %v287
  %v587 = vmul.f32 %v288, %v288
  %v588 = vmul.f32 %v289, %v289
  %v589 = vmul.f32 %v290, %v290
  %v590 = vmul.f32 %v291, %v291
  %v591 = vmul.f32 %v292, %v292
  %v592 = vmul.f32 %v293, %v293
  %v593 = vmul.f32 %v294, %v294
  %v594 = vmul.f32 %v295, %v295
  %v595 = vmul.f32 %v296, %v296
  %v596 = vmul.f32 %v297, %v297
  %v597 = vmul.f32 %v298, %v298
  %v598 = vmul.f32 %v299, %v299
  %v599 = vmul.f32 %v300, %v300
  %v600 = vmul.f32 %v301, %v301
  %v601 = vmul.f32 %v302, %v302
  %v602 = vmul.f32 %v303, %v303
  %v603 = vmul.f32 %v304, %v304
  %v604 = vmul.f32 %v305, %v305
  %v605 = vmul.f32 %v306, %v306
  %v606 = vmul.f32 %v307, %v307
  %v607 = vmul.f32 %v308, %v308
  %v608 = vmul.f32 %v309, %v309
  %v609 = vmul.f32 %v310, %v310
  %v610 = vmul.f32 %v311, %v311
  %v611 = vmul.f32 %v312, %v312
  %v612 = vmul.f32 %v313, %v313
  %v613 = vmul.f32 %v314, %v314
  %v614 = vmul.f32 %v315, %v315
  %v615 = vmul.f32 %v316, %v316
  %v616 = vmul.f32 %v317, %v317
  %v617 = vmul.f32 %v318, %v318
  %v618 = vmul.f32 %v319, %v319
  %v619 = vmul.f32 %v320, %v320
  %v620 = vmul.f32 %v321, %v321
  %v621 = vmul.f32 %v322, %v322
  %v622 = vmul.f32 %v323, %v323
  %v623 = vmul.f32 %v324, %v324
  %v624 = vmul.f32 %v325, %v325
  %v625 = vmul.f32 %v326, %v326
  %v626 = vmul.f32 %v327, %v327
  %v627 = vmul.f32 %v328, %v328
  %v628 = vmul.f32 %v329, %v329
  %v629 = vmul.f32 %v330, %v330
  %v630 = vmul.f32 %v331, %v331
  %v631 = vmul.f32 %v332, %v332
  %v632 = vmul.f32 %v333, %v333
  %v633 = vmul.f32 %v334, %v334
  %v634 = vmul.f32 %v335, %v335
  %v635 = vmul.f32 %v336, %v336
  %v636 = vmul.f32 %v337, %v337
  %v637 = vmul.f32 %v338, %v338
  %v638 = vmul.f32 %v339, %v339
  %v639 = vmul.f32 %v340, %v340
  %v640 = vmul.f32 %v341, %v341
  %v641 = vmul.f32 %v342, %v342
  %v642 = vmul.f32 %v343, %v343
  %v643 = vmul.f32 %v344, %v344
  %v644 = vmul.f32 %v345, %v345
  %v645 = vmul.f32 %v346, %v346
  %v646 = vmul.f32 %v347, %v347
  %v647 = vmul.f32 %v348, %v348
  %v648 = vmul.f32 %v349, %v349
  %v649 = vmul.f32 %v350, %v350
  %v650 = vmul.f32 %v351, %v351
  %v651 = vmul.f32 %v352, %v352
  %v652 = vmul.f32 %v353, %v353
  %v653 = vmul.f32 %v354, %v354
  %v654 = vmul.f32 %v355, %v355
  %v655 = vmul.f32 %v356, %v356
  %v656 = vmul.f32 %v357, %v357
  %v657 = vmul.f32 %v358, %v358
  %v658 = vmul.f32 %v359, %v359
  %v659 = vmul.f32 %v360, %v360
  %v660 = vmul.f32 %v361, %v361
  %v661 = vmul.f32 %v362, %v362
  %v662 = vmul.f32 %v363, %v363
  %v663 = vmul.f32 %v364, %v364
  %v664 = vmul.f32 %v365, %v365
  %v665 = vmul.f32 %v366, %v366
  %v666 = vmul.f32 %v367, %v367
  %v667 = vmul.f32 %v368, %v368
  %v668 = vmul.f32 %v369, %v369
  %v669 = vmul.f32 %v370, %v370
  %v670 = vmul.f32 %v371, %v371
  %v671 = vmul.f32 %v372, %v372
  %v672 = vmul.f32 %v373, %v373
  %v673 = vmul.f32 %v374, %v374
  %v674 = vmul.f32 %v375, %v375
  %v675 = vmul.f32 %v376, %v376
  %v676 = vmul.f32 %v377, %v377
  %v677 = vmul.f32 %v378, %v378
  %v678 = vmul.f32 %v379, %v379
  %v679 = vmul.f32 %v380, %v380
  %v680 = vmul.f32 %v381, %v381
  %v681 = vmul.f32 %v382, %v382
  %v682 = vmul.f32 %v383, %v383
  %v683 = vmul.f32 %v384, %v384
  %v684 = vmul.f32 %v385, %v385
  %v685 = vmul.f32 %v386, %v386
  %v686 = vmul.f32 %v387, %v387
  %v687 = vmul.f32 %v388, %v388
  %v688 = vmul.f32 %v389, %v389
  %v689 = vmul.f32 %v390, %v390
  %v690 = vmul.f32 %v391, %v391
  %v691 = vmul.f32 %v392, %v392
  %v692 = vmul.f32 %v393, %v393
  %v693 = vmul.f32 %v394, %v394
  %v694 = vmul.f32 %v395, %v395
  %v695 = vmul.f32 %v396, %v396
  %v696 = vmul.f32 %v397, %v397
  %v697 = vmul.f32 %v398, %v398
  %v698 = vmul.f32 %v399, %v399
  %v699 = vmul.f32 %v400, %v400
  %v700 = vmul.f32 %v401, %v401
  %v701 = vmul.f32 %v402, %v402
  %v702 = vmul.f32 %v403, %v403
  %v703 = vmul.f32 %v404, %v404
  %v704 = vmul.f32 %v405, %v405
  %v705 = vmul.f32 %v406, %v406
  %v706 = vmul.f32 %v407, %v407
  %v707 = vmul.f32 %v408, %v408
  %v708 = vmul.f32 %v409, %v409
  %v709 = vmul.f32 %v410, %v410
  %v710 = vadd.f32 %v582, %v584
  %v711 = vadd.f32 %v710, %v586
  %v712 = vadd.f32 %v711, %v588
  %v713 = vadd.f32 %v712, %v590
  %v714 = vadd.f32 %v713, %v592
  %v715 = vadd.f32 %v714, %v594
  %v716 = vadd.f32 %v715, %v596
  %v717 = vadd.f32 %v716, %v598
  %v718 = vadd.f32 %v717, %v600
  %v719 = vadd.f32 %v718, %v602
  %v720 = vadd.f32 %v719, %v604
  %v721 = vadd.f32 %v720, %v606
  %v722 = vadd.f32 %v721, %v608
  %v723 = vadd.f32 %v722, %v610
  %v724 = vadd.f32 %v723, %v612
  %v725 = vadd.f32 %v724, %v614
  %v726 = vadd.f32 %v725, %v616
  %v727 = vadd.f32 %v726, %v618
  %v728 = vadd.f32 %v727, %v620
  %v729 = vadd.f32 %v728, %v622
  %v730 = vadd.f32 %v729, %v624
  %v731 = vadd.f32 %v730, %v626
  %v732 = vadd.f32 %v731, %v628
  %v733 = vadd.f32 %v732, %v630
  %v734 = vadd.f32 %v733, %v632
  %v735 = vadd.f32 %v734, %v634
  %v736 = vadd.f32 %v735, %v636
  %v737 = vadd.f32 %v736, %v638
  %v738 = vadd.f32 %v737, %v640
  %v739 = vadd.f32 %v738, %v642
  %v740 = vadd.f32 %v739, %v644
  %v741 = vadd.f32 %v740, %v646
  %v742 = vadd.f32 %v741, %v648
  %v743 = vadd.f32 %v742, %v650
  %v744 = vadd.f32 %v743, %v652
  %v745 = vadd.f32 %v744, %v654
  %v746 = vadd.f32 %v745, %v656
  %v747 = vadd.f32 %v746, %v658
  %v748 = vadd.f32 %v747, %v660
  %v749 = vadd.f32 %v748, %v662
  %v750 = vadd.f32 %v749, %v664
  %v751 = vadd.f32 %v750, %v666
  %v752 = vadd.f32 %v751, %v668
  %v753 = vadd.f32 %v752, %v670
  %v754 = vadd.f32 %v753, %v672
  %v755 = vadd.f32 %v754, %v674
  %v756 = vadd.f32 %v755, %v676
  %v757 = vadd.f32 %v756, %v678
  %v758 = vadd.f32 %v757, %v680
  %v759 = vadd.f32 %v758, %v682
  %v760 = vadd.f32 %v759, %v684
  %v761 = vadd.f32 %v760, %v686
  %v762 = vadd.f32 %v761, %v688
  %v763 = vadd.f32 %v762, %v690
  %v764 = vadd.f32 %v763, %v692
  %v765 = vadd.f32 %v764, %v694
  %v766 = vadd.f32 %v765, %v696
  %v767 = vadd.f32 %v766, %v698
  %v768 = vadd.f32 %v767, %v700
  %v769 = vadd.f32 %v768, %v702
  %v770 = vadd.f32 %v769, %v704
  %v771 = vadd.f32 %v770, %v706
  %v772 = vadd.f32 %v771, %v708
  %v773 = vrot.slane %v772, 4
  %v774 = vadd.f32 %v772, %v773
  %v775 = vrot.slane %v774, 2
  %v776 = vadd.f32 %v774, %v775
  %v777 = vrot.slane %v776, 1
  %v778 = vadd.f32 %v776, %v777
  %v779 = vadd.f32 %v583, %v585
  %v780 = vadd.f32 %v779, %v587
  %v781 = vadd.f32 %v780, %v589
  %v782 = vadd.f32 %v781, %v591
  %v783 = vadd.f32 %v782, %v593
  %v784 = vadd.f32 %v783, %v595
  %v785 = vadd.f32 %v784, %v597
  %v786 = vadd.f32 %v785, %v599
  %v787 = vadd.f32 %v786, %v601
  %v788 = vadd.f32 %v787, %v603
  %v789 = vadd.f32 %v788, %v605
  %v790 = vadd.f32 %v789, %v607
  %v791 = vadd.f32 %v790, %v609
  %v792 = vadd.f32 %v791, %v611
  %v793 = vadd.f32 %v792, %v613
  %v794 = vadd.f32 %v793, %v615
  %v795 = vadd.f32 %v794, %v617
  %v796 = vadd.f32 %v795, %v619
  %v797 = vadd.f32 %v796, %v621
  %v798 = vadd.f32 %v797, %v623
  %v799 = vadd.f32 %v798, %v625
  %v800 = vadd.f32 %v799, %v627
  %v801 = vadd.f32 %v800, %v629
  %v802 = vadd.f32 %v801, %v631
  %v803 = vadd.f32 %v802, %v633
  %v804 = vadd.f32 %v803, %v635
  %v805 = vadd.f32 %v804, %v637
  %v806 = vadd.f32 %v805, %v639
  %v807 = vadd.f32 %v806, %v641
  %v808 = vadd.f32 %v807, %v643
  %v809 = vadd.f32 %v808, %v645
  %v810 = vadd.f32 %v809, %v647
  %v811 = vadd.f32 %v810, %v649
  %v812 = vadd.f32 %v811, %v651
  %v813 = vadd.f32 %v812, %v653
  %v814 = vadd.f32 %v813, %v655
  %v815 = vadd.f32 %v814, %v657
  %v816 = vadd.f32 %v815, %v659
  %v817 = vadd.f32 %v816, %v661
  %v818 = vadd.f32 %v817, %v663
  %v819 = vadd.f32 %v818, %v665
  %v820 = vadd.f32 %v819, %v667
  %v821 = vadd.f32 %v820, %v669
  %v822 = vadd.f32 %v821, %v671
  %v823 = vadd.f32 %v822, %v673
  %v824 = vadd.f32 %v823, %v675
  %v825 = vadd.f32 %v824, %v677
  %v826 = vadd.f32 %v825, %v679
  %v827 = vadd.f32 %v826, %v681
  %v828 = vadd.f32 %v827, %v683
  %v829 = vadd.f32 %v828, %v685
  %v830 = vadd.f32 %v829, %v687
  %v831 = vadd.f32 %v830, %v689
  %v832 = vadd.f32 %v831, %v691
  %v833 = vadd.f32 %v832, %v693
  %v834 = vadd.f32 %v833, %v695
  %v835 = vadd.f32 %v834, %v697
  %v836 = vadd.f32 %v835, %v699
  %v837 = vadd.f32 %v836, %v701
  %v838 = vadd.f32 %v837, %v703
  %v839 = vadd.f32 %v838, %v705
  %v840 = vadd.f32 %v839, %v707
  %v841 = vadd.f32 %v840, %v709
  %v842 = vrot.slane %v841, 4
  %v843 = vadd.f32 %v841, %v842
  %v844 = vrot.slane %v843, 2
  %v845 = vadd.f32 %v843, %v844
  %v846 = vrot.slane %v845, 1
  %v847 = vadd.f32 %v845, %v846
  %848 = vrot.lane.b32.xlu0 %v778, 16
  %v849 = vpop.permute.xlu0 %848
  %850 = vrot.lane.b32.xlu0 %v847, 16
  %v851 = vpop.permute.xlu0 %850
  %v852 = vsel %vm557, %v849, %v851
  %v853 = vsel %vm557, %v851, %v849
  %v854 = vadd.f32 %v778, %v853
  %v855 = vadd.f32 %v847, %v852
  %856 = vrot.lane.b32.xlu0 %v854, 32
  %v857 = vpop.permute.xlu0 %856
  %858 = vrot.lane.b32.xlu0 %v855, 32
  %v859 = vpop.permute.xlu0 %858
  %v860 = vsel %vm566, %v857, %v859
  %v861 = vsel %vm566, %v859, %v857
  %v862 = vadd.f32 %v854, %v861
  %v863 = vadd.f32 %v855, %v860
  %864 = vrot.lane.b32.xlu0 %v862, 64
  %v865 = vpop.permute.xlu0 %864
  %866 = vrot.lane.b32.xlu0 %v863, 64
  %v867 = vpop.permute.xlu0 %866
  %v868 = vsel %vm575, %v865, %v867
  %v869 = vsel %vm575, %v867, %v865
  %v870 = vadd.f32 %v862, %v869
  %v871 = vadd.f32 %v863, %v868
  %v872 = vadd.f32 %v870, %v871
  %v873 = vmul.f32 %v872, 0.00012207031
  %v874 = vmul.f32 %v581, %v581
  %v875 = vsub.f32 %v873, %v874
  %v876 = vadd.f32 %v875, 1e-05
  %v877 = vrsqrt.pop %v876
  %v879 = vcombine.low %v877, %v877
  %v881 = vunpack.c.l.s4 1966171168
  %v882 = vunpack.c.0.s8 %v881
  %v883 = vlaneseq
  %v884 = vshrl.u32 %v883, 7
  %v885 = vsub.s32 %v882, %v884
  %v886 = vrot.slane %v879, %v885
  %v888 = vunpack.c.l.s4 1966171168
  %v889 = vunpack.c.0.s8 %v888
  %v890 = vlaneseq
  %v891 = vshrl.u32 %v890, 7
  %v892 = vsub.s32 %v889, %v891
  %v893 = vrot.slane %v886, %v892
  %v895 = vmul.f32 %v411, %v893
  %v897 = vlaneseq
  %v898 = vshrl.u32 %v897, 7
  %v899 = vsub.s32 0, %v898
  %v900 = vrot.slane %v895, %v899
  %v901 = vlaneseq
  %v902 = vshrl.u32 %v901, 7
  %v903 = vsub.s32 1, %v902
  %v904 = vrot.slane %v895, %v903
  %v907 = vmul.f32 %v581, %v900
  %v908 = vmul.f32 %v581, %v904
  %v911 = vcombine.low %v907, %v908
  %v913 = vunpack.c.l.s4 1966171168
  %v914 = vunpack.c.0.s8 %v913
  %v915 = vlaneseq
  %v916 = vshrl.u32 %v915, 7
  %v917 = vsub.s32 %v914, %v916
  %v918 = vrot.slane %v911, %v917
  %v920 = vunpack.c.l.s4 1966171168
  %v921 = vunpack.c.0.s8 %v920
  %v922 = vlaneseq
  %v923 = vshrl.u32 %v922, 7
  %v924 = vsub.s32 %v921, %v923
  %v925 = vrot.slane %v918, %v924
  %v927 = vsub.f32 %v412, %v925
  %v928 = vmul.f32 %v283, %v900
  %v929 = vmul.f32 %v284, %v904
  %v930 = vmul.f32 %v285, %v900
  %v931 = vmul.f32 %v286, %v904
  %v932 = vmul.f32 %v287, %v900
  %v933 = vmul.f32 %v288, %v904
  %v934 = vmul.f32 %v289, %v900
  %v935 = vmul.f32 %v290, %v904
  %v936 = vmul.f32 %v291, %v900
  %v937 = vmul.f32 %v292, %v904
  %v938 = vmul.f32 %v293, %v900
  %v939 = vmul.f32 %v294, %v904
  %v940 = vmul.f32 %v295, %v900
  %v941 = vmul.f32 %v296, %v904
  %v942 = vmul.f32 %v297, %v900
  %v943 = vmul.f32 %v298, %v904
  %v944 = vmul.f32 %v299, %v900
  %v945 = vmul.f32 %v300, %v904
  %v946 = vmul.f32 %v301, %v900
  %v947 = vmul.f32 %v302, %v904
  %v948 = vmul.f32 %v303, %v900
  %v949 = vmul.f32 %v304, %v904
  %v950 = vmul.f32 %v305, %v900
  %v951 = vmul.f32 %v306, %v904
  %v952 = vmul.f32 %v307, %v900
  %v953 = vmul.f32 %v308, %v904
  %v954 = vmul.f32 %v309, %v900
  %v955 = vmul.f32 %v310, %v904
  %v956 = vmul.f32 %v311, %v900
  %v957 = vmul.f32 %v312, %v904
  %v958 = vmul.f32 %v313, %v900
  %v959 = vmul.f32 %v314, %v904
  %v960 = vmul.f32 %v315, %v900
  %v961 = vmul.f32 %v316, %v904
  %v962 = vmul.f32 %v317, %v900
  %v963 = vmul.f32 %v318, %v904
  %v964 = vmul.f32 %v319, %v900
  %v965 = vmul.f32 %v320, %v904
  %v966 = vmul.f32 %v321, %v900
  %v967 = vmul.f32 %v322, %v904
  %v968 = vmul.f32 %v323, %v900
  %v969 = vmul.f32 %v324, %v904
  %v970 = vmul.f32 %v325, %v900
  %v971 = vmul.f32 %v326, %v904
  %v972 = vmul.f32 %v327, %v900
  %v973 = vmul.f32 %v328, %v904
  %v974 = vmul.f32 %v329, %v900
  %v975 = vmul.f32 %v330, %v904
  %v976 = vmul.f32 %v331, %v900
  %v977 = vmul.f32 %v332, %v904
  %v978 = vmul.f32 %v333, %v900
  %v979 = vmul.f32 %v334, %v904
  %v980 = vmul.f32 %v335, %v900
  %v981 = vmul.f32 %v336, %v904
  %v982 = vmul.f32 %v337, %v900
  %v983 = vmul.f32 %v338, %v904
  %v984 = vmul.f32 %v339, %v900
  %v985 = vmul.f32 %v340, %v904
  %v986 = vmul.f32 %v341, %v900
  %v987 = vmul.f32 %v342, %v904
  %v988 = vmul.f32 %v343, %v900
  %v989 = vmul.f32 %v344, %v904
  %v990 = vmul.f32 %v345, %v900
  %v991 = vmul.f32 %v346, %v904
  %v992 = vmul.f32 %v347, %v900
  %v993 = vmul.f32 %v348, %v904
  %v994 = vmul.f32 %v349, %v900
  %v995 = vmul.f32 %v350, %v904
  %v996 = vmul.f32 %v351, %v900
  %v997 = vmul.f32 %v352, %v904
  %v998 = vmul.f32 %v353, %v900
  %v999 = vmul.f32 %v354, %v904
  %v1000 = vmul.f32 %v355, %v900
  %v1001 = vmul.f32 %v356, %v904
  %v1002 = vmul.f32 %v357, %v900
  %v1003 = vmul.f32 %v358, %v904
  %v1004 = vmul.f32 %v359, %v900
  %v1005 = vmul.f32 %v360, %v904
  %v1006 = vmul.f32 %v361, %v900
  %v1007 = vmul.f32 %v362, %v904
  %v1008 = vmul.f32 %v363, %v900
  %v1009 = vmul.f32 %v364, %v904
  %v1010 = vmul.f32 %v365, %v900
  %v1011 = vmul.f32 %v366, %v904
  %v1012 = vmul.f32 %v367, %v900
  %v1013 = vmul.f32 %v368, %v904
  %v1014 = vmul.f32 %v369, %v900
  %v1015 = vmul.f32 %v370, %v904
  %v1016 = vmul.f32 %v371, %v900
  %v1017 = vmul.f32 %v372, %v904
  %v1018 = vmul.f32 %v373, %v900
  %v1019 = vmul.f32 %v374, %v904
  %v1020 = vmul.f32 %v375, %v900
  %v1021 = vmul.f32 %v376, %v904
  %v1022 = vmul.f32 %v377, %v900
  %v1023 = vmul.f32 %v378, %v904
  %v1024 = vmul.f32 %v379, %v900
  %v1025 = vmul.f32 %v380, %v904
  %v1026 = vmul.f32 %v381, %v900
  %v1027 = vmul.f32 %v382, %v904
  %v1028 = vmul.f32 %v383, %v900
  %v1029 = vmul.f32 %v384, %v904
  %v1030 = vmul.f32 %v385, %v900
  %v1031 = vmul.f32 %v386, %v904
  %v1032 = vmul.f32 %v387, %v900
  %v1033 = vmul.f32 %v388, %v904
  %v1034 = vmul.f32 %v389, %v900
  %v1035 = vmul.f32 %v390, %v904
  %v1036 = vmul.f32 %v391, %v900
  %v1037 = vmul.f32 %v392, %v904
  %v1038 = vmul.f32 %v393, %v900
  %v1039 = vmul.f32 %v394, %v904
  %v1040 = vmul.f32 %v395, %v900
  %v1041 = vmul.f32 %v396, %v904
  %v1042 = vmul.f32 %v397, %v900
  %v1043 = vmul.f32 %v398, %v904
  %v1044 = vmul.f32 %v399, %v900
  %v1045 = vmul.f32 %v400, %v904
  %v1046 = vmul.f32 %v401, %v900
  %v1047 = vmul.f32 %v402, %v904
  %v1048 = vmul.f32 %v403, %v900
  %v1049 = vmul.f32 %v404, %v904
  %v1050 = vmul.f32 %v405, %v900
  %v1051 = vmul.f32 %v406, %v904
  %v1052 = vmul.f32 %v407, %v900
  %v1053 = vmul.f32 %v408, %v904
  %v1054 = vmul.f32 %v409, %v900
  %v1055 = vmul.f32 %v410, %v904
  %v1057 = vlaneseq
  %v1058 = vshrl.u32 %v1057, 7
  %v1059 = vsub.s32 0, %v1058
  %v1060 = vrot.slane %v927, %v1059
  %v1061 = vlaneseq
  %v1062 = vshrl.u32 %v1061, 7
  %v1063 = vsub.s32 1, %v1062
  %v1064 = vrot.slane %v927, %v1063
  %v1067 = vadd.f32 %v928, %v1060
  %v1068 = vadd.f32 %v929, %v1064
  %v1069 = vadd.f32 %v930, %v1060
  %v1070 = vadd.f32 %v931, %v1064
  %v1071 = vadd.f32 %v932, %v1060
  %v1072 = vadd.f32 %v933, %v1064
  %v1073 = vadd.f32 %v934, %v1060
  %v1074 = vadd.f32 %v935, %v1064
  %v1075 = vadd.f32 %v936, %v1060
  %v1076 = vadd.f32 %v937, %v1064
  %v1077 = vadd.f32 %v938, %v1060
  %v1078 = vadd.f32 %v939, %v1064
  %v1079 = vadd.f32 %v940, %v1060
  %v1080 = vadd.f32 %v941, %v1064
  %v1081 = vadd.f32 %v942, %v1060
  %v1082 = vadd.f32 %v943, %v1064
  %v1083 = vadd.f32 %v944, %v1060
  %v1084 = vadd.f32 %v945, %v1064
  %v1085 = vadd.f32 %v946, %v1060
  %v1086 = vadd.f32 %v947, %v1064
  %v1087 = vadd.f32 %v948, %v1060
  %v1088 = vadd.f32 %v949, %v1064
  %v1089 = vadd.f32 %v950, %v1060
  %v1090 = vadd.f32 %v951, %v1064
  %v1091 = vadd.f32 %v952, %v1060
  %v1092 = vadd.f32 %v953, %v1064
  %v1093 = vadd.f32 %v954, %v1060
  %v1094 = vadd.f32 %v955, %v1064
  %v1095 = vadd.f32 %v956, %v1060
  %v1096 = vadd.f32 %v957, %v1064
  %v1097 = vadd.f32 %v958, %v1060
  %v1098 = vadd.f32 %v959, %v1064
  %v1099 = vadd.f32 %v960, %v1060
  %v1100 = vadd.f32 %v961, %v1064
  %v1101 = vadd.f32 %v962, %v1060
  %v1102 = vadd.f32 %v963, %v1064
  %v1103 = vadd.f32 %v964, %v1060
  %v1104 = vadd.f32 %v965, %v1064
  %v1105 = vadd.f32 %v966, %v1060
  %v1106 = vadd.f32 %v967, %v1064
  %v1107 = vadd.f32 %v968, %v1060
  %v1108 = vadd.f32 %v969, %v1064
  %v1109 = vadd.f32 %v970, %v1060
  %v1110 = vadd.f32 %v971, %v1064
  %v1111 = vadd.f32 %v972, %v1060
  %v1112 = vadd.f32 %v973, %v1064
  %v1113 = vadd.f32 %v974, %v1060
  %v1114 = vadd.f32 %v975, %v1064
  %v1115 = vadd.f32 %v976, %v1060
  %v1116 = vadd.f32 %v977, %v1064
  %v1117 = vadd.f32 %v978, %v1060
  %v1118 = vadd.f32 %v979, %v1064
  %v1119 = vadd.f32 %v980, %v1060
  %v1120 = vadd.f32 %v981, %v1064
  %v1121 = vadd.f32 %v982, %v1060
  %v1122 = vadd.f32 %v983, %v1064
  %v1123 = vadd.f32 %v984, %v1060
  %v1124 = vadd.f32 %v985, %v1064
  %v1125 = vadd.f32 %v986, %v1060
  %v1126 = vadd.f32 %v987, %v1064
  %v1127 = vadd.f32 %v988, %v1060
  %v1128 = vadd.f32 %v989, %v1064
  %v1129 = vadd.f32 %v990, %v1060
  %v1130 = vadd.f32 %v991, %v1064
  %v1131 = vadd.f32 %v992, %v1060
  %v1132 = vadd.f32 %v993, %v1064
  %v1133 = vadd.f32 %v994, %v1060
  %v1134 = vadd.f32 %v995, %v1064
  %v1135 = vadd.f32 %v996, %v1060
  %v1136 = vadd.f32 %v997, %v1064
  %v1137 = vadd.f32 %v998, %v1060
  %v1138 = vadd.f32 %v999, %v1064
  %v1139 = vadd.f32 %v1000, %v1060
  %v1140 = vadd.f32 %v1001, %v1064
  %v1141 = vadd.f32 %v1002, %v1060
  %v1142 = vadd.f32 %v1003, %v1064
  %v1143 = vadd.f32 %v1004, %v1060
  %v1144 = vadd.f32 %v1005, %v1064
  %v1145 = vadd.f32 %v1006, %v1060
  %v1146 = vadd.f32 %v1007, %v1064
  %v1147 = vadd.f32 %v1008, %v1060
  %v1148 = vadd.f32 %v1009, %v1064
  %v1149 = vadd.f32 %v1010, %v1060
  %v1150 = vadd.f32 %v1011, %v1064
  %v1151 = vadd.f32 %v1012, %v1060
  %v1152 = vadd.f32 %v1013, %v1064
  %v1153 = vadd.f32 %v1014, %v1060
  %v1154 = vadd.f32 %v1015, %v1064
  %v1155 = vadd.f32 %v1016, %v1060
  %v1156 = vadd.f32 %v1017, %v1064
  %v1157 = vadd.f32 %v1018, %v1060
  %v1158 = vadd.f32 %v1019, %v1064
  %v1159 = vadd.f32 %v1020, %v1060
  %v1160 = vadd.f32 %v1021, %v1064
  %v1161 = vadd.f32 %v1022, %v1060
  %v1162 = vadd.f32 %v1023, %v1064
  %v1163 = vadd.f32 %v1024, %v1060
  %v1164 = vadd.f32 %v1025, %v1064
  %v1165 = vadd.f32 %v1026, %v1060
  %v1166 = vadd.f32 %v1027, %v1064
  %v1167 = vadd.f32 %v1028, %v1060
  %v1168 = vadd.f32 %v1029, %v1064
  %v1169 = vadd.f32 %v1030, %v1060
  %v1170 = vadd.f32 %v1031, %v1064
  %v1171 = vadd.f32 %v1032, %v1060
  %v1172 = vadd.f32 %v1033, %v1064
  %v1173 = vadd.f32 %v1034, %v1060
  %v1174 = vadd.f32 %v1035, %v1064
  %v1175 = vadd.f32 %v1036, %v1060
  %v1176 = vadd.f32 %v1037, %v1064
  %v1177 = vadd.f32 %v1038, %v1060
  %v1178 = vadd.f32 %v1039, %v1064
  %v1179 = vadd.f32 %v1040, %v1060
  %v1180 = vadd.f32 %v1041, %v1064
  %v1181 = vadd.f32 %v1042, %v1060
  %v1182 = vadd.f32 %v1043, %v1064
  %v1183 = vadd.f32 %v1044, %v1060
  %v1184 = vadd.f32 %v1045, %v1064
  %v1185 = vadd.f32 %v1046, %v1060
  %v1186 = vadd.f32 %v1047, %v1064
  %v1187 = vadd.f32 %v1048, %v1060
  %v1188 = vadd.f32 %v1049, %v1064
  %v1189 = vadd.f32 %v1050, %v1060
  %v1190 = vadd.f32 %v1051, %v1064
  %v1191 = vadd.f32 %v1052, %v1060
  %v1192 = vadd.f32 %v1053, %v1064
  %v1193 = vadd.f32 %v1054, %v1060
  %v1194 = vadd.f32 %v1055, %v1064
  %v1195 = vmax.f32 %v1067, 0.0
  %v1196 = vmax.f32 %v1068, 0.0
  %v1197 = vmax.f32 %v1069, 0.0
  %v1198 = vmax.f32 %v1070, 0.0
  %v1199 = vmax.f32 %v1071, 0.0
  %v1200 = vmax.f32 %v1072, 0.0
  %v1201 = vmax.f32 %v1073, 0.0
  %v1202 = vmax.f32 %v1074, 0.0
  %v1203 = vmax.f32 %v1075, 0.0
  %v1204 = vmax.f32 %v1076, 0.0
  %v1205 = vmax.f32 %v1077, 0.0
  %v1206 = vmax.f32 %v1078, 0.0
  %v1207 = vmax.f32 %v1079, 0.0
  %v1208 = vmax.f32 %v1080, 0.0
  %v1209 = vmax.f32 %v1081, 0.0
  %v1210 = vmax.f32 %v1082, 0.0
  %v1211 = vmax.f32 %v1083, 0.0
  %v1212 = vmax.f32 %v1084, 0.0
  %v1213 = vmax.f32 %v1085, 0.0
  %v1214 = vmax.f32 %v1086, 0.0
  %v1215 = vmax.f32 %v1087, 0.0
  %v1216 = vmax.f32 %v1088, 0.0
  %v1217 = vmax.f32 %v1089, 0.0
  %v1218 = vmax.f32 %v1090, 0.0
  %v1219 = vmax.f32 %v1091, 0.0
  %v1220 = vmax.f32 %v1092, 0.0
  %v1221 = vmax.f32 %v1093, 0.0
  %v1222 = vmax.f32 %v1094, 0.0
  %v1223 = vmax.f32 %v1095, 0.0
  %v1224 = vmax.f32 %v1096, 0.0
  %v1225 = vmax.f32 %v1097, 0.0
  %v1226 = vmax.f32 %v1098, 0.0
  %v1227 = vmax.f32 %v1099, 0.0
  %v1228 = vmax.f32 %v1100, 0.0
  %v1229 = vmax.f32 %v1101, 0.0
  %v1230 = vmax.f32 %v1102, 0.0
  %v1231 = vmax.f32 %v1103, 0.0
  %v1232 = vmax.f32 %v1104, 0.0
  %v1233 = vmax.f32 %v1105, 0.0
  %v1234 = vmax.f32 %v1106, 0.0
  %v1235 = vmax.f32 %v1107, 0.0
  %v1236 = vmax.f32 %v1108, 0.0
  %v1237 = vmax.f32 %v1109, 0.0
  %v1238 = vmax.f32 %v1110, 0.0
  %v1239 = vmax.f32 %v1111, 0.0
  %v1240 = vmax.f32 %v1112, 0.0
  %v1241 = vmax.f32 %v1113, 0.0
  %v1242 = vmax.f32 %v1114, 0.0
  %v1243 = vmax.f32 %v1115, 0.0
  %v1244 = vmax.f32 %v1116, 0.0
  %v1245 = vmax.f32 %v1117, 0.0
  %v1246 = vmax.f32 %v1118, 0.0
  %v1247 = vmax.f32 %v1119, 0.0
  %v1248 = vmax.f32 %v1120, 0.0
  %v1249 = vmax.f32 %v1121, 0.0
  %v1250 = vmax.f32 %v1122, 0.0
  %v1251 = vmax.f32 %v1123, 0.0
  %v1252 = vmax.f32 %v1124, 0.0
  %v1253 = vmax.f32 %v1125, 0.0
  %v1254 = vmax.f32 %v1126, 0.0
  %v1255 = vmax.f32 %v1127, 0.0
  %v1256 = vmax.f32 %v1128, 0.0
  %v1257 = vmax.f32 %v1129, 0.0
  %v1258 = vmax.f32 %v1130, 0.0
  %v1259 = vmax.f32 %v1131, 0.0
  %v1260 = vmax.f32 %v1132, 0.0
  %v1261 = vmax.f32 %v1133, 0.0
  %v1262 = vmax.f32 %v1134, 0.0
  %v1263 = vmax.f32 %v1135, 0.0
  %v1264 = vmax.f32 %v1136, 0.0
  %v1265 = vmax.f32 %v1137, 0.0
  %v1266 = vmax.f32 %v1138, 0.0
  %v1267 = vmax.f32 %v1139, 0.0
  %v1268 = vmax.f32 %v1140, 0.0
  %v1269 = vmax.f32 %v1141, 0.0
  %v1270 = vmax.f32 %v1142, 0.0
  %v1271 = vmax.f32 %v1143, 0.0
  %v1272 = vmax.f32 %v1144, 0.0
  %v1273 = vmax.f32 %v1145, 0.0
  %v1274 = vmax.f32 %v1146, 0.0
  %v1275 = vmax.f32 %v1147, 0.0
  %v1276 = vmax.f32 %v1148, 0.0
  %v1277 = vmax.f32 %v1149, 0.0
  %v1278 = vmax.f32 %v1150, 0.0
  %v1279 = vmax.f32 %v1151, 0.0
  %v1280 = vmax.f32 %v1152, 0.0
  %v1281 = vmax.f32 %v1153, 0.0
  %v1282 = vmax.f32 %v1154, 0.0
  %v1283 = vmax.f32 %v1155, 0.0
  %v1284 = vmax.f32 %v1156, 0.0
  %v1285 = vmax.f32 %v1157, 0.0
  %v1286 = vmax.f32 %v1158, 0.0
  %v1287 = vmax.f32 %v1159, 0.0
  %v1288 = vmax.f32 %v1160, 0.0
  %v1289 = vmax.f32 %v1161, 0.0
  %v1290 = vmax.f32 %v1162, 0.0
  %v1291 = vmax.f32 %v1163, 0.0
  %v1292 = vmax.f32 %v1164, 0.0
  %v1293 = vmax.f32 %v1165, 0.0
  %v1294 = vmax.f32 %v1166, 0.0
  %v1295 = vmax.f32 %v1167, 0.0
  %v1296 = vmax.f32 %v1168, 0.0
  %v1297 = vmax.f32 %v1169, 0.0
  %v1298 = vmax.f32 %v1170, 0.0
  %v1299 = vmax.f32 %v1171, 0.0
  %v1300 = vmax.f32 %v1172, 0.0
  %v1301 = vmax.f32 %v1173, 0.0
  %v1302 = vmax.f32 %v1174, 0.0
  %v1303 = vmax.f32 %v1175, 0.0
  %v1304 = vmax.f32 %v1176, 0.0
  %v1305 = vmax.f32 %v1177, 0.0
  %v1306 = vmax.f32 %v1178, 0.0
  %v1307 = vmax.f32 %v1179, 0.0
  %v1308 = vmax.f32 %v1180, 0.0
  %v1309 = vmax.f32 %v1181, 0.0
  %v1310 = vmax.f32 %v1182, 0.0
  %v1311 = vmax.f32 %v1183, 0.0
  %v1312 = vmax.f32 %v1184, 0.0
  %v1313 = vmax.f32 %v1185, 0.0
  %v1314 = vmax.f32 %v1186, 0.0
  %v1315 = vmax.f32 %v1187, 0.0
  %v1316 = vmax.f32 %v1188, 0.0
  %v1317 = vmax.f32 %v1189, 0.0
  %v1318 = vmax.f32 %v1190, 0.0
  %v1319 = vmax.f32 %v1191, 0.0
  %v1320 = vmax.f32 %v1192, 0.0
  %v1321 = vmax.f32 %v1193, 0.0
  %v1322 = vmax.f32 %v1194, 0.0
  %v1323 = vrot.slane %v1195, 7
  %v1324 = vrot.slane %v1196, 7
  %v1325 = vrot.slane %v1197, 7
  %v1326 = vrot.slane %v1198, 7
  %v1327 = vrot.slane %v1199, 7
  %v1328 = vrot.slane %v1200, 7
  %v1329 = vrot.slane %v1201, 7
  %v1330 = vrot.slane %v1202, 7
  %v1331 = vrot.slane %v1203, 7
  %v1332 = vrot.slane %v1204, 7
  %v1333 = vrot.slane %v1205, 7
  %v1334 = vrot.slane %v1206, 7
  %v1335 = vrot.slane %v1207, 7
  %v1336 = vrot.slane %v1208, 7
  %v1337 = vrot.slane %v1209, 7
  %v1338 = vrot.slane %v1210, 7
  %v1339 = vrot.slane %v1211, 7
  %v1340 = vrot.slane %v1212, 7
  %v1341 = vrot.slane %v1213, 7
  %v1342 = vrot.slane %v1214, 7
  %v1343 = vrot.slane %v1215, 7
  %v1344 = vrot.slane %v1216, 7
  %v1345 = vrot.slane %v1217, 7
  %v1346 = vrot.slane %v1218, 7
  %v1347 = vrot.slane %v1219, 7
  %v1348 = vrot.slane %v1220, 7
  %v1349 = vrot.slane %v1221, 7
  %v1350 = vrot.slane %v1222, 7
  %v1351 = vrot.slane %v1223, 7
  %v1352 = vrot.slane %v1224, 7
  %v1353 = vrot.slane %v1225, 7
  %v1354 = vrot.slane %v1226, 7
  %v1355 = vrot.slane %v1227, 7
  %v1356 = vrot.slane %v1228, 7
  %v1357 = vrot.slane %v1229, 7
  %v1358 = vrot.slane %v1230, 7
  %v1359 = vrot.slane %v1231, 7
  %v1360 = vrot.slane %v1232, 7
  %v1361 = vrot.slane %v1233, 7
  %v1362 = vrot.slane %v1234, 7
  %v1363 = vrot.slane %v1235, 7
  %v1364 = vrot.slane %v1236, 7
  %v1365 = vrot.slane %v1237, 7
  %v1366 = vrot.slane %v1238, 7
  %v1367 = vrot.slane %v1239, 7
  %v1368 = vrot.slane %v1240, 7
  %v1369 = vrot.slane %v1241, 7
  %v1370 = vrot.slane %v1242, 7
  %v1371 = vrot.slane %v1243, 7
  %v1372 = vrot.slane %v1244, 7
  %v1373 = vrot.slane %v1245, 7
  %v1374 = vrot.slane %v1246, 7
  %v1375 = vrot.slane %v1247, 7
  %v1376 = vrot.slane %v1248, 7
  %v1377 = vrot.slane %v1249, 7
  %v1378 = vrot.slane %v1250, 7
  %v1379 = vrot.slane %v1251, 7
  %v1380 = vrot.slane %v1252, 7
  %v1381 = vrot.slane %v1253, 7
  %v1382 = vrot.slane %v1254, 7
  %v1383 = vrot.slane %v1255, 7
  %v1384 = vrot.slane %v1256, 7
  %v1385 = vrot.slane %v1257, 7
  %v1386 = vrot.slane %v1258, 7
  %v1387 = vrot.slane %v1259, 7
  %v1388 = vrot.slane %v1260, 7
  %v1389 = vrot.slane %v1261, 7
  %v1390 = vrot.slane %v1262, 7
  %v1391 = vrot.slane %v1263, 7
  %v1392 = vrot.slane %v1264, 7
  %v1393 = vrot.slane %v1265, 7
  %v1394 = vrot.slane %v1266, 7
  %v1395 = vrot.slane %v1267, 7
  %v1396 = vrot.slane %v1268, 7
  %v1397 = vrot.slane %v1269, 7
  %v1398 = vrot.slane %v1270, 7
  %v1399 = vrot.slane %v1271, 7
  %v1400 = vrot.slane %v1272, 7
  %v1401 = vrot.slane %v1273, 7
  %v1402 = vrot.slane %v1274, 7
  %v1403 = vrot.slane %v1275, 7
  %v1404 = vrot.slane %v1276, 7
  %v1405 = vrot.slane %v1277, 7
  %v1406 = vrot.slane %v1278, 7
  %v1407 = vrot.slane %v1279, 7
  %v1408 = vrot.slane %v1280, 7
  %v1409 = vrot.slane %v1281, 7
  %v1410 = vrot.slane %v1282, 7
  %v1411 = vrot.slane %v1283, 7
  %v1412 = vrot.slane %v1284, 7
  %v1413 = vrot.slane %v1285, 7
  %v1414 = vrot.slane %v1286, 7
  %v1415 = vrot.slane %v1287, 7
  %v1416 = vrot.slane %v1288, 7
  %v1417 = vrot.slane %v1289, 7
  %v1418 = vrot.slane %v1290, 7
  %v1419 = vrot.slane %v1291, 7
  %v1420 = vrot.slane %v1292, 7
  %v1421 = vrot.slane %v1293, 7
  %v1422 = vrot.slane %v1294, 7
  %v1423 = vrot.slane %v1295, 7
  %v1424 = vrot.slane %v1296, 7
  %v1425 = vrot.slane %v1297, 7
  %v1426 = vrot.slane %v1298, 7
  %v1427 = vrot.slane %v1299, 7
  %v1428 = vrot.slane %v1300, 7
  %v1429 = vrot.slane %v1301, 7
  %v1430 = vrot.slane %v1302, 7
  %v1431 = vrot.slane %v1303, 7
  %v1432 = vrot.slane %v1304, 7
  %v1433 = vrot.slane %v1305, 7
  %v1434 = vrot.slane %v1306, 7
  %v1435 = vrot.slane %v1307, 7
  %v1436 = vrot.slane %v1308, 7
  %v1437 = vrot.slane %v1309, 7
  %v1438 = vrot.slane %v1310, 7
  %v1439 = vrot.slane %v1311, 7
  %v1440 = vrot.slane %v1312, 7
  %v1441 = vrot.slane %v1313, 7
  %v1442 = vrot.slane %v1314, 7
  %v1443 = vrot.slane %v1315, 7
  %v1444 = vrot.slane %v1316, 7
  %v1445 = vrot.slane %v1317, 7
  %v1446 = vrot.slane %v1318, 7
  %v1447 = vrot.slane %v1319, 7
  %v1448 = vrot.slane %v1320, 7
  %v1449 = vrot.slane %v1321, 7
  %v1450 = vrot.slane %v1322, 7
  %vm1451 = vcmp.lt.s32.totalorder %v27, 1
  %v1452 = vsel %vm1451, %v1447, %v1449
  %v1453 = vsel %vm1451, %v1448, %v1450
  %v1454 = vsel %vm1451, %v1445, %v1447
  %v1455 = vsel %vm1451, %v1446, %v1448
  %v1456 = vsel %vm1451, %v1443, %v1445
  %v1457 = vsel %vm1451, %v1444, %v1446
  %v1458 = vsel %vm1451, %v1441, %v1443
  %v1459 = vsel %vm1451, %v1442, %v1444
  %v1460 = vsel %vm1451, %v1439, %v1441
  %v1461 = vsel %vm1451, %v1440, %v1442
  %v1462 = vsel %vm1451, %v1437, %v1439
  %v1463 = vsel %vm1451, %v1438, %v1440
  %v1464 = vsel %vm1451, %v1435, %v1437
  %v1465 = vsel %vm1451, %v1436, %v1438
  %v1466 = vsel %vm1451, %v1433, %v1435
  %v1467 = vsel %vm1451, %v1434, %v1436
  %v1468 = vsel %vm1451, %v1431, %v1433
  %v1469 = vsel %vm1451, %v1432, %v1434
  %v1470 = vsel %vm1451, %v1429, %v1431
  %v1471 = vsel %vm1451, %v1430, %v1432
  %v1472 = vsel %vm1451, %v1427, %v1429
  %v1473 = vsel %vm1451, %v1428, %v1430
  %v1474 = vsel %vm1451, %v1425, %v1427
  %v1475 = vsel %vm1451, %v1426, %v1428
  %v1476 = vsel %vm1451, %v1423, %v1425
  %v1477 = vsel %vm1451, %v1424, %v1426
  %v1478 = vsel %vm1451, %v1421, %v1423
  %v1479 = vsel %vm1451, %v1422, %v1424
  %v1480 = vsel %vm1451, %v1419, %v1421
  %v1481 = vsel %vm1451, %v1420, %v1422
  %v1482 = vsel %vm1451, %v1417, %v1419
  %v1483 = vsel %vm1451, %v1418, %v1420
  %v1484 = vsel %vm1451, %v1415, %v1417
  %v1485 = vsel %vm1451, %v1416, %v1418
  %v1486 = vsel %vm1451, %v1413, %v1415
  %v1487 = vsel %vm1451, %v1414, %v1416
  %v1488 = vsel %vm1451, %v1411, %v1413
  %v1489 = vsel %vm1451, %v1412, %v1414
  %v1490 = vsel %vm1451, %v1409, %v1411
  %v1491 = vsel %vm1451, %v1410, %v1412
  %v1492 = vsel %vm1451, %v1407, %v1409
  %v1493 = vsel %vm1451, %v1408, %v1410
  %v1494 = vsel %vm1451, %v1405, %v1407
  %v1495 = vsel %vm1451, %v1406, %v1408
  %v1496 = vsel %vm1451, %v1403, %v1405
  %v1497 = vsel %vm1451, %v1404, %v1406
  %v1498 = vsel %vm1451, %v1401, %v1403
  %v1499 = vsel %vm1451, %v1402, %v1404
  %v1500 = vsel %vm1451, %v1399, %v1401
  %v1501 = vsel %vm1451, %v1400, %v1402
  %v1502 = vsel %vm1451, %v1397, %v1399
  %v1503 = vsel %vm1451, %v1398, %v1400
  %v1504 = vsel %vm1451, %v1395, %v1397
  %v1505 = vsel %vm1451, %v1396, %v1398
  %v1506 = vsel %vm1451, %v1393, %v1395
  %v1507 = vsel %vm1451, %v1394, %v1396
  %v1508 = vsel %vm1451, %v1391, %v1393
  %v1509 = vsel %vm1451, %v1392, %v1394
  %v1510 = vsel %vm1451, %v1389, %v1391
  %v1511 = vsel %vm1451, %v1390, %v1392
  %v1512 = vsel %vm1451, %v1387, %v1389
  %v1513 = vsel %vm1451, %v1388, %v1390
  %v1514 = vsel %vm1451, %v1385, %v1387
  %v1515 = vsel %vm1451, %v1386, %v1388
  %v1516 = vsel %vm1451, %v1383, %v1385
  %v1517 = vsel %vm1451, %v1384, %v1386
  %v1518 = vsel %vm1451, %v1381, %v1383
  %v1519 = vsel %vm1451, %v1382, %v1384
  %v1520 = vsel %vm1451, %v1379, %v1381
  %v1521 = vsel %vm1451, %v1380, %v1382
  %v1522 = vsel %vm1451, %v1377, %v1379
  %v1523 = vsel %vm1451, %v1378, %v1380
  %v1524 = vsel %vm1451, %v1375, %v1377
  %v1525 = vsel %vm1451, %v1376, %v1378
  %v1526 = vsel %vm1451, %v1373, %v1375
  %v1527 = vsel %vm1451, %v1374, %v1376
  %v1528 = vsel %vm1451, %v1371, %v1373
  %v1529 = vsel %vm1451, %v1372, %v1374
  %v1530 = vsel %vm1451, %v1369, %v1371
  %v1531 = vsel %vm1451, %v1370, %v1372
  %v1532 = vsel %vm1451, %v1367, %v1369
  %v1533 = vsel %vm1451, %v1368, %v1370
  %v1534 = vsel %vm1451, %v1365, %v1367
  %v1535 = vsel %vm1451, %v1366, %v1368
  %v1536 = vsel %vm1451, %v1363, %v1365
  %v1537 = vsel %vm1451, %v1364, %v1366
  %v1538 = vsel %vm1451, %v1361, %v1363
  %v1539 = vsel %vm1451, %v1362, %v1364
  %v1540 = vsel %vm1451, %v1359, %v1361
  %v1541 = vsel %vm1451, %v1360, %v1362
  %v1542 = vsel %vm1451, %v1357, %v1359
  %v1543 = vsel %vm1451, %v1358, %v1360
  %v1544 = vsel %vm1451, %v1355, %v1357
  %v1545 = vsel %vm1451, %v1356, %v1358
  %v1546 = vsel %vm1451, %v1353, %v1355
  %v1547 = vsel %vm1451, %v1354, %v1356
  %v1548 = vsel %vm1451, %v1351, %v1353
  %v1549 = vsel %vm1451, %v1352, %v1354
  %v1550 = vsel %vm1451, %v1349, %v1351
  %v1551 = vsel %vm1451, %v1350, %v1352
  %v1552 = vsel %vm1451, %v1347, %v1349
  %v1553 = vsel %vm1451, %v1348, %v1350
  %v1554 = vsel %vm1451, %v1345, %v1347
  %v1555 = vsel %vm1451, %v1346, %v1348
  %v1556 = vsel %vm1451, %v1343, %v1345
  %v1557 = vsel %vm1451, %v1344, %v1346
  %v1558 = vsel %vm1451, %v1341, %v1343
  %v1559 = vsel %vm1451, %v1342, %v1344
  %v1560 = vsel %vm1451, %v1339, %v1341
  %v1561 = vsel %vm1451, %v1340, %v1342
  %v1562 = vsel %vm1451, %v1337, %v1339
  %v1563 = vsel %vm1451, %v1338, %v1340
  %v1564 = vsel %vm1451, %v1335, %v1337
  %v1565 = vsel %vm1451, %v1336, %v1338
  %v1566 = vsel %vm1451, %v1333, %v1335
  %v1567 = vsel %vm1451, %v1334, %v1336
  %v1568 = vsel %vm1451, %v1331, %v1333
  %v1569 = vsel %vm1451, %v1332, %v1334
  %v1570 = vsel %vm1451, %v1329, %v1331
  %v1571 = vsel %vm1451, %v1330, %v1332
  %v1572 = vsel %vm1451, %v1327, %v1329
  %v1573 = vsel %vm1451, %v1328, %v1330
  %v1574 = vsel %vm1451, %v1325, %v1327
  %v1575 = vsel %vm1451, %v1326, %v1328
  %v1576 = vsel %vm1451, %v1323, %v1325
  %v1577 = vsel %vm1451, %v1324, %v1326
  %v1578 = vsel %vm1451, %v1449, %v1323
  %v1579 = vsel %vm1451, %v1450, %v1324
  %v1580 = vsel %vm155, 0.0, %v1578
  %v1581 = vsel %vm155, 0.0, %v1579
  %v1582 = vsel %vm156, 0.0, %v1576
  %v1583 = vsel %vm156, 0.0, %v1577
  %v1584 = vsel %vm157, 0.0, %v1574
  %v1585 = vsel %vm157, 0.0, %v1575
  %v1586 = vsel %vm158, 0.0, %v1572
  %v1587 = vsel %vm158, 0.0, %v1573
  %v1588 = vsel %vm159, 0.0, %v1570
  %v1589 = vsel %vm159, 0.0, %v1571
  %v1590 = vsel %vm160, 0.0, %v1568
  %v1591 = vsel %vm160, 0.0, %v1569
  %v1592 = vsel %vm161, 0.0, %v1566
  %v1593 = vsel %vm161, 0.0, %v1567
  %v1594 = vsel %vm162, 0.0, %v1564
  %v1595 = vsel %vm162, 0.0, %v1565
  %v1596 = vsel %vm163, 0.0, %v1562
  %v1597 = vsel %vm163, 0.0, %v1563
  %v1598 = vsel %vm164, 0.0, %v1560
  %v1599 = vsel %vm164, 0.0, %v1561
  %v1600 = vsel %vm165, 0.0, %v1558
  %v1601 = vsel %vm165, 0.0, %v1559
  %v1602 = vsel %vm166, 0.0, %v1556
  %v1603 = vsel %vm166, 0.0, %v1557
  %v1604 = vsel %vm167, 0.0, %v1554
  %v1605 = vsel %vm167, 0.0, %v1555
  %v1606 = vsel %vm168, 0.0, %v1552
  %v1607 = vsel %vm168, 0.0, %v1553
  %v1608 = vsel %vm169, 0.0, %v1550
  %v1609 = vsel %vm169, 0.0, %v1551
  %v1610 = vsel %vm170, 0.0, %v1548
  %v1611 = vsel %vm170, 0.0, %v1549
  %v1612 = vsel %vm171, 0.0, %v1546
  %v1613 = vsel %vm171, 0.0, %v1547
  %v1614 = vsel %vm172, 0.0, %v1544
  %v1615 = vsel %vm172, 0.0, %v1545
  %v1616 = vsel %vm173, 0.0, %v1542
  %v1617 = vsel %vm173, 0.0, %v1543
  %v1618 = vsel %vm174, 0.0, %v1540
  %v1619 = vsel %vm174, 0.0, %v1541
  %v1620 = vsel %vm175, 0.0, %v1538
  %v1621 = vsel %vm175, 0.0, %v1539
  %v1622 = vsel %vm176, 0.0, %v1536
  %v1623 = vsel %vm176, 0.0, %v1537
  %v1624 = vsel %vm177, 0.0, %v1534
  %v1625 = vsel %vm177, 0.0, %v1535
  %v1626 = vsel %vm178, 0.0, %v1532
  %v1627 = vsel %vm178, 0.0, %v1533
  %v1628 = vsel %vm179, 0.0, %v1530
  %v1629 = vsel %vm179, 0.0, %v1531
  %v1630 = vsel %vm180, 0.0, %v1528
  %v1631 = vsel %vm180, 0.0, %v1529
  %v1632 = vsel %vm181, 0.0, %v1526
  %v1633 = vsel %vm181, 0.0, %v1527
  %v1634 = vsel %vm182, 0.0, %v1524
  %v1635 = vsel %vm182, 0.0, %v1525
  %v1636 = vsel %vm183, 0.0, %v1522
  %v1637 = vsel %vm183, 0.0, %v1523
  %v1638 = vsel %vm184, 0.0, %v1520
  %v1639 = vsel %vm184, 0.0, %v1521
  %v1640 = vsel %vm185, 0.0, %v1518
  %v1641 = vsel %vm185, 0.0, %v1519
  %v1642 = vsel %vm186, 0.0, %v1516
  %v1643 = vsel %vm186, 0.0, %v1517
  %v1644 = vsel %vm187, 0.0, %v1514
  %v1645 = vsel %vm187, 0.0, %v1515
  %v1646 = vsel %vm188, 0.0, %v1512
  %v1647 = vsel %vm188, 0.0, %v1513
  %v1648 = vsel %vm189, 0.0, %v1510
  %v1649 = vsel %vm189, 0.0, %v1511
  %v1650 = vsel %vm190, 0.0, %v1508
  %v1651 = vsel %vm190, 0.0, %v1509
  %v1652 = vsel %vm191, 0.0, %v1506
  %v1653 = vsel %vm191, 0.0, %v1507
  %v1654 = vsel %vm192, 0.0, %v1504
  %v1655 = vsel %vm192, 0.0, %v1505
  %v1656 = vsel %vm193, 0.0, %v1502
  %v1657 = vsel %vm193, 0.0, %v1503
  %v1658 = vsel %vm194, 0.0, %v1500
  %v1659 = vsel %vm194, 0.0, %v1501
  %v1660 = vsel %vm195, 0.0, %v1498
  %v1661 = vsel %vm195, 0.0, %v1499
  %v1662 = vsel %vm196, 0.0, %v1496
  %v1663 = vsel %vm196, 0.0, %v1497
  %v1664 = vsel %vm197, 0.0, %v1494
  %v1665 = vsel %vm197, 0.0, %v1495
  %v1666 = vsel %vm198, 0.0, %v1492
  %v1667 = vsel %vm198, 0.0, %v1493
  %v1668 = vsel %vm199, 0.0, %v1490
  %v1669 = vsel %vm199, 0.0, %v1491
  %v1670 = vsel %vm200, 0.0, %v1488
  %v1671 = vsel %vm200, 0.0, %v1489
  %v1672 = vsel %vm201, 0.0, %v1486
  %v1673 = vsel %vm201, 0.0, %v1487
  %v1674 = vsel %vm202, 0.0, %v1484
  %v1675 = vsel %vm202, 0.0, %v1485
  %v1676 = vsel %vm203, 0.0, %v1482
  %v1677 = vsel %vm203, 0.0, %v1483
  %v1678 = vsel %vm204, 0.0, %v1480
  %v1679 = vsel %vm204, 0.0, %v1481
  %v1680 = vsel %vm205, 0.0, %v1478
  %v1681 = vsel %vm205, 0.0, %v1479
  %v1682 = vsel %vm206, 0.0, %v1476
  %v1683 = vsel %vm206, 0.0, %v1477
  %v1684 = vsel %vm207, 0.0, %v1474
  %v1685 = vsel %vm207, 0.0, %v1475
  %v1686 = vsel %vm208, 0.0, %v1472
  %v1687 = vsel %vm208, 0.0, %v1473
  %v1688 = vsel %vm209, 0.0, %v1470
  %v1689 = vsel %vm209, 0.0, %v1471
  %v1690 = vsel %vm210, 0.0, %v1468
  %v1691 = vsel %vm210, 0.0, %v1469
  %v1692 = vsel %vm211, 0.0, %v1466
  %v1693 = vsel %vm211, 0.0, %v1467
  %v1694 = vsel %vm212, 0.0, %v1464
  %v1695 = vsel %vm212, 0.0, %v1465
  %v1696 = vsel %vm213, 0.0, %v1462
  %v1697 = vsel %vm213, 0.0, %v1463
  %v1698 = vsel %vm214, 0.0, %v1460
  %v1699 = vsel %vm214, 0.0, %v1461
  %v1700 = vsel %vm215, 0.0, %v1458
  %v1701 = vsel %vm215, 0.0, %v1459
  %v1702 = vsel %vm216, 0.0, %v1456
  %v1703 = vsel %vm216, 0.0, %v1457
  %v1704 = vsel %vm217, 0.0, %v1454
  %v1705 = vsel %vm217, 0.0, %v1455
  %v1706 = vsel %vm218, 0.0, %v1452
  %v1707 = vsel %vm218, 0.0, %v1453
  %v1708 = vrot.slane %v1195, 1
  %v1709 = vrot.slane %v1196, 1
  %v1710 = vrot.slane %v1197, 1
  %v1711 = vrot.slane %v1198, 1
  %v1712 = vrot.slane %v1199, 1
  %v1713 = vrot.slane %v1200, 1
  %v1714 = vrot.slane %v1201, 1
  %v1715 = vrot.slane %v1202, 1
  %v1716 = vrot.slane %v1203, 1
  %v1717 = vrot.slane %v1204, 1
  %v1718 = vrot.slane %v1205, 1
  %v1719 = vrot.slane %v1206, 1
  %v1720 = vrot.slane %v1207, 1
  %v1721 = vrot.slane %v1208, 1
  %v1722 = vrot.slane %v1209, 1
  %v1723 = vrot.slane %v1210, 1
  %v1724 = vrot.slane %v1211, 1
  %v1725 = vrot.slane %v1212, 1
  %v1726 = vrot.slane %v1213, 1
  %v1727 = vrot.slane %v1214, 1
  %v1728 = vrot.slane %v1215, 1
  %v1729 = vrot.slane %v1216, 1
  %v1730 = vrot.slane %v1217, 1
  %v1731 = vrot.slane %v1218, 1
  %v1732 = vrot.slane %v1219, 1
  %v1733 = vrot.slane %v1220, 1
  %v1734 = vrot.slane %v1221, 1
  %v1735 = vrot.slane %v1222, 1
  %v1736 = vrot.slane %v1223, 1
  %v1737 = vrot.slane %v1224, 1
  %v1738 = vrot.slane %v1225, 1
  %v1739 = vrot.slane %v1226, 1
  %v1740 = vrot.slane %v1227, 1
  %v1741 = vrot.slane %v1228, 1
  %v1742 = vrot.slane %v1229, 1
  %v1743 = vrot.slane %v1230, 1
  %v1744 = vrot.slane %v1231, 1
  %v1745 = vrot.slane %v1232, 1
  %v1746 = vrot.slane %v1233, 1
  %v1747 = vrot.slane %v1234, 1
  %v1748 = vrot.slane %v1235, 1
  %v1749 = vrot.slane %v1236, 1
  %v1750 = vrot.slane %v1237, 1
  %v1751 = vrot.slane %v1238, 1
  %v1752 = vrot.slane %v1239, 1
  %v1753 = vrot.slane %v1240, 1
  %v1754 = vrot.slane %v1241, 1
  %v1755 = vrot.slane %v1242, 1
  %v1756 = vrot.slane %v1243, 1
  %v1757 = vrot.slane %v1244, 1
  %v1758 = vrot.slane %v1245, 1
  %v1759 = vrot.slane %v1246, 1
  %v1760 = vrot.slane %v1247, 1
  %v1761 = vrot.slane %v1248, 1
  %v1762 = vrot.slane %v1249, 1
  %v1763 = vrot.slane %v1250, 1
  %v1764 = vrot.slane %v1251, 1
  %v1765 = vrot.slane %v1252, 1
  %v1766 = vrot.slane %v1253, 1
  %v1767 = vrot.slane %v1254, 1
  %v1768 = vrot.slane %v1255, 1
  %v1769 = vrot.slane %v1256, 1
  %v1770 = vrot.slane %v1257, 1
  %v1771 = vrot.slane %v1258, 1
  %v1772 = vrot.slane %v1259, 1
  %v1773 = vrot.slane %v1260, 1
  %v1774 = vrot.slane %v1261, 1
  %v1775 = vrot.slane %v1262, 1
  %v1776 = vrot.slane %v1263, 1
  %v1777 = vrot.slane %v1264, 1
  %v1778 = vrot.slane %v1265, 1
  %v1779 = vrot.slane %v1266, 1
  %v1780 = vrot.slane %v1267, 1
  %v1781 = vrot.slane %v1268, 1
  %v1782 = vrot.slane %v1269, 1
  %v1783 = vrot.slane %v1270, 1
  %v1784 = vrot.slane %v1271, 1
  %v1785 = vrot.slane %v1272, 1
  %v1786 = vrot.slane %v1273, 1
  %v1787 = vrot.slane %v1274, 1
  %v1788 = vrot.slane %v1275, 1
  %v1789 = vrot.slane %v1276, 1
  %v1790 = vrot.slane %v1277, 1
  %v1791 = vrot.slane %v1278, 1
  %v1792 = vrot.slane %v1279, 1
  %v1793 = vrot.slane %v1280, 1
  %v1794 = vrot.slane %v1281, 1
  %v1795 = vrot.slane %v1282, 1
  %v1796 = vrot.slane %v1283, 1
  %v1797 = vrot.slane %v1284, 1
  %v1798 = vrot.slane %v1285, 1
  %v1799 = vrot.slane %v1286, 1
  %v1800 = vrot.slane %v1287, 1
  %v1801 = vrot.slane %v1288, 1
  %v1802 = vrot.slane %v1289, 1
  %v1803 = vrot.slane %v1290, 1
  %v1804 = vrot.slane %v1291, 1
  %v1805 = vrot.slane %v1292, 1
  %v1806 = vrot.slane %v1293, 1
  %v1807 = vrot.slane %v1294, 1
  %v1808 = vrot.slane %v1295, 1
  %v1809 = vrot.slane %v1296, 1
  %v1810 = vrot.slane %v1297, 1
  %v1811 = vrot.slane %v1298, 1
  %v1812 = vrot.slane %v1299, 1
  %v1813 = vrot.slane %v1300, 1
  %v1814 = vrot.slane %v1301, 1
  %v1815 = vrot.slane %v1302, 1
  %v1816 = vrot.slane %v1303, 1
  %v1817 = vrot.slane %v1304, 1
  %v1818 = vrot.slane %v1305, 1
  %v1819 = vrot.slane %v1306, 1
  %v1820 = vrot.slane %v1307, 1
  %v1821 = vrot.slane %v1308, 1
  %v1822 = vrot.slane %v1309, 1
  %v1823 = vrot.slane %v1310, 1
  %v1824 = vrot.slane %v1311, 1
  %v1825 = vrot.slane %v1312, 1
  %v1826 = vrot.slane %v1313, 1
  %v1827 = vrot.slane %v1314, 1
  %v1828 = vrot.slane %v1315, 1
  %v1829 = vrot.slane %v1316, 1
  %v1830 = vrot.slane %v1317, 1
  %v1831 = vrot.slane %v1318, 1
  %v1832 = vrot.slane %v1319, 1
  %v1833 = vrot.slane %v1320, 1
  %v1834 = vrot.slane %v1321, 1
  %v1835 = vrot.slane %v1322, 1
  %vm1836 = vcmp.lt.s32.totalorder %v27, 7
  %v1837 = vsel %vm1836, %v1832, %v1834
  %v1838 = vsel %vm1836, %v1833, %v1835
  %v1839 = vsel %vm1836, %v1830, %v1832
  %v1840 = vsel %vm1836, %v1831, %v1833
  %v1841 = vsel %vm1836, %v1828, %v1830
  %v1842 = vsel %vm1836, %v1829, %v1831
  %v1843 = vsel %vm1836, %v1826, %v1828
  %v1844 = vsel %vm1836, %v1827, %v1829
  %v1845 = vsel %vm1836, %v1824, %v1826
  %v1846 = vsel %vm1836, %v1825, %v1827
  %v1847 = vsel %vm1836, %v1822, %v1824
  %v1848 = vsel %vm1836, %v1823, %v1825
  %v1849 = vsel %vm1836, %v1820, %v1822
  %v1850 = vsel %vm1836, %v1821, %v1823
  %v1851 = vsel %vm1836, %v1818, %v1820
  %v1852 = vsel %vm1836, %v1819, %v1821
  %v1853 = vsel %vm1836, %v1816, %v1818
  %v1854 = vsel %vm1836, %v1817, %v1819
  %v1855 = vsel %vm1836, %v1814, %v1816
  %v1856 = vsel %vm1836, %v1815, %v1817
  %v1857 = vsel %vm1836, %v1812, %v1814
  %v1858 = vsel %vm1836, %v1813, %v1815
  %v1859 = vsel %vm1836, %v1810, %v1812
  %v1860 = vsel %vm1836, %v1811, %v1813
  %v1861 = vsel %vm1836, %v1808, %v1810
  %v1862 = vsel %vm1836, %v1809, %v1811
  %v1863 = vsel %vm1836, %v1806, %v1808
  %v1864 = vsel %vm1836, %v1807, %v1809
  %v1865 = vsel %vm1836, %v1804, %v1806
  %v1866 = vsel %vm1836, %v1805, %v1807
  %v1867 = vsel %vm1836, %v1802, %v1804
  %v1868 = vsel %vm1836, %v1803, %v1805
  %v1869 = vsel %vm1836, %v1800, %v1802
  %v1870 = vsel %vm1836, %v1801, %v1803
  %v1871 = vsel %vm1836, %v1798, %v1800
  %v1872 = vsel %vm1836, %v1799, %v1801
  %v1873 = vsel %vm1836, %v1796, %v1798
  %v1874 = vsel %vm1836, %v1797, %v1799
  %v1875 = vsel %vm1836, %v1794, %v1796
  %v1876 = vsel %vm1836, %v1795, %v1797
  %v1877 = vsel %vm1836, %v1792, %v1794
  %v1878 = vsel %vm1836, %v1793, %v1795
  %v1879 = vsel %vm1836, %v1790, %v1792
  %v1880 = vsel %vm1836, %v1791, %v1793
  %v1881 = vsel %vm1836, %v1788, %v1790
  %v1882 = vsel %vm1836, %v1789, %v1791
  %v1883 = vsel %vm1836, %v1786, %v1788
  %v1884 = vsel %vm1836, %v1787, %v1789
  %v1885 = vsel %vm1836, %v1784, %v1786
  %v1886 = vsel %vm1836, %v1785, %v1787
  %v1887 = vsel %vm1836, %v1782, %v1784
  %v1888 = vsel %vm1836, %v1783, %v1785
  %v1889 = vsel %vm1836, %v1780, %v1782
  %v1890 = vsel %vm1836, %v1781, %v1783
  %v1891 = vsel %vm1836, %v1778, %v1780
  %v1892 = vsel %vm1836, %v1779, %v1781
  %v1893 = vsel %vm1836, %v1776, %v1778
  %v1894 = vsel %vm1836, %v1777, %v1779
  %v1895 = vsel %vm1836, %v1774, %v1776
  %v1896 = vsel %vm1836, %v1775, %v1777
  %v1897 = vsel %vm1836, %v1772, %v1774
  %v1898 = vsel %vm1836, %v1773, %v1775
  %v1899 = vsel %vm1836, %v1770, %v1772
  %v1900 = vsel %vm1836, %v1771, %v1773
  %v1901 = vsel %vm1836, %v1768, %v1770
  %v1902 = vsel %vm1836, %v1769, %v1771
  %v1903 = vsel %vm1836, %v1766, %v1768
  %v1904 = vsel %vm1836, %v1767, %v1769
  %v1905 = vsel %vm1836, %v1764, %v1766
  %v1906 = vsel %vm1836, %v1765, %v1767
  %v1907 = vsel %vm1836, %v1762, %v1764
  %v1908 = vsel %vm1836, %v1763, %v1765
  %v1909 = vsel %vm1836, %v1760, %v1762
  %v1910 = vsel %vm1836, %v1761, %v1763
  %v1911 = vsel %vm1836, %v1758, %v1760
  %v1912 = vsel %vm1836, %v1759, %v1761
  %v1913 = vsel %vm1836, %v1756, %v1758
  %v1914 = vsel %vm1836, %v1757, %v1759
  %v1915 = vsel %vm1836, %v1754, %v1756
  %v1916 = vsel %vm1836, %v1755, %v1757
  %v1917 = vsel %vm1836, %v1752, %v1754
  %v1918 = vsel %vm1836, %v1753, %v1755
  %v1919 = vsel %vm1836, %v1750, %v1752
  %v1920 = vsel %vm1836, %v1751, %v1753
  %v1921 = vsel %vm1836, %v1748, %v1750
  %v1922 = vsel %vm1836, %v1749, %v1751
  %v1923 = vsel %vm1836, %v1746, %v1748
  %v1924 = vsel %vm1836, %v1747, %v1749
  %v1925 = vsel %vm1836, %v1744, %v1746
  %v1926 = vsel %vm1836, %v1745, %v1747
  %v1927 = vsel %vm1836, %v1742, %v1744
  %v1928 = vsel %vm1836, %v1743, %v1745
  %v1929 = vsel %vm1836, %v1740, %v1742
  %v1930 = vsel %vm1836, %v1741, %v1743
  %v1931 = vsel %vm1836, %v1738, %v1740
  %v1932 = vsel %vm1836, %v1739, %v1741
  %v1933 = vsel %vm1836, %v1736, %v1738
  %v1934 = vsel %vm1836, %v1737, %v1739
  %v1935 = vsel %vm1836, %v1734, %v1736
  %v1936 = vsel %vm1836, %v1735, %v1737
  %v1937 = vsel %vm1836, %v1732, %v1734
  %v1938 = vsel %vm1836, %v1733, %v1735
  %v1939 = vsel %vm1836, %v1730, %v1732
  %v1940 = vsel %vm1836, %v1731, %v1733
  %v1941 = vsel %vm1836, %v1728, %v1730
  %v1942 = vsel %vm1836, %v1729, %v1731
  %v1943 = vsel %vm1836, %v1726, %v1728
  %v1944 = vsel %vm1836, %v1727, %v1729
  %v1945 = vsel %vm1836, %v1724, %v1726
  %v1946 = vsel %vm1836, %v1725, %v1727
  %v1947 = vsel %vm1836, %v1722, %v1724
  %v1948 = vsel %vm1836, %v1723, %v1725
  %v1949 = vsel %vm1836, %v1720, %v1722
  %v1950 = vsel %vm1836, %v1721, %v1723
  %v1951 = vsel %vm1836, %v1718, %v1720
  %v1952 = vsel %vm1836, %v1719, %v1721
  %v1953 = vsel %vm1836, %v1716, %v1718
  %v1954 = vsel %vm1836, %v1717, %v1719
  %v1955 = vsel %vm1836, %v1714, %v1716
  %v1956 = vsel %vm1836, %v1715, %v1717
  %v1957 = vsel %vm1836, %v1712, %v1714
  %v1958 = vsel %vm1836, %v1713, %v1715
  %v1959 = vsel %vm1836, %v1710, %v1712
  %v1960 = vsel %vm1836, %v1711, %v1713
  %v1961 = vsel %vm1836, %v1708, %v1710
  %v1962 = vsel %vm1836, %v1709, %v1711
  %v1963 = vsel %vm1836, %v1834, %v1708
  %v1964 = vsel %vm1836, %v1835, %v1709
  %v1965 = vsel %vm219, 0.0, %v1961
  %v1966 = vsel %vm219, 0.0, %v1962
  %v1967 = vsel %vm220, 0.0, %v1959
  %v1968 = vsel %vm220, 0.0, %v1960
  %v1969 = vsel %vm221, 0.0, %v1957
  %v1970 = vsel %vm221, 0.0, %v1958
  %v1971 = vsel %vm222, 0.0, %v1955
  %v1972 = vsel %vm222, 0.0, %v1956
  %v1973 = vsel %vm223, 0.0, %v1953
  %v1974 = vsel %vm223, 0.0, %v1954
  %v1975 = vsel %vm224, 0.0, %v1951
  %v1976 = vsel %vm224, 0.0, %v1952
  %v1977 = vsel %vm225, 0.0, %v1949
  %v1978 = vsel %vm225, 0.0, %v1950
  %v1979 = vsel %vm226, 0.0, %v1947
  %v1980 = vsel %vm226, 0.0, %v1948
  %v1981 = vsel %vm227, 0.0, %v1945
  %v1982 = vsel %vm227, 0.0, %v1946
  %v1983 = vsel %vm228, 0.0, %v1943
  %v1984 = vsel %vm228, 0.0, %v1944
  %v1985 = vsel %vm229, 0.0, %v1941
  %v1986 = vsel %vm229, 0.0, %v1942
  %v1987 = vsel %vm230, 0.0, %v1939
  %v1988 = vsel %vm230, 0.0, %v1940
  %v1989 = vsel %vm231, 0.0, %v1937
  %v1990 = vsel %vm231, 0.0, %v1938
  %v1991 = vsel %vm232, 0.0, %v1935
  %v1992 = vsel %vm232, 0.0, %v1936
  %v1993 = vsel %vm233, 0.0, %v1933
  %v1994 = vsel %vm233, 0.0, %v1934
  %v1995 = vsel %vm234, 0.0, %v1931
  %v1996 = vsel %vm234, 0.0, %v1932
  %v1997 = vsel %vm235, 0.0, %v1929
  %v1998 = vsel %vm235, 0.0, %v1930
  %v1999 = vsel %vm236, 0.0, %v1927
  %v2000 = vsel %vm236, 0.0, %v1928
  %v2001 = vsel %vm237, 0.0, %v1925
  %v2002 = vsel %vm237, 0.0, %v1926
  %v2003 = vsel %vm238, 0.0, %v1923
  %v2004 = vsel %vm238, 0.0, %v1924
  %v2005 = vsel %vm239, 0.0, %v1921
  %v2006 = vsel %vm239, 0.0, %v1922
  %v2007 = vsel %vm240, 0.0, %v1919
  %v2008 = vsel %vm240, 0.0, %v1920
  %v2009 = vsel %vm241, 0.0, %v1917
  %v2010 = vsel %vm241, 0.0, %v1918
  %v2011 = vsel %vm242, 0.0, %v1915
  %v2012 = vsel %vm242, 0.0, %v1916
  %v2013 = vsel %vm243, 0.0, %v1913
  %v2014 = vsel %vm243, 0.0, %v1914
  %v2015 = vsel %vm244, 0.0, %v1911
  %v2016 = vsel %vm244, 0.0, %v1912
  %v2017 = vsel %vm245, 0.0, %v1909
  %v2018 = vsel %vm245, 0.0, %v1910
  %v2019 = vsel %vm246, 0.0, %v1907
  %v2020 = vsel %vm246, 0.0, %v1908
  %v2021 = vsel %vm247, 0.0, %v1905
  %v2022 = vsel %vm247, 0.0, %v1906
  %v2023 = vsel %vm248, 0.0, %v1903
  %v2024 = vsel %vm248, 0.0, %v1904
  %v2025 = vsel %vm249, 0.0, %v1901
  %v2026 = vsel %vm249, 0.0, %v1902
  %v2027 = vsel %vm250, 0.0, %v1899
  %v2028 = vsel %vm250, 0.0, %v1900
  %v2029 = vsel %vm251, 0.0, %v1897
  %v2030 = vsel %vm251, 0.0, %v1898
  %v2031 = vsel %vm252, 0.0, %v1895
  %v2032 = vsel %vm252, 0.0, %v1896
  %v2033 = vsel %vm253, 0.0, %v1893
  %v2034 = vsel %vm253, 0.0, %v1894
  %v2035 = vsel %vm254, 0.0, %v1891
  %v2036 = vsel %vm254, 0.0, %v1892
  %v2037 = vsel %vm255, 0.0, %v1889
  %v2038 = vsel %vm255, 0.0, %v1890
  %v2039 = vsel %vm256, 0.0, %v1887
  %v2040 = vsel %vm256, 0.0, %v1888
  %v2041 = vsel %vm257, 0.0, %v1885
  %v2042 = vsel %vm257, 0.0, %v1886
  %v2043 = vsel %vm258, 0.0, %v1883
  %v2044 = vsel %vm258, 0.0, %v1884
  %v2045 = vsel %vm259, 0.0, %v1881
  %v2046 = vsel %vm259, 0.0, %v1882
  %v2047 = vsel %vm260, 0.0, %v1879
  %v2048 = vsel %vm260, 0.0, %v1880
  %v2049 = vsel %vm261, 0.0, %v1877
  %v2050 = vsel %vm261, 0.0, %v1878
  %v2051 = vsel %vm262, 0.0, %v1875
  %v2052 = vsel %vm262, 0.0, %v1876
  %v2053 = vsel %vm263, 0.0, %v1873
  %v2054 = vsel %vm263, 0.0, %v1874
  %v2055 = vsel %vm264, 0.0, %v1871
  %v2056 = vsel %vm264, 0.0, %v1872
  %v2057 = vsel %vm265, 0.0, %v1869
  %v2058 = vsel %vm265, 0.0, %v1870
  %v2059 = vsel %vm266, 0.0, %v1867
  %v2060 = vsel %vm266, 0.0, %v1868
  %v2061 = vsel %vm267, 0.0, %v1865
  %v2062 = vsel %vm267, 0.0, %v1866
  %v2063 = vsel %vm268, 0.0, %v1863
  %v2064 = vsel %vm268, 0.0, %v1864
  %v2065 = vsel %vm269, 0.0, %v1861
  %v2066 = vsel %vm269, 0.0, %v1862
  %v2067 = vsel %vm270, 0.0, %v1859
  %v2068 = vsel %vm270, 0.0, %v1860
  %v2069 = vsel %vm271, 0.0, %v1857
  %v2070 = vsel %vm271, 0.0, %v1858
  %v2071 = vsel %vm272, 0.0, %v1855
  %v2072 = vsel %vm272, 0.0, %v1856
  %v2073 = vsel %vm273, 0.0, %v1853
  %v2074 = vsel %vm273, 0.0, %v1854
  %v2075 = vsel %vm274, 0.0, %v1851
  %v2076 = vsel %vm274, 0.0, %v1852
  %v2077 = vsel %vm275, 0.0, %v1849
  %v2078 = vsel %vm275, 0.0, %v1850
  %v2079 = vsel %vm276, 0.0, %v1847
  %v2080 = vsel %vm276, 0.0, %v1848
  %v2081 = vsel %vm277, 0.0, %v1845
  %v2082 = vsel %vm277, 0.0, %v1846
  %v2083 = vsel %vm278, 0.0, %v1843
  %v2084 = vsel %vm278, 0.0, %v1844
  %v2085 = vsel %vm279, 0.0, %v1841
  %v2086 = vsel %vm279, 0.0, %v1842
  %v2087 = vsel %vm280, 0.0, %v1839
  %v2088 = vsel %vm280, 0.0, %v1840
  %v2089 = vsel %vm281, 0.0, %v1837
  %v2090 = vsel %vm281, 0.0, %v1838
  %v2091 = vsel %vm282, 0.0, %v1963
  %v2092 = vsel %vm282, 0.0, %v1964
  %v2093 = vpack.c.bf16 %v1582, %v1580
  %v2094 = vpack.c.bf16 %v1583, %v1581
  %v2095 = vpack.c.bf16 %v1586, %v1584
  %v2096 = vpack.c.bf16 %v1587, %v1585
  %v2097 = vpack.c.bf16 %v1590, %v1588
  %v2098 = vpack.c.bf16 %v1591, %v1589
  %v2099 = vpack.c.bf16 %v1594, %v1592
  %v2100 = vpack.c.bf16 %v1595, %v1593
  %v2101 = vpack.c.bf16 %v1598, %v1596
  %v2102 = vpack.c.bf16 %v1599, %v1597
  %v2103 = vpack.c.bf16 %v1602, %v1600
  %v2104 = vpack.c.bf16 %v1603, %v1601
  %v2105 = vpack.c.bf16 %v1606, %v1604
  %v2106 = vpack.c.bf16 %v1607, %v1605
  %v2107 = vpack.c.bf16 %v1610, %v1608
  %v2108 = vpack.c.bf16 %v1611, %v1609
  %v2109 = vpack.c.bf16 %v1614, %v1612
  %v2110 = vpack.c.bf16 %v1615, %v1613
  %v2111 = vpack.c.bf16 %v1618, %v1616
  %v2112 = vpack.c.bf16 %v1619, %v1617
  %v2113 = vpack.c.bf16 %v1622, %v1620
  %v2114 = vpack.c.bf16 %v1623, %v1621
  %v2115 = vpack.c.bf16 %v1626, %v1624
  %v2116 = vpack.c.bf16 %v1627, %v1625
  %v2117 = vpack.c.bf16 %v1630, %v1628
  %v2118 = vpack.c.bf16 %v1631, %v1629
  %v2119 = vpack.c.bf16 %v1634, %v1632
  %v2120 = vpack.c.bf16 %v1635, %v1633
  %v2121 = vpack.c.bf16 %v1638, %v1636
  %v2122 = vpack.c.bf16 %v1639, %v1637
  %v2123 = vpack.c.bf16 %v1642, %v1640
  %v2124 = vpack.c.bf16 %v1643, %v1641
  %v2125 = vpack.c.bf16 %v1646, %v1644
  %v2126 = vpack.c.bf16 %v1647, %v1645
  %v2127 = vpack.c.bf16 %v1650, %v1648
  %v2128 = vpack.c.bf16 %v1651, %v1649
  %v2129 = vpack.c.bf16 %v1654, %v1652
  %v2130 = vpack.c.bf16 %v1655, %v1653
  %v2131 = vpack.c.bf16 %v1658, %v1656
  %v2132 = vpack.c.bf16 %v1659, %v1657
  %v2133 = vpack.c.bf16 %v1662, %v1660
  %v2134 = vpack.c.bf16 %v1663, %v1661
  %v2135 = vpack.c.bf16 %v1666, %v1664
  %v2136 = vpack.c.bf16 %v1667, %v1665
  %v2137 = vpack.c.bf16 %v1670, %v1668
  %v2138 = vpack.c.bf16 %v1671, %v1669
  %v2139 = vpack.c.bf16 %v1674, %v1672
  %v2140 = vpack.c.bf16 %v1675, %v1673
  %v2141 = vpack.c.bf16 %v1678, %v1676
  %v2142 = vpack.c.bf16 %v1679, %v1677
  %v2143 = vpack.c.bf16 %v1682, %v1680
  %v2144 = vpack.c.bf16 %v1683, %v1681
  %v2145 = vpack.c.bf16 %v1686, %v1684
  %v2146 = vpack.c.bf16 %v1687, %v1685
  %v2147 = vpack.c.bf16 %v1690, %v1688
  %v2148 = vpack.c.bf16 %v1691, %v1689
  %v2149 = vpack.c.bf16 %v1694, %v1692
  %v2150 = vpack.c.bf16 %v1695, %v1693
  %v2151 = vpack.c.bf16 %v1698, %v1696
  %v2152 = vpack.c.bf16 %v1699, %v1697
  %v2153 = vpack.c.bf16 %v1702, %v1700
  %v2154 = vpack.c.bf16 %v1703, %v1701
  %v2155 = vpack.c.bf16 %v1706, %v1704
  %v2156 = vpack.c.bf16 %v1707, %v1705
  %v2157 = vld [vmem:[%s5] sm:$0xff]
  %v2158 = vld [vmem:[%s5 + $0x8] sm:$0xff]
  %v2159 = vld [vmem:[%s5 + $0x10] sm:$0xff]
  %v2160 = vld [vmem:[%s5 + $0x18] sm:$0xff]
  %v2161 = vld [vmem:[%s5 + $0x20] sm:$0xff]
  %v2162 = vld [vmem:[%s5 + $0x28] sm:$0xff]
  %v2163 = vld [vmem:[%s5 + $0x30] sm:$0xff]
  %v2164 = vld [vmem:[%s5 + $0x38] sm:$0xff]
  %v2165 = vld [vmem:[%s5 + $0x40] sm:$0xff]
  %v2166 = vld [vmem:[%s5 + $0x48] sm:$0xff]
  %v2167 = vld [vmem:[%s5 + $0x50] sm:$0xff]
  %v2168 = vld [vmem:[%s5 + $0x58] sm:$0xff]
  %v2169 = vld [vmem:[%s5 + $0x60] sm:$0xff]
  %v2170 = vld [vmem:[%s5 + $0x68] sm:$0xff]
  %v2171 = vld [vmem:[%s5 + $0x70] sm:$0xff]
  %v2172 = vld [vmem:[%s5 + $0x78] sm:$0xff]
  %v2173 = vld [vmem:[%s5 + $0x80] sm:$0xff]
  %v2174 = vld [vmem:[%s5 + $0x88] sm:$0xff]
  %v2175 = vld [vmem:[%s5 + $0x90] sm:$0xff]
  %v2176 = vld [vmem:[%s5 + $0x98] sm:$0xff]
  %v2177 = vld [vmem:[%s5 + $0xa0] sm:$0xff]
  %v2178 = vld [vmem:[%s5 + $0xa8] sm:$0xff]
  %v2179 = vld [vmem:[%s5 + $0xb0] sm:$0xff]
  %v2180 = vld [vmem:[%s5 + $0xb8] sm:$0xff]
  %v2181 = vld [vmem:[%s5 + $0xc0] sm:$0xff]
  %v2182 = vld [vmem:[%s5 + $0xc8] sm:$0xff]
  %v2183 = vld [vmem:[%s5 + $0xd0] sm:$0xff]
  %v2184 = vld [vmem:[%s5 + $0xd8] sm:$0xff]
  %v2185 = vld [vmem:[%s5 + $0xe0] sm:$0xff]
  %v2186 = vld [vmem:[%s5 + $0xe8] sm:$0xff]
  %v2187 = vld [vmem:[%s5 + $0xf0] sm:$0xff]
  %v2188 = vld [vmem:[%s5 + $0xf8] sm:$0xff]
  %v2189 = vpack.c.bf16 %v1197, %v1195
  %v2190 = vpack.c.bf16 %v1198, %v1196
  %v2191 = vpack.c.bf16 %v1201, %v1199
  %v2192 = vpack.c.bf16 %v1202, %v1200
  %v2193 = vpack.c.bf16 %v1205, %v1203
  %v2194 = vpack.c.bf16 %v1206, %v1204
  %v2195 = vpack.c.bf16 %v1209, %v1207
  %v2196 = vpack.c.bf16 %v1210, %v1208
  %v2197 = vpack.c.bf16 %v1213, %v1211
  %v2198 = vpack.c.bf16 %v1214, %v1212
  %v2199 = vpack.c.bf16 %v1217, %v1215
  %v2200 = vpack.c.bf16 %v1218, %v1216
  %v2201 = vpack.c.bf16 %v1221, %v1219
  %v2202 = vpack.c.bf16 %v1222, %v1220
  %v2203 = vpack.c.bf16 %v1225, %v1223
  %v2204 = vpack.c.bf16 %v1226, %v1224
  %v2205 = vpack.c.bf16 %v1229, %v1227
  %v2206 = vpack.c.bf16 %v1230, %v1228
  %v2207 = vpack.c.bf16 %v1233, %v1231
  %v2208 = vpack.c.bf16 %v1234, %v1232
  %v2209 = vpack.c.bf16 %v1237, %v1235
  %v2210 = vpack.c.bf16 %v1238, %v1236
  %v2211 = vpack.c.bf16 %v1241, %v1239
  %v2212 = vpack.c.bf16 %v1242, %v1240
  %v2213 = vpack.c.bf16 %v1245, %v1243
  %v2214 = vpack.c.bf16 %v1246, %v1244
  %v2215 = vpack.c.bf16 %v1249, %v1247
  %v2216 = vpack.c.bf16 %v1250, %v1248
  %v2217 = vpack.c.bf16 %v1253, %v1251
  %v2218 = vpack.c.bf16 %v1254, %v1252
  %v2219 = vpack.c.bf16 %v1257, %v1255
  %v2220 = vpack.c.bf16 %v1258, %v1256
  %v2221 = vpack.c.bf16 %v1261, %v1259
  %v2222 = vpack.c.bf16 %v1262, %v1260
  %v2223 = vpack.c.bf16 %v1265, %v1263
  %v2224 = vpack.c.bf16 %v1266, %v1264
  %v2225 = vpack.c.bf16 %v1269, %v1267
  %v2226 = vpack.c.bf16 %v1270, %v1268
  %v2227 = vpack.c.bf16 %v1273, %v1271
  %v2228 = vpack.c.bf16 %v1274, %v1272
  %v2229 = vpack.c.bf16 %v1277, %v1275
  %v2230 = vpack.c.bf16 %v1278, %v1276
  %v2231 = vpack.c.bf16 %v1281, %v1279
  %v2232 = vpack.c.bf16 %v1282, %v1280
  %v2233 = vpack.c.bf16 %v1285, %v1283
  %v2234 = vpack.c.bf16 %v1286, %v1284
  %v2235 = vpack.c.bf16 %v1289, %v1287
  %v2236 = vpack.c.bf16 %v1290, %v1288
  %v2237 = vpack.c.bf16 %v1293, %v1291
  %v2238 = vpack.c.bf16 %v1294, %v1292
  %v2239 = vpack.c.bf16 %v1297, %v1295
  %v2240 = vpack.c.bf16 %v1298, %v1296
  %v2241 = vpack.c.bf16 %v1301, %v1299
  %v2242 = vpack.c.bf16 %v1302, %v1300
  %v2243 = vpack.c.bf16 %v1305, %v1303
  %v2244 = vpack.c.bf16 %v1306, %v1304
  %v2245 = vpack.c.bf16 %v1309, %v1307
  %v2246 = vpack.c.bf16 %v1310, %v1308
  %v2247 = vpack.c.bf16 %v1313, %v1311
  %v2248 = vpack.c.bf16 %v1314, %v1312
  %v2249 = vpack.c.bf16 %v1317, %v1315
  %v2250 = vpack.c.bf16 %v1318, %v1316
  %v2251 = vpack.c.bf16 %v1321, %v1319
  %v2252 = vpack.c.bf16 %v1322, %v1320
  %s2253 = scalar_lea.vmem %s5, 256
  %v2254 = vld [vmem:[%s2253] sm:$0xff]
  %v2255 = vld [vmem:[%s2253 + $0x8] sm:$0xff]
  %v2256 = vld [vmem:[%s2253 + $0x10] sm:$0xff]
  %v2257 = vld [vmem:[%s2253 + $0x18] sm:$0xff]
  %v2258 = vld [vmem:[%s2253 + $0x20] sm:$0xff]
  %v2259 = vld [vmem:[%s2253 + $0x28] sm:$0xff]
  %v2260 = vld [vmem:[%s2253 + $0x30] sm:$0xff]
  %v2261 = vld [vmem:[%s2253 + $0x38] sm:$0xff]
  %v2262 = vld [vmem:[%s2253 + $0x40] sm:$0xff]
  %v2263 = vld [vmem:[%s2253 + $0x48] sm:$0xff]
  %v2264 = vld [vmem:[%s2253 + $0x50] sm:$0xff]
  %v2265 = vld [vmem:[%s2253 + $0x58] sm:$0xff]
  %v2266 = vld [vmem:[%s2253 + $0x60] sm:$0xff]
  %v2267 = vld [vmem:[%s2253 + $0x68] sm:$0xff]
  %v2268 = vld [vmem:[%s2253 + $0x70] sm:$0xff]
  %v2269 = vld [vmem:[%s2253 + $0x78] sm:$0xff]
  %v2270 = vld [vmem:[%s2253 + $0x80] sm:$0xff]
  %v2271 = vld [vmem:[%s2253 + $0x88] sm:$0xff]
  %v2272 = vld [vmem:[%s2253 + $0x90] sm:$0xff]
  %v2273 = vld [vmem:[%s2253 + $0x98] sm:$0xff]
  %v2274 = vld [vmem:[%s2253 + $0xa0] sm:$0xff]
  %v2275 = vld [vmem:[%s2253 + $0xa8] sm:$0xff]
  %v2276 = vld [vmem:[%s2253 + $0xb0] sm:$0xff]
  %v2277 = vld [vmem:[%s2253 + $0xb8] sm:$0xff]
  %v2278 = vld [vmem:[%s2253 + $0xc0] sm:$0xff]
  %v2279 = vld [vmem:[%s2253 + $0xc8] sm:$0xff]
  %v2280 = vld [vmem:[%s2253 + $0xd0] sm:$0xff]
  %v2281 = vld [vmem:[%s2253 + $0xd8] sm:$0xff]
  %v2282 = vld [vmem:[%s2253 + $0xe0] sm:$0xff]
  %v2283 = vld [vmem:[%s2253 + $0xe8] sm:$0xff]
  %v2284 = vld [vmem:[%s2253 + $0xf0] sm:$0xff]
  %v2285 = vld [vmem:[%s2253 + $0xf8] sm:$0xff]
  %v2318 = vunpack.c.l.b16 %v2254
  %v2319 = vunpack.c.h.b16 %v2254
  %v2320 = vunpack.c.l.b16 %v2255
  %v2321 = vunpack.c.h.b16 %v2255
  %v2322 = vunpack.c.l.b16 %v2256
  %v2323 = vunpack.c.h.b16 %v2256
  %v2324 = vunpack.c.l.b16 %v2257
  %v2325 = vunpack.c.h.b16 %v2257
  %v2326 = vunpack.c.l.b16 %v2258
  %v2327 = vunpack.c.h.b16 %v2258
  %v2328 = vunpack.c.l.b16 %v2259
  %v2329 = vunpack.c.h.b16 %v2259
  %v2330 = vunpack.c.l.b16 %v2260
  %v2331 = vunpack.c.h.b16 %v2260
  %v2332 = vunpack.c.l.b16 %v2261
  %v2333 = vunpack.c.h.b16 %v2261
  %v2334 = vunpack.c.l.b16 %v2262
  %v2335 = vunpack.c.h.b16 %v2262
  %v2336 = vunpack.c.l.b16 %v2263
  %v2337 = vunpack.c.h.b16 %v2263
  %v2338 = vunpack.c.l.b16 %v2264
  %v2339 = vunpack.c.h.b16 %v2264
  %v2340 = vunpack.c.l.b16 %v2265
  %v2341 = vunpack.c.h.b16 %v2265
  %v2342 = vunpack.c.l.b16 %v2266
  %v2343 = vunpack.c.h.b16 %v2266
  %v2344 = vunpack.c.l.b16 %v2267
  %v2345 = vunpack.c.h.b16 %v2267
  %v2346 = vunpack.c.l.b16 %v2268
  %v2347 = vunpack.c.h.b16 %v2268
  %v2348 = vunpack.c.l.b16 %v2269
  %v2349 = vunpack.c.h.b16 %v2269
  %v2350 = vunpack.c.l.b16 %v2270
  %v2351 = vunpack.c.h.b16 %v2270
  %v2352 = vunpack.c.l.b16 %v2271
  %v2353 = vunpack.c.h.b16 %v2271
  %v2354 = vunpack.c.l.b16 %v2272
  %v2355 = vunpack.c.h.b16 %v2272
  %v2356 = vunpack.c.l.b16 %v2273
  %v2357 = vunpack.c.h.b16 %v2273
  %v2358 = vunpack.c.l.b16 %v2274
  %v2359 = vunpack.c.h.b16 %v2274
  %v2360 = vunpack.c.l.b16 %v2275
  %v2361 = vunpack.c.h.b16 %v2275
  %v2362 = vunpack.c.l.b16 %v2276
  %v2363 = vunpack.c.h.b16 %v2276
  %v2364 = vunpack.c.l.b16 %v2277
  %v2365 = vunpack.c.h.b16 %v2277
  %v2366 = vunpack.c.l.b16 %v2278
  %v2367 = vunpack.c.h.b16 %v2278
  %v2368 = vunpack.c.l.b16 %v2279
  %v2369 = vunpack.c.h.b16 %v2279
  %v2370 = vunpack.c.l.b16 %v2280
  %v2371 = vunpack.c.h.b16 %v2280
  %v2372 = vunpack.c.l.b16 %v2281
  %v2373 = vunpack.c.h.b16 %v2281
  %v2374 = vunpack.c.l.b16 %v2282
  %v2375 = vunpack.c.h.b16 %v2282
  %v2376 = vunpack.c.l.b16 %v2283
  %v2377 = vunpack.c.h.b16 %v2283
  %v2378 = vunpack.c.l.b16 %v2284
  %v2379 = vunpack.c.h.b16 %v2284
  %v2380 = vunpack.c.l.b16 %v2285
  %v2381 = vunpack.c.h.b16 %v2285
  %v2382 = vpack.c.b16 %v2320, %v2318
  %v2383 = vpack.c.b16 %v2321, %v2319
  %v2384 = vpack.c.b16 %v2324, %v2322
  %v2385 = vpack.c.b16 %v2325, %v2323
  %v2386 = vpack.c.b16 %v2328, %v2326
  %v2387 = vpack.c.b16 %v2329, %v2327
  %v2388 = vpack.c.b16 %v2332, %v2330
  %v2389 = vpack.c.b16 %v2333, %v2331
  %v2390 = vpack.c.b16 %v2336, %v2334
  %v2391 = vpack.c.b16 %v2337, %v2335
  %v2392 = vpack.c.b16 %v2340, %v2338
  %v2393 = vpack.c.b16 %v2341, %v2339
  %v2394 = vpack.c.b16 %v2344, %v2342
  %v2395 = vpack.c.b16 %v2345, %v2343
  %v2396 = vpack.c.b16 %v2348, %v2346
  %v2397 = vpack.c.b16 %v2349, %v2347
  %v2398 = vpack.c.b16 %v2352, %v2350
  %v2399 = vpack.c.b16 %v2353, %v2351
  %v2400 = vpack.c.b16 %v2356, %v2354
  %v2401 = vpack.c.b16 %v2357, %v2355
  %v2402 = vpack.c.b16 %v2360, %v2358
  %v2403 = vpack.c.b16 %v2361, %v2359
  %v2404 = vpack.c.b16 %v2364, %v2362
  %v2405 = vpack.c.b16 %v2365, %v2363
  %v2406 = vpack.c.b16 %v2368, %v2366
  %v2407 = vpack.c.b16 %v2369, %v2367
  %v2408 = vpack.c.b16 %v2372, %v2370
  %v2409 = vpack.c.b16 %v2373, %v2371
  %v2410 = vpack.c.b16 %v2376, %v2374
  %v2411 = vpack.c.b16 %v2377, %v2375
  %v2412 = vpack.c.b16 %v2380, %v2378
  %v2413 = vpack.c.b16 %v2381, %v2379
  %2446 = vmatprep.subr.bf16.mxu0 %v2383
  %2447 = vmatpush1.bf16.msra.mxu0 %v2382
  %2448 = vmatprep.subr.bf16.mxu0 %v2385
  %2449 = vmatpush1.bf16.msra.mxu0 %v2384
  %2450 = vmatprep.subr.bf16.mxu0 %v2387
  %2451 = vmatpush1.bf16.msra.mxu0 %v2386
  %2452 = vmatprep.subr.bf16.mxu0 %v2389
  %2453 = vmatpush1.bf16.msra.mxu0 %v2388
  %2454 = vmatprep.subr.bf16.mxu0 %v2391
  %2455 = vmatpush1.bf16.msra.mxu0 %v2390
  %2456 = vmatprep.subr.bf16.mxu0 %v2393
  %2457 = vmatpush1.bf16.msra.mxu0 %v2392
  %2458 = vmatprep.subr.bf16.mxu0 %v2395
  %2459 = vmatpush1.bf16.msra.mxu0 %v2394
  %2460 = vmatprep.subr.bf16.mxu0 %v2397
  %2461 = vmatpush1.bf16.msra.mxu0 %v2396
  %2462 = vmatprep.subr.bf16.mxu0 %v2399
  %2463 = vmatpush1.bf16.msra.mxu0 %v2398
  %2464 = vmatprep.subr.bf16.mxu0 %v2401
  %2465 = vmatpush1.bf16.msra.mxu0 %v2400
  %2466 = vmatprep.subr.bf16.mxu0 %v2403
  %2467 = vmatpush1.bf16.msra.mxu0 %v2402
  %2468 = vmatprep.subr.bf16.mxu0 %v2405
  %2469 = vmatpush1.bf16.msra.mxu0 %v2404
  %2470 = vmatprep.subr.bf16.mxu0 %v2407
  %2471 = vmatpush1.bf16.msra.mxu0 %v2406
  %2472 = vmatprep.subr.bf16.mxu0 %v2409
  %2473 = vmatpush1.bf16.msra.mxu0 %v2408
  %2474 = vmatprep.subr.bf16.mxu0 %v2411
  %2475 = vmatpush1.bf16.msra.mxu0 %v2410
  %2476 = vmatprep.subr.bf16.mxu0 %v2413
  %2477 = vmatpush1.bf16.msra.mxu0 %v2412
  %2478 = vmatprep.mubr.bf16.mxu0 %v2190
  %2479 = vmatmul.mubr.bf16.gmra.mrb[0].mxu0 %v2189
  %v2480 = vpop.f32.mrb[0].mxu0
  %v2481 = vadd.f32 0.0, %v2480
  %v2482 = vpop.f32.mrb[0].mxu0
  %v2483 = vadd.f32 0.0, %v2482
  %v2484 = vpop.f32.mrb[0].mxu0
  %v2485 = vadd.f32 0.0, %v2484
  %v2486 = vpop.f32.mrb[0].mxu0
  %v2487 = vadd.f32 0.0, %v2486
  %2488 = vmatprep.mubr.bf16.mxu0 %v2192
  %2489 = vmatmul.mubr.bf16.gmra.mrb[0].mxu0 %v2191
  %v2490 = vpop.f32.mrb[0].mxu0
  %v2491 = vadd.f32 0.0, %v2490
  %v2492 = vpop.f32.mrb[0].mxu0
  %v2493 = vadd.f32 0.0, %v2492
  %v2494 = vpop.f32.mrb[0].mxu0
  %v2495 = vadd.f32 0.0, %v2494
  %v2496 = vpop.f32.mrb[0].mxu0
  %v2497 = vadd.f32 0.0, %v2496
  %2498 = vmatprep.mubr.bf16.mxu0 %v2194
  %2499 = vmatmul.mubr.bf16.gmra.mrb[0].mxu0 %v2193
  %v2500 = vpop.f32.mrb[0].mxu0
  %v2501 = vadd.f32 0.0, %v2500
  %v2502 = vpop.f32.mrb[0].mxu0
  %v2503 = vadd.f32 0.0, %v2502
  %v2504 = vpop.f32.mrb[0].mxu0
  %v2505 = vadd.f32 0.0, %v2504
  %v2506 = vpop.f32.mrb[0].mxu0
  %v2507 = vadd.f32 0.0, %v2506
  %2508 = vmatprep.mubr.bf16.mxu0 %v2196
  %2509 = vmatmul.mubr.bf16.gmra.mrb[0].mxu0 %v2195
  %v2510 = vpop.f32.mrb[0].mxu0
  %v2511 = vadd.f32 0.0, %v2510
  %v2512 = vpop.f32.mrb[0].mxu0
  %v2513 = vadd.f32 0.0, %v2512
  %v2514 = vpop.f32.mrb[0].mxu0
  %v2515 = vadd.f32 0.0, %v2514
  %v2516 = vpop.f32.mrb[0].mxu0
  %v2517 = vadd.f32 0.0, %v2516
  %2518 = vmatprep.mubr.bf16.mxu0 %v2198
  %2519 = vmatmul.mubr.bf16.gmra.mrb[0].mxu0 %v2197
  %v2520 = vpop.f32.mrb[0].mxu0
  %v2521 = vadd.f32 0.0, %v2520
  %v2522 = vpop.f32.mrb[0].mxu0
  %v2523 = vadd.f32 0.0, %v2522
  %v2524 = vpop.f32.mrb[0].mxu0
  %v2525 = vadd.f32 0.0, %v2524
  %v2526 = vpop.f32.mrb[0].mxu0
  %v2527 = vadd.f32 0.0, %v2526
  %2528 = vmatprep.mubr.bf16.mxu0 %v2200
  %2529 = vmatmul.mubr.bf16.gmra.mrb[0].mxu0 %v2199
  %v2530 = vpop.f32.mrb[0].mxu0
  %v2531 = vadd.f32 0.0, %v2530
  %v2532 = vpop.f32.mrb[0].mxu0
  %v2533 = vadd.f32 0.0, %v2532
  %v2534 = vpop.f32.mrb[0].mxu0
  %v2535 = vadd.f32 0.0, %v2534
  %v2536 = vpop.f32.mrb[0].mxu0
  %v2537 = vadd.f32 0.0, %v2536
  %2538 = vmatprep.mubr.bf16.mxu0 %v2202
  %2539 = vmatmul.mubr.bf16.gmra.mrb[0].mxu0 %v2201
  %v2540 = vpop.f32.mrb[0].mxu0
  %v2541 = vadd.f32 0.0, %v2540
  %v2542 = vpop.f32.mrb[0].mxu0
  %v2543 = vadd.f32 0.0, %v2542
  %v2544 = vpop.f32.mrb[0].mxu0
  %v2545 = vadd.f32 0.0, %v2544
  %v2546 = vpop.f32.mrb[0].mxu0
  %v2547 = vadd.f32 0.0, %v2546
  %2548 = vmatprep.mubr.bf16.mxu0 %v2204
  %2549 = vmatmul.mubr.bf16.gmra.mrb[0].mxu0 %v2203
  %v2550 = vpop.f32.mrb[0].mxu0
  %v2551 = vadd.f32 0.0, %v2550
  %v2552 = vpop.f32.mrb[0].mxu0
  %v2553 = vadd.f32 0.0, %v2552
  %v2554 = vpop.f32.mrb[0].mxu0
  %v2555 = vadd.f32 0.0, %v2554
  %v2556 = vpop.f32.mrb[0].mxu0
  %v2557 = vadd.f32 0.0, %v2556
  %2558 = vmatprep.mubr.bf16.mxu0 %v2206
  %2559 = vmatmul.mubr.bf16.gmra.mrb[0].mxu0 %v2205
  %v2560 = vpop.f32.mrb[0].mxu0
  %v2561 = vadd.f32 0.0, %v2560
  %v2562 = vpop.f32.mrb[0].mxu0
  %v2563 = vadd.f32 0.0, %v2562
  %v2564 = vpop.f32.mrb[0].mxu0
  %v2565 = vadd.f32 0.0, %v2564
  %v2566 = vpop.f32.mrb[0].mxu0
  %v2567 = vadd.f32 0.0, %v2566
  %2568 = vmatprep.mubr.bf16.mxu0 %v2208
  %2569 = vmatmul.mubr.bf16.gmra.mrb[0].mxu0 %v2207
  %v2570 = vpop.f32.mrb[0].mxu0
  %v2571 = vadd.f32 0.0, %v2570
  %v2572 = vpop.f32.mrb[0].mxu0
  %v2573 = vadd.f32 0.0, %v2572
  %v2574 = vpop.f32.mrb[0].mxu0
  %v2575 = vadd.f32 0.0, %v2574
  %v2576 = vpop.f32.mrb[0].mxu0
  %v2577 = vadd.f32 0.0, %v2576
  %2578 = vmatprep.mubr.bf16.mxu0 %v2210
  %2579 = vmatmul.mubr.bf16.gmra.mrb[0].mxu0 %v2209
  %v2580 = vpop.f32.mrb[0].mxu0
  %v2581 = vadd.f32 0.0, %v2580
  %v2582 = vpop.f32.mrb[0].mxu0
  %v2583 = vadd.f32 0.0, %v2582
  %v2584 = vpop.f32.mrb[0].mxu0
  %v2585 = vadd.f32 0.0, %v2584
  %v2586 = vpop.f32.mrb[0].mxu0
  %v2587 = vadd.f32 0.0, %v2586
  %2588 = vmatprep.mubr.bf16.mxu0 %v2212
  %2589 = vmatmul.mubr.bf16.gmra.mrb[0].mxu0 %v2211
  %v2590 = vpop.f32.mrb[0].mxu0
  %v2591 = vadd.f32 0.0, %v2590
  %v2592 = vpop.f32.mrb[0].mxu0
  %v2593 = vadd.f32 0.0, %v2592
  %v2594 = vpop.f32.mrb[0].mxu0
  %v2595 = vadd.f32 0.0, %v2594
  %v2596 = vpop.f32.mrb[0].mxu0
  %v2597 = vadd.f32 0.0, %v2596
  %2598 = vmatprep.mubr.bf16.mxu0 %v2214
  %2599 = vmatmul.mubr.bf16.gmra.mrb[0].mxu0 %v2213
  %v2600 = vpop.f32.mrb[0].mxu0
  %v2601 = vadd.f32 0.0, %v2600
  %v2602 = vpop.f32.mrb[0].mxu0
  %v2603 = vadd.f32 0.0, %v2602
  %v2604 = vpop.f32.mrb[0].mxu0
  %v2605 = vadd.f32 0.0, %v2604
  %v2606 = vpop.f32.mrb[0].mxu0
  %v2607 = vadd.f32 0.0, %v2606
  %2608 = vmatprep.mubr.bf16.mxu0 %v2216
  %2609 = vmatmul.mubr.bf16.gmra.mrb[0].mxu0 %v2215
  %v2610 = vpop.f32.mrb[0].mxu0
  %v2611 = vadd.f32 0.0, %v2610
  %v2612 = vpop.f32.mrb[0].mxu0
  %v2613 = vadd.f32 0.0, %v2612
  %v2614 = vpop.f32.mrb[0].mxu0
  %v2615 = vadd.f32 0.0, %v2614
  %v2616 = vpop.f32.mrb[0].mxu0
  %v2617 = vadd.f32 0.0, %v2616
  %2618 = vmatprep.mubr.bf16.mxu0 %v2218
  %2619 = vmatmul.mubr.bf16.gmra.mrb[0].mxu0 %v2217
  %v2620 = vpop.f32.mrb[0].mxu0
  %v2621 = vadd.f32 0.0, %v2620
  %v2622 = vpop.f32.mrb[0].mxu0
  %v2623 = vadd.f32 0.0, %v2622
  %v2624 = vpop.f32.mrb[0].mxu0
  %v2625 = vadd.f32 0.0, %v2624
  %v2626 = vpop.f32.mrb[0].mxu0
  %v2627 = vadd.f32 0.0, %v2626
  %2628 = vmatprep.mubr.bf16.mxu0 %v2220
  %2629 = vmatmul.mubr.bf16.gmra.mrb[0].mxu0 %v2219
  %v2630 = vpop.f32.mrb[0].mxu0
  %v2631 = vadd.f32 0.0, %v2630
  %v2632 = vpop.f32.mrb[0].mxu0
  %v2633 = vadd.f32 0.0, %v2632
  %v2634 = vpop.f32.mrb[0].mxu0
  %v2635 = vadd.f32 0.0, %v2634
  %v2636 = vpop.f32.mrb[0].mxu0
  %v2637 = vadd.f32 0.0, %v2636
  %2638 = vmatprep.mubr.bf16.mxu0 %v2222
  %2639 = vmatmul.mubr.bf16.gmra.mrb[0].mxu0 %v2221
  %v2640 = vpop.f32.mrb[0].mxu0
  %v2641 = vadd.f32 0.0, %v2640
  %v2642 = vpop.f32.mrb[0].mxu0
  %v2643 = vadd.f32 0.0, %v2642
  %v2644 = vpop.f32.mrb[0].mxu0
  %v2645 = vadd.f32 0.0, %v2644
  %v2646 = vpop.f32.mrb[0].mxu0
  %v2647 = vadd.f32 0.0, %v2646
  %2648 = vmatprep.mubr.bf16.mxu0 %v2224
  %2649 = vmatmul.mubr.bf16.gmra.mrb[0].mxu0 %v2223
  %v2650 = vpop.f32.mrb[0].mxu0
  %v2651 = vadd.f32 0.0, %v2650
  %v2652 = vpop.f32.mrb[0].mxu0
  %v2653 = vadd.f32 0.0, %v2652
  %v2654 = vpop.f32.mrb[0].mxu0
  %v2655 = vadd.f32 0.0, %v2654
  %v2656 = vpop.f32.mrb[0].mxu0
  %v2657 = vadd.f32 0.0, %v2656
  %2658 = vmatprep.mubr.bf16.mxu0 %v2226
  %2659 = vmatmul.mubr.bf16.gmra.mrb[0].mxu0 %v2225
  %v2660 = vpop.f32.mrb[0].mxu0
  %v2661 = vadd.f32 0.0, %v2660
  %v2662 = vpop.f32.mrb[0].mxu0
  %v2663 = vadd.f32 0.0, %v2662
  %v2664 = vpop.f32.mrb[0].mxu0
  %v2665 = vadd.f32 0.0, %v2664
  %v2666 = vpop.f32.mrb[0].mxu0
  %v2667 = vadd.f32 0.0, %v2666
  %2668 = vmatprep.mubr.bf16.mxu0 %v2228
  %2669 = vmatmul.mubr.bf16.gmra.mrb[0].mxu0 %v2227
  %v2670 = vpop.f32.mrb[0].mxu0
  %v2671 = vadd.f32 0.0, %v2670
  %v2672 = vpop.f32.mrb[0].mxu0
  %v2673 = vadd.f32 0.0, %v2672
  %v2674 = vpop.f32.mrb[0].mxu0
  %v2675 = vadd.f32 0.0, %v2674
  %v2676 = vpop.f32.mrb[0].mxu0
  %v2677 = vadd.f32 0.0, %v2676
  %2678 = vmatprep.mubr.bf16.mxu0 %v2230
  %2679 = vmatmul.mubr.bf16.gmra.mrb[0].mxu0 %v2229
  %v2680 = vpop.f32.mrb[0].mxu0
  %v2681 = vadd.f32 0.0, %v2680
  %v2682 = vpop.f32.mrb[0].mxu0
  %v2683 = vadd.f32 0.0, %v2682
  %v2684 = vpop.f32.mrb[0].mxu0
  %v2685 = vadd.f32 0.0, %v2684
  %v2686 = vpop.f32.mrb[0].mxu0
  %v2687 = vadd.f32 0.0, %v2686
  %2688 = vmatprep.mubr.bf16.mxu0 %v2232
  %2689 = vmatmul.mubr.bf16.gmra.mrb[0].mxu0 %v2231
  %v2690 = vpop.f32.mrb[0].mxu0
  %v2691 = vadd.f32 0.0, %v2690
  %v2692 = vpop.f32.mrb[0].mxu0
  %v2693 = vadd.f32 0.0, %v2692
  %v2694 = vpop.f32.mrb[0].mxu0
  %v2695 = vadd.f32 0.0, %v2694
  %v2696 = vpop.f32.mrb[0].mxu0
  %v2697 = vadd.f32 0.0, %v2696
  %2698 = vmatprep.mubr.bf16.mxu0 %v2234
  %2699 = vmatmul.mubr.bf16.gmra.mrb[0].mxu0 %v2233
  %v2700 = vpop.f32.mrb[0].mxu0
  %v2701 = vadd.f32 0.0, %v2700
  %v2702 = vpop.f32.mrb[0].mxu0
  %v2703 = vadd.f32 0.0, %v2702
  %v2704 = vpop.f32.mrb[0].mxu0
  %v2705 = vadd.f32 0.0, %v2704
  %v2706 = vpop.f32.mrb[0].mxu0
  %v2707 = vadd.f32 0.0, %v2706
  %2708 = vmatprep.mubr.bf16.mxu0 %v2236
  %2709 = vmatmul.mubr.bf16.gmra.mrb[0].mxu0 %v2235
  %v2710 = vpop.f32.mrb[0].mxu0
  %v2711 = vadd.f32 0.0, %v2710
  %v2712 = vpop.f32.mrb[0].mxu0
  %v2713 = vadd.f32 0.0, %v2712
  %v2714 = vpop.f32.mrb[0].mxu0
  %v2715 = vadd.f32 0.0, %v2714
  %v2716 = vpop.f32.mrb[0].mxu0
  %v2717 = vadd.f32 0.0, %v2716
  %2718 = vmatprep.mubr.bf16.mxu0 %v2238
  %2719 = vmatmul.mubr.bf16.gmra.mrb[0].mxu0 %v2237
  %v2720 = vpop.f32.mrb[0].mxu0
  %v2721 = vadd.f32 0.0, %v2720
  %v2722 = vpop.f32.mrb[0].mxu0
  %v2723 = vadd.f32 0.0, %v2722
  %v2724 = vpop.f32.mrb[0].mxu0
  %v2725 = vadd.f32 0.0, %v2724
  %v2726 = vpop.f32.mrb[0].mxu0
  %v2727 = vadd.f32 0.0, %v2726
  %2728 = vmatprep.mubr.bf16.mxu0 %v2240
  %2729 = vmatmul.mubr.bf16.gmra.mrb[0].mxu0 %v2239
  %v2730 = vpop.f32.mrb[0].mxu0
  %v2731 = vadd.f32 0.0, %v2730
  %v2732 = vpop.f32.mrb[0].mxu0
  %v2733 = vadd.f32 0.0, %v2732
  %v2734 = vpop.f32.mrb[0].mxu0
  %v2735 = vadd.f32 0.0, %v2734
  %v2736 = vpop.f32.mrb[0].mxu0
  %v2737 = vadd.f32 0.0, %v2736
  %2738 = vmatprep.mubr.bf16.mxu0 %v2242
  %2739 = vmatmul.mubr.bf16.gmra.mrb[0].mxu0 %v2241
  %v2740 = vpop.f32.mrb[0].mxu0
  %v2741 = vadd.f32 0.0, %v2740
  %v2742 = vpop.f32.mrb[0].mxu0
  %v2743 = vadd.f32 0.0, %v2742
  %v2744 = vpop.f32.mrb[0].mxu0
  %v2745 = vadd.f32 0.0, %v2744
  %v2746 = vpop.f32.mrb[0].mxu0
  %v2747 = vadd.f32 0.0, %v2746
  %2748 = vmatprep.mubr.bf16.mxu0 %v2244
  %2749 = vmatmul.mubr.bf16.gmra.mrb[0].mxu0 %v2243
  %v2750 = vpop.f32.mrb[0].mxu0
  %v2751 = vadd.f32 0.0, %v2750
  %v2752 = vpop.f32.mrb[0].mxu0
  %v2753 = vadd.f32 0.0, %v2752
  %v2754 = vpop.f32.mrb[0].mxu0
  %v2755 = vadd.f32 0.0, %v2754
  %v2756 = vpop.f32.mrb[0].mxu0
  %v2757 = vadd.f32 0.0, %v2756
  %2758 = vmatprep.mubr.bf16.mxu0 %v2246
  %2759 = vmatmul.mubr.bf16.gmra.mrb[0].mxu0 %v2245
  %v2760 = vpop.f32.mrb[0].mxu0
  %v2761 = vadd.f32 0.0, %v2760
  %v2762 = vpop.f32.mrb[0].mxu0
  %v2763 = vadd.f32 0.0, %v2762
  %v2764 = vpop.f32.mrb[0].mxu0
  %v2765 = vadd.f32 0.0, %v2764
  %v2766 = vpop.f32.mrb[0].mxu0
  %v2767 = vadd.f32 0.0, %v2766
  %2768 = vmatprep.mubr.bf16.mxu0 %v2248
  %2769 = vmatmul.mubr.bf16.gmra.mrb[0].mxu0 %v2247
  %v2770 = vpop.f32.mrb[0].mxu0
  %v2771 = vadd.f32 0.0, %v2770
  %v2772 = vpop.f32.mrb[0].mxu0
  %v2773 = vadd.f32 0.0, %v2772
  %v2774 = vpop.f32.mrb[0].mxu0
  %v2775 = vadd.f32 0.0, %v2774
  %v2776 = vpop.f32.mrb[0].mxu0
  %v2777 = vadd.f32 0.0, %v2776
  %2778 = vmatprep.mubr.bf16.mxu0 %v2250
  %2779 = vmatmul.mubr.bf16.gmra.mrb[0].mxu0 %v2249
  %v2780 = vpop.f32.mrb[0].mxu0
  %v2781 = vadd.f32 0.0, %v2780
  %v2782 = vpop.f32.mrb[0].mxu0
  %v2783 = vadd.f32 0.0, %v2782
  %v2784 = vpop.f32.mrb[0].mxu0
  %v2785 = vadd.f32 0.0, %v2784
  %v2786 = vpop.f32.mrb[0].mxu0
  %v2787 = vadd.f32 0.0, %v2786
  %2788 = vmatprep.mubr.bf16.mxu0 %v2252
  %2789 = vmatmul.mubr.bf16.gmra.mrb[0].mxu0 %v2251
  %v2790 = vpop.f32.mrb[0].mxu0
  %v2791 = vadd.f32 0.0, %v2790
  %v2792 = vpop.f32.mrb[0].mxu0
  %v2793 = vadd.f32 0.0, %v2792
  %v2794 = vpop.f32.mrb[0].mxu0
  %v2795 = vadd.f32 0.0, %v2794
  %v2796 = vpop.f32.mrb[0].mxu0
  %v2797 = vadd.f32 0.0, %v2796
  %2798 = vdwg.mxu0
  %v2831 = vunpack.c.l.b16 %v2157
  %v2832 = vunpack.c.h.b16 %v2157
  %v2833 = vunpack.c.l.b16 %v2158
  %v2834 = vunpack.c.h.b16 %v2158
  %v2835 = vunpack.c.l.b16 %v2159
  %v2836 = vunpack.c.h.b16 %v2159
  %v2837 = vunpack.c.l.b16 %v2160
  %v2838 = vunpack.c.h.b16 %v2160
  %v2839 = vunpack.c.l.b16 %v2161
  %v2840 = vunpack.c.h.b16 %v2161
  %v2841 = vunpack.c.l.b16 %v2162
  %v2842 = vunpack.c.h.b16 %v2162
  %v2843 = vunpack.c.l.b16 %v2163
  %v2844 = vunpack.c.h.b16 %v2163
  %v2845 = vunpack.c.l.b16 %v2164
  %v2846 = vunpack.c.h.b16 %v2164
  %v2847 = vunpack.c.l.b16 %v2165
  %v2848 = vunpack.c.h.b16 %v2165
  %v2849 = vunpack.c.l.b16 %v2166
  %v2850 = vunpack.c.h.b16 %v2166
  %v2851 = vunpack.c.l.b16 %v2167
  %v2852 = vunpack.c.h.b16 %v2167
  %v2853 = vunpack.c.l.b16 %v2168
  %v2854 = vunpack.c.h.b16 %v2168
  %v2855 = vunpack.c.l.b16 %v2169
  %v2856 = vunpack.c.h.b16 %v2169
  %v2857 = vunpack.c.l.b16 %v2170
  %v2858 = vunpack.c.h.b16 %v2170
  %v2859 = vunpack.c.l.b16 %v2171
  %v2860 = vunpack.c.h.b16 %v2171
  %v2861 = vunpack.c.l.b16 %v2172
  %v2862 = vunpack.c.h.b16 %v2172
  %v2863 = vunpack.c.l.b16 %v2173
  %v2864 = vunpack.c.h.b16 %v2173
  %v2865 = vunpack.c.l.b16 %v2174
  %v2866 = vunpack.c.h.b16 %v2174
  %v2867 = vunpack.c.l.b16 %v2175
  %v2868 = vunpack.c.h.b16 %v2175
  %v2869 = vunpack.c.l.b16 %v2176
  %v2870 = vunpack.c.h.b16 %v2176
  %v2871 = vunpack.c.l.b16 %v2177
  %v2872 = vunpack.c.h.b16 %v2177
  %v2873 = vunpack.c.l.b16 %v2178
  %v2874 = vunpack.c.h.b16 %v2178
  %v2875 = vunpack.c.l.b16 %v2179
  %v2876 = vunpack.c.h.b16 %v2179
  %v2877 = vunpack.c.l.b16 %v2180
  %v2878 = vunpack.c.h.b16 %v2180
  %v2879 = vunpack.c.l.b16 %v2181
  %v2880 = vunpack.c.h.b16 %v2181
  %v2881 = vunpack.c.l.b16 %v2182
  %v2882 = vunpack.c.h.b16 %v2182
  %v2883 = vunpack.c.l.b16 %v2183
  %v2884 = vunpack.c.h.b16 %v2183
  %v2885 = vunpack.c.l.b16 %v2184
  %v2886 = vunpack.c.h.b16 %v2184
  %v2887 = vunpack.c.l.b16 %v2185
  %v2888 = vunpack.c.h.b16 %v2185
  %v2889 = vunpack.c.l.b16 %v2186
  %v2890 = vunpack.c.h.b16 %v2186
  %v2891 = vunpack.c.l.b16 %v2187
  %v2892 = vunpack.c.h.b16 %v2187
  %v2893 = vunpack.c.l.b16 %v2188
  %v2894 = vunpack.c.h.b16 %v2188
  %v2895 = vpack.c.b16 %v2833, %v2831
  %v2896 = vpack.c.b16 %v2834, %v2832
  %v2897 = vpack.c.b16 %v2837, %v2835
  %v2898 = vpack.c.b16 %v2838, %v2836
  %v2899 = vpack.c.b16 %v2841, %v2839
  %v2900 = vpack.c.b16 %v2842, %v2840
  %v2901 = vpack.c.b16 %v2845, %v2843
  %v2902 = vpack.c.b16 %v2846, %v2844
  %v2903 = vpack.c.b16 %v2849, %v2847
  %v2904 = vpack.c.b16 %v2850, %v2848
  %v2905 = vpack.c.b16 %v2853, %v2851
  %v2906 = vpack.c.b16 %v2854, %v2852
  %v2907 = vpack.c.b16 %v2857, %v2855
  %v2908 = vpack.c.b16 %v2858, %v2856
  %v2909 = vpack.c.b16 %v2861, %v2859
  %v2910 = vpack.c.b16 %v2862, %v2860
  %v2911 = vpack.c.b16 %v2865, %v2863
  %v2912 = vpack.c.b16 %v2866, %v2864
  %v2913 = vpack.c.b16 %v2869, %v2867
  %v2914 = vpack.c.b16 %v2870, %v2868
  %v2915 = vpack.c.b16 %v2873, %v2871
  %v2916 = vpack.c.b16 %v2874, %v2872
  %v2917 = vpack.c.b16 %v2877, %v2875
  %v2918 = vpack.c.b16 %v2878, %v2876
  %v2919 = vpack.c.b16 %v2881, %v2879
  %v2920 = vpack.c.b16 %v2882, %v2880
  %v2921 = vpack.c.b16 %v2885, %v2883
  %v2922 = vpack.c.b16 %v2886, %v2884
  %v2923 = vpack.c.b16 %v2889, %v2887
  %v2924 = vpack.c.b16 %v2890, %v2888
  %v2925 = vpack.c.b16 %v2893, %v2891
  %v2926 = vpack.c.b16 %v2894, %v2892
  %2959 = vmatprep.subr.bf16.mxu0 %v2896
  %2960 = vmatpush1.bf16.msra.mxu0 %v2895
  %2961 = vmatprep.subr.bf16.mxu0 %v2898
  %2962 = vmatpush1.bf16.msra.mxu0 %v2897
  %2963 = vmatprep.subr.bf16.mxu0 %v2900
  %2964 = vmatpush1.bf16.msra.mxu0 %v2899
  %2965 = vmatprep.subr.bf16.mxu0 %v2902
  %2966 = vmatpush1.bf16.msra.mxu0 %v2901
  %2967 = vmatprep.subr.bf16.mxu0 %v2904
  %2968 = vmatpush1.bf16.msra.mxu0 %v2903
  %2969 = vmatprep.subr.bf16.mxu0 %v2906
  %2970 = vmatpush1.bf16.msra.mxu0 %v2905
  %2971 = vmatprep.subr.bf16.mxu0 %v2908
  %2972 = vmatpush1.bf16.msra.mxu0 %v2907
  %2973 = vmatprep.subr.bf16.mxu0 %v2910
  %2974 = vmatpush1.bf16.msra.mxu0 %v2909
  %2975 = vmatprep.subr.bf16.mxu0 %v2912
  %2976 = vmatpush1.bf16.msra.mxu0 %v2911
  %2977 = vmatprep.subr.bf16.mxu0 %v2914
  %2978 = vmatpush1.bf16.msra.mxu0 %v2913
  %2979 = vmatprep.subr.bf16.mxu0 %v2916
  %2980 = vmatpush1.bf16.msra.mxu0 %v2915
  %2981 = vmatprep.subr.bf16.mxu0 %v2918
  %2982 = vmatpush1.bf16.msra.mxu0 %v2917
  %2983 = vmatprep.subr.bf16.mxu0 %v2920
  %2984 = vmatpush1.bf16.msra.mxu0 %v2919
  %2985 = vmatprep.subr.bf16.mxu0 %v2922
  %2986 = vmatpush1.bf16.msra.mxu0 %v2921
  %2987 = vmatprep.subr.bf16.mxu0 %v2924
  %2988 = vmatpush1.bf16.msra.mxu0 %v2923
  %2989 = vmatprep.subr.bf16.mxu0 %v2926
  %2990 = vmatpush1.bf16.msra.mxu0 %v2925
  %2991 = vmatprep.mubr.bf16.mxu0 %v2094
  %2992 = vmatmul.mubr.bf16.gmra.mrb[0].mxu0 %v2093
  %v2993 = vpop.f32.mrb[0].mxu0
  %v2994 = vadd.f32 %v2481, %v2993
  %v2995 = vpop.f32.mrb[0].mxu0
  %v2996 = vadd.f32 %v2483, %v2995
  %v2997 = vpop.f32.mrb[0].mxu0
  %v2998 = vadd.f32 %v2485, %v2997
  %v2999 = vpop.f32.mrb[0].mxu0
  %v3000 = vadd.f32 %v2487, %v2999
  %3001 = vmatprep.mubr.bf16.mxu0 %v2096
  %3002 = vmatmul.mubr.bf16.gmra.mrb[0].mxu0 %v2095
  %v3003 = vpop.f32.mrb[0].mxu0
  %v3004 = vadd.f32 %v2491, %v3003
  %v3005 = vpop.f32.mrb[0].mxu0
  %v3006 = vadd.f32 %v2493, %v3005
  %v3007 = vpop.f32.mrb[0].mxu0
  %v3008 = vadd.f32 %v2495, %v3007
  %v3009 = vpop.f32.mrb[0].mxu0
  %v3010 = vadd.f32 %v2497, %v3009
  %3011 = vmatprep.mubr.bf16.mxu0 %v2098
  %3012 = vmatmul.mubr.bf16.gmra.mrb[0].mxu0 %v2097
  %v3013 = vpop.f32.mrb[0].mxu0
  %v3014 = vadd.f32 %v2501, %v3013
  %v3015 = vpop.f32.mrb[0].mxu0
  %v3016 = vadd.f32 %v2503, %v3015
  %v3017 = vpop.f32.mrb[0].mxu0
  %v3018 = vadd.f32 %v2505, %v3017
  %v3019 = vpop.f32.mrb[0].mxu0
  %v3020 = vadd.f32 %v2507, %v3019
  %3021 = vmatprep.mubr.bf16.mxu0 %v2100
  %3022 = vmatmul.mubr.bf16.gmra.mrb[0].mxu0 %v2099
  %v3023 = vpop.f32.mrb[0].mxu0
  %v3024 = vadd.f32 %v2511, %v3023
  %v3025 = vpop.f32.mrb[0].mxu0
  %v3026 = vadd.f32 %v2513, %v3025
  %v3027 = vpop.f32.mrb[0].mxu0
  %v3028 = vadd.f32 %v2515, %v3027
  %v3029 = vpop.f32.mrb[0].mxu0
  %v3030 = vadd.f32 %v2517, %v3029
  %3031 = vmatprep.mubr.bf16.mxu0 %v2102
  %3032 = vmatmul.mubr.bf16.gmra.mrb[0].mxu0 %v2101
  %v3033 = vpop.f32.mrb[0].mxu0
  %v3034 = vadd.f32 %v2521, %v3033
  %v3035 = vpop.f32.mrb[0].mxu0
  %v3036 = vadd.f32 %v2523, %v3035
  %v3037 = vpop.f32.mrb[0].mxu0
  %v3038 = vadd.f32 %v2525, %v3037
  %v3039 = vpop.f32.mrb[0].mxu0
  %v3040 = vadd.f32 %v2527, %v3039
  %3041 = vmatprep.mubr.bf16.mxu0 %v2104
  %3042 = vmatmul.mubr.bf16.gmra.mrb[0].mxu0 %v2103
  %v3043 = vpop.f32.mrb[0].mxu0
  %v3044 = vadd.f32 %v2531, %v3043
  %v3045 = vpop.f32.mrb[0].mxu0
  %v3046 = vadd.f32 %v2533, %v3045
  %v3047 = vpop.f32.mrb[0].mxu0
  %v3048 = vadd.f32 %v2535, %v3047
  %v3049 = vpop.f32.mrb[0].mxu0
  %v3050 = vadd.f32 %v2537, %v3049
  %3051 = vmatprep.mubr.bf16.mxu0 %v2106
  %3052 = vmatmul.mubr.bf16.gmra.mrb[0].mxu0 %v2105
  %v3053 = vpop.f32.mrb[0].mxu0
  %v3054 = vadd.f32 %v2541, %v3053
  %v3055 = vpop.f32.mrb[0].mxu0
  %v3056 = vadd.f32 %v2543, %v3055
  %v3057 = vpop.f32.mrb[0].mxu0
  %v3058 = vadd.f32 %v2545, %v3057
  %v3059 = vpop.f32.mrb[0].mxu0
  %v3060 = vadd.f32 %v2547, %v3059
  %3061 = vmatprep.mubr.bf16.mxu0 %v2108
  %3062 = vmatmul.mubr.bf16.gmra.mrb[0].mxu0 %v2107
  %v3063 = vpop.f32.mrb[0].mxu0
  %v3064 = vadd.f32 %v2551, %v3063
  %v3065 = vpop.f32.mrb[0].mxu0
  %v3066 = vadd.f32 %v2553, %v3065
  %v3067 = vpop.f32.mrb[0].mxu0
  %v3068 = vadd.f32 %v2555, %v3067
  %v3069 = vpop.f32.mrb[0].mxu0
  %v3070 = vadd.f32 %v2557, %v3069
  %3071 = vmatprep.mubr.bf16.mxu0 %v2110
  %3072 = vmatmul.mubr.bf16.gmra.mrb[0].mxu0 %v2109
  %v3073 = vpop.f32.mrb[0].mxu0
  %v3074 = vadd.f32 %v2561, %v3073
  %v3075 = vpop.f32.mrb[0].mxu0
  %v3076 = vadd.f32 %v2563, %v3075
  %v3077 = vpop.f32.mrb[0].mxu0
  %v3078 = vadd.f32 %v2565, %v3077
  %v3079 = vpop.f32.mrb[0].mxu0
  %v3080 = vadd.f32 %v2567, %v3079
  %3081 = vmatprep.mubr.bf16.mxu0 %v2112
  %3082 = vmatmul.mubr.bf16.gmra.mrb[0].mxu0 %v2111
  %v3083 = vpop.f32.mrb[0].mxu0
  %v3084 = vadd.f32 %v2571, %v3083
  %v3085 = vpop.f32.mrb[0].mxu0
  %v3086 = vadd.f32 %v2573, %v3085
  %v3087 = vpop.f32.mrb[0].mxu0
  %v3088 = vadd.f32 %v2575, %v3087
  %v3089 = vpop.f32.mrb[0].mxu0
  %v3090 = vadd.f32 %v2577, %v3089
  %3091 = vmatprep.mubr.bf16.mxu0 %v2114
  %3092 = vmatmul.mubr.bf16.gmra.mrb[0].mxu0 %v2113
  %v3093 = vpop.f32.mrb[0].mxu0
  %v3094 = vadd.f32 %v2581, %v3093
  %v3095 = vpop.f32.mrb[0].mxu0
  %v3096 = vadd.f32 %v2583, %v3095
  %v3097 = vpop.f32.mrb[0].mxu0
  %v3098 = vadd.f32 %v2585, %v3097
  %v3099 = vpop.f32.mrb[0].mxu0
  %v3100 = vadd.f32 %v2587, %v3099
  %3101 = vmatprep.mubr.bf16.mxu0 %v2116
  %3102 = vmatmul.mubr.bf16.gmra.mrb[0].mxu0 %v2115
  %v3103 = vpop.f32.mrb[0].mxu0
  %v3104 = vadd.f32 %v2591, %v3103
  %v3105 = vpop.f32.mrb[0].mxu0
  %v3106 = vadd.f32 %v2593, %v3105
  %v3107 = vpop.f32.mrb[0].mxu0
  %v3108 = vadd.f32 %v2595, %v3107
  %v3109 = vpop.f32.mrb[0].mxu0
  %v3110 = vadd.f32 %v2597, %v3109
  %3111 = vmatprep.mubr.bf16.mxu0 %v2118
  %3112 = vmatmul.mubr.bf16.gmra.mrb[0].mxu0 %v2117
  %v3113 = vpop.f32.mrb[0].mxu0
  %v3114 = vadd.f32 %v2601, %v3113
  %v3115 = vpop.f32.mrb[0].mxu0
  %v3116 = vadd.f32 %v2603, %v3115
  %v3117 = vpop.f32.mrb[0].mxu0
  %v3118 = vadd.f32 %v2605, %v3117
  %v3119 = vpop.f32.mrb[0].mxu0
  %v3120 = vadd.f32 %v2607, %v3119
  %3121 = vmatprep.mubr.bf16.mxu0 %v2120
  %3122 = vmatmul.mubr.bf16.gmra.mrb[0].mxu0 %v2119
  %v3123 = vpop.f32.mrb[0].mxu0
  %v3124 = vadd.f32 %v2611, %v3123
  %v3125 = vpop.f32.mrb[0].mxu0
  %v3126 = vadd.f32 %v2613, %v3125
  %v3127 = vpop.f32.mrb[0].mxu0
  %v3128 = vadd.f32 %v2615, %v3127
  %v3129 = vpop.f32.mrb[0].mxu0
  %v3130 = vadd.f32 %v2617, %v3129
  %3131 = vmatprep.mubr.bf16.mxu0 %v2122
  %3132 = vmatmul.mubr.bf16.gmra.mrb[0].mxu0 %v2121
  %v3133 = vpop.f32.mrb[0].mxu0
  %v3134 = vadd.f32 %v2621, %v3133
  %v3135 = vpop.f32.mrb[0].mxu0
  %v3136 = vadd.f32 %v2623, %v3135
  %v3137 = vpop.f32.mrb[0].mxu0
  %v3138 = vadd.f32 %v2625, %v3137
  %v3139 = vpop.f32.mrb[0].mxu0
  %v3140 = vadd.f32 %v2627, %v3139
  %3141 = vmatprep.mubr.bf16.mxu0 %v2124
  %3142 = vmatmul.mubr.bf16.gmra.mrb[0].mxu0 %v2123
  %v3143 = vpop.f32.mrb[0].mxu0
  %v3144 = vadd.f32 %v2631, %v3143
  %v3145 = vpop.f32.mrb[0].mxu0
  %v3146 = vadd.f32 %v2633, %v3145
  %v3147 = vpop.f32.mrb[0].mxu0
  %v3148 = vadd.f32 %v2635, %v3147
  %v3149 = vpop.f32.mrb[0].mxu0
  %v3150 = vadd.f32 %v2637, %v3149
  %3151 = vmatprep.mubr.bf16.mxu0 %v2126
  %3152 = vmatmul.mubr.bf16.gmra.mrb[0].mxu0 %v2125
  %v3153 = vpop.f32.mrb[0].mxu0
  %v3154 = vadd.f32 %v2641, %v3153
  %v3155 = vpop.f32.mrb[0].mxu0
  %v3156 = vadd.f32 %v2643, %v3155
  %v3157 = vpop.f32.mrb[0].mxu0
  %v3158 = vadd.f32 %v2645, %v3157
  %v3159 = vpop.f32.mrb[0].mxu0
  %v3160 = vadd.f32 %v2647, %v3159
  %3161 = vmatprep.mubr.bf16.mxu0 %v2128
  %3162 = vmatmul.mubr.bf16.gmra.mrb[0].mxu0 %v2127
  %v3163 = vpop.f32.mrb[0].mxu0
  %v3164 = vadd.f32 %v2651, %v3163
  %v3165 = vpop.f32.mrb[0].mxu0
  %v3166 = vadd.f32 %v2653, %v3165
  %v3167 = vpop.f32.mrb[0].mxu0
  %v3168 = vadd.f32 %v2655, %v3167
  %v3169 = vpop.f32.mrb[0].mxu0
  %v3170 = vadd.f32 %v2657, %v3169
  %3171 = vmatprep.mubr.bf16.mxu0 %v2130
  %3172 = vmatmul.mubr.bf16.gmra.mrb[0].mxu0 %v2129
  %v3173 = vpop.f32.mrb[0].mxu0
  %v3174 = vadd.f32 %v2661, %v3173
  %v3175 = vpop.f32.mrb[0].mxu0
  %v3176 = vadd.f32 %v2663, %v3175
  %v3177 = vpop.f32.mrb[0].mxu0
  %v3178 = vadd.f32 %v2665, %v3177
  %v3179 = vpop.f32.mrb[0].mxu0
  %v3180 = vadd.f32 %v2667, %v3179
  %3181 = vmatprep.mubr.bf16.mxu0 %v2132
  %3182 = vmatmul.mubr.bf16.gmra.mrb[0].mxu0 %v2131
  %v3183 = vpop.f32.mrb[0].mxu0
  %v3184 = vadd.f32 %v2671, %v3183
  %v3185 = vpop.f32.mrb[0].mxu0
  %v3186 = vadd.f32 %v2673, %v3185
  %v3187 = vpop.f32.mrb[0].mxu0
  %v3188 = vadd.f32 %v2675, %v3187
  %v3189 = vpop.f32.mrb[0].mxu0
  %v3190 = vadd.f32 %v2677, %v3189
  %3191 = vmatprep.mubr.bf16.mxu0 %v2134
  %3192 = vmatmul.mubr.bf16.gmra.mrb[0].mxu0 %v2133
  %v3193 = vpop.f32.mrb[0].mxu0
  %v3194 = vadd.f32 %v2681, %v3193
  %v3195 = vpop.f32.mrb[0].mxu0
  %v3196 = vadd.f32 %v2683, %v3195
  %v3197 = vpop.f32.mrb[0].mxu0
  %v3198 = vadd.f32 %v2685, %v3197
  %v3199 = vpop.f32.mrb[0].mxu0
  %v3200 = vadd.f32 %v2687, %v3199
  %3201 = vmatprep.mubr.bf16.mxu0 %v2136
  %3202 = vmatmul.mubr.bf16.gmra.mrb[0].mxu0 %v2135
  %v3203 = vpop.f32.mrb[0].mxu0
  %v3204 = vadd.f32 %v2691, %v3203
  %v3205 = vpop.f32.mrb[0].mxu0
  %v3206 = vadd.f32 %v2693, %v3205
  %v3207 = vpop.f32.mrb[0].mxu0
  %v3208 = vadd.f32 %v2695, %v3207
  %v3209 = vpop.f32.mrb[0].mxu0
  %v3210 = vadd.f32 %v2697, %v3209
  %3211 = vmatprep.mubr.bf16.mxu0 %v2138
  %3212 = vmatmul.mubr.bf16.gmra.mrb[0].mxu0 %v2137
  %v3213 = vpop.f32.mrb[0].mxu0
  %v3214 = vadd.f32 %v2701, %v3213
  %v3215 = vpop.f32.mrb[0].mxu0
  %v3216 = vadd.f32 %v2703, %v3215
  %v3217 = vpop.f32.mrb[0].mxu0
  %v3218 = vadd.f32 %v2705, %v3217
  %v3219 = vpop.f32.mrb[0].mxu0
  %v3220 = vadd.f32 %v2707, %v3219
  %3221 = vmatprep.mubr.bf16.mxu0 %v2140
  %3222 = vmatmul.mubr.bf16.gmra.mrb[0].mxu0 %v2139
  %v3223 = vpop.f32.mrb[0].mxu0
  %v3224 = vadd.f32 %v2711, %v3223
  %v3225 = vpop.f32.mrb[0].mxu0
  %v3226 = vadd.f32 %v2713, %v3225
  %v3227 = vpop.f32.mrb[0].mxu0
  %v3228 = vadd.f32 %v2715, %v3227
  %v3229 = vpop.f32.mrb[0].mxu0
  %v3230 = vadd.f32 %v2717, %v3229
  %3231 = vmatprep.mubr.bf16.mxu0 %v2142
  %3232 = vmatmul.mubr.bf16.gmra.mrb[0].mxu0 %v2141
  %v3233 = vpop.f32.mrb[0].mxu0
  %v3234 = vadd.f32 %v2721, %v3233
  %v3235 = vpop.f32.mrb[0].mxu0
  %v3236 = vadd.f32 %v2723, %v3235
  %v3237 = vpop.f32.mrb[0].mxu0
  %v3238 = vadd.f32 %v2725, %v3237
  %v3239 = vpop.f32.mrb[0].mxu0
  %v3240 = vadd.f32 %v2727, %v3239
  %3241 = vmatprep.mubr.bf16.mxu0 %v2144
  %3242 = vmatmul.mubr.bf16.gmra.mrb[0].mxu0 %v2143
  %v3243 = vpop.f32.mrb[0].mxu0
  %v3244 = vadd.f32 %v2731, %v3243
  %v3245 = vpop.f32.mrb[0].mxu0
  %v3246 = vadd.f32 %v2733, %v3245
  %v3247 = vpop.f32.mrb[0].mxu0
  %v3248 = vadd.f32 %v2735, %v3247
  %v3249 = vpop.f32.mrb[0].mxu0
  %v3250 = vadd.f32 %v2737, %v3249
  %3251 = vmatprep.mubr.bf16.mxu0 %v2146
  %3252 = vmatmul.mubr.bf16.gmra.mrb[0].mxu0 %v2145
  %v3253 = vpop.f32.mrb[0].mxu0
  %v3254 = vadd.f32 %v2741, %v3253
  %v3255 = vpop.f32.mrb[0].mxu0
  %v3256 = vadd.f32 %v2743, %v3255
  %v3257 = vpop.f32.mrb[0].mxu0
  %v3258 = vadd.f32 %v2745, %v3257
  %v3259 = vpop.f32.mrb[0].mxu0
  %v3260 = vadd.f32 %v2747, %v3259
  %3261 = vmatprep.mubr.bf16.mxu0 %v2148
  %3262 = vmatmul.mubr.bf16.gmra.mrb[0].mxu0 %v2147
  %v3263 = vpop.f32.mrb[0].mxu0
  %v3264 = vadd.f32 %v2751, %v3263
  %v3265 = vpop.f32.mrb[0].mxu0
  %v3266 = vadd.f32 %v2753, %v3265
  %v3267 = vpop.f32.mrb[0].mxu0
  %v3268 = vadd.f32 %v2755, %v3267
  %v3269 = vpop.f32.mrb[0].mxu0
  %v3270 = vadd.f32 %v2757, %v3269
  %3271 = vmatprep.mubr.bf16.mxu0 %v2150
  %3272 = vmatmul.mubr.bf16.gmra.mrb[0].mxu0 %v2149
  %v3273 = vpop.f32.mrb[0].mxu0
  %v3274 = vadd.f32 %v2761, %v3273
  %v3275 = vpop.f32.mrb[0].mxu0
  %v3276 = vadd.f32 %v2763, %v3275
  %v3277 = vpop.f32.mrb[0].mxu0
  %v3278 = vadd.f32 %v2765, %v3277
  %v3279 = vpop.f32.mrb[0].mxu0
  %v3280 = vadd.f32 %v2767, %v3279
  %3281 = vmatprep.mubr.bf16.mxu0 %v2152
  %3282 = vmatmul.mubr.bf16.gmra.mrb[0].mxu0 %v2151
  %v3283 = vpop.f32.mrb[0].mxu0
  %v3284 = vadd.f32 %v2771, %v3283
  %v3285 = vpop.f32.mrb[0].mxu0
  %v3286 = vadd.f32 %v2773, %v3285
  %v3287 = vpop.f32.mrb[0].mxu0
  %v3288 = vadd.f32 %v2775, %v3287
  %v3289 = vpop.f32.mrb[0].mxu0
  %v3290 = vadd.f32 %v2777, %v3289
  %3291 = vmatprep.mubr.bf16.mxu0 %v2154
  %3292 = vmatmul.mubr.bf16.gmra.mrb[0].mxu0 %v2153
  %v3293 = vpop.f32.mrb[0].mxu0
  %v3294 = vadd.f32 %v2781, %v3293
  %v3295 = vpop.f32.mrb[0].mxu0
  %v3296 = vadd.f32 %v2783, %v3295
  %v3297 = vpop.f32.mrb[0].mxu0
  %v3298 = vadd.f32 %v2785, %v3297
  %v3299 = vpop.f32.mrb[0].mxu0
  %v3300 = vadd.f32 %v2787, %v3299
  %3301 = vmatprep.mubr.bf16.mxu0 %v2156
  %3302 = vmatmul.mubr.bf16.gmra.mrb[0].mxu0 %v2155
  %v3303 = vpop.f32.mrb[0].mxu0
  %v3304 = vadd.f32 %v2791, %v3303
  %v3305 = vpop.f32.mrb[0].mxu0
  %v3306 = vadd.f32 %v2793, %v3305
  %v3307 = vpop.f32.mrb[0].mxu0
  %v3308 = vadd.f32 %v2795, %v3307
  %v3309 = vpop.f32.mrb[0].mxu0
  %v3310 = vadd.f32 %v2797, %v3309
  %3311 = vdwg.mxu0
  %v3312 = vpack.c.bf16 %v1967, %v1965
  %v3313 = vpack.c.bf16 %v1968, %v1966
  %v3314 = vpack.c.bf16 %v1971, %v1969
  %v3315 = vpack.c.bf16 %v1972, %v1970
  %v3316 = vpack.c.bf16 %v1975, %v1973
  %v3317 = vpack.c.bf16 %v1976, %v1974
  %v3318 = vpack.c.bf16 %v1979, %v1977
  %v3319 = vpack.c.bf16 %v1980, %v1978
  %v3320 = vpack.c.bf16 %v1983, %v1981
  %v3321 = vpack.c.bf16 %v1984, %v1982
  %v3322 = vpack.c.bf16 %v1987, %v1985
  %v3323 = vpack.c.bf16 %v1988, %v1986
  %v3324 = vpack.c.bf16 %v1991, %v1989
  %v3325 = vpack.c.bf16 %v1992, %v1990
  %v3326 = vpack.c.bf16 %v1995, %v1993
  %v3327 = vpack.c.bf16 %v1996, %v1994
  %v3328 = vpack.c.bf16 %v1999, %v1997
  %v3329 = vpack.c.bf16 %v2000, %v1998
  %v3330 = vpack.c.bf16 %v2003, %v2001
  %v3331 = vpack.c.bf16 %v2004, %v2002
  %v3332 = vpack.c.bf16 %v2007, %v2005
  %v3333 = vpack.c.bf16 %v2008, %v2006
  %v3334 = vpack.c.bf16 %v2011, %v2009
  %v3335 = vpack.c.bf16 %v2012, %v2010
  %v3336 = vpack.c.bf16 %v2015, %v2013
  %v3337 = vpack.c.bf16 %v2016, %v2014
  %v3338 = vpack.c.bf16 %v2019, %v2017
  %v3339 = vpack.c.bf16 %v2020, %v2018
  %v3340 = vpack.c.bf16 %v2023, %v2021
  %v3341 = vpack.c.bf16 %v2024, %v2022
  %v3342 = vpack.c.bf16 %v2027, %v2025
  %v3343 = vpack.c.bf16 %v2028, %v2026
  %v3344 = vpack.c.bf16 %v2031, %v2029
  %v3345 = vpack.c.bf16 %v2032, %v2030
  %v3346 = vpack.c.bf16 %v2035, %v2033
  %v3347 = vpack.c.bf16 %v2036, %v2034
  %v3348 = vpack.c.bf16 %v2039, %v2037
  %v3349 = vpack.c.bf16 %v2040, %v2038
  %v3350 = vpack.c.bf16 %v2043, %v2041
  %v3351 = vpack.c.bf16 %v2044, %v2042
  %v3352 = vpack.c.bf16 %v2047, %v2045
  %v3353 = vpack.c.bf16 %v2048, %v2046
  %v3354 = vpack.c.bf16 %v2051, %v2049
  %v3355 = vpack.c.bf16 %v2052, %v2050
  %v3356 = vpack.c.bf16 %v2055, %v2053
  %v3357 = vpack.c.bf16 %v2056, %v2054
  %v3358 = vpack.c.bf16 %v2059, %v2057
  %v3359 = vpack.c.bf16 %v2060, %v2058
  %v3360 = vpack.c.bf16 %v2063, %v2061
  %v3361 = vpack.c.bf16 %v2064, %v2062
  %v3362 = vpack.c.bf16 %v2067, %v2065
  %v3363 = vpack.c.bf16 %v2068, %v2066
  %v3364 = vpack.c.bf16 %v2071, %v2069
  %v3365 = vpack.c.bf16 %v2072, %v2070
  %v3366 = vpack.c.bf16 %v2075, %v2073
  %v3367 = vpack.c.bf16 %v2076, %v2074
  %v3368 = vpack.c.bf16 %v2079, %v2077
  %v3369 = vpack.c.bf16 %v2080, %v2078
  %v3370 = vpack.c.bf16 %v2083, %v2081
  %v3371 = vpack.c.bf16 %v2084, %v2082
  %v3372 = vpack.c.bf16 %v2087, %v2085
  %v3373 = vpack.c.bf16 %v2088, %v2086
  %v3374 = vpack.c.bf16 %v2091, %v2089
  %v3375 = vpack.c.bf16 %v2092, %v2090
  %s3376 = scalar_lea.vmem %s5, 512
  %v3377 = vld [vmem:[%s3376] sm:$0xff]
  %v3378 = vld [vmem:[%s3376 + $0x8] sm:$0xff]
  %v3379 = vld [vmem:[%s3376 + $0x10] sm:$0xff]
  %v3380 = vld [vmem:[%s3376 + $0x18] sm:$0xff]
  %v3381 = vld [vmem:[%s3376 + $0x20] sm:$0xff]
  %v3382 = vld [vmem:[%s3376 + $0x28] sm:$0xff]
  %v3383 = vld [vmem:[%s3376 + $0x30] sm:$0xff]
  %v3384 = vld [vmem:[%s3376 + $0x38] sm:$0xff]
  %v3385 = vld [vmem:[%s3376 + $0x40] sm:$0xff]
  %v3386 = vld [vmem:[%s3376 + $0x48] sm:$0xff]
  %v3387 = vld [vmem:[%s3376 + $0x50] sm:$0xff]
  %v3388 = vld [vmem:[%s3376 + $0x58] sm:$0xff]
  %v3389 = vld [vmem:[%s3376 + $0x60] sm:$0xff]
  %v3390 = vld [vmem:[%s3376 + $0x68] sm:$0xff]
  %v3391 = vld [vmem:[%s3376 + $0x70] sm:$0xff]
  %v3392 = vld [vmem:[%s3376 + $0x78] sm:$0xff]
  %v3393 = vld [vmem:[%s3376 + $0x80] sm:$0xff]
  %v3394 = vld [vmem:[%s3376 + $0x88] sm:$0xff]
  %v3395 = vld [vmem:[%s3376 + $0x90] sm:$0xff]
  %v3396 = vld [vmem:[%s3376 + $0x98] sm:$0xff]
  %v3397 = vld [vmem:[%s3376 + $0xa0] sm:$0xff]
  %v3398 = vld [vmem:[%s3376 + $0xa8] sm:$0xff]
  %v3399 = vld [vmem:[%s3376 + $0xb0] sm:$0xff]
  %v3400 = vld [vmem:[%s3376 + $0xb8] sm:$0xff]
  %v3401 = vld [vmem:[%s3376 + $0xc0] sm:$0xff]
  %v3402 = vld [vmem:[%s3376 + $0xc8] sm:$0xff]
  %v3403 = vld [vmem:[%s3376 + $0xd0] sm:$0xff]
  %v3404 = vld [vmem:[%s3376 + $0xd8] sm:$0xff]
  %v3405 = vld [vmem:[%s3376 + $0xe0] sm:$0xff]
  %v3406 = vld [vmem:[%s3376 + $0xe8] sm:$0xff]
  %v3407 = vld [vmem:[%s3376 + $0xf0] sm:$0xff]
  %v3408 = vld [vmem:[%s3376 + $0xf8] sm:$0xff]
  %v3441 = vunpack.c.l.b16 %v3377
  %v3442 = vunpack.c.h.b16 %v3377
  %v3443 = vunpack.c.l.b16 %v3378
  %v3444 = vunpack.c.h.b16 %v3378
  %v3445 = vunpack.c.l.b16 %v3379
  %v3446 = vunpack.c.h.b16 %v3379
  %v3447 = vunpack.c.l.b16 %v3380
  %v3448 = vunpack.c.h.b16 %v3380
  %v3449 = vunpack.c.l.b16 %v3381
  %v3450 = vunpack.c.h.b16 %v3381
  %v3451 = vunpack.c.l.b16 %v3382
  %v3452 = vunpack.c.h.b16 %v3382
  %v3453 = vunpack.c.l.b16 %v3383
  %v3454 = vunpack.c.h.b16 %v3383
  %v3455 = vunpack.c.l.b16 %v3384
  %v3456 = vunpack.c.h.b16 %v3384
  %v3457 = vunpack.c.l.b16 %v3385
  %v3458 = vunpack.c.h.b16 %v3385
  %v3459 = vunpack.c.l.b16 %v3386
  %v3460 = vunpack.c.h.b16 %v3386
  %v3461 = vunpack.c.l.b16 %v3387
  %v3462 = vunpack.c.h.b16 %v3387
  %v3463 = vunpack.c.l.b16 %v3388
  %v3464 = vunpack.c.h.b16 %v3388
  %v3465 = vunpack.c.l.b16 %v3389
  %v3466 = vunpack.c.h.b16 %v3389
  %v3467 = vunpack.c.l.b16 %v3390
  %v3468 = vunpack.c.h.b16 %v3390
  %v3469 = vunpack.c.l.b16 %v3391
  %v3470 = vunpack.c.h.b16 %v3391
  %v3471 = vunpack.c.l.b16 %v3392
  %v3472 = vunpack.c.h.b16 %v3392
  %v3473 = vunpack.c.l.b16 %v3393
  %v3474 = vunpack.c.h.b16 %v3393
  %v3475 = vunpack.c.l.b16 %v3394
  %v3476 = vunpack.c.h.b16 %v3394
  %v3477 = vunpack.c.l.b16 %v3395
  %v3478 = vunpack.c.h.b16 %v3395
  %v3479 = vunpack.c.l.b16 %v3396
  %v3480 = vunpack.c.h.b16 %v3396
  %v3481 = vunpack.c.l.b16 %v3397
  %v3482 = vunpack.c.h.b16 %v3397
  %v3483 = vunpack.c.l.b16 %v3398
  %v3484 = vunpack.c.h.b16 %v3398
  %v3485 = vunpack.c.l.b16 %v3399
  %v3486 = vunpack.c.h.b16 %v3399
  %v3487 = vunpack.c.l.b16 %v3400
  %v3488 = vunpack.c.h.b16 %v3400
  %v3489 = vunpack.c.l.b16 %v3401
  %v3490 = vunpack.c.h.b16 %v3401
  %v3491 = vunpack.c.l.b16 %v3402
  %v3492 = vunpack.c.h.b16 %v3402
  %v3493 = vunpack.c.l.b16 %v3403
  %v3494 = vunpack.c.h.b16 %v3403
  %v3495 = vunpack.c.l.b16 %v3404
  %v3496 = vunpack.c.h.b16 %v3404
  %v3497 = vunpack.c.l.b16 %v3405
  %v3498 = vunpack.c.h.b16 %v3405
  %v3499 = vunpack.c.l.b16 %v3406
  %v3500 = vunpack.c.h.b16 %v3406
  %v3501 = vunpack.c.l.b16 %v3407
  %v3502 = vunpack.c.h.b16 %v3407
  %v3503 = vunpack.c.l.b16 %v3408
  %v3504 = vunpack.c.h.b16 %v3408
  %v3505 = vpack.c.b16 %v3443, %v3441
  %v3506 = vpack.c.b16 %v3444, %v3442
  %v3507 = vpack.c.b16 %v3447, %v3445
  %v3508 = vpack.c.b16 %v3448, %v3446
  %v3509 = vpack.c.b16 %v3451, %v3449
  %v3510 = vpack.c.b16 %v3452, %v3450
  %v3511 = vpack.c.b16 %v3455, %v3453
  %v3512 = vpack.c.b16 %v3456, %v3454
  %v3513 = vpack.c.b16 %v3459, %v3457
  %v3514 = vpack.c.b16 %v3460, %v3458
  %v3515 = vpack.c.b16 %v3463, %v3461
  %v3516 = vpack.c.b16 %v3464, %v3462
  %v3517 = vpack.c.b16 %v3467, %v3465
  %v3518 = vpack.c.b16 %v3468, %v3466
  %v3519 = vpack.c.b16 %v3471, %v3469
  %v3520 = vpack.c.b16 %v3472, %v3470
  %v3521 = vpack.c.b16 %v3475, %v3473
  %v3522 = vpack.c.b16 %v3476, %v3474
  %v3523 = vpack.c.b16 %v3479, %v3477
  %v3524 = vpack.c.b16 %v3480, %v3478
  %v3525 = vpack.c.b16 %v3483, %v3481
  %v3526 = vpack.c.b16 %v3484, %v3482
  %v3527 = vpack.c.b16 %v3487, %v3485
  %v3528 = vpack.c.b16 %v3488, %v3486
  %v3529 = vpack.c.b16 %v3491, %v3489
  %v3530 = vpack.c.b16 %v3492, %v3490
  %v3531 = vpack.c.b16 %v3495, %v3493
  %v3532 = vpack.c.b16 %v3496, %v3494
  %v3533 = vpack.c.b16 %v3499, %v3497
  %v3534 = vpack.c.b16 %v3500, %v3498
  %v3535 = vpack.c.b16 %v3503, %v3501
  %v3536 = vpack.c.b16 %v3504, %v3502
  %3569 = vmatprep.subr.bf16.mxu0 %v3506
  %3570 = vmatpush1.bf16.msra.mxu0 %v3505
  %3571 = vmatprep.subr.bf16.mxu0 %v3508
  %3572 = vmatpush1.bf16.msra.mxu0 %v3507
  %3573 = vmatprep.subr.bf16.mxu0 %v3510
  %3574 = vmatpush1.bf16.msra.mxu0 %v3509
  %3575 = vmatprep.subr.bf16.mxu0 %v3512
  %3576 = vmatpush1.bf16.msra.mxu0 %v3511
  %3577 = vmatprep.subr.bf16.mxu0 %v3514
  %3578 = vmatpush1.bf16.msra.mxu0 %v3513
  %3579 = vmatprep.subr.bf16.mxu0 %v3516
  %3580 = vmatpush1.bf16.msra.mxu0 %v3515
  %3581 = vmatprep.subr.bf16.mxu0 %v3518
  %3582 = vmatpush1.bf16.msra.mxu0 %v3517
  %3583 = vmatprep.subr.bf16.mxu0 %v3520
  %3584 = vmatpush1.bf16.msra.mxu0 %v3519
  %3585 = vmatprep.subr.bf16.mxu0 %v3522
  %3586 = vmatpush1.bf16.msra.mxu0 %v3521
  %3587 = vmatprep.subr.bf16.mxu0 %v3524
  %3588 = vmatpush1.bf16.msra.mxu0 %v3523
  %3589 = vmatprep.subr.bf16.mxu0 %v3526
  %3590 = vmatpush1.bf16.msra.mxu0 %v3525
  %3591 = vmatprep.subr.bf16.mxu0 %v3528
  %3592 = vmatpush1.bf16.msra.mxu0 %v3527
  %3593 = vmatprep.subr.bf16.mxu0 %v3530
  %3594 = vmatpush1.bf16.msra.mxu0 %v3529
  %3595 = vmatprep.subr.bf16.mxu0 %v3532
  %3596 = vmatpush1.bf16.msra.mxu0 %v3531
  %3597 = vmatprep.subr.bf16.mxu0 %v3534
  %3598 = vmatpush1.bf16.msra.mxu0 %v3533
  %3599 = vmatprep.subr.bf16.mxu0 %v3536
  %3600 = vmatpush1.bf16.msra.mxu0 %v3535
  %3601 = vmatprep.mubr.bf16.mxu0 %v3313
  %3602 = vmatmul.mubr.bf16.gmra.mrb[0].mxu0 %v3312
  %v3603 = vpop.f32.mrb[0].mxu0
  %v3604 = vadd.f32 0.0, %v3603
  %v3605 = vpop.f32.mrb[0].mxu0
  %v3606 = vadd.f32 0.0, %v3605
  %v3607 = vpop.f32.mrb[0].mxu0
  %v3608 = vadd.f32 0.0, %v3607
  %v3609 = vpop.f32.mrb[0].mxu0
  %v3610 = vadd.f32 0.0, %v3609
  %3611 = vmatprep.mubr.bf16.mxu0 %v3315
  %3612 = vmatmul.mubr.bf16.gmra.mrb[0].mxu0 %v3314
  %v3613 = vpop.f32.mrb[0].mxu0
  %v3614 = vadd.f32 0.0, %v3613
  %v3615 = vpop.f32.mrb[0].mxu0
  %v3616 = vadd.f32 0.0, %v3615
  %v3617 = vpop.f32.mrb[0].mxu0
  %v3618 = vadd.f32 0.0, %v3617
  %v3619 = vpop.f32.mrb[0].mxu0
  %v3620 = vadd.f32 0.0, %v3619
  %3621 = vmatprep.mubr.bf16.mxu0 %v3317
  %3622 = vmatmul.mubr.bf16.gmra.mrb[0].mxu0 %v3316
  %v3623 = vpop.f32.mrb[0].mxu0
  %v3624 = vadd.f32 0.0, %v3623
  %v3625 = vpop.f32.mrb[0].mxu0
  %v3626 = vadd.f32 0.0, %v3625
  %v3627 = vpop.f32.mrb[0].mxu0
  %v3628 = vadd.f32 0.0, %v3627
  %v3629 = vpop.f32.mrb[0].mxu0
  %v3630 = vadd.f32 0.0, %v3629
  %3631 = vmatprep.mubr.bf16.mxu0 %v3319
  %3632 = vmatmul.mubr.bf16.gmra.mrb[0].mxu0 %v3318
  %v3633 = vpop.f32.mrb[0].mxu0
  %v3634 = vadd.f32 0.0, %v3633
  %v3635 = vpop.f32.mrb[0].mxu0
  %v3636 = vadd.f32 0.0, %v3635
  %v3637 = vpop.f32.mrb[0].mxu0
  %v3638 = vadd.f32 0.0, %v3637
  %v3639 = vpop.f32.mrb[0].mxu0
  %v3640 = vadd.f32 0.0, %v3639
  %3641 = vmatprep.mubr.bf16.mxu0 %v3321
  %3642 = vmatmul.mubr.bf16.gmra.mrb[0].mxu0 %v3320
  %v3643 = vpop.f32.mrb[0].mxu0
  %v3644 = vadd.f32 0.0, %v3643
  %v3645 = vpop.f32.mrb[0].mxu0
  %v3646 = vadd.f32 0.0, %v3645
  %v3647 = vpop.f32.mrb[0].mxu0
  %v3648 = vadd.f32 0.0, %v3647
  %v3649 = vpop.f32.mrb[0].mxu0
  %v3650 = vadd.f32 0.0, %v3649
  %3651 = vmatprep.mubr.bf16.mxu0 %v3323
  %3652 = vmatmul.mubr.bf16.gmra.mrb[0].mxu0 %v3322
  %v3653 = vpop.f32.mrb[0].mxu0
  %v3654 = vadd.f32 0.0, %v3653
  %v3655 = vpop.f32.mrb[0].mxu0
  %v3656 = vadd.f32 0.0, %v3655
  %v3657 = vpop.f32.mrb[0].mxu0
  %v3658 = vadd.f32 0.0, %v3657
  %v3659 = vpop.f32.mrb[0].mxu0
  %v3660 = vadd.f32 0.0, %v3659
  %3661 = vmatprep.mubr.bf16.mxu0 %v3325
  %3662 = vmatmul.mubr.bf16.gmra.mrb[0].mxu0 %v3324
  %v3663 = vpop.f32.mrb[0].mxu0
  %v3664 = vadd.f32 0.0, %v3663
  %v3665 = vpop.f32.mrb[0].mxu0
  %v3666 = vadd.f32 0.0, %v3665
  %v3667 = vpop.f32.mrb[0].mxu0
  %v3668 = vadd.f32 0.0, %v3667
  %v3669 = vpop.f32.mrb[0].mxu0
  %v3670 = vadd.f32 0.0, %v3669
  %3671 = vmatprep.mubr.bf16.mxu0 %v3327
  %3672 = vmatmul.mubr.bf16.gmra.mrb[0].mxu0 %v3326
  %v3673 = vpop.f32.mrb[0].mxu0
  %v3674 = vadd.f32 0.0, %v3673
  %v3675 = vpop.f32.mrb[0].mxu0
  %v3676 = vadd.f32 0.0, %v3675
  %v3677 = vpop.f32.mrb[0].mxu0
  %v3678 = vadd.f32 0.0, %v3677
  %v3679 = vpop.f32.mrb[0].mxu0
  %v3680 = vadd.f32 0.0, %v3679
  %3681 = vmatprep.mubr.bf16.mxu0 %v3329
  %3682 = vmatmul.mubr.bf16.gmra.mrb[0].mxu0 %v3328
  %v3683 = vpop.f32.mrb[0].mxu0
  %v3684 = vadd.f32 0.0, %v3683
  %v3685 = vpop.f32.mrb[0].mxu0
  %v3686 = vadd.f32 0.0, %v3685
  %v3687 = vpop.f32.mrb[0].mxu0
  %v3688 = vadd.f32 0.0, %v3687
  %v3689 = vpop.f32.mrb[0].mxu0
  %v3690 = vadd.f32 0.0, %v3689
  %3691 = vmatprep.mubr.bf16.mxu0 %v3331
  %3692 = vmatmul.mubr.bf16.gmra.mrb[0].mxu0 %v3330
  %v3693 = vpop.f32.mrb[0].mxu0
  %v3694 = vadd.f32 0.0, %v3693
  %v3695 = vpop.f32.mrb[0].mxu0
  %v3696 = vadd.f32 0.0, %v3695
  %v3697 = vpop.f32.mrb[0].mxu0
  %v3698 = vadd.f32 0.0, %v3697
  %v3699 = vpop.f32.mrb[0].mxu0
  %v3700 = vadd.f32 0.0, %v3699
  %3701 = vmatprep.mubr.bf16.mxu0 %v3333
  %3702 = vmatmul.mubr.bf16.gmra.mrb[0].mxu0 %v3332
  %v3703 = vpop.f32.mrb[0].mxu0
  %v3704 = vadd.f32 0.0, %v3703
  %v3705 = vpop.f32.mrb[0].mxu0
  %v3706 = vadd.f32 0.0, %v3705
  %v3707 = vpop.f32.mrb[0].mxu0
  %v3708 = vadd.f32 0.0, %v3707
  %v3709 = vpop.f32.mrb[0].mxu0
  %v3710 = vadd.f32 0.0, %v3709
  %3711 = vmatprep.mubr.bf16.mxu0 %v3335
  %3712 = vmatmul.mubr.bf16.gmra.mrb[0].mxu0 %v3334
  %v3713 = vpop.f32.mrb[0].mxu0
  %v3714 = vadd.f32 0.0, %v3713
  %v3715 = vpop.f32.mrb[0].mxu0
  %v3716 = vadd.f32 0.0, %v3715
  %v3717 = vpop.f32.mrb[0].mxu0
  %v3718 = vadd.f32 0.0, %v3717
  %v3719 = vpop.f32.mrb[0].mxu0
  %v3720 = vadd.f32 0.0, %v3719
  %3721 = vmatprep.mubr.bf16.mxu0 %v3337
  %3722 = vmatmul.mubr.bf16.gmra.mrb[0].mxu0 %v3336
  %v3723 = vpop.f32.mrb[0].mxu0
  %v3724 = vadd.f32 0.0, %v3723
  %v3725 = vpop.f32.mrb[0].mxu0
  %v3726 = vadd.f32 0.0, %v3725
  %v3727 = vpop.f32.mrb[0].mxu0
  %v3728 = vadd.f32 0.0, %v3727
  %v3729 = vpop.f32.mrb[0].mxu0
  %v3730 = vadd.f32 0.0, %v3729
  %3731 = vmatprep.mubr.bf16.mxu0 %v3339
  %3732 = vmatmul.mubr.bf16.gmra.mrb[0].mxu0 %v3338
  %v3733 = vpop.f32.mrb[0].mxu0
  %v3734 = vadd.f32 0.0, %v3733
  %v3735 = vpop.f32.mrb[0].mxu0
  %v3736 = vadd.f32 0.0, %v3735
  %v3737 = vpop.f32.mrb[0].mxu0
  %v3738 = vadd.f32 0.0, %v3737
  %v3739 = vpop.f32.mrb[0].mxu0
  %v3740 = vadd.f32 0.0, %v3739
  %3741 = vmatprep.mubr.bf16.mxu0 %v3341
  %3742 = vmatmul.mubr.bf16.gmra.mrb[0].mxu0 %v3340
  %v3743 = vpop.f32.mrb[0].mxu0
  %v3744 = vadd.f32 0.0, %v3743
  %v3745 = vpop.f32.mrb[0].mxu0
  %v3746 = vadd.f32 0.0, %v3745
  %v3747 = vpop.f32.mrb[0].mxu0
  %v3748 = vadd.f32 0.0, %v3747
  %v3749 = vpop.f32.mrb[0].mxu0
  %v3750 = vadd.f32 0.0, %v3749
  %3751 = vmatprep.mubr.bf16.mxu0 %v3343
  %3752 = vmatmul.mubr.bf16.gmra.mrb[0].mxu0 %v3342
  %v3753 = vpop.f32.mrb[0].mxu0
  %v3754 = vadd.f32 0.0, %v3753
  %v3755 = vpop.f32.mrb[0].mxu0
  %v3756 = vadd.f32 0.0, %v3755
  %v3757 = vpop.f32.mrb[0].mxu0
  %v3758 = vadd.f32 0.0, %v3757
  %v3759 = vpop.f32.mrb[0].mxu0
  %v3760 = vadd.f32 0.0, %v3759
  %3761 = vmatprep.mubr.bf16.mxu0 %v3345
  %3762 = vmatmul.mubr.bf16.gmra.mrb[0].mxu0 %v3344
  %v3763 = vpop.f32.mrb[0].mxu0
  %v3764 = vadd.f32 0.0, %v3763
  %v3765 = vpop.f32.mrb[0].mxu0
  %v3766 = vadd.f32 0.0, %v3765
  %v3767 = vpop.f32.mrb[0].mxu0
  %v3768 = vadd.f32 0.0, %v3767
  %v3769 = vpop.f32.mrb[0].mxu0
  %v3770 = vadd.f32 0.0, %v3769
  %3771 = vmatprep.mubr.bf16.mxu0 %v3347
  %3772 = vmatmul.mubr.bf16.gmra.mrb[0].mxu0 %v3346
  %v3773 = vpop.f32.mrb[0].mxu0
  %v3774 = vadd.f32 0.0, %v3773
  %v3775 = vpop.f32.mrb[0].mxu0
  %v3776 = vadd.f32 0.0, %v3775
  %v3777 = vpop.f32.mrb[0].mxu0
  %v3778 = vadd.f32 0.0, %v3777
  %v3779 = vpop.f32.mrb[0].mxu0
  %v3780 = vadd.f32 0.0, %v3779
  %3781 = vmatprep.mubr.bf16.mxu0 %v3349
  %3782 = vmatmul.mubr.bf16.gmra.mrb[0].mxu0 %v3348
  %v3783 = vpop.f32.mrb[0].mxu0
  %v3784 = vadd.f32 0.0, %v3783
  %v3785 = vpop.f32.mrb[0].mxu0
  %v3786 = vadd.f32 0.0, %v3785
  %v3787 = vpop.f32.mrb[0].mxu0
  %v3788 = vadd.f32 0.0, %v3787
  %v3789 = vpop.f32.mrb[0].mxu0
  %v3790 = vadd.f32 0.0, %v3789
  %3791 = vmatprep.mubr.bf16.mxu0 %v3351
  %3792 = vmatmul.mubr.bf16.gmra.mrb[0].mxu0 %v3350
  %v3793 = vpop.f32.mrb[0].mxu0
  %v3794 = vadd.f32 0.0, %v3793
  %v3795 = vpop.f32.mrb[0].mxu0
  %v3796 = vadd.f32 0.0, %v3795
  %v3797 = vpop.f32.mrb[0].mxu0
  %v3798 = vadd.f32 0.0, %v3797
  %v3799 = vpop.f32.mrb[0].mxu0
  %v3800 = vadd.f32 0.0, %v3799
  %3801 = vmatprep.mubr.bf16.mxu0 %v3353
  %3802 = vmatmul.mubr.bf16.gmra.mrb[0].mxu0 %v3352
  %v3803 = vpop.f32.mrb[0].mxu0
  %v3804 = vadd.f32 0.0, %v3803
  %v3805 = vpop.f32.mrb[0].mxu0
  %v3806 = vadd.f32 0.0, %v3805
  %v3807 = vpop.f32.mrb[0].mxu0
  %v3808 = vadd.f32 0.0, %v3807
  %v3809 = vpop.f32.mrb[0].mxu0
  %v3810 = vadd.f32 0.0, %v3809
  %3811 = vmatprep.mubr.bf16.mxu0 %v3355
  %3812 = vmatmul.mubr.bf16.gmra.mrb[0].mxu0 %v3354
  %v3813 = vpop.f32.mrb[0].mxu0
  %v3814 = vadd.f32 0.0, %v3813
  %v3815 = vpop.f32.mrb[0].mxu0
  %v3816 = vadd.f32 0.0, %v3815
  %v3817 = vpop.f32.mrb[0].mxu0
  %v3818 = vadd.f32 0.0, %v3817
  %v3819 = vpop.f32.mrb[0].mxu0
  %v3820 = vadd.f32 0.0, %v3819
  %3821 = vmatprep.mubr.bf16.mxu0 %v3357
  %3822 = vmatmul.mubr.bf16.gmra.mrb[0].mxu0 %v3356
  %v3823 = vpop.f32.mrb[0].mxu0
  %v3824 = vadd.f32 0.0, %v3823
  %v3825 = vpop.f32.mrb[0].mxu0
  %v3826 = vadd.f32 0.0, %v3825
  %v3827 = vpop.f32.mrb[0].mxu0
  %v3828 = vadd.f32 0.0, %v3827
  %v3829 = vpop.f32.mrb[0].mxu0
  %v3830 = vadd.f32 0.0, %v3829
  %3831 = vmatprep.mubr.bf16.mxu0 %v3359
  %3832 = vmatmul.mubr.bf16.gmra.mrb[0].mxu0 %v3358
  %v3833 = vpop.f32.mrb[0].mxu0
  %v3834 = vadd.f32 0.0, %v3833
  %v3835 = vpop.f32.mrb[0].mxu0
  %v3836 = vadd.f32 0.0, %v3835
  %v3837 = vpop.f32.mrb[0].mxu0
  %v3838 = vadd.f32 0.0, %v3837
  %v3839 = vpop.f32.mrb[0].mxu0
  %v3840 = vadd.f32 0.0, %v3839
  %3841 = vmatprep.mubr.bf16.mxu0 %v3361
  %3842 = vmatmul.mubr.bf16.gmra.mrb[0].mxu0 %v3360
  %v3843 = vpop.f32.mrb[0].mxu0
  %v3844 = vadd.f32 0.0, %v3843
  %v3845 = vpop.f32.mrb[0].mxu0
  %v3846 = vadd.f32 0.0, %v3845
  %v3847 = vpop.f32.mrb[0].mxu0
  %v3848 = vadd.f32 0.0, %v3847
  %v3849 = vpop.f32.mrb[0].mxu0
  %v3850 = vadd.f32 0.0, %v3849
  %3851 = vmatprep.mubr.bf16.mxu0 %v3363
  %3852 = vmatmul.mubr.bf16.gmra.mrb[0].mxu0 %v3362
  %v3853 = vpop.f32.mrb[0].mxu0
  %v3854 = vadd.f32 0.0, %v3853
  %v3855 = vpop.f32.mrb[0].mxu0
  %v3856 = vadd.f32 0.0, %v3855
  %v3857 = vpop.f32.mrb[0].mxu0
  %v3858 = vadd.f32 0.0, %v3857
  %v3859 = vpop.f32.mrb[0].mxu0
  %v3860 = vadd.f32 0.0, %v3859
  %3861 = vmatprep.mubr.bf16.mxu0 %v3365
  %3862 = vmatmul.mubr.bf16.gmra.mrb[0].mxu0 %v3364
  %v3863 = vpop.f32.mrb[0].mxu0
  %v3864 = vadd.f32 0.0, %v3863
  %v3865 = vpop.f32.mrb[0].mxu0
  %v3866 = vadd.f32 0.0, %v3865
  %v3867 = vpop.f32.mrb[0].mxu0
  %v3868 = vadd.f32 0.0, %v3867
  %v3869 = vpop.f32.mrb[0].mxu0
  %v3870 = vadd.f32 0.0, %v3869
  %3871 = vmatprep.mubr.bf16.mxu0 %v3367
  %3872 = vmatmul.mubr.bf16.gmra.mrb[0].mxu0 %v3366
  %v3873 = vpop.f32.mrb[0].mxu0
  %v3874 = vadd.f32 0.0, %v3873
  %v3875 = vpop.f32.mrb[0].mxu0
  %v3876 = vadd.f32 0.0, %v3875
  %v3877 = vpop.f32.mrb[0].mxu0
  %v3878 = vadd.f32 0.0, %v3877
  %v3879 = vpop.f32.mrb[0].mxu0
  %v3880 = vadd.f32 0.0, %v3879
  %3881 = vmatprep.mubr.bf16.mxu0 %v3369
  %3882 = vmatmul.mubr.bf16.gmra.mrb[0].mxu0 %v3368
  %v3883 = vpop.f32.mrb[0].mxu0
  %v3884 = vadd.f32 0.0, %v3883
  %v3885 = vpop.f32.mrb[0].mxu0
  %v3886 = vadd.f32 0.0, %v3885
  %v3887 = vpop.f32.mrb[0].mxu0
  %v3888 = vadd.f32 0.0, %v3887
  %v3889 = vpop.f32.mrb[0].mxu0
  %v3890 = vadd.f32 0.0, %v3889
  %3891 = vmatprep.mubr.bf16.mxu0 %v3371
  %3892 = vmatmul.mubr.bf16.gmra.mrb[0].mxu0 %v3370
  %v3893 = vpop.f32.mrb[0].mxu0
  %v3894 = vadd.f32 0.0, %v3893
  %v3895 = vpop.f32.mrb[0].mxu0
  %v3896 = vadd.f32 0.0, %v3895
  %v3897 = vpop.f32.mrb[0].mxu0
  %v3898 = vadd.f32 0.0, %v3897
  %v3899 = vpop.f32.mrb[0].mxu0
  %v3900 = vadd.f32 0.0, %v3899
  %3901 = vmatprep.mubr.bf16.mxu0 %v3373
  %3902 = vmatmul.mubr.bf16.gmra.mrb[0].mxu0 %v3372
  %v3903 = vpop.f32.mrb[0].mxu0
  %v3904 = vadd.f32 0.0, %v3903
  %v3905 = vpop.f32.mrb[0].mxu0
  %v3906 = vadd.f32 0.0, %v3905
  %v3907 = vpop.f32.mrb[0].mxu0
  %v3908 = vadd.f32 0.0, %v3907
  %v3909 = vpop.f32.mrb[0].mxu0
  %v3910 = vadd.f32 0.0, %v3909
  %3911 = vmatprep.mubr.bf16.mxu0 %v3375
  %3912 = vmatmul.mubr.bf16.gmra.mrb[0].mxu0 %v3374
  %v3913 = vpop.f32.mrb[0].mxu0
  %v3914 = vadd.f32 0.0, %v3913
  %v3915 = vpop.f32.mrb[0].mxu0
  %v3916 = vadd.f32 0.0, %v3915
  %v3917 = vpop.f32.mrb[0].mxu0
  %v3918 = vadd.f32 0.0, %v3917
  %v3919 = vpop.f32.mrb[0].mxu0
  %v3920 = vadd.f32 0.0, %v3919
  %3921 = vdwg.mxu0
  %v3922 = vadd.f32 %v2994, %v3604
  %v3923 = vadd.f32 %v2996, %v3606
  %v3924 = vadd.f32 %v2998, %v3608
  %v3925 = vadd.f32 %v3000, %v3610
  %v3926 = vadd.f32 %v3004, %v3614
  %v3927 = vadd.f32 %v3006, %v3616
  %v3928 = vadd.f32 %v3008, %v3618
  %v3929 = vadd.f32 %v3010, %v3620
  %v3930 = vadd.f32 %v3014, %v3624
  %v3931 = vadd.f32 %v3016, %v3626
  %v3932 = vadd.f32 %v3018, %v3628
  %v3933 = vadd.f32 %v3020, %v3630
  %v3934 = vadd.f32 %v3024, %v3634
  %v3935 = vadd.f32 %v3026, %v3636
  %v3936 = vadd.f32 %v3028, %v3638
  %v3937 = vadd.f32 %v3030, %v3640
  %v3938 = vadd.f32 %v3034, %v3644
  %v3939 = vadd.f32 %v3036, %v3646
  %v3940 = vadd.f32 %v3038, %v3648
  %v3941 = vadd.f32 %v3040, %v3650
  %v3942 = vadd.f32 %v3044, %v3654
  %v3943 = vadd.f32 %v3046, %v3656
  %v3944 = vadd.f32 %v3048, %v3658
  %v3945 = vadd.f32 %v3050, %v3660
  %v3946 = vadd.f32 %v3054, %v3664
  %v3947 = vadd.f32 %v3056, %v3666
  %v3948 = vadd.f32 %v3058, %v3668
  %v3949 = vadd.f32 %v3060, %v3670
  %v3950 = vadd.f32 %v3064, %v3674
  %v3951 = vadd.f32 %v3066, %v3676
  %v3952 = vadd.f32 %v3068, %v3678
  %v3953 = vadd.f32 %v3070, %v3680
  %v3954 = vadd.f32 %v3074, %v3684
  %v3955 = vadd.f32 %v3076, %v3686
  %v3956 = vadd.f32 %v3078, %v3688
  %v3957 = vadd.f32 %v3080, %v3690
  %v3958 = vadd.f32 %v3084, %v3694
  %v3959 = vadd.f32 %v3086, %v3696
  %v3960 = vadd.f32 %v3088, %v3698
  %v3961 = vadd.f32 %v3090, %v3700
  %v3962 = vadd.f32 %v3094, %v3704
  %v3963 = vadd.f32 %v3096, %v3706
  %v3964 = vadd.f32 %v3098, %v3708
  %v3965 = vadd.f32 %v3100, %v3710
  %v3966 = vadd.f32 %v3104, %v3714
  %v3967 = vadd.f32 %v3106, %v3716
  %v3968 = vadd.f32 %v3108, %v3718
  %v3969 = vadd.f32 %v3110, %v3720
  %v3970 = vadd.f32 %v3114, %v3724
  %v3971 = vadd.f32 %v3116, %v3726
  %v3972 = vadd.f32 %v3118, %v3728
  %v3973 = vadd.f32 %v3120, %v3730
  %v3974 = vadd.f32 %v3124, %v3734
  %v3975 = vadd.f32 %v3126, %v3736
  %v3976 = vadd.f32 %v3128, %v3738
  %v3977 = vadd.f32 %v3130, %v3740
  %v3978 = vadd.f32 %v3134, %v3744
  %v3979 = vadd.f32 %v3136, %v3746
  %v3980 = vadd.f32 %v3138, %v3748
  %v3981 = vadd.f32 %v3140, %v3750
  %v3982 = vadd.f32 %v3144, %v3754
  %v3983 = vadd.f32 %v3146, %v3756
  %v3984 = vadd.f32 %v3148, %v3758
  %v3985 = vadd.f32 %v3150, %v3760
  %v3986 = vadd.f32 %v3154, %v3764
  %v3987 = vadd.f32 %v3156, %v3766
  %v3988 = vadd.f32 %v3158, %v3768
  %v3989 = vadd.f32 %v3160, %v3770
  %v3990 = vadd.f32 %v3164, %v3774
  %v3991 = vadd.f32 %v3166, %v3776
  %v3992 = vadd.f32 %v3168, %v3778
  %v3993 = vadd.f32 %v3170, %v3780
  %v3994 = vadd.f32 %v3174, %v3784
  %v3995 = vadd.f32 %v3176, %v3786
  %v3996 = vadd.f32 %v3178, %v3788
  %v3997 = vadd.f32 %v3180, %v3790
  %v3998 = vadd.f32 %v3184, %v3794
  %v3999 = vadd.f32 %v3186, %v3796
  %v4000 = vadd.f32 %v3188, %v3798
  %v4001 = vadd.f32 %v3190, %v3800
  %v4002 = vadd.f32 %v3194, %v3804
  %v4003 = vadd.f32 %v3196, %v3806
  %v4004 = vadd.f32 %v3198, %v3808
  %v4005 = vadd.f32 %v3200, %v3810
  %v4006 = vadd.f32 %v3204, %v3814
  %v4007 = vadd.f32 %v3206, %v3816
  %v4008 = vadd.f32 %v3208, %v3818
  %v4009 = vadd.f32 %v3210, %v3820
  %v4010 = vadd.f32 %v3214, %v3824
  %v4011 = vadd.f32 %v3216, %v3826
  %v4012 = vadd.f32 %v3218, %v3828
  %v4013 = vadd.f32 %v3220, %v3830
  %v4014 = vadd.f32 %v3224, %v3834
  %v4015 = vadd.f32 %v3226, %v3836
  %v4016 = vadd.f32 %v3228, %v3838
  %v4017 = vadd.f32 %v3230, %v3840
  %v4018 = vadd.f32 %v3234, %v3844
  %v4019 = vadd.f32 %v3236, %v3846
  %v4020 = vadd.f32 %v3238, %v3848
  %v4021 = vadd.f32 %v3240, %v3850
  %v4022 = vadd.f32 %v3244, %v3854
  %v4023 = vadd.f32 %v3246, %v3856
  %v4024 = vadd.f32 %v3248, %v3858
  %v4025 = vadd.f32 %v3250, %v3860
  %v4026 = vadd.f32 %v3254, %v3864
  %v4027 = vadd.f32 %v3256, %v3866
  %v4028 = vadd.f32 %v3258, %v3868
  %v4029 = vadd.f32 %v3260, %v3870
  %v4030 = vadd.f32 %v3264, %v3874
  %v4031 = vadd.f32 %v3266, %v3876
  %v4032 = vadd.f32 %v3268, %v3878
  %v4033 = vadd.f32 %v3270, %v3880
  %v4034 = vadd.f32 %v3274, %v3884
  %v4035 = vadd.f32 %v3276, %v3886
  %v4036 = vadd.f32 %v3278, %v3888
  %v4037 = vadd.f32 %v3280, %v3890
  %v4038 = vadd.f32 %v3284, %v3894
  %v4039 = vadd.f32 %v3286, %v3896
  %v4040 = vadd.f32 %v3288, %v3898
  %v4041 = vadd.f32 %v3290, %v3900
  %v4042 = vadd.f32 %v3294, %v3904
  %v4043 = vadd.f32 %v3296, %v3906
  %v4044 = vadd.f32 %v3298, %v3908
  %v4045 = vadd.f32 %v3300, %v3910
  %v4046 = vadd.f32 %v3304, %v3914
  %v4047 = vadd.f32 %v3306, %v3916
  %v4048 = vadd.f32 %v3308, %v3918
  %v4049 = vadd.f32 %v3310, %v3920
  %v4050 = vld [vmem:[%s3] sm:$0x3]
  %v4051 = vld [vmem:[%s4] sm:$0x3]
  %v4052 = vadd.f32 %v3922, %v3924
  %v4053 = vadd.f32 %v4052, %v3926
  %v4054 = vadd.f32 %v4053, %v3928
  %v4055 = vadd.f32 %v4054, %v3930
  %v4056 = vadd.f32 %v4055, %v3932
  %v4057 = vadd.f32 %v4056, %v3934
  %v4058 = vadd.f32 %v4057, %v3936
  %v4059 = vadd.f32 %v4058, %v3938
  %v4060 = vadd.f32 %v4059, %v3940
  %v4061 = vadd.f32 %v4060, %v3942
  %v4062 = vadd.f32 %v4061, %v3944
  %v4063 = vadd.f32 %v4062, %v3946
  %v4064 = vadd.f32 %v4063, %v3948
  %v4065 = vadd.f32 %v4064, %v3950
  %v4066 = vadd.f32 %v4065, %v3952
  %v4067 = vadd.f32 %v4066, %v3954
  %v4068 = vadd.f32 %v4067, %v3956
  %v4069 = vadd.f32 %v4068, %v3958
  %v4070 = vadd.f32 %v4069, %v3960
  %v4071 = vadd.f32 %v4070, %v3962
  %v4072 = vadd.f32 %v4071, %v3964
  %v4073 = vadd.f32 %v4072, %v3966
  %v4074 = vadd.f32 %v4073, %v3968
  %v4075 = vadd.f32 %v4074, %v3970
  %v4076 = vadd.f32 %v4075, %v3972
  %v4077 = vadd.f32 %v4076, %v3974
  %v4078 = vadd.f32 %v4077, %v3976
  %v4079 = vadd.f32 %v4078, %v3978
  %v4080 = vadd.f32 %v4079, %v3980
  %v4081 = vadd.f32 %v4080, %v3982
  %v4082 = vadd.f32 %v4081, %v3984
  %v4083 = vadd.f32 %v4082, %v3986
  %v4084 = vadd.f32 %v4083, %v3988
  %v4085 = vadd.f32 %v4084, %v3990
  %v4086 = vadd.f32 %v4085, %v3992
  %v4087 = vadd.f32 %v4086, %v3994
  %v4088 = vadd.f32 %v4087, %v3996
  %v4089 = vadd.f32 %v4088, %v3998
  %v4090 = vadd.f32 %v4089, %v4000
  %v4091 = vadd.f32 %v4090, %v4002
  %v4092 = vadd.f32 %v4091, %v4004
  %v4093 = vadd.f32 %v4092, %v4006
  %v4094 = vadd.f32 %v4093, %v4008
  %v4095 = vadd.f32 %v4094, %v4010
  %v4096 = vadd.f32 %v4095, %v4012
  %v4097 = vadd.f32 %v4096, %v4014
  %v4098 = vadd.f32 %v4097, %v4016
  %v4099 = vadd.f32 %v4098, %v4018
  %v4100 = vadd.f32 %v4099, %v4020
  %v4101 = vadd.f32 %v4100, %v4022
  %v4102 = vadd.f32 %v4101, %v4024
  %v4103 = vadd.f32 %v4102, %v4026
  %v4104 = vadd.f32 %v4103, %v4028
  %v4105 = vadd.f32 %v4104, %v4030
  %v4106 = vadd.f32 %v4105, %v4032
  %v4107 = vadd.f32 %v4106, %v4034
  %v4108 = vadd.f32 %v4107, %v4036
  %v4109 = vadd.f32 %v4108, %v4038
  %v4110 = vadd.f32 %v4109, %v4040
  %v4111 = vadd.f32 %v4110, %v4042
  %v4112 = vadd.f32 %v4111, %v4044
  %v4113 = vadd.f32 %v4112, %v4046
  %v4114 = vadd.f32 %v4113, %v4048
  %v4115 = vrot.slane %v4114, 4
  %v4116 = vadd.f32 %v4114, %v4115
  %v4117 = vrot.slane %v4116, 2
  %v4118 = vadd.f32 %v4116, %v4117
  %v4119 = vrot.slane %v4118, 1
  %v4120 = vadd.f32 %v4118, %v4119
  %v4121 = vadd.f32 %v3923, %v3925
  %v4122 = vadd.f32 %v4121, %v3927
  %v4123 = vadd.f32 %v4122, %v3929
  %v4124 = vadd.f32 %v4123, %v3931
  %v4125 = vadd.f32 %v4124, %v3933
  %v4126 = vadd.f32 %v4125, %v3935
  %v4127 = vadd.f32 %v4126, %v3937
  %v4128 = vadd.f32 %v4127, %v3939
  %v4129 = vadd.f32 %v4128, %v3941
  %v4130 = vadd.f32 %v4129, %v3943
  %v4131 = vadd.f32 %v4130, %v3945
  %v4132 = vadd.f32 %v4131, %v3947
  %v4133 = vadd.f32 %v4132, %v3949
  %v4134 = vadd.f32 %v4133, %v3951
  %v4135 = vadd.f32 %v4134, %v3953
  %v4136 = vadd.f32 %v4135, %v3955
  %v4137 = vadd.f32 %v4136, %v3957
  %v4138 = vadd.f32 %v4137, %v3959
  %v4139 = vadd.f32 %v4138, %v3961
  %v4140 = vadd.f32 %v4139, %v3963
  %v4141 = vadd.f32 %v4140, %v3965
  %v4142 = vadd.f32 %v4141, %v3967
  %v4143 = vadd.f32 %v4142, %v3969
  %v4144 = vadd.f32 %v4143, %v3971
  %v4145 = vadd.f32 %v4144, %v3973
  %v4146 = vadd.f32 %v4145, %v3975
  %v4147 = vadd.f32 %v4146, %v3977
  %v4148 = vadd.f32 %v4147, %v3979
  %v4149 = vadd.f32 %v4148, %v3981
  %v4150 = vadd.f32 %v4149, %v3983
  %v4151 = vadd.f32 %v4150, %v3985
  %v4152 = vadd.f32 %v4151, %v3987
  %v4153 = vadd.f32 %v4152, %v3989
  %v4154 = vadd.f32 %v4153, %v3991
  %v4155 = vadd.f32 %v4154, %v3993
  %v4156 = vadd.f32 %v4155, %v3995
  %v4157 = vadd.f32 %v4156, %v3997
  %v4158 = vadd.f32 %v4157, %v3999
  %v4159 = vadd.f32 %v4158, %v4001
  %v4160 = vadd.f32 %v4159, %v4003
  %v4161 = vadd.f32 %v4160, %v4005
  %v4162 = vadd.f32 %v4161, %v4007
  %v4163 = vadd.f32 %v4162, %v4009
  %v4164 = vadd.f32 %v4163, %v4011
  %v4165 = vadd.f32 %v4164, %v4013
  %v4166 = vadd.f32 %v4165, %v4015
  %v4167 = vadd.f32 %v4166, %v4017
  %v4168 = vadd.f32 %v4167, %v4019
  %v4169 = vadd.f32 %v4168, %v4021
  %v4170 = vadd.f32 %v4169, %v4023
  %v4171 = vadd.f32 %v4170, %v4025
  %v4172 = vadd.f32 %v4171, %v4027
  %v4173 = vadd.f32 %v4172, %v4029
  %v4174 = vadd.f32 %v4173, %v4031
  %v4175 = vadd.f32 %v4174, %v4033
  %v4176 = vadd.f32 %v4175, %v4035
  %v4177 = vadd.f32 %v4176, %v4037
  %v4178 = vadd.f32 %v4177, %v4039
  %v4179 = vadd.f32 %v4178, %v4041
  %v4180 = vadd.f32 %v4179, %v4043
  %v4181 = vadd.f32 %v4180, %v4045
  %v4182 = vadd.f32 %v4181, %v4047
  %v4183 = vadd.f32 %v4182, %v4049
  %v4184 = vrot.slane %v4183, 4
  %v4185 = vadd.f32 %v4183, %v4184
  %v4186 = vrot.slane %v4185, 2
  %v4187 = vadd.f32 %v4185, %v4186
  %v4188 = vrot.slane %v4187, 1
  %v4189 = vadd.f32 %v4187, %v4188
  %4190 = vrot.lane.b32.xlu0 %v4120, 16
  %v4191 = vpop.permute.xlu0 %4190
  %4192 = vrot.lane.b32.xlu0 %v4189, 16
  %v4193 = vpop.permute.xlu0 %4192
  %v4194 = vsel %vm557, %v4191, %v4193
  %v4195 = vsel %vm557, %v4193, %v4191
  %v4196 = vadd.f32 %v4120, %v4195
  %v4197 = vadd.f32 %v4189, %v4194
  %4198 = vrot.lane.b32.xlu0 %v4196, 32
  %v4199 = vpop.permute.xlu0 %4198
  %4200 = vrot.lane.b32.xlu0 %v4197, 32
  %v4201 = vpop.permute.xlu0 %4200
  %v4202 = vsel %vm566, %v4199, %v4201
  %v4203 = vsel %vm566, %v4201, %v4199
  %v4204 = vadd.f32 %v4196, %v4203
  %v4205 = vadd.f32 %v4197, %v4202
  %4206 = vrot.lane.b32.xlu0 %v4204, 64
  %v4207 = vpop.permute.xlu0 %4206
  %4208 = vrot.lane.b32.xlu0 %v4205, 64
  %v4209 = vpop.permute.xlu0 %4208
  %v4210 = vsel %vm575, %v4207, %v4209
  %v4211 = vsel %vm575, %v4209, %v4207
  %v4212 = vadd.f32 %v4204, %v4211
  %v4213 = vadd.f32 %v4205, %v4210
  %v4214 = vadd.f32 %v4212, %v4213
  %v4215 = vmul.f32 %v4214, 0.00012207031
  %v4216 = vmul.f32 %v3922, %v3922
  %v4217 = vmul.f32 %v3923, %v3923
  %v4218 = vmul.f32 %v3924, %v3924
  %v4219 = vmul.f32 %v3925, %v3925
  %v4220 = vmul.f32 %v3926, %v3926
  %v4221 = vmul.f32 %v3927, %v3927
  %v4222 = vmul.f32 %v3928, %v3928
  %v4223 = vmul.f32 %v3929, %v3929
  %v4224 = vmul.f32 %v3930, %v3930
  %v4225 = vmul.f32 %v3931, %v3931
  %v4226 = vmul.f32 %v3932, %v3932
  %v4227 = vmul.f32 %v3933, %v3933
  %v4228 = vmul.f32 %v3934, %v3934
  %v4229 = vmul.f32 %v3935, %v3935
  %v4230 = vmul.f32 %v3936, %v3936
  %v4231 = vmul.f32 %v3937, %v3937
  %v4232 = vmul.f32 %v3938, %v3938
  %v4233 = vmul.f32 %v3939, %v3939
  %v4234 = vmul.f32 %v3940, %v3940
  %v4235 = vmul.f32 %v3941, %v3941
  %v4236 = vmul.f32 %v3942, %v3942
  %v4237 = vmul.f32 %v3943, %v3943
  %v4238 = vmul.f32 %v3944, %v3944
  %v4239 = vmul.f32 %v3945, %v3945
  %v4240 = vmul.f32 %v3946, %v3946
  %v4241 = vmul.f32 %v3947, %v3947
  %v4242 = vmul.f32 %v3948, %v3948
  %v4243 = vmul.f32 %v3949, %v3949
  %v4244 = vmul.f32 %v3950, %v3950
  %v4245 = vmul.f32 %v3951, %v3951
  %v4246 = vmul.f32 %v3952, %v3952
  %v4247 = vmul.f32 %v3953, %v3953
  %v4248 = vmul.f32 %v3954, %v3954
  %v4249 = vmul.f32 %v3955, %v3955
  %v4250 = vmul.f32 %v3956, %v3956
  %v4251 = vmul.f32 %v3957, %v3957
  %v4252 = vmul.f32 %v3958, %v3958
  %v4253 = vmul.f32 %v3959, %v3959
  %v4254 = vmul.f32 %v3960, %v3960
  %v4255 = vmul.f32 %v3961, %v3961
  %v4256 = vmul.f32 %v3962, %v3962
  %v4257 = vmul.f32 %v3963, %v3963
  %v4258 = vmul.f32 %v3964, %v3964
  %v4259 = vmul.f32 %v3965, %v3965
  %v4260 = vmul.f32 %v3966, %v3966
  %v4261 = vmul.f32 %v3967, %v3967
  %v4262 = vmul.f32 %v3968, %v3968
  %v4263 = vmul.f32 %v3969, %v3969
  %v4264 = vmul.f32 %v3970, %v3970
  %v4265 = vmul.f32 %v3971, %v3971
  %v4266 = vmul.f32 %v3972, %v3972
  %v4267 = vmul.f32 %v3973, %v3973
  %v4268 = vmul.f32 %v3974, %v3974
  %v4269 = vmul.f32 %v3975, %v3975
  %v4270 = vmul.f32 %v3976, %v3976
  %v4271 = vmul.f32 %v3977, %v3977
  %v4272 = vmul.f32 %v3978, %v3978
  %v4273 = vmul.f32 %v3979, %v3979
  %v4274 = vmul.f32 %v3980, %v3980
  %v4275 = vmul.f32 %v3981, %v3981
  %v4276 = vmul.f32 %v3982, %v3982
  %v4277 = vmul.f32 %v3983, %v3983
  %v4278 = vmul.f32 %v3984, %v3984
  %v4279 = vmul.f32 %v3985, %v3985
  %v4280 = vmul.f32 %v3986, %v3986
  %v4281 = vmul.f32 %v3987, %v3987
  %v4282 = vmul.f32 %v3988, %v3988
  %v4283 = vmul.f32 %v3989, %v3989
  %v4284 = vmul.f32 %v3990, %v3990
  %v4285 = vmul.f32 %v3991, %v3991
  %v4286 = vmul.f32 %v3992, %v3992
  %v4287 = vmul.f32 %v3993, %v3993
  %v4288 = vmul.f32 %v3994, %v3994
  %v4289 = vmul.f32 %v3995, %v3995
  %v4290 = vmul.f32 %v3996, %v3996
  %v4291 = vmul.f32 %v3997, %v3997
  %v4292 = vmul.f32 %v3998, %v3998
  %v4293 = vmul.f32 %v3999, %v3999
  %v4294 = vmul.f32 %v4000, %v4000
  %v4295 = vmul.f32 %v4001, %v4001
  %v4296 = vmul.f32 %v4002, %v4002
  %v4297 = vmul.f32 %v4003, %v4003
  %v4298 = vmul.f32 %v4004, %v4004
  %v4299 = vmul.f32 %v4005, %v4005
  %v4300 = vmul.f32 %v4006, %v4006
  %v4301 = vmul.f32 %v4007, %v4007
  %v4302 = vmul.f32 %v4008, %v4008
  %v4303 = vmul.f32 %v4009, %v4009
  %v4304 = vmul.f32 %v4010, %v4010
  %v4305 = vmul.f32 %v4011, %v4011
  %v4306 = vmul.f32 %v4012, %v4012
  %v4307 = vmul.f32 %v4013, %v4013
  %v4308 = vmul.f32 %v4014, %v4014
  %v4309 = vmul.f32 %v4015, %v4015
  %v4310 = vmul.f32 %v4016, %v4016
  %v4311 = vmul.f32 %v4017, %v4017
  %v4312 = vmul.f32 %v4018, %v4018
  %v4313 = vmul.f32 %v4019, %v4019
  %v4314 = vmul.f32 %v4020, %v4020
  %v4315 = vmul.f32 %v4021, %v4021
  %v4316 = vmul.f32 %v4022, %v4022
  %v4317 = vmul.f32 %v4023, %v4023
  %v4318 = vmul.f32 %v4024, %v4024
  %v4319 = vmul.f32 %v4025, %v4025
  %v4320 = vmul.f32 %v4026, %v4026
  %v4321 = vmul.f32 %v4027, %v4027
  %v4322 = vmul.f32 %v4028, %v4028
  %v4323 = vmul.f32 %v4029, %v4029
  %v4324 = vmul.f32 %v4030, %v4030
  %v4325 = vmul.f32 %v4031, %v4031
  %v4326 = vmul.f32 %v4032, %v4032
  %v4327 = vmul.f32 %v4033, %v4033
  %v4328 = vmul.f32 %v4034, %v4034
  %v4329 = vmul.f32 %v4035, %v4035
  %v4330 = vmul.f32 %v4036, %v4036
  %v4331 = vmul.f32 %v4037, %v4037
  %v4332 = vmul.f32 %v4038, %v4038
  %v4333 = vmul.f32 %v4039, %v4039
  %v4334 = vmul.f32 %v4040, %v4040
  %v4335 = vmul.f32 %v4041, %v4041
  %v4336 = vmul.f32 %v4042, %v4042
  %v4337 = vmul.f32 %v4043, %v4043
  %v4338 = vmul.f32 %v4044, %v4044
  %v4339 = vmul.f32 %v4045, %v4045
  %v4340 = vmul.f32 %v4046, %v4046
  %v4341 = vmul.f32 %v4047, %v4047
  %v4342 = vmul.f32 %v4048, %v4048
  %v4343 = vmul.f32 %v4049, %v4049
  %v4344 = vadd.f32 %v4216, %v4218
  %v4345 = vadd.f32 %v4344, %v4220
  %v4346 = vadd.f32 %v4345, %v4222
  %v4347 = vadd.f32 %v4346, %v4224
  %v4348 = vadd.f32 %v4347, %v4226
  %v4349 = vadd.f32 %v4348, %v4228
  %v4350 = vadd.f32 %v4349, %v4230
  %v4351 = vadd.f32 %v4350, %v4232
  %v4352 = vadd.f32 %v4351, %v4234
  %v4353 = vadd.f32 %v4352, %v4236
  %v4354 = vadd.f32 %v4353, %v4238
  %v4355 = vadd.f32 %v4354, %v4240
  %v4356 = vadd.f32 %v4355, %v4242
  %v4357 = vadd.f32 %v4356, %v4244
  %v4358 = vadd.f32 %v4357, %v4246
  %v4359 = vadd.f32 %v4358, %v4248
  %v4360 = vadd.f32 %v4359, %v4250
  %v4361 = vadd.f32 %v4360, %v4252
  %v4362 = vadd.f32 %v4361, %v4254
  %v4363 = vadd.f32 %v4362, %v4256
  %v4364 = vadd.f32 %v4363, %v4258
  %v4365 = vadd.f32 %v4364, %v4260
  %v4366 = vadd.f32 %v4365, %v4262
  %v4367 = vadd.f32 %v4366, %v4264
  %v4368 = vadd.f32 %v4367, %v4266
  %v4369 = vadd.f32 %v4368, %v4268
  %v4370 = vadd.f32 %v4369, %v4270
  %v4371 = vadd.f32 %v4370, %v4272
  %v4372 = vadd.f32 %v4371, %v4274
  %v4373 = vadd.f32 %v4372, %v4276
  %v4374 = vadd.f32 %v4373, %v4278
  %v4375 = vadd.f32 %v4374, %v4280
  %v4376 = vadd.f32 %v4375, %v4282
  %v4377 = vadd.f32 %v4376, %v4284
  %v4378 = vadd.f32 %v4377, %v4286
  %v4379 = vadd.f32 %v4378, %v4288
  %v4380 = vadd.f32 %v4379, %v4290
  %v4381 = vadd.f32 %v4380, %v4292
  %v4382 = vadd.f32 %v4381, %v4294
  %v4383 = vadd.f32 %v4382, %v4296
  %v4384 = vadd.f32 %v4383, %v4298
  %v4385 = vadd.f32 %v4384, %v4300
  %v4386 = vadd.f32 %v4385, %v4302
  %v4387 = vadd.f32 %v4386, %v4304
  %v4388 = vadd.f32 %v4387, %v4306
  %v4389 = vadd.f32 %v4388, %v4308
  %v4390 = vadd.f32 %v4389, %v4310
  %v4391 = vadd.f32 %v4390, %v4312
  %v4392 = vadd.f32 %v4391, %v4314
  %v4393 = vadd.f32 %v4392, %v4316
  %v4394 = vadd.f32 %v4393, %v4318
  %v4395 = vadd.f32 %v4394, %v4320
  %v4396 = vadd.f32 %v4395, %v4322
  %v4397 = vadd.f32 %v4396, %v4324
  %v4398 = vadd.f32 %v4397, %v4326
  %v4399 = vadd.f32 %v4398, %v4328
  %v4400 = vadd.f32 %v4399, %v4330
  %v4401 = vadd.f32 %v4400, %v4332
  %v4402 = vadd.f32 %v4401, %v4334
  %v4403 = vadd.f32 %v4402, %v4336
  %v4404 = vadd.f32 %v4403, %v4338
  %v4405 = vadd.f32 %v4404, %v4340
  %v4406 = vadd.f32 %v4405, %v4342
  %v4407 = vrot.slane %v4406, 4
  %v4408 = vadd.f32 %v4406, %v4407
  %v4409 = vrot.slane %v4408, 2
  %v4410 = vadd.f32 %v4408, %v4409
  %v4411 = vrot.slane %v4410, 1
  %v4412 = vadd.f32 %v4410, %v4411
  %v4413 = vadd.f32 %v4217, %v4219
  %v4414 = vadd.f32 %v4413, %v4221
  %v4415 = vadd.f32 %v4414, %v4223
  %v4416 = vadd.f32 %v4415, %v4225
  %v4417 = vadd.f32 %v4416, %v4227
  %v4418 = vadd.f32 %v4417, %v4229
  %v4419 = vadd.f32 %v4418, %v4231
  %v4420 = vadd.f32 %v4419, %v4233
  %v4421 = vadd.f32 %v4420, %v4235
  %v4422 = vadd.f32 %v4421, %v4237
  %v4423 = vadd.f32 %v4422, %v4239
  %v4424 = vadd.f32 %v4423, %v4241
  %v4425 = vadd.f32 %v4424, %v4243
  %v4426 = vadd.f32 %v4425, %v4245
  %v4427 = vadd.f32 %v4426, %v4247
  %v4428 = vadd.f32 %v4427, %v4249
  %v4429 = vadd.f32 %v4428, %v4251
  %v4430 = vadd.f32 %v4429, %v4253
  %v4431 = vadd.f32 %v4430, %v4255
  %v4432 = vadd.f32 %v4431, %v4257
  %v4433 = vadd.f32 %v4432, %v4259
  %v4434 = vadd.f32 %v4433, %v4261
  %v4435 = vadd.f32 %v4434, %v4263
  %v4436 = vadd.f32 %v4435, %v4265
  %v4437 = vadd.f32 %v4436, %v4267
  %v4438 = vadd.f32 %v4437, %v4269
  %v4439 = vadd.f32 %v4438, %v4271
  %v4440 = vadd.f32 %v4439, %v4273
  %v4441 = vadd.f32 %v4440, %v4275
  %v4442 = vadd.f32 %v4441, %v4277
  %v4443 = vadd.f32 %v4442, %v4279
  %v4444 = vadd.f32 %v4443, %v4281
  %v4445 = vadd.f32 %v4444, %v4283
  %v4446 = vadd.f32 %v4445, %v4285
  %v4447 = vadd.f32 %v4446, %v4287
  %v4448 = vadd.f32 %v4447, %v4289
  %v4449 = vadd.f32 %v4448, %v4291
  %v4450 = vadd.f32 %v4449, %v4293
  %v4451 = vadd.f32 %v4450, %v4295
  %v4452 = vadd.f32 %v4451, %v4297
  %v4453 = vadd.f32 %v4452, %v4299
  %v4454 = vadd.f32 %v4453, %v4301
  %v4455 = vadd.f32 %v4454, %v4303
  %v4456 = vadd.f32 %v4455, %v4305
  %v4457 = vadd.f32 %v4456, %v4307
  %v4458 = vadd.f32 %v4457, %v4309
  %v4459 = vadd.f32 %v4458, %v4311
  %v4460 = vadd.f32 %v4459, %v4313
  %v4461 = vadd.f32 %v4460, %v4315
  %v4462 = vadd.f32 %v4461, %v4317
  %v4463 = vadd.f32 %v4462, %v4319
  %v4464 = vadd.f32 %v4463, %v4321
  %v4465 = vadd.f32 %v4464, %v4323
  %v4466 = vadd.f32 %v4465, %v4325
  %v4467 = vadd.f32 %v4466, %v4327
  %v4468 = vadd.f32 %v4467, %v4329
  %v4469 = vadd.f32 %v4468, %v4331
  %v4470 = vadd.f32 %v4469, %v4333
  %v4471 = vadd.f32 %v4470, %v4335
  %v4472 = vadd.f32 %v4471, %v4337
  %v4473 = vadd.f32 %v4472, %v4339
  %v4474 = vadd.f32 %v4473, %v4341
  %v4475 = vadd.f32 %v4474, %v4343
  %v4476 = vrot.slane %v4475, 4
  %v4477 = vadd.f32 %v4475, %v4476
  %v4478 = vrot.slane %v4477, 2
  %v4479 = vadd.f32 %v4477, %v4478
  %v4480 = vrot.slane %v4479, 1
  %v4481 = vadd.f32 %v4479, %v4480
  %4482 = vrot.lane.b32.xlu0 %v4412, 16
  %v4483 = vpop.permute.xlu0 %4482
  %4484 = vrot.lane.b32.xlu0 %v4481, 16
  %v4485 = vpop.permute.xlu0 %4484
  %v4486 = vsel %vm557, %v4483, %v4485
  %v4487 = vsel %vm557, %v4485, %v4483
  %v4488 = vadd.f32 %v4412, %v4487
  %v4489 = vadd.f32 %v4481, %v4486
  %4490 = vrot.lane.b32.xlu0 %v4488, 32
  %v4491 = vpop.permute.xlu0 %4490
  %4492 = vrot.lane.b32.xlu0 %v4489, 32
  %v4493 = vpop.permute.xlu0 %4492
  %v4494 = vsel %vm566, %v4491, %v4493
  %v4495 = vsel %vm566, %v4493, %v4491
  %v4496 = vadd.f32 %v4488, %v4495
  %v4497 = vadd.f32 %v4489, %v4494
  %4498 = vrot.lane.b32.xlu0 %v4496, 64
  %v4499 = vpop.permute.xlu0 %4498
  %4500 = vrot.lane.b32.xlu0 %v4497, 64
  %v4501 = vpop.permute.xlu0 %4500
  %v4502 = vsel %vm575, %v4499, %v4501
  %v4503 = vsel %vm575, %v4501, %v4499
  %v4504 = vadd.f32 %v4496, %v4503
  %v4505 = vadd.f32 %v4497, %v4502
  %v4506 = vadd.f32 %v4504, %v4505
  %v4507 = vmul.f32 %v4506, 0.00012207031
  %v4508 = vmul.f32 %v4215, %v4215
  %v4509 = vsub.f32 %v4507, %v4508
  %v4510 = vadd.f32 %v4509, 1e-05
  %v4511 = vrsqrt.pop %v4510
  %v4513 = vcombine.low %v4511, %v4511
  %v4515 = vunpack.c.l.s4 1966171168
  %v4516 = vunpack.c.0.s8 %v4515
  %v4517 = vlaneseq
  %v4518 = vshrl.u32 %v4517, 7
  %v4519 = vsub.s32 %v4516, %v4518
  %v4520 = vrot.slane %v4513, %v4519
  %v4522 = vunpack.c.l.s4 1966171168
  %v4523 = vunpack.c.0.s8 %v4522
  %v4524 = vlaneseq
  %v4525 = vshrl.u32 %v4524, 7
  %v4526 = vsub.s32 %v4523, %v4525
  %v4527 = vrot.slane %v4520, %v4526
  %v4529 = vmul.f32 %v4050, %v4527
  %v4531 = vlaneseq
  %v4532 = vshrl.u32 %v4531, 7
  %v4533 = vsub.s32 0, %v4532
  %v4534 = vrot.slane %v4529, %v4533
  %v4535 = vlaneseq
  %v4536 = vshrl.u32 %v4535, 7
  %v4537 = vsub.s32 1, %v4536
  %v4538 = vrot.slane %v4529, %v4537
  %v4541 = vmul.f32 %v4215, %v4534
  %v4542 = vmul.f32 %v4215, %v4538
  %v4545 = vcombine.low %v4541, %v4542
  %v4547 = vunpack.c.l.s4 1966171168
  %v4548 = vunpack.c.0.s8 %v4547
  %v4549 = vlaneseq
  %v4550 = vshrl.u32 %v4549, 7
  %v4551 = vsub.s32 %v4548, %v4550
  %v4552 = vrot.slane %v4545, %v4551
  %v4554 = vunpack.c.l.s4 1966171168
  %v4555 = vunpack.c.0.s8 %v4554
  %v4556 = vlaneseq
  %v4557 = vshrl.u32 %v4556, 7
  %v4558 = vsub.s32 %v4555, %v4557
  %v4559 = vrot.slane %v4552, %v4558
  %v4561 = vsub.f32 %v4051, %v4559
  %v4562 = vmul.f32 %v3922, %v4534
  %v4563 = vmul.f32 %v3923, %v4538
  %v4564 = vmul.f32 %v3924, %v4534
  %v4565 = vmul.f32 %v3925, %v4538
  %v4566 = vmul.f32 %v3926, %v4534
  %v4567 = vmul.f32 %v3927, %v4538
  %v4568 = vmul.f32 %v3928, %v4534
  %v4569 = vmul.f32 %v3929, %v4538
  %v4570 = vmul.f32 %v3930, %v4534
  %v4571 = vmul.f32 %v3931, %v4538
  %v4572 = vmul.f32 %v3932, %v4534
  %v4573 = vmul.f32 %v3933, %v4538
  %v4574 = vmul.f32 %v3934, %v4534
  %v4575 = vmul.f32 %v3935, %v4538
  %v4576 = vmul.f32 %v3936, %v4534
  %v4577 = vmul.f32 %v3937, %v4538
  %v4578 = vmul.f32 %v3938, %v4534
  %v4579 = vmul.f32 %v3939, %v4538
  %v4580 = vmul.f32 %v3940, %v4534
  %v4581 = vmul.f32 %v3941, %v4538
  %v4582 = vmul.f32 %v3942, %v4534
  %v4583 = vmul.f32 %v3943, %v4538
  %v4584 = vmul.f32 %v3944, %v4534
  %v4585 = vmul.f32 %v3945, %v4538
  %v4586 = vmul.f32 %v3946, %v4534
  %v4587 = vmul.f32 %v3947, %v4538
  %v4588 = vmul.f32 %v3948, %v4534
  %v4589 = vmul.f32 %v3949, %v4538
  %v4590 = vmul.f32 %v3950, %v4534
  %v4591 = vmul.f32 %v3951, %v4538
  %v4592 = vmul.f32 %v3952, %v4534
  %v4593 = vmul.f32 %v3953, %v4538
  %v4594 = vmul.f32 %v3954, %v4534
  %v4595 = vmul.f32 %v3955, %v4538
  %v4596 = vmul.f32 %v3956, %v4534
  %v4597 = vmul.f32 %v3957, %v4538
  %v4598 = vmul.f32 %v3958, %v4534
  %v4599 = vmul.f32 %v3959, %v4538
  %v4600 = vmul.f32 %v3960, %v4534
  %v4601 = vmul.f32 %v3961, %v4538
  %v4602 = vmul.f32 %v3962, %v4534
  %v4603 = vmul.f32 %v3963, %v4538
  %v4604 = vmul.f32 %v3964, %v4534
  %v4605 = vmul.f32 %v3965, %v4538
  %v4606 = vmul.f32 %v3966, %v4534
  %v4607 = vmul.f32 %v3967, %v4538
  %v4608 = vmul.f32 %v3968, %v4534
  %v4609 = vmul.f32 %v3969, %v4538
  %v4610 = vmul.f32 %v3970, %v4534
  %v4611 = vmul.f32 %v3971, %v4538
  %v4612 = vmul.f32 %v3972, %v4534
  %v4613 = vmul.f32 %v3973, %v4538
  %v4614 = vmul.f32 %v3974, %v4534
  %v4615 = vmul.f32 %v3975, %v4538
  %v4616 = vmul.f32 %v3976, %v4534
  %v4617 = vmul.f32 %v3977, %v4538
  %v4618 = vmul.f32 %v3978, %v4534
  %v4619 = vmul.f32 %v3979, %v4538
  %v4620 = vmul.f32 %v3980, %v4534
  %v4621 = vmul.f32 %v3981, %v4538
  %v4622 = vmul.f32 %v3982, %v4534
  %v4623 = vmul.f32 %v3983, %v4538
  %v4624 = vmul.f32 %v3984, %v4534
  %v4625 = vmul.f32 %v3985, %v4538
  %v4626 = vmul.f32 %v3986, %v4534
  %v4627 = vmul.f32 %v3987, %v4538
  %v4628 = vmul.f32 %v3988, %v4534
  %v4629 = vmul.f32 %v3989, %v4538
  %v4630 = vmul.f32 %v3990, %v4534
  %v4631 = vmul.f32 %v3991, %v4538
  %v4632 = vmul.f32 %v3992, %v4534
  %v4633 = vmul.f32 %v3993, %v4538
  %v4634 = vmul.f32 %v3994, %v4534
  %v4635 = vmul.f32 %v3995, %v4538
  %v4636 = vmul.f32 %v3996, %v4534
  %v4637 = vmul.f32 %v3997, %v4538
  %v4638 = vmul.f32 %v3998, %v4534
  %v4639 = vmul.f32 %v3999, %v4538
  %v4640 = vmul.f32 %v4000, %v4534
  %v4641 = vmul.f32 %v4001, %v4538
  %v4642 = vmul.f32 %v4002, %v4534
  %v4643 = vmul.f32 %v4003, %v4538
  %v4644 = vmul.f32 %v4004, %v4534
  %v4645 = vmul.f32 %v4005, %v4538
  %v4646 = vmul.f32 %v4006, %v4534
  %v4647 = vmul.f32 %v4007, %v4538
  %v4648 = vmul.f32 %v4008, %v4534
  %v4649 = vmul.f32 %v4009, %v4538
  %v4650 = vmul.f32 %v4010, %v4534
  %v4651 = vmul.f32 %v4011, %v4538
  %v4652 = vmul.f32 %v4012, %v4534
  %v4653 = vmul.f32 %v4013, %v4538
  %v4654 = vmul.f32 %v4014, %v4534
  %v4655 = vmul.f32 %v4015, %v4538
  %v4656 = vmul.f32 %v4016, %v4534
  %v4657 = vmul.f32 %v4017, %v4538
  %v4658 = vmul.f32 %v4018, %v4534
  %v4659 = vmul.f32 %v4019, %v4538
  %v4660 = vmul.f32 %v4020, %v4534
  %v4661 = vmul.f32 %v4021, %v4538
  %v4662 = vmul.f32 %v4022, %v4534
  %v4663 = vmul.f32 %v4023, %v4538
  %v4664 = vmul.f32 %v4024, %v4534
  %v4665 = vmul.f32 %v4025, %v4538
  %v4666 = vmul.f32 %v4026, %v4534
  %v4667 = vmul.f32 %v4027, %v4538
  %v4668 = vmul.f32 %v4028, %v4534
  %v4669 = vmul.f32 %v4029, %v4538
  %v4670 = vmul.f32 %v4030, %v4534
  %v4671 = vmul.f32 %v4031, %v4538
  %v4672 = vmul.f32 %v4032, %v4534
  %v4673 = vmul.f32 %v4033, %v4538
  %v4674 = vmul.f32 %v4034, %v4534
  %v4675 = vmul.f32 %v4035, %v4538
  %v4676 = vmul.f32 %v4036, %v4534
  %v4677 = vmul.f32 %v4037, %v4538
  %v4678 = vmul.f32 %v4038, %v4534
  %v4679 = vmul.f32 %v4039, %v4538
  %v4680 = vmul.f32 %v4040, %v4534
  %v4681 = vmul.f32 %v4041, %v4538
  %v4682 = vmul.f32 %v4042, %v4534
  %v4683 = vmul.f32 %v4043, %v4538
  %v4684 = vmul.f32 %v4044, %v4534
  %v4685 = vmul.f32 %v4045, %v4538
  %v4686 = vmul.f32 %v4046, %v4534
  %v4687 = vmul.f32 %v4047, %v4538
  %v4688 = vmul.f32 %v4048, %v4534
  %v4689 = vmul.f32 %v4049, %v4538
  %v4691 = vlaneseq
  %v4692 = vshrl.u32 %v4691, 7
  %v4693 = vsub.s32 0, %v4692
  %v4694 = vrot.slane %v4561, %v4693
  %v4695 = vlaneseq
  %v4696 = vshrl.u32 %v4695, 7
  %v4697 = vsub.s32 1, %v4696
  %v4698 = vrot.slane %v4561, %v4697
  %v4701 = vadd.f32 %v4562, %v4694
  %v4702 = vadd.f32 %v4563, %v4698
  %v4703 = vadd.f32 %v4564, %v4694
  %v4704 = vadd.f32 %v4565, %v4698
  %v4705 = vadd.f32 %v4566, %v4694
  %v4706 = vadd.f32 %v4567, %v4698
  %v4707 = vadd.f32 %v4568, %v4694
  %v4708 = vadd.f32 %v4569, %v4698
  %v4709 = vadd.f32 %v4570, %v4694
  %v4710 = vadd.f32 %v4571, %v4698
  %v4711 = vadd.f32 %v4572, %v4694
  %v4712 = vadd.f32 %v4573, %v4698
  %v4713 = vadd.f32 %v4574, %v4694
  %v4714 = vadd.f32 %v4575, %v4698
  %v4715 = vadd.f32 %v4576, %v4694
  %v4716 = vadd.f32 %v4577, %v4698
  %v4717 = vadd.f32 %v4578, %v4694
  %v4718 = vadd.f32 %v4579, %v4698
  %v4719 = vadd.f32 %v4580, %v4694
  %v4720 = vadd.f32 %v4581, %v4698
  %v4721 = vadd.f32 %v4582, %v4694
  %v4722 = vadd.f32 %v4583, %v4698
  %v4723 = vadd.f32 %v4584, %v4694
  %v4724 = vadd.f32 %v4585, %v4698
  %v4725 = vadd.f32 %v4586, %v4694
  %v4726 = vadd.f32 %v4587, %v4698
  %v4727 = vadd.f32 %v4588, %v4694
  %v4728 = vadd.f32 %v4589, %v4698
  %v4729 = vadd.f32 %v4590, %v4694
  %v4730 = vadd.f32 %v4591, %v4698
  %v4731 = vadd.f32 %v4592, %v4694
  %v4732 = vadd.f32 %v4593, %v4698
  %v4733 = vadd.f32 %v4594, %v4694
  %v4734 = vadd.f32 %v4595, %v4698
  %v4735 = vadd.f32 %v4596, %v4694
  %v4736 = vadd.f32 %v4597, %v4698
  %v4737 = vadd.f32 %v4598, %v4694
  %v4738 = vadd.f32 %v4599, %v4698
  %v4739 = vadd.f32 %v4600, %v4694
  %v4740 = vadd.f32 %v4601, %v4698
  %v4741 = vadd.f32 %v4602, %v4694
  %v4742 = vadd.f32 %v4603, %v4698
  %v4743 = vadd.f32 %v4604, %v4694
  %v4744 = vadd.f32 %v4605, %v4698
  %v4745 = vadd.f32 %v4606, %v4694
  %v4746 = vadd.f32 %v4607, %v4698
  %v4747 = vadd.f32 %v4608, %v4694
  %v4748 = vadd.f32 %v4609, %v4698
  %v4749 = vadd.f32 %v4610, %v4694
  %v4750 = vadd.f32 %v4611, %v4698
  %v4751 = vadd.f32 %v4612, %v4694
  %v4752 = vadd.f32 %v4613, %v4698
  %v4753 = vadd.f32 %v4614, %v4694
  %v4754 = vadd.f32 %v4615, %v4698
  %v4755 = vadd.f32 %v4616, %v4694
  %v4756 = vadd.f32 %v4617, %v4698
  %v4757 = vadd.f32 %v4618, %v4694
  %v4758 = vadd.f32 %v4619, %v4698
  %v4759 = vadd.f32 %v4620, %v4694
  %v4760 = vadd.f32 %v4621, %v4698
  %v4761 = vadd.f32 %v4622, %v4694
  %v4762 = vadd.f32 %v4623, %v4698
  %v4763 = vadd.f32 %v4624, %v4694
  %v4764 = vadd.f32 %v4625, %v4698
  %v4765 = vadd.f32 %v4626, %v4694
  %v4766 = vadd.f32 %v4627, %v4698
  %v4767 = vadd.f32 %v4628, %v4694
  %v4768 = vadd.f32 %v4629, %v4698
  %v4769 = vadd.f32 %v4630, %v4694
  %v4770 = vadd.f32 %v4631, %v4698
  %v4771 = vadd.f32 %v4632, %v4694
  %v4772 = vadd.f32 %v4633, %v4698
  %v4773 = vadd.f32 %v4634, %v4694
  %v4774 = vadd.f32 %v4635, %v4698
  %v4775 = vadd.f32 %v4636, %v4694
  %v4776 = vadd.f32 %v4637, %v4698
  %v4777 = vadd.f32 %v4638, %v4694
  %v4778 = vadd.f32 %v4639, %v4698
  %v4779 = vadd.f32 %v4640, %v4694
  %v4780 = vadd.f32 %v4641, %v4698
  %v4781 = vadd.f32 %v4642, %v4694
  %v4782 = vadd.f32 %v4643, %v4698
  %v4783 = vadd.f32 %v4644, %v4694
  %v4784 = vadd.f32 %v4645, %v4698
  %v4785 = vadd.f32 %v4646, %v4694
  %v4786 = vadd.f32 %v4647, %v4698
  %v4787 = vadd.f32 %v4648, %v4694
  %v4788 = vadd.f32 %v4649, %v4698
  %v4789 = vadd.f32 %v4650, %v4694
  %v4790 = vadd.f32 %v4651, %v4698
  %v4791 = vadd.f32 %v4652, %v4694
  %v4792 = vadd.f32 %v4653, %v4698
  %v4793 = vadd.f32 %v4654, %v4694
  %v4794 = vadd.f32 %v4655, %v4698
  %v4795 = vadd.f32 %v4656, %v4694
  %v4796 = vadd.f32 %v4657, %v4698
  %v4797 = vadd.f32 %v4658, %v4694
  %v4798 = vadd.f32 %v4659, %v4698
  %v4799 = vadd.f32 %v4660, %v4694
  %v4800 = vadd.f32 %v4661, %v4698
  %v4801 = vadd.f32 %v4662, %v4694
  %v4802 = vadd.f32 %v4663, %v4698
  %v4803 = vadd.f32 %v4664, %v4694
  %v4804 = vadd.f32 %v4665, %v4698
  %v4805 = vadd.f32 %v4666, %v4694
  %v4806 = vadd.f32 %v4667, %v4698
  %v4807 = vadd.f32 %v4668, %v4694
  %v4808 = vadd.f32 %v4669, %v4698
  %v4809 = vadd.f32 %v4670, %v4694
  %v4810 = vadd.f32 %v4671, %v4698
  %v4811 = vadd.f32 %v4672, %v4694
  %v4812 = vadd.f32 %v4673, %v4698
  %v4813 = vadd.f32 %v4674, %v4694
  %v4814 = vadd.f32 %v4675, %v4698
  %v4815 = vadd.f32 %v4676, %v4694
  %v4816 = vadd.f32 %v4677, %v4698
  %v4817 = vadd.f32 %v4678, %v4694
  %v4818 = vadd.f32 %v4679, %v4698
  %v4819 = vadd.f32 %v4680, %v4694
  %v4820 = vadd.f32 %v4681, %v4698
  %v4821 = vadd.f32 %v4682, %v4694
  %v4822 = vadd.f32 %v4683, %v4698
  %v4823 = vadd.f32 %v4684, %v4694
  %v4824 = vadd.f32 %v4685, %v4698
  %v4825 = vadd.f32 %v4686, %v4694
  %v4826 = vadd.f32 %v4687, %v4698
  %v4827 = vadd.f32 %v4688, %v4694
  %v4828 = vadd.f32 %v4689, %v4698
  %v4829 = vmax.f32 %v4701, 0.0
  %v4830 = vmax.f32 %v4702, 0.0
  %v4831 = vmax.f32 %v4703, 0.0
  %v4832 = vmax.f32 %v4704, 0.0
  %v4833 = vmax.f32 %v4705, 0.0
  %v4834 = vmax.f32 %v4706, 0.0
  %v4835 = vmax.f32 %v4707, 0.0
  %v4836 = vmax.f32 %v4708, 0.0
  %v4837 = vmax.f32 %v4709, 0.0
  %v4838 = vmax.f32 %v4710, 0.0
  %v4839 = vmax.f32 %v4711, 0.0
  %v4840 = vmax.f32 %v4712, 0.0
  %v4841 = vmax.f32 %v4713, 0.0
  %v4842 = vmax.f32 %v4714, 0.0
  %v4843 = vmax.f32 %v4715, 0.0
  %v4844 = vmax.f32 %v4716, 0.0
  %v4845 = vmax.f32 %v4717, 0.0
  %v4846 = vmax.f32 %v4718, 0.0
  %v4847 = vmax.f32 %v4719, 0.0
  %v4848 = vmax.f32 %v4720, 0.0
  %v4849 = vmax.f32 %v4721, 0.0
  %v4850 = vmax.f32 %v4722, 0.0
  %v4851 = vmax.f32 %v4723, 0.0
  %v4852 = vmax.f32 %v4724, 0.0
  %v4853 = vmax.f32 %v4725, 0.0
  %v4854 = vmax.f32 %v4726, 0.0
  %v4855 = vmax.f32 %v4727, 0.0
  %v4856 = vmax.f32 %v4728, 0.0
  %v4857 = vmax.f32 %v4729, 0.0
  %v4858 = vmax.f32 %v4730, 0.0
  %v4859 = vmax.f32 %v4731, 0.0
  %v4860 = vmax.f32 %v4732, 0.0
  %v4861 = vmax.f32 %v4733, 0.0
  %v4862 = vmax.f32 %v4734, 0.0
  %v4863 = vmax.f32 %v4735, 0.0
  %v4864 = vmax.f32 %v4736, 0.0
  %v4865 = vmax.f32 %v4737, 0.0
  %v4866 = vmax.f32 %v4738, 0.0
  %v4867 = vmax.f32 %v4739, 0.0
  %v4868 = vmax.f32 %v4740, 0.0
  %v4869 = vmax.f32 %v4741, 0.0
  %v4870 = vmax.f32 %v4742, 0.0
  %v4871 = vmax.f32 %v4743, 0.0
  %v4872 = vmax.f32 %v4744, 0.0
  %v4873 = vmax.f32 %v4745, 0.0
  %v4874 = vmax.f32 %v4746, 0.0
  %v4875 = vmax.f32 %v4747, 0.0
  %v4876 = vmax.f32 %v4748, 0.0
  %v4877 = vmax.f32 %v4749, 0.0
  %v4878 = vmax.f32 %v4750, 0.0
  %v4879 = vmax.f32 %v4751, 0.0
  %v4880 = vmax.f32 %v4752, 0.0
  %v4881 = vmax.f32 %v4753, 0.0
  %v4882 = vmax.f32 %v4754, 0.0
  %v4883 = vmax.f32 %v4755, 0.0
  %v4884 = vmax.f32 %v4756, 0.0
  %v4885 = vmax.f32 %v4757, 0.0
  %v4886 = vmax.f32 %v4758, 0.0
  %v4887 = vmax.f32 %v4759, 0.0
  %v4888 = vmax.f32 %v4760, 0.0
  %v4889 = vmax.f32 %v4761, 0.0
  %v4890 = vmax.f32 %v4762, 0.0
  %v4891 = vmax.f32 %v4763, 0.0
  %v4892 = vmax.f32 %v4764, 0.0
  %v4893 = vmax.f32 %v4765, 0.0
  %v4894 = vmax.f32 %v4766, 0.0
  %v4895 = vmax.f32 %v4767, 0.0
  %v4896 = vmax.f32 %v4768, 0.0
  %v4897 = vmax.f32 %v4769, 0.0
  %v4898 = vmax.f32 %v4770, 0.0
  %v4899 = vmax.f32 %v4771, 0.0
  %v4900 = vmax.f32 %v4772, 0.0
  %v4901 = vmax.f32 %v4773, 0.0
  %v4902 = vmax.f32 %v4774, 0.0
  %v4903 = vmax.f32 %v4775, 0.0
  %v4904 = vmax.f32 %v4776, 0.0
  %v4905 = vmax.f32 %v4777, 0.0
  %v4906 = vmax.f32 %v4778, 0.0
  %v4907 = vmax.f32 %v4779, 0.0
  %v4908 = vmax.f32 %v4780, 0.0
  %v4909 = vmax.f32 %v4781, 0.0
  %v4910 = vmax.f32 %v4782, 0.0
  %v4911 = vmax.f32 %v4783, 0.0
  %v4912 = vmax.f32 %v4784, 0.0
  %v4913 = vmax.f32 %v4785, 0.0
  %v4914 = vmax.f32 %v4786, 0.0
  %v4915 = vmax.f32 %v4787, 0.0
  %v4916 = vmax.f32 %v4788, 0.0
  %v4917 = vmax.f32 %v4789, 0.0
  %v4918 = vmax.f32 %v4790, 0.0
  %v4919 = vmax.f32 %v4791, 0.0
  %v4920 = vmax.f32 %v4792, 0.0
  %v4921 = vmax.f32 %v4793, 0.0
  %v4922 = vmax.f32 %v4794, 0.0
  %v4923 = vmax.f32 %v4795, 0.0
  %v4924 = vmax.f32 %v4796, 0.0
  %v4925 = vmax.f32 %v4797, 0.0
  %v4926 = vmax.f32 %v4798, 0.0
  %v4927 = vmax.f32 %v4799, 0.0
  %v4928 = vmax.f32 %v4800, 0.0
  %v4929 = vmax.f32 %v4801, 0.0
  %v4930 = vmax.f32 %v4802, 0.0
  %v4931 = vmax.f32 %v4803, 0.0
  %v4932 = vmax.f32 %v4804, 0.0
  %v4933 = vmax.f32 %v4805, 0.0
  %v4934 = vmax.f32 %v4806, 0.0
  %v4935 = vmax.f32 %v4807, 0.0
  %v4936 = vmax.f32 %v4808, 0.0
  %v4937 = vmax.f32 %v4809, 0.0
  %v4938 = vmax.f32 %v4810, 0.0
  %v4939 = vmax.f32 %v4811, 0.0
  %v4940 = vmax.f32 %v4812, 0.0
  %v4941 = vmax.f32 %v4813, 0.0
  %v4942 = vmax.f32 %v4814, 0.0
  %v4943 = vmax.f32 %v4815, 0.0
  %v4944 = vmax.f32 %v4816, 0.0
  %v4945 = vmax.f32 %v4817, 0.0
  %v4946 = vmax.f32 %v4818, 0.0
  %v4947 = vmax.f32 %v4819, 0.0
  %v4948 = vmax.f32 %v4820, 0.0
  %v4949 = vmax.f32 %v4821, 0.0
  %v4950 = vmax.f32 %v4822, 0.0
  %v4951 = vmax.f32 %v4823, 0.0
  %v4952 = vmax.f32 %v4824, 0.0
  %v4953 = vmax.f32 %v4825, 0.0
  %v4954 = vmax.f32 %v4826, 0.0
  %v4955 = vmax.f32 %v4827, 0.0
  %v4956 = vmax.f32 %v4828, 0.0
  %v4957 = vrot.slane %v4829, 7
  %v4958 = vrot.slane %v4830, 7
  %v4959 = vrot.slane %v4831, 7
  %v4960 = vrot.slane %v4832, 7
  %v4961 = vrot.slane %v4833, 7
  %v4962 = vrot.slane %v4834, 7
  %v4963 = vrot.slane %v4835, 7
  %v4964 = vrot.slane %v4836, 7
  %v4965 = vrot.slane %v4837, 7
  %v4966 = vrot.slane %v4838, 7
  %v4967 = vrot.slane %v4839, 7
  %v4968 = vrot.slane %v4840, 7
  %v4969 = vrot.slane %v4841, 7
  %v4970 = vrot.slane %v4842, 7
  %v4971 = vrot.slane %v4843, 7
  %v4972 = vrot.slane %v4844, 7
  %v4973 = vrot.slane %v4845, 7
  %v4974 = vrot.slane %v4846, 7
  %v4975 = vrot.slane %v4847, 7
  %v4976 = vrot.slane %v4848, 7
  %v4977 = vrot.slane %v4849, 7
  %v4978 = vrot.slane %v4850, 7
  %v4979 = vrot.slane %v4851, 7
  %v4980 = vrot.slane %v4852, 7
  %v4981 = vrot.slane %v4853, 7
  %v4982 = vrot.slane %v4854, 7
  %v4983 = vrot.slane %v4855, 7
  %v4984 = vrot.slane %v4856, 7
  %v4985 = vrot.slane %v4857, 7
  %v4986 = vrot.slane %v4858, 7
  %v4987 = vrot.slane %v4859, 7
  %v4988 = vrot.slane %v4860, 7
  %v4989 = vrot.slane %v4861, 7
  %v4990 = vrot.slane %v4862, 7
  %v4991 = vrot.slane %v4863, 7
  %v4992 = vrot.slane %v4864, 7
  %v4993 = vrot.slane %v4865, 7
  %v4994 = vrot.slane %v4866, 7
  %v4995 = vrot.slane %v4867, 7
  %v4996 = vrot.slane %v4868, 7
  %v4997 = vrot.slane %v4869, 7
  %v4998 = vrot.slane %v4870, 7
  %v4999 = vrot.slane %v4871, 7
  %v5000 = vrot.slane %v4872, 7
  %v5001 = vrot.slane %v4873, 7
  %v5002 = vrot.slane %v4874, 7
  %v5003 = vrot.slane %v4875, 7
  %v5004 = vrot.slane %v4876, 7
  %v5005 = vrot.slane %v4877, 7
  %v5006 = vrot.slane %v4878, 7
  %v5007 = vrot.slane %v4879, 7
  %v5008 = vrot.slane %v4880, 7
  %v5009 = vrot.slane %v4881, 7
  %v5010 = vrot.slane %v4882, 7
  %v5011 = vrot.slane %v4883, 7
  %v5012 = vrot.slane %v4884, 7
  %v5013 = vrot.slane %v4885, 7
  %v5014 = vrot.slane %v4886, 7
  %v5015 = vrot.slane %v4887, 7
  %v5016 = vrot.slane %v4888, 7
  %v5017 = vrot.slane %v4889, 7
  %v5018 = vrot.slane %v4890, 7
  %v5019 = vrot.slane %v4891, 7
  %v5020 = vrot.slane %v4892, 7
  %v5021 = vrot.slane %v4893, 7
  %v5022 = vrot.slane %v4894, 7
  %v5023 = vrot.slane %v4895, 7
  %v5024 = vrot.slane %v4896, 7
  %v5025 = vrot.slane %v4897, 7
  %v5026 = vrot.slane %v4898, 7
  %v5027 = vrot.slane %v4899, 7
  %v5028 = vrot.slane %v4900, 7
  %v5029 = vrot.slane %v4901, 7
  %v5030 = vrot.slane %v4902, 7
  %v5031 = vrot.slane %v4903, 7
  %v5032 = vrot.slane %v4904, 7
  %v5033 = vrot.slane %v4905, 7
  %v5034 = vrot.slane %v4906, 7
  %v5035 = vrot.slane %v4907, 7
  %v5036 = vrot.slane %v4908, 7
  %v5037 = vrot.slane %v4909, 7
  %v5038 = vrot.slane %v4910, 7
  %v5039 = vrot.slane %v4911, 7
  %v5040 = vrot.slane %v4912, 7
  %v5041 = vrot.slane %v4913, 7
  %v5042 = vrot.slane %v4914, 7
  %v5043 = vrot.slane %v4915, 7
  %v5044 = vrot.slane %v4916, 7
  %v5045 = vrot.slane %v4917, 7
  %v5046 = vrot.slane %v4918, 7
  %v5047 = vrot.slane %v4919, 7
  %v5048 = vrot.slane %v4920, 7
  %v5049 = vrot.slane %v4921, 7
  %v5050 = vrot.slane %v4922, 7
  %v5051 = vrot.slane %v4923, 7
  %v5052 = vrot.slane %v4924, 7
  %v5053 = vrot.slane %v4925, 7
  %v5054 = vrot.slane %v4926, 7
  %v5055 = vrot.slane %v4927, 7
  %v5056 = vrot.slane %v4928, 7
  %v5057 = vrot.slane %v4929, 7
  %v5058 = vrot.slane %v4930, 7
  %v5059 = vrot.slane %v4931, 7
  %v5060 = vrot.slane %v4932, 7
  %v5061 = vrot.slane %v4933, 7
  %v5062 = vrot.slane %v4934, 7
  %v5063 = vrot.slane %v4935, 7
  %v5064 = vrot.slane %v4936, 7
  %v5065 = vrot.slane %v4937, 7
  %v5066 = vrot.slane %v4938, 7
  %v5067 = vrot.slane %v4939, 7
  %v5068 = vrot.slane %v4940, 7
  %v5069 = vrot.slane %v4941, 7
  %v5070 = vrot.slane %v4942, 7
  %v5071 = vrot.slane %v4943, 7
  %v5072 = vrot.slane %v4944, 7
  %v5073 = vrot.slane %v4945, 7
  %v5074 = vrot.slane %v4946, 7
  %v5075 = vrot.slane %v4947, 7
  %v5076 = vrot.slane %v4948, 7
  %v5077 = vrot.slane %v4949, 7
  %v5078 = vrot.slane %v4950, 7
  %v5079 = vrot.slane %v4951, 7
  %v5080 = vrot.slane %v4952, 7
  %v5081 = vrot.slane %v4953, 7
  %v5082 = vrot.slane %v4954, 7
  %v5083 = vrot.slane %v4955, 7
  %v5084 = vrot.slane %v4956, 7
  %v5085 = vsel %vm1451, %v5081, %v5083
  %v5086 = vsel %vm1451, %v5082, %v5084
  %v5087 = vsel %vm1451, %v5079, %v5081
  %v5088 = vsel %vm1451, %v5080, %v5082
  %v5089 = vsel %vm1451, %v5077, %v5079
  %v5090 = vsel %vm1451, %v5078, %v5080
  %v5091 = vsel %vm1451, %v5075, %v5077
  %v5092 = vsel %vm1451, %v5076, %v5078
  %v5093 = vsel %vm1451, %v5073, %v5075
  %v5094 = vsel %vm1451, %v5074, %v5076
  %v5095 = vsel %vm1451, %v5071, %v5073
  %v5096 = vsel %vm1451, %v5072, %v5074
  %v5097 = vsel %vm1451, %v5069, %v5071
  %v5098 = vsel %vm1451, %v5070, %v5072
  %v5099 = vsel %vm1451, %v5067, %v5069
  %v5100 = vsel %vm1451, %v5068, %v5070
  %v5101 = vsel %vm1451, %v5065, %v5067
  %v5102 = vsel %vm1451, %v5066, %v5068
  %v5103 = vsel %vm1451, %v5063, %v5065
  %v5104 = vsel %vm1451, %v5064, %v5066
  %v5105 = vsel %vm1451, %v5061, %v5063
  %v5106 = vsel %vm1451, %v5062, %v5064
  %v5107 = vsel %vm1451, %v5059, %v5061
  %v5108 = vsel %vm1451, %v5060, %v5062
  %v5109 = vsel %vm1451, %v5057, %v5059
  %v5110 = vsel %vm1451, %v5058, %v5060
  %v5111 = vsel %vm1451, %v5055, %v5057
  %v5112 = vsel %vm1451, %v5056, %v5058
  %v5113 = vsel %vm1451, %v5053, %v5055
  %v5114 = vsel %vm1451, %v5054, %v5056
  %v5115 = vsel %vm1451, %v5051, %v5053
  %v5116 = vsel %vm1451, %v5052, %v5054
  %v5117 = vsel %vm1451, %v5049, %v5051
  %v5118 = vsel %vm1451, %v5050, %v5052
  %v5119 = vsel %vm1451, %v5047, %v5049
  %v5120 = vsel %vm1451, %v5048, %v5050
  %v5121 = vsel %vm1451, %v5045, %v5047
  %v5122 = vsel %vm1451, %v5046, %v5048
  %v5123 = vsel %vm1451, %v5043, %v5045
  %v5124 = vsel %vm1451, %v5044, %v5046
  %v5125 = vsel %vm1451, %v5041, %v5043
  %v5126 = vsel %vm1451, %v5042, %v5044
  %v5127 = vsel %vm1451, %v5039, %v5041
  %v5128 = vsel %vm1451, %v5040, %v5042
  %v5129 = vsel %vm1451, %v5037, %v5039
  %v5130 = vsel %vm1451, %v5038, %v5040
  %v5131 = vsel %vm1451, %v5035, %v5037
  %v5132 = vsel %vm1451, %v5036, %v5038
  %v5133 = vsel %vm1451, %v5033, %v5035
  %v5134 = vsel %vm1451, %v5034, %v5036
  %v5135 = vsel %vm1451, %v5031, %v5033
  %v5136 = vsel %vm1451, %v5032, %v5034
  %v5137 = vsel %vm1451, %v5029, %v5031
  %v5138 = vsel %vm1451, %v5030, %v5032
  %v5139 = vsel %vm1451, %v5027, %v5029
  %v5140 = vsel %vm1451, %v5028, %v5030
  %v5141 = vsel %vm1451, %v5025, %v5027
  %v5142 = vsel %vm1451, %v5026, %v5028
  %v5143 = vsel %vm1451, %v5023, %v5025
  %v5144 = vsel %vm1451, %v5024, %v5026
  %v5145 = vsel %vm1451, %v5021, %v5023
  %v5146 = vsel %vm1451, %v5022, %v5024
  %v5147 = vsel %vm1451, %v5019, %v5021
  %v5148 = vsel %vm1451, %v5020, %v5022
  %v5149 = vsel %vm1451, %v5017, %v5019
  %v5150 = vsel %vm1451, %v5018, %v5020
  %v5151 = vsel %vm1451, %v5015, %v5017
  %v5152 = vsel %vm1451, %v5016, %v5018
  %v5153 = vsel %vm1451, %v5013, %v5015
  %v5154 = vsel %vm1451, %v5014, %v5016
  %v5155 = vsel %vm1451, %v5011, %v5013
  %v5156 = vsel %vm1451, %v5012, %v5014
  %v5157 = vsel %vm1451, %v5009, %v5011
  %v5158 = vsel %vm1451, %v5010, %v5012
  %v5159 = vsel %vm1451, %v5007, %v5009
  %v5160 = vsel %vm1451, %v5008, %v5010
  %v5161 = vsel %vm1451, %v5005, %v5007
  %v5162 = vsel %vm1451, %v5006, %v5008
  %v5163 = vsel %vm1451, %v5003, %v5005
  %v5164 = vsel %vm1451, %v5004, %v5006
  %v5165 = vsel %vm1451, %v5001, %v5003
  %v5166 = vsel %vm1451, %v5002, %v5004
  %v5167 = vsel %vm1451, %v4999, %v5001
  %v5168 = vsel %vm1451, %v5000, %v5002
  %v5169 = vsel %vm1451, %v4997, %v4999
  %v5170 = vsel %vm1451, %v4998, %v5000
  %v5171 = vsel %vm1451, %v4995, %v4997
  %v5172 = vsel %vm1451, %v4996, %v4998
  %v5173 = vsel %vm1451, %v4993, %v4995
  %v5174 = vsel %vm1451, %v4994, %v4996
  %v5175 = vsel %vm1451, %v4991, %v4993
  %v5176 = vsel %vm1451, %v4992, %v4994
  %v5177 = vsel %vm1451, %v4989, %v4991
  %v5178 = vsel %vm1451, %v4990, %v4992
  %v5179 = vsel %vm1451, %v4987, %v4989
  %v5180 = vsel %vm1451, %v4988, %v4990
  %v5181 = vsel %vm1451, %v4985, %v4987
  %v5182 = vsel %vm1451, %v4986, %v4988
  %v5183 = vsel %vm1451, %v4983, %v4985
  %v5184 = vsel %vm1451, %v4984, %v4986
  %v5185 = vsel %vm1451, %v4981, %v4983
  %v5186 = vsel %vm1451, %v4982, %v4984
  %v5187 = vsel %vm1451, %v4979, %v4981
  %v5188 = vsel %vm1451, %v4980, %v4982
  %v5189 = vsel %vm1451, %v4977, %v4979
  %v5190 = vsel %vm1451, %v4978, %v4980
  %v5191 = vsel %vm1451, %v4975, %v4977
  %v5192 = vsel %vm1451, %v4976, %v4978
  %v5193 = vsel %vm1451, %v4973, %v4975
  %v5194 = vsel %vm1451, %v4974, %v4976
  %v5195 = vsel %vm1451, %v4971, %v4973
  %v5196 = vsel %vm1451, %v4972, %v4974
  %v5197 = vsel %vm1451, %v4969, %v4971
  %v5198 = vsel %vm1451, %v4970, %v4972
  %v5199 = vsel %vm1451, %v4967, %v4969
  %v5200 = vsel %vm1451, %v4968, %v4970
  %v5201 = vsel %vm1451, %v4965, %v4967
  %v5202 = vsel %vm1451, %v4966, %v4968
  %v5203 = vsel %vm1451, %v4963, %v4965
  %v5204 = vsel %vm1451, %v4964, %v4966
  %v5205 = vsel %vm1451, %v4961, %v4963
  %v5206 = vsel %vm1451, %v4962, %v4964
  %v5207 = vsel %vm1451, %v4959, %v4961
  %v5208 = vsel %vm1451, %v4960, %v4962
  %v5209 = vsel %vm1451, %v4957, %v4959
  %v5210 = vsel %vm1451, %v4958, %v4960
  %v5211 = vsel %vm1451, %v5083, %v4957
  %v5212 = vsel %vm1451, %v5084, %v4958
  %v5213 = vsel %vm155, 0.0, %v5211
  %v5214 = vsel %vm155, 0.0, %v5212
  %v5215 = vsel %vm156, 0.0, %v5209
  %v5216 = vsel %vm156, 0.0, %v5210
  %v5217 = vsel %vm157, 0.0, %v5207
  %v5218 = vsel %vm157, 0.0, %v5208
  %v5219 = vsel %vm158, 0.0, %v5205
  %v5220 = vsel %vm158, 0.0, %v5206
  %v5221 = vsel %vm159, 0.0, %v5203
  %v5222 = vsel %vm159, 0.0, %v5204
  %v5223 = vsel %vm160, 0.0, %v5201
  %v5224 = vsel %vm160, 0.0, %v5202
  %v5225 = vsel %vm161, 0.0, %v5199
  %v5226 = vsel %vm161, 0.0, %v5200
  %v5227 = vsel %vm162, 0.0, %v5197
  %v5228 = vsel %vm162, 0.0, %v5198
  %v5229 = vsel %vm163, 0.0, %v5195
  %v5230 = vsel %vm163, 0.0, %v5196
  %v5231 = vsel %vm164, 0.0, %v5193
  %v5232 = vsel %vm164, 0.0, %v5194
  %v5233 = vsel %vm165, 0.0, %v5191
  %v5234 = vsel %vm165, 0.0, %v5192
  %v5235 = vsel %vm166, 0.0, %v5189
  %v5236 = vsel %vm166, 0.0, %v5190
  %v5237 = vsel %vm167, 0.0, %v5187
  %v5238 = vsel %vm167, 0.0, %v5188
  %v5239 = vsel %vm168, 0.0, %v5185
  %v5240 = vsel %vm168, 0.0, %v5186
  %v5241 = vsel %vm169, 0.0, %v5183
  %v5242 = vsel %vm169, 0.0, %v5184
  %v5243 = vsel %vm170, 0.0, %v5181
  %v5244 = vsel %vm170, 0.0, %v5182
  %v5245 = vsel %vm171, 0.0, %v5179
  %v5246 = vsel %vm171, 0.0, %v5180
  %v5247 = vsel %vm172, 0.0, %v5177
  %v5248 = vsel %vm172, 0.0, %v5178
  %v5249 = vsel %vm173, 0.0, %v5175
  %v5250 = vsel %vm173, 0.0, %v5176
  %v5251 = vsel %vm174, 0.0, %v5173
  %v5252 = vsel %vm174, 0.0, %v5174
  %v5253 = vsel %vm175, 0.0, %v5171
  %v5254 = vsel %vm175, 0.0, %v5172
  %v5255 = vsel %vm176, 0.0, %v5169
  %v5256 = vsel %vm176, 0.0, %v5170
  %v5257 = vsel %vm177, 0.0, %v5167
  %v5258 = vsel %vm177, 0.0, %v5168
  %v5259 = vsel %vm178, 0.0, %v5165
  %v5260 = vsel %vm178, 0.0, %v5166
  %v5261 = vsel %vm179, 0.0, %v5163
  %v5262 = vsel %vm179, 0.0, %v5164
  %v5263 = vsel %vm180, 0.0, %v5161
  %v5264 = vsel %vm180, 0.0, %v5162
  %v5265 = vsel %vm181, 0.0, %v5159
  %v5266 = vsel %vm181, 0.0, %v5160
  %v5267 = vsel %vm182, 0.0, %v5157
  %v5268 = vsel %vm182, 0.0, %v5158
  %v5269 = vsel %vm183, 0.0, %v5155
  %v5270 = vsel %vm183, 0.0, %v5156
  %v5271 = vsel %vm184, 0.0, %v5153
  %v5272 = vsel %vm184, 0.0, %v5154
  %v5273 = vsel %vm185, 0.0, %v5151
  %v5274 = vsel %vm185, 0.0, %v5152
  %v5275 = vsel %vm186, 0.0, %v5149
  %v5276 = vsel %vm186, 0.0, %v5150
  %v5277 = vsel %vm187, 0.0, %v5147
  %v5278 = vsel %vm187, 0.0, %v5148
  %v5279 = vsel %vm188, 0.0, %v5145
  %v5280 = vsel %vm188, 0.0, %v5146
  %v5281 = vsel %vm189, 0.0, %v5143
  %v5282 = vsel %vm189, 0.0, %v5144
  %v5283 = vsel %vm190, 0.0, %v5141
  %v5284 = vsel %vm190, 0.0, %v5142
  %v5285 = vsel %vm191, 0.0, %v5139
  %v5286 = vsel %vm191, 0.0, %v5140
  %v5287 = vsel %vm192, 0.0, %v5137
  %v5288 = vsel %vm192, 0.0, %v5138
  %v5289 = vsel %vm193, 0.0, %v5135
  %v5290 = vsel %vm193, 0.0, %v5136
  %v5291 = vsel %vm194, 0.0, %v5133
  %v5292 = vsel %vm194, 0.0, %v5134
  %v5293 = vsel %vm195, 0.0, %v5131
  %v5294 = vsel %vm195, 0.0, %v5132
  %v5295 = vsel %vm196, 0.0, %v5129
  %v5296 = vsel %vm196, 0.0, %v5130
  %v5297 = vsel %vm197, 0.0, %v5127
  %v5298 = vsel %vm197, 0.0, %v5128
  %v5299 = vsel %vm198, 0.0, %v5125
  %v5300 = vsel %vm198, 0.0, %v5126
  %v5301 = vsel %vm199, 0.0, %v5123
  %v5302 = vsel %vm199, 0.0, %v5124
  %v5303 = vsel %vm200, 0.0, %v5121
  %v5304 = vsel %vm200, 0.0, %v5122
  %v5305 = vsel %vm201, 0.0, %v5119
  %v5306 = vsel %vm201, 0.0, %v5120
  %v5307 = vsel %vm202, 0.0, %v5117
  %v5308 = vsel %vm202, 0.0, %v5118
  %v5309 = vsel %vm203, 0.0, %v5115
  %v5310 = vsel %vm203, 0.0, %v5116
  %v5311 = vsel %vm204, 0.0, %v5113
  %v5312 = vsel %vm204, 0.0, %v5114
  %v5313 = vsel %vm205, 0.0, %v5111
  %v5314 = vsel %vm205, 0.0, %v5112
  %v5315 = vsel %vm206, 0.0, %v5109
  %v5316 = vsel %vm206, 0.0, %v5110
  %v5317 = vsel %vm207, 0.0, %v5107
  %v5318 = vsel %vm207, 0.0, %v5108
  %v5319 = vsel %vm208, 0.0, %v5105
  %v5320 = vsel %vm208, 0.0, %v5106
  %v5321 = vsel %vm209, 0.0, %v5103
  %v5322 = vsel %vm209, 0.0, %v5104
  %v5323 = vsel %vm210, 0.0, %v5101
  %v5324 = vsel %vm210, 0.0, %v5102
  %v5325 = vsel %vm211, 0.0, %v5099
  %v5326 = vsel %vm211, 0.0, %v5100
  %v5327 = vsel %vm212, 0.0, %v5097
  %v5328 = vsel %vm212, 0.0, %v5098
  %v5329 = vsel %vm213, 0.0, %v5095
  %v5330 = vsel %vm213, 0.0, %v5096
  %v5331 = vsel %vm214, 0.0, %v5093
  %v5332 = vsel %vm214, 0.0, %v5094
  %v5333 = vsel %vm215, 0.0, %v5091
  %v5334 = vsel %vm215, 0.0, %v5092
  %v5335 = vsel %vm216, 0.0, %v5089
  %v5336 = vsel %vm216, 0.0, %v5090
  %v5337 = vsel %vm217, 0.0, %v5087
  %v5338 = vsel %vm217, 0.0, %v5088
  %v5339 = vsel %vm218, 0.0, %v5085
  %v5340 = vsel %vm218, 0.0, %v5086
  %v5341 = vrot.slane %v4829, 1
  %v5342 = vrot.slane %v4830, 1
  %v5343 = vrot.slane %v4831, 1
  %v5344 = vrot.slane %v4832, 1
  %v5345 = vrot.slane %v4833, 1
  %v5346 = vrot.slane %v4834, 1
  %v5347 = vrot.slane %v4835, 1
  %v5348 = vrot.slane %v4836, 1
  %v5349 = vrot.slane %v4837, 1
  %v5350 = vrot.slane %v4838, 1
  %v5351 = vrot.slane %v4839, 1
  %v5352 = vrot.slane %v4840, 1
  %v5353 = vrot.slane %v4841, 1
  %v5354 = vrot.slane %v4842, 1
  %v5355 = vrot.slane %v4843, 1
  %v5356 = vrot.slane %v4844, 1
  %v5357 = vrot.slane %v4845, 1
  %v5358 = vrot.slane %v4846, 1
  %v5359 = vrot.slane %v4847, 1
  %v5360 = vrot.slane %v4848, 1
  %v5361 = vrot.slane %v4849, 1
  %v5362 = vrot.slane %v4850, 1
  %v5363 = vrot.slane %v4851, 1
  %v5364 = vrot.slane %v4852, 1
  %v5365 = vrot.slane %v4853, 1
  %v5366 = vrot.slane %v4854, 1
  %v5367 = vrot.slane %v4855, 1
  %v5368 = vrot.slane %v4856, 1
  %v5369 = vrot.slane %v4857, 1
  %v5370 = vrot.slane %v4858, 1
  %v5371 = vrot.slane %v4859, 1
  %v5372 = vrot.slane %v4860, 1
  %v5373 = vrot.slane %v4861, 1
  %v5374 = vrot.slane %v4862, 1
  %v5375 = vrot.slane %v4863, 1
  %v5376 = vrot.slane %v4864, 1
  %v5377 = vrot.slane %v4865, 1
  %v5378 = vrot.slane %v4866, 1
  %v5379 = vrot.slane %v4867, 1
  %v5380 = vrot.slane %v4868, 1
  %v5381 = vrot.slane %v4869, 1
  %v5382 = vrot.slane %v4870, 1
  %v5383 = vrot.slane %v4871, 1
  %v5384 = vrot.slane %v4872, 1
  %v5385 = vrot.slane %v4873, 1
  %v5386 = vrot.slane %v4874, 1
  %v5387 = vrot.slane %v4875, 1
  %v5388 = vrot.slane %v4876, 1
  %v5389 = vrot.slane %v4877, 1
  %v5390 = vrot.slane %v4878, 1
  %v5391 = vrot.slane %v4879, 1
  %v5392 = vrot.slane %v4880, 1
  %v5393 = vrot.slane %v4881, 1
  %v5394 = vrot.slane %v4882, 1
  %v5395 = vrot.slane %v4883, 1
  %v5396 = vrot.slane %v4884, 1
  %v5397 = vrot.slane %v4885, 1
  %v5398 = vrot.slane %v4886, 1
  %v5399 = vrot.slane %v4887, 1
  %v5400 = vrot.slane %v4888, 1
  %v5401 = vrot.slane %v4889, 1
  %v5402 = vrot.slane %v4890, 1
  %v5403 = vrot.slane %v4891, 1
  %v5404 = vrot.slane %v4892, 1
  %v5405 = vrot.slane %v4893, 1
  %v5406 = vrot.slane %v4894, 1
  %v5407 = vrot.slane %v4895, 1
  %v5408 = vrot.slane %v4896, 1
  %v5409 = vrot.slane %v4897, 1
  %v5410 = vrot.slane %v4898, 1
  %v5411 = vrot.slane %v4899, 1
  %v5412 = vrot.slane %v4900, 1
  %v5413 = vrot.slane %v4901, 1
  %v5414 = vrot.slane %v4902, 1
  %v5415 = vrot.slane %v4903, 1
  %v5416 = vrot.slane %v4904, 1
  %v5417 = vrot.slane %v4905, 1
  %v5418 = vrot.slane %v4906, 1
  %v5419 = vrot.slane %v4907, 1
  %v5420 = vrot.slane %v4908, 1
  %v5421 = vrot.slane %v4909, 1
  %v5422 = vrot.slane %v4910, 1
  %v5423 = vrot.slane %v4911, 1
  %v5424 = vrot.slane %v4912, 1
  %v5425 = vrot.slane %v4913, 1
  %v5426 = vrot.slane %v4914, 1
  %v5427 = vrot.slane %v4915, 1
  %v5428 = vrot.slane %v4916, 1
  %v5429 = vrot.slane %v4917, 1
  %v5430 = vrot.slane %v4918, 1
  %v5431 = vrot.slane %v4919, 1
  %v5432 = vrot.slane %v4920, 1
  %v5433 = vrot.slane %v4921, 1
  %v5434 = vrot.slane %v4922, 1
  %v5435 = vrot.slane %v4923, 1
  %v5436 = vrot.slane %v4924, 1
  %v5437 = vrot.slane %v4925, 1
  %v5438 = vrot.slane %v4926, 1
  %v5439 = vrot.slane %v4927, 1
  %v5440 = vrot.slane %v4928, 1
  %v5441 = vrot.slane %v4929, 1
  %v5442 = vrot.slane %v4930, 1
  %v5443 = vrot.slane %v4931, 1
  %v5444 = vrot.slane %v4932, 1
  %v5445 = vrot.slane %v4933, 1
  %v5446 = vrot.slane %v4934, 1
  %v5447 = vrot.slane %v4935, 1
  %v5448 = vrot.slane %v4936, 1
  %v5449 = vrot.slane %v4937, 1
  %v5450 = vrot.slane %v4938, 1
  %v5451 = vrot.slane %v4939, 1
  %v5452 = vrot.slane %v4940, 1
  %v5453 = vrot.slane %v4941, 1
  %v5454 = vrot.slane %v4942, 1
  %v5455 = vrot.slane %v4943, 1
  %v5456 = vrot.slane %v4944, 1
  %v5457 = vrot.slane %v4945, 1
  %v5458 = vrot.slane %v4946, 1
  %v5459 = vrot.slane %v4947, 1
  %v5460 = vrot.slane %v4948, 1
  %v5461 = vrot.slane %v4949, 1
  %v5462 = vrot.slane %v4950, 1
  %v5463 = vrot.slane %v4951, 1
  %v5464 = vrot.slane %v4952, 1
  %v5465 = vrot.slane %v4953, 1
  %v5466 = vrot.slane %v4954, 1
  %v5467 = vrot.slane %v4955, 1
  %v5468 = vrot.slane %v4956, 1
  %v5469 = vsel %vm1836, %v5465, %v5467
  %v5470 = vsel %vm1836, %v5466, %v5468
  %v5471 = vsel %vm1836, %v5463, %v5465
  %v5472 = vsel %vm1836, %v5464, %v5466
  %v5473 = vsel %vm1836, %v5461, %v5463
  %v5474 = vsel %vm1836, %v5462, %v5464
  %v5475 = vsel %vm1836, %v5459, %v5461
  %v5476 = vsel %vm1836, %v5460, %v5462
  %v5477 = vsel %vm1836, %v5457, %v5459
  %v5478 = vsel %vm1836, %v5458, %v5460
  %v5479 = vsel %vm1836, %v5455, %v5457
  %v5480 = vsel %vm1836, %v5456, %v5458
  %v5481 = vsel %vm1836, %v5453, %v5455
  %v5482 = vsel %vm1836, %v5454, %v5456
  %v5483 = vsel %vm1836, %v5451, %v5453
  %v5484 = vsel %vm1836, %v5452, %v5454
  %v5485 = vsel %vm1836, %v5449, %v5451
  %v5486 = vsel %vm1836, %v5450, %v5452
  %v5487 = vsel %vm1836, %v5447, %v5449
  %v5488 = vsel %vm1836, %v5448, %v5450
  %v5489 = vsel %vm1836, %v5445, %v5447
  %v5490 = vsel %vm1836, %v5446, %v5448
  %v5491 = vsel %vm1836, %v5443, %v5445
  %v5492 = vsel %vm1836, %v5444, %v5446
  %v5493 = vsel %vm1836, %v5441, %v5443
  %v5494 = vsel %vm1836, %v5442, %v5444
  %v5495 = vsel %vm1836, %v5439, %v5441
  %v5496 = vsel %vm1836, %v5440, %v5442
  %v5497 = vsel %vm1836, %v5437, %v5439
  %v5498 = vsel %vm1836, %v5438, %v5440
  %v5499 = vsel %vm1836, %v5435, %v5437
  %v5500 = vsel %vm1836, %v5436, %v5438
  %v5501 = vsel %vm1836, %v5433, %v5435
  %v5502 = vsel %vm1836, %v5434, %v5436
  %v5503 = vsel %vm1836, %v5431, %v5433
  %v5504 = vsel %vm1836, %v5432, %v5434
  %v5505 = vsel %vm1836, %v5429, %v5431
  %v5506 = vsel %vm1836, %v5430, %v5432
  %v5507 = vsel %vm1836, %v5427, %v5429
  %v5508 = vsel %vm1836, %v5428, %v5430
  %v5509 = vsel %vm1836, %v5425, %v5427
  %v5510 = vsel %vm1836, %v5426, %v5428
  %v5511 = vsel %vm1836, %v5423, %v5425
  %v5512 = vsel %vm1836, %v5424, %v5426
  %v5513 = vsel %vm1836, %v5421, %v5423
  %v5514 = vsel %vm1836, %v5422, %v5424
  %v5515 = vsel %vm1836, %v5419, %v5421
  %v5516 = vsel %vm1836, %v5420, %v5422
  %v5517 = vsel %vm1836, %v5417, %v5419
  %v5518 = vsel %vm1836, %v5418, %v5420
  %v5519 = vsel %vm1836, %v5415, %v5417
  %v5520 = vsel %vm1836, %v5416, %v5418
  %v5521 = vsel %vm1836, %v5413, %v5415
  %v5522 = vsel %vm1836, %v5414, %v5416
  %v5523 = vsel %vm1836, %v5411, %v5413
  %v5524 = vsel %vm1836, %v5412, %v5414
  %v5525 = vsel %vm1836, %v5409, %v5411
  %v5526 = vsel %vm1836, %v5410, %v5412
  %v5527 = vsel %vm1836, %v5407, %v5409
  %v5528 = vsel %vm1836, %v5408, %v5410
  %v5529 = vsel %vm1836, %v5405, %v5407
  %v5530 = vsel %vm1836, %v5406, %v5408
  %v5531 = vsel %vm1836, %v5403, %v5405
  %v5532 = vsel %vm1836, %v5404, %v5406
  %v5533 = vsel %vm1836, %v5401, %v5403
  %v5534 = vsel %vm1836, %v5402, %v5404
  %v5535 = vsel %vm1836, %v5399, %v5401
  %v5536 = vsel %vm1836, %v5400, %v5402
  %v5537 = vsel %vm1836, %v5397, %v5399
  %v5538 = vsel %vm1836, %v5398, %v5400
  %v5539 = vsel %vm1836, %v5395, %v5397
  %v5540 = vsel %vm1836, %v5396, %v5398
  %v5541 = vsel %vm1836, %v5393, %v5395
  %v5542 = vsel %vm1836, %v5394, %v5396
  %v5543 = vsel %vm1836, %v5391, %v5393
  %v5544 = vsel %vm1836, %v5392, %v5394
  %v5545 = vsel %vm1836, %v5389, %v5391
  %v5546 = vsel %vm1836, %v5390, %v5392
  %v5547 = vsel %vm1836, %v5387, %v5389
  %v5548 = vsel %vm1836, %v5388, %v5390
  %v5549 = vsel %vm1836, %v5385, %v5387
  %v5550 = vsel %vm1836, %v5386, %v5388
  %v5551 = vsel %vm1836, %v5383, %v5385
  %v5552 = vsel %vm1836, %v5384, %v5386
  %v5553 = vsel %vm1836, %v5381, %v5383
  %v5554 = vsel %vm1836, %v5382, %v5384
  %v5555 = vsel %vm1836, %v5379, %v5381
  %v5556 = vsel %vm1836, %v5380, %v5382
  %v5557 = vsel %vm1836, %v5377, %v5379
  %v5558 = vsel %vm1836, %v5378, %v5380
  %v5559 = vsel %vm1836, %v5375, %v5377
  %v5560 = vsel %vm1836, %v5376, %v5378
  %v5561 = vsel %vm1836, %v5373, %v5375
  %v5562 = vsel %vm1836, %v5374, %v5376
  %v5563 = vsel %vm1836, %v5371, %v5373
  %v5564 = vsel %vm1836, %v5372, %v5374
  %v5565 = vsel %vm1836, %v5369, %v5371
  %v5566 = vsel %vm1836, %v5370, %v5372
  %v5567 = vsel %vm1836, %v5367, %v5369
  %v5568 = vsel %vm1836, %v5368, %v5370
  %v5569 = vsel %vm1836, %v5365, %v5367
  %v5570 = vsel %vm1836, %v5366, %v5368
  %v5571 = vsel %vm1836, %v5363, %v5365
  %v5572 = vsel %vm1836, %v5364, %v5366
  %v5573 = vsel %vm1836, %v5361, %v5363
  %v5574 = vsel %vm1836, %v5362, %v5364
  %v5575 = vsel %vm1836, %v5359, %v5361
  %v5576 = vsel %vm1836, %v5360, %v5362
  %v5577 = vsel %vm1836, %v5357, %v5359
  %v5578 = vsel %vm1836, %v5358, %v5360
  %v5579 = vsel %vm1836, %v5355, %v5357
  %v5580 = vsel %vm1836, %v5356, %v5358
  %v5581 = vsel %vm1836, %v5353, %v5355
  %v5582 = vsel %vm1836, %v5354, %v5356
  %v5583 = vsel %vm1836, %v5351, %v5353
  %v5584 = vsel %vm1836, %v5352, %v5354
  %v5585 = vsel %vm1836, %v5349, %v5351
  %v5586 = vsel %vm1836, %v5350, %v5352
  %v5587 = vsel %vm1836, %v5347, %v5349
  %v5588 = vsel %vm1836, %v5348, %v5350
  %v5589 = vsel %vm1836, %v5345, %v5347
  %v5590 = vsel %vm1836, %v5346, %v5348
  %v5591 = vsel %vm1836, %v5343, %v5345
  %v5592 = vsel %vm1836, %v5344, %v5346
  %v5593 = vsel %vm1836, %v5341, %v5343
  %v5594 = vsel %vm1836, %v5342, %v5344
  %v5595 = vsel %vm1836, %v5467, %v5341
  %v5596 = vsel %vm1836, %v5468, %v5342
  %v5597 = vsel %vm219, 0.0, %v5593
  %v5598 = vsel %vm219, 0.0, %v5594
  %v5599 = vsel %vm220, 0.0, %v5591
  %v5600 = vsel %vm220, 0.0, %v5592
  %v5601 = vsel %vm221, 0.0, %v5589
  %v5602 = vsel %vm221, 0.0, %v5590
  %v5603 = vsel %vm222, 0.0, %v5587
  %v5604 = vsel %vm222, 0.0, %v5588
  %v5605 = vsel %vm223, 0.0, %v5585
  %v5606 = vsel %vm223, 0.0, %v5586
  %v5607 = vsel %vm224, 0.0, %v5583
  %v5608 = vsel %vm224, 0.0, %v5584
  %v5609 = vsel %vm225, 0.0, %v5581
  %v5610 = vsel %vm225, 0.0, %v5582
  %v5611 = vsel %vm226, 0.0, %v5579
  %v5612 = vsel %vm226, 0.0, %v5580
  %v5613 = vsel %vm227, 0.0, %v5577
  %v5614 = vsel %vm227, 0.0, %v5578
  %v5615 = vsel %vm228, 0.0, %v5575
  %v5616 = vsel %vm228, 0.0, %v5576
  %v5617 = vsel %vm229, 0.0, %v5573
  %v5618 = vsel %vm229, 0.0, %v5574
  %v5619 = vsel %vm230, 0.0, %v5571
  %v5620 = vsel %vm230, 0.0, %v5572
  %v5621 = vsel %vm231, 0.0, %v5569
  %v5622 = vsel %vm231, 0.0, %v5570
  %v5623 = vsel %vm232, 0.0, %v5567
  %v5624 = vsel %vm232, 0.0, %v5568
  %v5625 = vsel %vm233, 0.0, %v5565
  %v5626 = vsel %vm233, 0.0, %v5566
  %v5627 = vsel %vm234, 0.0, %v5563
  %v5628 = vsel %vm234, 0.0, %v5564
  %v5629 = vsel %vm235, 0.0, %v5561
  %v5630 = vsel %vm235, 0.0, %v5562
  %v5631 = vsel %vm236, 0.0, %v5559
  %v5632 = vsel %vm236, 0.0, %v5560
  %v5633 = vsel %vm237, 0.0, %v5557
  %v5634 = vsel %vm237, 0.0, %v5558
  %v5635 = vsel %vm238, 0.0, %v5555
  %v5636 = vsel %vm238, 0.0, %v5556
  %v5637 = vsel %vm239, 0.0, %v5553
  %v5638 = vsel %vm239, 0.0, %v5554
  %v5639 = vsel %vm240, 0.0, %v5551
  %v5640 = vsel %vm240, 0.0, %v5552
  %v5641 = vsel %vm241, 0.0, %v5549
  %v5642 = vsel %vm241, 0.0, %v5550
  %v5643 = vsel %vm242, 0.0, %v5547
  %v5644 = vsel %vm242, 0.0, %v5548
  %v5645 = vsel %vm243, 0.0, %v5545
  %v5646 = vsel %vm243, 0.0, %v5546
  %v5647 = vsel %vm244, 0.0, %v5543
  %v5648 = vsel %vm244, 0.0, %v5544
  %v5649 = vsel %vm245, 0.0, %v5541
  %v5650 = vsel %vm245, 0.0, %v5542
  %v5651 = vsel %vm246, 0.0, %v5539
  %v5652 = vsel %vm246, 0.0, %v5540
  %v5653 = vsel %vm247, 0.0, %v5537
  %v5654 = vsel %vm247, 0.0, %v5538
  %v5655 = vsel %vm248, 0.0, %v5535
  %v5656 = vsel %vm248, 0.0, %v5536
  %v5657 = vsel %vm249, 0.0, %v5533
  %v5658 = vsel %vm249, 0.0, %v5534
  %v5659 = vsel %vm250, 0.0, %v5531
  %v5660 = vsel %vm250, 0.0, %v5532
  %v5661 = vsel %vm251, 0.0, %v5529
  %v5662 = vsel %vm251, 0.0, %v5530
  %v5663 = vsel %vm252, 0.0, %v5527
  %v5664 = vsel %vm252, 0.0, %v5528
  %v5665 = vsel %vm253, 0.0, %v5525
  %v5666 = vsel %vm253, 0.0, %v5526
  %v5667 = vsel %vm254, 0.0, %v5523
  %v5668 = vsel %vm254, 0.0, %v5524
  %v5669 = vsel %vm255, 0.0, %v5521
  %v5670 = vsel %vm255, 0.0, %v5522
  %v5671 = vsel %vm256, 0.0, %v5519
  %v5672 = vsel %vm256, 0.0, %v5520
  %v5673 = vsel %vm257, 0.0, %v5517
  %v5674 = vsel %vm257, 0.0, %v5518
  %v5675 = vsel %vm258, 0.0, %v5515
  %v5676 = vsel %vm258, 0.0, %v5516
  %v5677 = vsel %vm259, 0.0, %v5513
  %v5678 = vsel %vm259, 0.0, %v5514
  %v5679 = vsel %vm260, 0.0, %v5511
  %v5680 = vsel %vm260, 0.0, %v5512
  %v5681 = vsel %vm261, 0.0, %v5509
  %v5682 = vsel %vm261, 0.0, %v5510
  %v5683 = vsel %vm262, 0.0, %v5507
  %v5684 = vsel %vm262, 0.0, %v5508
  %v5685 = vsel %vm263, 0.0, %v5505
  %v5686 = vsel %vm263, 0.0, %v5506
  %v5687 = vsel %vm264, 0.0, %v5503
  %v5688 = vsel %vm264, 0.0, %v5504
  %v5689 = vsel %vm265, 0.0, %v5501
  %v5690 = vsel %vm265, 0.0, %v5502
  %v5691 = vsel %vm266, 0.0, %v5499
  %v5692 = vsel %vm266, 0.0, %v5500
  %v5693 = vsel %vm267, 0.0, %v5497
  %v5694 = vsel %vm267, 0.0, %v5498
  %v5695 = vsel %vm268, 0.0, %v5495
  %v5696 = vsel %vm268, 0.0, %v5496
  %v5697 = vsel %vm269, 0.0, %v5493
  %v5698 = vsel %vm269, 0.0, %v5494
  %v5699 = vsel %vm270, 0.0, %v5491
  %v5700 = vsel %vm270, 0.0, %v5492
  %v5701 = vsel %vm271, 0.0, %v5489
  %v5702 = vsel %vm271, 0.0, %v5490
  %v5703 = vsel %vm272, 0.0, %v5487
  %v5704 = vsel %vm272, 0.0, %v5488
  %v5705 = vsel %vm273, 0.0, %v5485
  %v5706 = vsel %vm273, 0.0, %v5486
  %v5707 = vsel %vm274, 0.0, %v5483
  %v5708 = vsel %vm274, 0.0, %v5484
  %v5709 = vsel %vm275, 0.0, %v5481
  %v5710 = vsel %vm275, 0.0, %v5482
  %v5711 = vsel %vm276, 0.0, %v5479
  %v5712 = vsel %vm276, 0.0, %v5480
  %v5713 = vsel %vm277, 0.0, %v5477
  %v5714 = vsel %vm277, 0.0, %v5478
  %v5715 = vsel %vm278, 0.0, %v5475
  %v5716 = vsel %vm278, 0.0, %v5476
  %v5717 = vsel %vm279, 0.0, %v5473
  %v5718 = vsel %vm279, 0.0, %v5474
  %v5719 = vsel %vm280, 0.0, %v5471
  %v5720 = vsel %vm280, 0.0, %v5472
  %v5721 = vsel %vm281, 0.0, %v5469
  %v5722 = vsel %vm281, 0.0, %v5470
  %v5723 = vsel %vm282, 0.0, %v5595
  %v5724 = vsel %vm282, 0.0, %v5596
  %v5725 = vpack.c.bf16 %v5215, %v5213
  %v5726 = vpack.c.bf16 %v5216, %v5214
  %v5727 = vpack.c.bf16 %v5219, %v5217
  %v5728 = vpack.c.bf16 %v5220, %v5218
  %v5729 = vpack.c.bf16 %v5223, %v5221
  %v5730 = vpack.c.bf16 %v5224, %v5222
  %v5731 = vpack.c.bf16 %v5227, %v5225
  %v5732 = vpack.c.bf16 %v5228, %v5226
  %v5733 = vpack.c.bf16 %v5231, %v5229
  %v5734 = vpack.c.bf16 %v5232, %v5230
  %v5735 = vpack.c.bf16 %v5235, %v5233
  %v5736 = vpack.c.bf16 %v5236, %v5234
  %v5737 = vpack.c.bf16 %v5239, %v5237
  %v5738 = vpack.c.bf16 %v5240, %v5238
  %v5739 = vpack.c.bf16 %v5243, %v5241
  %v5740 = vpack.c.bf16 %v5244, %v5242
  %v5741 = vpack.c.bf16 %v5247, %v5245
  %v5742 = vpack.c.bf16 %v5248, %v5246
  %v5743 = vpack.c.bf16 %v5251, %v5249
  %v5744 = vpack.c.bf16 %v5252, %v5250
  %v5745 = vpack.c.bf16 %v5255, %v5253
  %v5746 = vpack.c.bf16 %v5256, %v5254
  %v5747 = vpack.c.bf16 %v5259, %v5257
  %v5748 = vpack.c.bf16 %v5260, %v5258
  %v5749 = vpack.c.bf16 %v5263, %v5261
  %v5750 = vpack.c.bf16 %v5264, %v5262
  %v5751 = vpack.c.bf16 %v5267, %v5265
  %v5752 = vpack.c.bf16 %v5268, %v5266
  %v5753 = vpack.c.bf16 %v5271, %v5269
  %v5754 = vpack.c.bf16 %v5272, %v5270
  %v5755 = vpack.c.bf16 %v5275, %v5273
  %v5756 = vpack.c.bf16 %v5276, %v5274
  %v5757 = vpack.c.bf16 %v5279, %v5277
  %v5758 = vpack.c.bf16 %v5280, %v5278
  %v5759 = vpack.c.bf16 %v5283, %v5281
  %v5760 = vpack.c.bf16 %v5284, %v5282
  %v5761 = vpack.c.bf16 %v5287, %v5285
  %v5762 = vpack.c.bf16 %v5288, %v5286
  %v5763 = vpack.c.bf16 %v5291, %v5289
  %v5764 = vpack.c.bf16 %v5292, %v5290
  %v5765 = vpack.c.bf16 %v5295, %v5293
  %v5766 = vpack.c.bf16 %v5296, %v5294
  %v5767 = vpack.c.bf16 %v5299, %v5297
  %v5768 = vpack.c.bf16 %v5300, %v5298
  %v5769 = vpack.c.bf16 %v5303, %v5301
  %v5770 = vpack.c.bf16 %v5304, %v5302
  %v5771 = vpack.c.bf16 %v5307, %v5305
  %v5772 = vpack.c.bf16 %v5308, %v5306
  %v5773 = vpack.c.bf16 %v5311, %v5309
  %v5774 = vpack.c.bf16 %v5312, %v5310
  %v5775 = vpack.c.bf16 %v5315, %v5313
  %v5776 = vpack.c.bf16 %v5316, %v5314
  %v5777 = vpack.c.bf16 %v5319, %v5317
  %v5778 = vpack.c.bf16 %v5320, %v5318
  %v5779 = vpack.c.bf16 %v5323, %v5321
  %v5780 = vpack.c.bf16 %v5324, %v5322
  %v5781 = vpack.c.bf16 %v5327, %v5325
  %v5782 = vpack.c.bf16 %v5328, %v5326
  %v5783 = vpack.c.bf16 %v5331, %v5329
  %v5784 = vpack.c.bf16 %v5332, %v5330
  %v5785 = vpack.c.bf16 %v5335, %v5333
  %v5786 = vpack.c.bf16 %v5336, %v5334
  %v5787 = vpack.c.bf16 %v5339, %v5337
  %v5788 = vpack.c.bf16 %v5340, %v5338
  %v5789 = vld [vmem:[%s6] sm:$0xff]
  %v5790 = vld [vmem:[%s6 + $0x8] sm:$0xff]
  %v5791 = vld [vmem:[%s6 + $0x10] sm:$0xff]
  %v5792 = vld [vmem:[%s6 + $0x18] sm:$0xff]
  %v5793 = vld [vmem:[%s6 + $0x20] sm:$0xff]
  %v5794 = vld [vmem:[%s6 + $0x28] sm:$0xff]
  %v5795 = vld [vmem:[%s6 + $0x30] sm:$0xff]
  %v5796 = vld [vmem:[%s6 + $0x38] sm:$0xff]
  %v5797 = vld [vmem:[%s6 + $0x40] sm:$0xff]
  %v5798 = vld [vmem:[%s6 + $0x48] sm:$0xff]
  %v5799 = vld [vmem:[%s6 + $0x50] sm:$0xff]
  %v5800 = vld [vmem:[%s6 + $0x58] sm:$0xff]
  %v5801 = vld [vmem:[%s6 + $0x60] sm:$0xff]
  %v5802 = vld [vmem:[%s6 + $0x68] sm:$0xff]
  %v5803 = vld [vmem:[%s6 + $0x70] sm:$0xff]
  %v5804 = vld [vmem:[%s6 + $0x78] sm:$0xff]
  %v5805 = vld [vmem:[%s6 + $0x80] sm:$0xff]
  %v5806 = vld [vmem:[%s6 + $0x88] sm:$0xff]
  %v5807 = vld [vmem:[%s6 + $0x90] sm:$0xff]
  %v5808 = vld [vmem:[%s6 + $0x98] sm:$0xff]
  %v5809 = vld [vmem:[%s6 + $0xa0] sm:$0xff]
  %v5810 = vld [vmem:[%s6 + $0xa8] sm:$0xff]
  %v5811 = vld [vmem:[%s6 + $0xb0] sm:$0xff]
  %v5812 = vld [vmem:[%s6 + $0xb8] sm:$0xff]
  %v5813 = vld [vmem:[%s6 + $0xc0] sm:$0xff]
  %v5814 = vld [vmem:[%s6 + $0xc8] sm:$0xff]
  %v5815 = vld [vmem:[%s6 + $0xd0] sm:$0xff]
  %v5816 = vld [vmem:[%s6 + $0xd8] sm:$0xff]
  %v5817 = vld [vmem:[%s6 + $0xe0] sm:$0xff]
  %v5818 = vld [vmem:[%s6 + $0xe8] sm:$0xff]
  %v5819 = vld [vmem:[%s6 + $0xf0] sm:$0xff]
  %v5820 = vld [vmem:[%s6 + $0xf8] sm:$0xff]
  %v5821 = vpack.c.bf16 %v4831, %v4829
  %v5822 = vpack.c.bf16 %v4832, %v4830
  %v5823 = vpack.c.bf16 %v4835, %v4833
  %v5824 = vpack.c.bf16 %v4836, %v4834
  %v5825 = vpack.c.bf16 %v4839, %v4837
  %v5826 = vpack.c.bf16 %v4840, %v4838
  %v5827 = vpack.c.bf16 %v4843, %v4841
  %v5828 = vpack.c.bf16 %v4844, %v4842
  %v5829 = vpack.c.bf16 %v4847, %v4845
  %v5830 = vpack.c.bf16 %v4848, %v4846
  %v5831 = vpack.c.bf16 %v4851, %v4849
  %v5832 = vpack.c.bf16 %v4852, %v4850
  %v5833 = vpack.c.bf16 %v4855, %v4853
  %v5834 = vpack.c.bf16 %v4856, %v4854
  %v5835 = vpack.c.bf16 %v4859, %v4857
  %v5836 = vpack.c.bf16 %v4860, %v4858
  %v5837 = vpack.c.bf16 %v4863, %v4861
  %v5838 = vpack.c.bf16 %v4864, %v4862
  %v5839 = vpack.c.bf16 %v4867, %v4865
  %v5840 = vpack.c.bf16 %v4868, %v4866
  %v5841 = vpack.c.bf16 %v4871, %v4869
  %v5842 = vpack.c.bf16 %v4872, %v4870
  %v5843 = vpack.c.bf16 %v4875, %v4873
  %v5844 = vpack.c.bf16 %v4876, %v4874
  %v5845 = vpack.c.bf16 %v4879, %v4877
  %v5846 = vpack.c.bf16 %v4880, %v4878
  %v5847 = vpack.c.bf16 %v4883, %v4881
  %v5848 = vpack.c.bf16 %v4884, %v4882
  %v5849 = vpack.c.bf16 %v4887, %v4885
  %v5850 = vpack.c.bf16 %v4888, %v4886
  %v5851 = vpack.c.bf16 %v4891, %v4889
  %v5852 = vpack.c.bf16 %v4892, %v4890
  %v5853 = vpack.c.bf16 %v4895, %v4893
  %v5854 = vpack.c.bf16 %v4896, %v4894
  %v5855 = vpack.c.bf16 %v4899, %v4897
  %v5856 = vpack.c.bf16 %v4900, %v4898
  %v5857 = vpack.c.bf16 %v4903, %v4901
  %v5858 = vpack.c.bf16 %v4904, %v4902
  %v5859 = vpack.c.bf16 %v4907, %v4905
  %v5860 = vpack.c.bf16 %v4908, %v4906
  %v5861 = vpack.c.bf16 %v4911, %v4909
  %v5862 = vpack.c.bf16 %v4912, %v4910
  %v5863 = vpack.c.bf16 %v4915, %v4913
  %v5864 = vpack.c.bf16 %v4916, %v4914
  %v5865 = vpack.c.bf16 %v4919, %v4917
  %v5866 = vpack.c.bf16 %v4920, %v4918
  %v5867 = vpack.c.bf16 %v4923, %v4921
  %v5868 = vpack.c.bf16 %v4924, %v4922
  %v5869 = vpack.c.bf16 %v4927, %v4925
  %v5870 = vpack.c.bf16 %v4928, %v4926
  %v5871 = vpack.c.bf16 %v4931, %v4929
  %v5872 = vpack.c.bf16 %v4932, %v4930
  %v5873 = vpack.c.bf16 %v4935, %v4933
  %v5874 = vpack.c.bf16 %v4936, %v4934
  %v5875 = vpack.c.bf16 %v4939, %v4937
  %v5876 = vpack.c.bf16 %v4940, %v4938
  %v5877 = vpack.c.bf16 %v4943, %v4941
  %v5878 = vpack.c.bf16 %v4944, %v4942
  %v5879 = vpack.c.bf16 %v4947, %v4945
  %v5880 = vpack.c.bf16 %v4948, %v4946
  %v5881 = vpack.c.bf16 %v4951, %v4949
  %v5882 = vpack.c.bf16 %v4952, %v4950
  %v5883 = vpack.c.bf16 %v4955, %v4953
  %v5884 = vpack.c.bf16 %v4956, %v4954
  %s5885 = scalar_lea.vmem %s6, 256
  %v5886 = vld [vmem:[%s5885] sm:$0xff]
  %v5887 = vld [vmem:[%s5885 + $0x8] sm:$0xff]
  %v5888 = vld [vmem:[%s5885 + $0x10] sm:$0xff]
  %v5889 = vld [vmem:[%s5885 + $0x18] sm:$0xff]
  %v5890 = vld [vmem:[%s5885 + $0x20] sm:$0xff]
  %v5891 = vld [vmem:[%s5885 + $0x28] sm:$0xff]
  %v5892 = vld [vmem:[%s5885 + $0x30] sm:$0xff]
  %v5893 = vld [vmem:[%s5885 + $0x38] sm:$0xff]
  %v5894 = vld [vmem:[%s5885 + $0x40] sm:$0xff]
  %v5895 = vld [vmem:[%s5885 + $0x48] sm:$0xff]
  %v5896 = vld [vmem:[%s5885 + $0x50] sm:$0xff]
  %v5897 = vld [vmem:[%s5885 + $0x58] sm:$0xff]
  %v5898 = vld [vmem:[%s5885 + $0x60] sm:$0xff]
  %v5899 = vld [vmem:[%s5885 + $0x68] sm:$0xff]
  %v5900 = vld [vmem:[%s5885 + $0x70] sm:$0xff]
  %v5901 = vld [vmem:[%s5885 + $0x78] sm:$0xff]
  %v5902 = vld [vmem:[%s5885 + $0x80] sm:$0xff]
  %v5903 = vld [vmem:[%s5885 + $0x88] sm:$0xff]
  %v5904 = vld [vmem:[%s5885 + $0x90] sm:$0xff]
  %v5905 = vld [vmem:[%s5885 + $0x98] sm:$0xff]
  %v5906 = vld [vmem:[%s5885 + $0xa0] sm:$0xff]
  %v5907 = vld [vmem:[%s5885 + $0xa8] sm:$0xff]
  %v5908 = vld [vmem:[%s5885 + $0xb0] sm:$0xff]
  %v5909 = vld [vmem:[%s5885 + $0xb8] sm:$0xff]
  %v5910 = vld [vmem:[%s5885 + $0xc0] sm:$0xff]
  %v5911 = vld [vmem:[%s5885 + $0xc8] sm:$0xff]
  %v5912 = vld [vmem:[%s5885 + $0xd0] sm:$0xff]
  %v5913 = vld [vmem:[%s5885 + $0xd8] sm:$0xff]
  %v5914 = vld [vmem:[%s5885 + $0xe0] sm:$0xff]
  %v5915 = vld [vmem:[%s5885 + $0xe8] sm:$0xff]
  %v5916 = vld [vmem:[%s5885 + $0xf0] sm:$0xff]
  %v5917 = vld [vmem:[%s5885 + $0xf8] sm:$0xff]
  %v5950 = vunpack.c.l.b16 %v5886
  %v5951 = vunpack.c.h.b16 %v5886
  %v5952 = vunpack.c.l.b16 %v5887
  %v5953 = vunpack.c.h.b16 %v5887
  %v5954 = vunpack.c.l.b16 %v5888
  %v5955 = vunpack.c.h.b16 %v5888
  %v5956 = vunpack.c.l.b16 %v5889
  %v5957 = vunpack.c.h.b16 %v5889
  %v5958 = vunpack.c.l.b16 %v5890
  %v5959 = vunpack.c.h.b16 %v5890
  %v5960 = vunpack.c.l.b16 %v5891
  %v5961 = vunpack.c.h.b16 %v5891
  %v5962 = vunpack.c.l.b16 %v5892
  %v5963 = vunpack.c.h.b16 %v5892
  %v5964 = vunpack.c.l.b16 %v5893
  %v5965 = vunpack.c.h.b16 %v5893
  %v5966 = vunpack.c.l.b16 %v5894
  %v5967 = vunpack.c.h.b16 %v5894
  %v5968 = vunpack.c.l.b16 %v5895
  %v5969 = vunpack.c.h.b16 %v5895
  %v5970 = vunpack.c.l.b16 %v5896
  %v5971 = vunpack.c.h.b16 %v5896
  %v5972 = vunpack.c.l.b16 %v5897
  %v5973 = vunpack.c.h.b16 %v5897
  %v5974 = vunpack.c.l.b16 %v5898
  %v5975 = vunpack.c.h.b16 %v5898
  %v5976 = vunpack.c.l.b16 %v5899
  %v5977 = vunpack.c.h.b16 %v5899
  %v5978 = vunpack.c.l.b16 %v5900
  %v5979 = vunpack.c.h.b16 %v5900
  %v5980 = vunpack.c.l.b16 %v5901
  %v5981 = vunpack.c.h.b16 %v5901
  %v5982 = vunpack.c.l.b16 %v5902
  %v5983 = vunpack.c.h.b16 %v5902
  %v5984 = vunpack.c.l.b16 %v5903
  %v5985 = vunpack.c.h.b16 %v5903
  %v5986 = vunpack.c.l.b16 %v5904
  %v5987 = vunpack.c.h.b16 %v5904
  %v5988 = vunpack.c.l.b16 %v5905
  %v5989 = vunpack.c.h.b16 %v5905
  %v5990 = vunpack.c.l.b16 %v5906
  %v5991 = vunpack.c.h.b16 %v5906
  %v5992 = vunpack.c.l.b16 %v5907
  %v5993 = vunpack.c.h.b16 %v5907
  %v5994 = vunpack.c.l.b16 %v5908
  %v5995 = vunpack.c.h.b16 %v5908
  %v5996 = vunpack.c.l.b16 %v5909
  %v5997 = vunpack.c.h.b16 %v5909
  %v5998 = vunpack.c.l.b16 %v5910
  %v5999 = vunpack.c.h.b16 %v5910
  %v6000 = vunpack.c.l.b16 %v5911
  %v6001 = vunpack.c.h.b16 %v5911
  %v6002 = vunpack.c.l.b16 %v5912
  %v6003 = vunpack.c.h.b16 %v5912
  %v6004 = vunpack.c.l.b16 %v5913
  %v6005 = vunpack.c.h.b16 %v5913
  %v6006 = vunpack.c.l.b16 %v5914
  %v6007 = vunpack.c.h.b16 %v5914
  %v6008 = vunpack.c.l.b16 %v5915
  %v6009 = vunpack.c.h.b16 %v5915
  %v6010 = vunpack.c.l.b16 %v5916
  %v6011 = vunpack.c.h.b16 %v5916
  %v6012 = vunpack.c.l.b16 %v5917
  %v6013 = vunpack.c.h.b16 %v5917
  %v6014 = vpack.c.b16 %v5952, %v5950
  %v6015 = vpack.c.b16 %v5953, %v5951
  %v6016 = vpack.c.b16 %v5956, %v5954
  %v6017 = vpack.c.b16 %v5957, %v5955
  %v6018 = vpack.c.b16 %v5960, %v5958
  %v6019 = vpack.c.b16 %v5961, %v5959
  %v6020 = vpack.c.b16 %v5964, %v5962
  %v6021 = vpack.c.b16 %v5965, %v5963
  %v6022 = vpack.c.b16 %v5968, %v5966
  %v6023 = vpack.c.b16 %v5969, %v5967
  %v6024 = vpack.c.b16 %v5972, %v5970
  %v6025 = vpack.c.b16 %v5973, %v5971
  %v6026 = vpack.c.b16 %v5976, %v5974
  %v6027 = vpack.c.b16 %v5977, %v5975
  %v6028 = vpack.c.b16 %v5980, %v5978
  %v6029 = vpack.c.b16 %v5981, %v5979
  %v6030 = vpack.c.b16 %v5984, %v5982
  %v6031 = vpack.c.b16 %v5985, %v5983
  %v6032 = vpack.c.b16 %v5988, %v5986
  %v6033 = vpack.c.b16 %v5989, %v5987
  %v6034 = vpack.c.b16 %v5992, %v5990
  %v6035 = vpack.c.b16 %v5993, %v5991
  %v6036 = vpack.c.b16 %v5996, %v5994
  %v6037 = vpack.c.b16 %v5997, %v5995
  %v6038 = vpack.c.b16 %v6000, %v5998
  %v6039 = vpack.c.b16 %v6001, %v5999
  %v6040 = vpack.c.b16 %v6004, %v6002
  %v6041 = vpack.c.b16 %v6005, %v6003
  %v6042 = vpack.c.b16 %v6008, %v6006
  %v6043 = vpack.c.b16 %v6009, %v6007
  %v6044 = vpack.c.b16 %v6012, %v6010
  %v6045 = vpack.c.b16 %v6013, %v6011
  %6078 = vmatprep.subr.bf16.mxu0 %v6015
  %6079 = vmatpush1.bf16.msra.mxu0 %v6014
  %6080 = vmatprep.subr.bf16.mxu0 %v6017
  %6081 = vmatpush1.bf16.msra.mxu0 %v6016
  %6082 = vmatprep.subr.bf16.mxu0 %v6019
  %6083 = vmatpush1.bf16.msra.mxu0 %v6018
  %6084 = vmatprep.subr.bf16.mxu0 %v6021
  %6085 = vmatpush1.bf16.msra.mxu0 %v6020
  %6086 = vmatprep.subr.bf16.mxu0 %v6023
  %6087 = vmatpush1.bf16.msra.mxu0 %v6022
  %6088 = vmatprep.subr.bf16.mxu0 %v6025
  %6089 = vmatpush1.bf16.msra.mxu0 %v6024
  %6090 = vmatprep.subr.bf16.mxu0 %v6027
  %6091 = vmatpush1.bf16.msra.mxu0 %v6026
  %6092 = vmatprep.subr.bf16.mxu0 %v6029
  %6093 = vmatpush1.bf16.msra.mxu0 %v6028
  %6094 = vmatprep.subr.bf16.mxu0 %v6031
  %6095 = vmatpush1.bf16.msra.mxu0 %v6030
  %6096 = vmatprep.subr.bf16.mxu0 %v6033
  %6097 = vmatpush1.bf16.msra.mxu0 %v6032
  %6098 = vmatprep.subr.bf16.mxu0 %v6035
  %6099 = vmatpush1.bf16.msra.mxu0 %v6034
  %6100 = vmatprep.subr.bf16.mxu0 %v6037
  %6101 = vmatpush1.bf16.msra.mxu0 %v6036
  %6102 = vmatprep.subr.bf16.mxu0 %v6039
  %6103 = vmatpush1.bf16.msra.mxu0 %v6038
  %6104 = vmatprep.subr.bf16.mxu0 %v6041
  %6105 = vmatpush1.bf16.msra.mxu0 %v6040
  %6106 = vmatprep.subr.bf16.mxu0 %v6043
  %6107 = vmatpush1.bf16.msra.mxu0 %v6042
  %6108 = vmatprep.subr.bf16.mxu0 %v6045
  %6109 = vmatpush1.bf16.msra.mxu0 %v6044
  %6110 = vmatprep.mubr.bf16.mxu0 %v5822
  %6111 = vmatmul.mubr.bf16.gmra.mrb[0].mxu0 %v5821
  %v6112 = vpop.f32.mrb[0].mxu0
  %v6113 = vadd.f32 0.0, %v6112
  %v6114 = vpop.f32.mrb[0].mxu0
  %v6115 = vadd.f32 0.0, %v6114
  %v6116 = vpop.f32.mrb[0].mxu0
  %v6117 = vadd.f32 0.0, %v6116
  %v6118 = vpop.f32.mrb[0].mxu0
  %v6119 = vadd.f32 0.0, %v6118
  %6120 = vmatprep.mubr.bf16.mxu0 %v5824
  %6121 = vmatmul.mubr.bf16.gmra.mrb[0].mxu0 %v5823
  %v6122 = vpop.f32.mrb[0].mxu0
  %v6123 = vadd.f32 0.0, %v6122
  %v6124 = vpop.f32.mrb[0].mxu0
  %v6125 = vadd.f32 0.0, %v6124
  %v6126 = vpop.f32.mrb[0].mxu0
  %v6127 = vadd.f32 0.0, %v6126
  %v6128 = vpop.f32.mrb[0].mxu0
  %v6129 = vadd.f32 0.0, %v6128
  %6130 = vmatprep.mubr.bf16.mxu0 %v5826
  %6131 = vmatmul.mubr.bf16.gmra.mrb[0].mxu0 %v5825
  %v6132 = vpop.f32.mrb[0].mxu0
  %v6133 = vadd.f32 0.0, %v6132
  %v6134 = vpop.f32.mrb[0].mxu0
  %v6135 = vadd.f32 0.0, %v6134
  %v6136 = vpop.f32.mrb[0].mxu0
  %v6137 = vadd.f32 0.0, %v6136
  %v6138 = vpop.f32.mrb[0].mxu0
  %v6139 = vadd.f32 0.0, %v6138
  %6140 = vmatprep.mubr.bf16.mxu0 %v5828
  %6141 = vmatmul.mubr.bf16.gmra.mrb[0].mxu0 %v5827
  %v6142 = vpop.f32.mrb[0].mxu0
  %v6143 = vadd.f32 0.0, %v6142
  %v6144 = vpop.f32.mrb[0].mxu0
  %v6145 = vadd.f32 0.0, %v6144
  %v6146 = vpop.f32.mrb[0].mxu0
  %v6147 = vadd.f32 0.0, %v6146
  %v6148 = vpop.f32.mrb[0].mxu0
  %v6149 = vadd.f32 0.0, %v6148
  %6150 = vmatprep.mubr.bf16.mxu0 %v5830
  %6151 = vmatmul.mubr.bf16.gmra.mrb[0].mxu0 %v5829
  %v6152 = vpop.f32.mrb[0].mxu0
  %v6153 = vadd.f32 0.0, %v6152
  %v6154 = vpop.f32.mrb[0].mxu0
  %v6155 = vadd.f32 0.0, %v6154
  %v6156 = vpop.f32.mrb[0].mxu0
  %v6157 = vadd.f32 0.0, %v6156
  %v6158 = vpop.f32.mrb[0].mxu0
  %v6159 = vadd.f32 0.0, %v6158
  %6160 = vmatprep.mubr.bf16.mxu0 %v5832
  %6161 = vmatmul.mubr.bf16.gmra.mrb[0].mxu0 %v5831
  %v6162 = vpop.f32.mrb[0].mxu0
  %v6163 = vadd.f32 0.0, %v6162
  %v6164 = vpop.f32.mrb[0].mxu0
  %v6165 = vadd.f32 0.0, %v6164
  %v6166 = vpop.f32.mrb[0].mxu0
  %v6167 = vadd.f32 0.0, %v6166
  %v6168 = vpop.f32.mrb[0].mxu0
  %v6169 = vadd.f32 0.0, %v6168
  %6170 = vmatprep.mubr.bf16.mxu0 %v5834
  %6171 = vmatmul.mubr.bf16.gmra.mrb[0].mxu0 %v5833
  %v6172 = vpop.f32.mrb[0].mxu0
  %v6173 = vadd.f32 0.0, %v6172
  %v6174 = vpop.f32.mrb[0].mxu0
  %v6175 = vadd.f32 0.0, %v6174
  %v6176 = vpop.f32.mrb[0].mxu0
  %v6177 = vadd.f32 0.0, %v6176
  %v6178 = vpop.f32.mrb[0].mxu0
  %v6179 = vadd.f32 0.0, %v6178
  %6180 = vmatprep.mubr.bf16.mxu0 %v5836
  %6181 = vmatmul.mubr.bf16.gmra.mrb[0].mxu0 %v5835
  %v6182 = vpop.f32.mrb[0].mxu0
  %v6183 = vadd.f32 0.0, %v6182
  %v6184 = vpop.f32.mrb[0].mxu0
  %v6185 = vadd.f32 0.0, %v6184
  %v6186 = vpop.f32.mrb[0].mxu0
  %v6187 = vadd.f32 0.0, %v6186
  %v6188 = vpop.f32.mrb[0].mxu0
  %v6189 = vadd.f32 0.0, %v6188
  %6190 = vmatprep.mubr.bf16.mxu0 %v5838
  %6191 = vmatmul.mubr.bf16.gmra.mrb[0].mxu0 %v5837
  %v6192 = vpop.f32.mrb[0].mxu0
  %v6193 = vadd.f32 0.0, %v6192
  %v6194 = vpop.f32.mrb[0].mxu0
  %v6195 = vadd.f32 0.0, %v6194
  %v6196 = vpop.f32.mrb[0].mxu0
  %v6197 = vadd.f32 0.0, %v6196
  %v6198 = vpop.f32.mrb[0].mxu0
  %v6199 = vadd.f32 0.0, %v6198
  %6200 = vmatprep.mubr.bf16.mxu0 %v5840
  %6201 = vmatmul.mubr.bf16.gmra.mrb[0].mxu0 %v5839
  %v6202 = vpop.f32.mrb[0].mxu0
  %v6203 = vadd.f32 0.0, %v6202
  %v6204 = vpop.f32.mrb[0].mxu0
  %v6205 = vadd.f32 0.0, %v6204
  %v6206 = vpop.f32.mrb[0].mxu0
  %v6207 = vadd.f32 0.0, %v6206
  %v6208 = vpop.f32.mrb[0].mxu0
  %v6209 = vadd.f32 0.0, %v6208
  %6210 = vmatprep.mubr.bf16.mxu0 %v5842
  %6211 = vmatmul.mubr.bf16.gmra.mrb[0].mxu0 %v5841
  %v6212 = vpop.f32.mrb[0].mxu0
  %v6213 = vadd.f32 0.0, %v6212
  %v6214 = vpop.f32.mrb[0].mxu0
  %v6215 = vadd.f32 0.0, %v6214
  %v6216 = vpop.f32.mrb[0].mxu0
  %v6217 = vadd.f32 0.0, %v6216
  %v6218 = vpop.f32.mrb[0].mxu0
  %v6219 = vadd.f32 0.0, %v6218
  %6220 = vmatprep.mubr.bf16.mxu0 %v5844
  %6221 = vmatmul.mubr.bf16.gmra.mrb[0].mxu0 %v5843
  %v6222 = vpop.f32.mrb[0].mxu0
  %v6223 = vadd.f32 0.0, %v6222
  %v6224 = vpop.f32.mrb[0].mxu0
  %v6225 = vadd.f32 0.0, %v6224
  %v6226 = vpop.f32.mrb[0].mxu0
  %v6227 = vadd.f32 0.0, %v6226
  %v6228 = vpop.f32.mrb[0].mxu0
  %v6229 = vadd.f32 0.0, %v6228
  %6230 = vmatprep.mubr.bf16.mxu0 %v5846
  %6231 = vmatmul.mubr.bf16.gmra.mrb[0].mxu0 %v5845
  %v6232 = vpop.f32.mrb[0].mxu0
  %v6233 = vadd.f32 0.0, %v6232
  %v6234 = vpop.f32.mrb[0].mxu0
  %v6235 = vadd.f32 0.0, %v6234
  %v6236 = vpop.f32.mrb[0].mxu0
  %v6237 = vadd.f32 0.0, %v6236
  %v6238 = vpop.f32.mrb[0].mxu0
  %v6239 = vadd.f32 0.0, %v6238
  %6240 = vmatprep.mubr.bf16.mxu0 %v5848
  %6241 = vmatmul.mubr.bf16.gmra.mrb[0].mxu0 %v5847
  %v6242 = vpop.f32.mrb[0].mxu0
  %v6243 = vadd.f32 0.0, %v6242
  %v6244 = vpop.f32.mrb[0].mxu0
  %v6245 = vadd.f32 0.0, %v6244
  %v6246 = vpop.f32.mrb[0].mxu0
  %v6247 = vadd.f32 0.0, %v6246
  %v6248 = vpop.f32.mrb[0].mxu0
  %v6249 = vadd.f32 0.0, %v6248
  %6250 = vmatprep.mubr.bf16.mxu0 %v5850
  %6251 = vmatmul.mubr.bf16.gmra.mrb[0].mxu0 %v5849
  %v6252 = vpop.f32.mrb[0].mxu0
  %v6253 = vadd.f32 0.0, %v6252
  %v6254 = vpop.f32.mrb[0].mxu0
  %v6255 = vadd.f32 0.0, %v6254
  %v6256 = vpop.f32.mrb[0].mxu0
  %v6257 = vadd.f32 0.0, %v6256
  %v6258 = vpop.f32.mrb[0].mxu0
  %v6259 = vadd.f32 0.0, %v6258
  %6260 = vmatprep.mubr.bf16.mxu0 %v5852
  %6261 = vmatmul.mubr.bf16.gmra.mrb[0].mxu0 %v5851
  %v6262 = vpop.f32.mrb[0].mxu0
  %v6263 = vadd.f32 0.0, %v6262
  %v6264 = vpop.f32.mrb[0].mxu0
  %v6265 = vadd.f32 0.0, %v6264
  %v6266 = vpop.f32.mrb[0].mxu0
  %v6267 = vadd.f32 0.0, %v6266
  %v6268 = vpop.f32.mrb[0].mxu0
  %v6269 = vadd.f32 0.0, %v6268
  %6270 = vmatprep.mubr.bf16.mxu0 %v5854
  %6271 = vmatmul.mubr.bf16.gmra.mrb[0].mxu0 %v5853
  %v6272 = vpop.f32.mrb[0].mxu0
  %v6273 = vadd.f32 0.0, %v6272
  %v6274 = vpop.f32.mrb[0].mxu0
  %v6275 = vadd.f32 0.0, %v6274
  %v6276 = vpop.f32.mrb[0].mxu0
  %v6277 = vadd.f32 0.0, %v6276
  %v6278 = vpop.f32.mrb[0].mxu0
  %v6279 = vadd.f32 0.0, %v6278
  %6280 = vmatprep.mubr.bf16.mxu0 %v5856
  %6281 = vmatmul.mubr.bf16.gmra.mrb[0].mxu0 %v5855
  %v6282 = vpop.f32.mrb[0].mxu0
  %v6283 = vadd.f32 0.0, %v6282
  %v6284 = vpop.f32.mrb[0].mxu0
  %v6285 = vadd.f32 0.0, %v6284
  %v6286 = vpop.f32.mrb[0].mxu0
  %v6287 = vadd.f32 0.0, %v6286
  %v6288 = vpop.f32.mrb[0].mxu0
  %v6289 = vadd.f32 0.0, %v6288
  %6290 = vmatprep.mubr.bf16.mxu0 %v5858
  %6291 = vmatmul.mubr.bf16.gmra.mrb[0].mxu0 %v5857
  %v6292 = vpop.f32.mrb[0].mxu0
  %v6293 = vadd.f32 0.0, %v6292
  %v6294 = vpop.f32.mrb[0].mxu0
  %v6295 = vadd.f32 0.0, %v6294
  %v6296 = vpop.f32.mrb[0].mxu0
  %v6297 = vadd.f32 0.0, %v6296
  %v6298 = vpop.f32.mrb[0].mxu0
  %v6299 = vadd.f32 0.0, %v6298
  %6300 = vmatprep.mubr.bf16.mxu0 %v5860
  %6301 = vmatmul.mubr.bf16.gmra.mrb[0].mxu0 %v5859
  %v6302 = vpop.f32.mrb[0].mxu0
  %v6303 = vadd.f32 0.0, %v6302
  %v6304 = vpop.f32.mrb[0].mxu0
  %v6305 = vadd.f32 0.0, %v6304
  %v6306 = vpop.f32.mrb[0].mxu0
  %v6307 = vadd.f32 0.0, %v6306
  %v6308 = vpop.f32.mrb[0].mxu0
  %v6309 = vadd.f32 0.0, %v6308
  %6310 = vmatprep.mubr.bf16.mxu0 %v5862
  %6311 = vmatmul.mubr.bf16.gmra.mrb[0].mxu0 %v5861
  %v6312 = vpop.f32.mrb[0].mxu0
  %v6313 = vadd.f32 0.0, %v6312
  %v6314 = vpop.f32.mrb[0].mxu0
  %v6315 = vadd.f32 0.0, %v6314
  %v6316 = vpop.f32.mrb[0].mxu0
  %v6317 = vadd.f32 0.0, %v6316
  %v6318 = vpop.f32.mrb[0].mxu0
  %v6319 = vadd.f32 0.0, %v6318
  %6320 = vmatprep.mubr.bf16.mxu0 %v5864
  %6321 = vmatmul.mubr.bf16.gmra.mrb[0].mxu0 %v5863
  %v6322 = vpop.f32.mrb[0].mxu0
  %v6323 = vadd.f32 0.0, %v6322
  %v6324 = vpop.f32.mrb[0].mxu0
  %v6325 = vadd.f32 0.0, %v6324
  %v6326 = vpop.f32.mrb[0].mxu0
  %v6327 = vadd.f32 0.0, %v6326
  %v6328 = vpop.f32.mrb[0].mxu0
  %v6329 = vadd.f32 0.0, %v6328
  %6330 = vmatprep.mubr.bf16.mxu0 %v5866
  %6331 = vmatmul.mubr.bf16.gmra.mrb[0].mxu0 %v5865
  %v6332 = vpop.f32.mrb[0].mxu0
  %v6333 = vadd.f32 0.0, %v6332
  %v6334 = vpop.f32.mrb[0].mxu0
  %v6335 = vadd.f32 0.0, %v6334
  %v6336 = vpop.f32.mrb[0].mxu0
  %v6337 = vadd.f32 0.0, %v6336
  %v6338 = vpop.f32.mrb[0].mxu0
  %v6339 = vadd.f32 0.0, %v6338
  %6340 = vmatprep.mubr.bf16.mxu0 %v5868
  %6341 = vmatmul.mubr.bf16.gmra.mrb[0].mxu0 %v5867
  %v6342 = vpop.f32.mrb[0].mxu0
  %v6343 = vadd.f32 0.0, %v6342
  %v6344 = vpop.f32.mrb[0].mxu0
  %v6345 = vadd.f32 0.0, %v6344
  %v6346 = vpop.f32.mrb[0].mxu0
  %v6347 = vadd.f32 0.0, %v6346
  %v6348 = vpop.f32.mrb[0].mxu0
  %v6349 = vadd.f32 0.0, %v6348
  %6350 = vmatprep.mubr.bf16.mxu0 %v5870
  %6351 = vmatmul.mubr.bf16.gmra.mrb[0].mxu0 %v5869
  %v6352 = vpop.f32.mrb[0].mxu0
  %v6353 = vadd.f32 0.0, %v6352
  %v6354 = vpop.f32.mrb[0].mxu0
  %v6355 = vadd.f32 0.0, %v6354
  %v6356 = vpop.f32.mrb[0].mxu0
  %v6357 = vadd.f32 0.0, %v6356
  %v6358 = vpop.f32.mrb[0].mxu0
  %v6359 = vadd.f32 0.0, %v6358
  %6360 = vmatprep.mubr.bf16.mxu0 %v5872
  %6361 = vmatmul.mubr.bf16.gmra.mrb[0].mxu0 %v5871
  %v6362 = vpop.f32.mrb[0].mxu0
  %v6363 = vadd.f32 0.0, %v6362
  %v6364 = vpop.f32.mrb[0].mxu0
  %v6365 = vadd.f32 0.0, %v6364
  %v6366 = vpop.f32.mrb[0].mxu0
  %v6367 = vadd.f32 0.0, %v6366
  %v6368 = vpop.f32.mrb[0].mxu0
  %v6369 = vadd.f32 0.0, %v6368
  %6370 = vmatprep.mubr.bf16.mxu0 %v5874
  %6371 = vmatmul.mubr.bf16.gmra.mrb[0].mxu0 %v5873
  %v6372 = vpop.f32.mrb[0].mxu0
  %v6373 = vadd.f32 0.0, %v6372
  %v6374 = vpop.f32.mrb[0].mxu0
  %v6375 = vadd.f32 0.0, %v6374
  %v6376 = vpop.f32.mrb[0].mxu0
  %v6377 = vadd.f32 0.0, %v6376
  %v6378 = vpop.f32.mrb[0].mxu0
  %v6379 = vadd.f32 0.0, %v6378
  %6380 = vmatprep.mubr.bf16.mxu0 %v5876
  %6381 = vmatmul.mubr.bf16.gmra.mrb[0].mxu0 %v5875
  %v6382 = vpop.f32.mrb[0].mxu0
  %v6383 = vadd.f32 0.0, %v6382
  %v6384 = vpop.f32.mrb[0].mxu0
  %v6385 = vadd.f32 0.0, %v6384
  %v6386 = vpop.f32.mrb[0].mxu0
  %v6387 = vadd.f32 0.0, %v6386
  %v6388 = vpop.f32.mrb[0].mxu0
  %v6389 = vadd.f32 0.0, %v6388
  %6390 = vmatprep.mubr.bf16.mxu0 %v5878
  %6391 = vmatmul.mubr.bf16.gmra.mrb[0].mxu0 %v5877
  %v6392 = vpop.f32.mrb[0].mxu0
  %v6393 = vadd.f32 0.0, %v6392
  %v6394 = vpop.f32.mrb[0].mxu0
  %v6395 = vadd.f32 0.0, %v6394
  %v6396 = vpop.f32.mrb[0].mxu0
  %v6397 = vadd.f32 0.0, %v6396
  %v6398 = vpop.f32.mrb[0].mxu0
  %v6399 = vadd.f32 0.0, %v6398
  %6400 = vmatprep.mubr.bf16.mxu0 %v5880
  %6401 = vmatmul.mubr.bf16.gmra.mrb[0].mxu0 %v5879
  %v6402 = vpop.f32.mrb[0].mxu0
  %v6403 = vadd.f32 0.0, %v6402
  %v6404 = vpop.f32.mrb[0].mxu0
  %v6405 = vadd.f32 0.0, %v6404
  %v6406 = vpop.f32.mrb[0].mxu0
  %v6407 = vadd.f32 0.0, %v6406
  %v6408 = vpop.f32.mrb[0].mxu0
  %v6409 = vadd.f32 0.0, %v6408
  %6410 = vmatprep.mubr.bf16.mxu0 %v5882
  %6411 = vmatmul.mubr.bf16.gmra.mrb[0].mxu0 %v5881
  %v6412 = vpop.f32.mrb[0].mxu0
  %v6413 = vadd.f32 0.0, %v6412
  %v6414 = vpop.f32.mrb[0].mxu0
  %v6415 = vadd.f32 0.0, %v6414
  %v6416 = vpop.f32.mrb[0].mxu0
  %v6417 = vadd.f32 0.0, %v6416
  %v6418 = vpop.f32.mrb[0].mxu0
  %v6419 = vadd.f32 0.0, %v6418
  %6420 = vmatprep.mubr.bf16.mxu0 %v5884
  %6421 = vmatmul.mubr.bf16.gmra.mrb[0].mxu0 %v5883
  %v6422 = vpop.f32.mrb[0].mxu0
  %v6423 = vadd.f32 0.0, %v6422
  %v6424 = vpop.f32.mrb[0].mxu0
  %v6425 = vadd.f32 0.0, %v6424
  %v6426 = vpop.f32.mrb[0].mxu0
  %v6427 = vadd.f32 0.0, %v6426
  %v6428 = vpop.f32.mrb[0].mxu0
  %v6429 = vadd.f32 0.0, %v6428
  %6430 = vdwg.mxu0
  %v6463 = vunpack.c.l.b16 %v5789
  %v6464 = vunpack.c.h.b16 %v5789
  %v6465 = vunpack.c.l.b16 %v5790
  %v6466 = vunpack.c.h.b16 %v5790
  %v6467 = vunpack.c.l.b16 %v5791
  %v6468 = vunpack.c.h.b16 %v5791
  %v6469 = vunpack.c.l.b16 %v5792
  %v6470 = vunpack.c.h.b16 %v5792
  %v6471 = vunpack.c.l.b16 %v5793
  %v6472 = vunpack.c.h.b16 %v5793
  %v6473 = vunpack.c.l.b16 %v5794
  %v6474 = vunpack.c.h.b16 %v5794
  %v6475 = vunpack.c.l.b16 %v5795
  %v6476 = vunpack.c.h.b16 %v5795
  %v6477 = vunpack.c.l.b16 %v5796
  %v6478 = vunpack.c.h.b16 %v5796
  %v6479 = vunpack.c.l.b16 %v5797
  %v6480 = vunpack.c.h.b16 %v5797
  %v6481 = vunpack.c.l.b16 %v5798
  %v6482 = vunpack.c.h.b16 %v5798
  %v6483 = vunpack.c.l.b16 %v5799
  %v6484 = vunpack.c.h.b16 %v5799
  %v6485 = vunpack.c.l.b16 %v5800
  %v6486 = vunpack.c.h.b16 %v5800
  %v6487 = vunpack.c.l.b16 %v5801
  %v6488 = vunpack.c.h.b16 %v5801
  %v6489 = vunpack.c.l.b16 %v5802
  %v6490 = vunpack.c.h.b16 %v5802
  %v6491 = vunpack.c.l.b16 %v5803
  %v6492 = vunpack.c.h.b16 %v5803
  %v6493 = vunpack.c.l.b16 %v5804
  %v6494 = vunpack.c.h.b16 %v5804
  %v6495 = vunpack.c.l.b16 %v5805
  %v6496 = vunpack.c.h.b16 %v5805
  %v6497 = vunpack.c.l.b16 %v5806
  %v6498 = vunpack.c.h.b16 %v5806
  %v6499 = vunpack.c.l.b16 %v5807
  %v6500 = vunpack.c.h.b16 %v5807
  %v6501 = vunpack.c.l.b16 %v5808
  %v6502 = vunpack.c.h.b16 %v5808
  %v6503 = vunpack.c.l.b16 %v5809
  %v6504 = vunpack.c.h.b16 %v5809
  %v6505 = vunpack.c.l.b16 %v5810
  %v6506 = vunpack.c.h.b16 %v5810
  %v6507 = vunpack.c.l.b16 %v5811
  %v6508 = vunpack.c.h.b16 %v5811
  %v6509 = vunpack.c.l.b16 %v5812
  %v6510 = vunpack.c.h.b16 %v5812
  %v6511 = vunpack.c.l.b16 %v5813
  %v6512 = vunpack.c.h.b16 %v5813
  %v6513 = vunpack.c.l.b16 %v5814
  %v6514 = vunpack.c.h.b16 %v5814
  %v6515 = vunpack.c.l.b16 %v5815
  %v6516 = vunpack.c.h.b16 %v5815
  %v6517 = vunpack.c.l.b16 %v5816
  %v6518 = vunpack.c.h.b16 %v5816
  %v6519 = vunpack.c.l.b16 %v5817
  %v6520 = vunpack.c.h.b16 %v5817
  %v6521 = vunpack.c.l.b16 %v5818
  %v6522 = vunpack.c.h.b16 %v5818
  %v6523 = vunpack.c.l.b16 %v5819
  %v6524 = vunpack.c.h.b16 %v5819
  %v6525 = vunpack.c.l.b16 %v5820
  %v6526 = vunpack.c.h.b16 %v5820
  %v6527 = vpack.c.b16 %v6465, %v6463
  %v6528 = vpack.c.b16 %v6466, %v6464
  %v6529 = vpack.c.b16 %v6469, %v6467
  %v6530 = vpack.c.b16 %v6470, %v6468
  %v6531 = vpack.c.b16 %v6473, %v6471
  %v6532 = vpack.c.b16 %v6474, %v6472
  %v6533 = vpack.c.b16 %v6477, %v6475
  %v6534 = vpack.c.b16 %v6478, %v6476
  %v6535 = vpack.c.b16 %v6481, %v6479
  %v6536 = vpack.c.b16 %v6482, %v6480
  %v6537 = vpack.c.b16 %v6485, %v6483
  %v6538 = vpack.c.b16 %v6486, %v6484
  %v6539 = vpack.c.b16 %v6489, %v6487
  %v6540 = vpack.c.b16 %v6490, %v6488
  %v6541 = vpack.c.b16 %v6493, %v6491
  %v6542 = vpack.c.b16 %v6494, %v6492
  %v6543 = vpack.c.b16 %v6497, %v6495
  %v6544 = vpack.c.b16 %v6498, %v6496
  %v6545 = vpack.c.b16 %v6501, %v6499
  %v6546 = vpack.c.b16 %v6502, %v6500
  %v6547 = vpack.c.b16 %v6505, %v6503
  %v6548 = vpack.c.b16 %v6506, %v6504
  %v6549 = vpack.c.b16 %v6509, %v6507
  %v6550 = vpack.c.b16 %v6510, %v6508
  %v6551 = vpack.c.b16 %v6513, %v6511
  %v6552 = vpack.c.b16 %v6514, %v6512
  %v6553 = vpack.c.b16 %v6517, %v6515
  %v6554 = vpack.c.b16 %v6518, %v6516
  %v6555 = vpack.c.b16 %v6521, %v6519
  %v6556 = vpack.c.b16 %v6522, %v6520
  %v6557 = vpack.c.b16 %v6525, %v6523
  %v6558 = vpack.c.b16 %v6526, %v6524
  %6591 = vmatprep.subr.bf16.mxu0 %v6528
  %6592 = vmatpush1.bf16.msra.mxu0 %v6527
  %6593 = vmatprep.subr.bf16.mxu0 %v6530
  %6594 = vmatpush1.bf16.msra.mxu0 %v6529
  %6595 = vmatprep.subr.bf16.mxu0 %v6532
  %6596 = vmatpush1.bf16.msra.mxu0 %v6531
  %6597 = vmatprep.subr.bf16.mxu0 %v6534
  %6598 = vmatpush1.bf16.msra.mxu0 %v6533
  %6599 = vmatprep.subr.bf16.mxu0 %v6536
  %6600 = vmatpush1.bf16.msra.mxu0 %v6535
  %6601 = vmatprep.subr.bf16.mxu0 %v6538
  %6602 = vmatpush1.bf16.msra.mxu0 %v6537
  %6603 = vmatprep.subr.bf16.mxu0 %v6540
  %6604 = vmatpush1.bf16.msra.mxu0 %v6539
  %6605 = vmatprep.subr.bf16.mxu0 %v6542
  %6606 = vmatpush1.bf16.msra.mxu0 %v6541
  %6607 = vmatprep.subr.bf16.mxu0 %v6544
  %6608 = vmatpush1.bf16.msra.mxu0 %v6543
  %6609 = vmatprep.subr.bf16.mxu0 %v6546
  %6610 = vmatpush1.bf16.msra.mxu0 %v6545
  %6611 = vmatprep.subr.bf16.mxu0 %v6548
  %6612 = vmatpush1.bf16.msra.mxu0 %v6547
  %6613 = vmatprep.subr.bf16.mxu0 %v6550
  %6614 = vmatpush1.bf16.msra.mxu0 %v6549
  %6615 = vmatprep.subr.bf16.mxu0 %v6552
  %6616 = vmatpush1.bf16.msra.mxu0 %v6551
  %6617 = vmatprep.subr.bf16.mxu0 %v6554
  %6618 = vmatpush1.bf16.msra.mxu0 %v6553
  %6619 = vmatprep.subr.bf16.mxu0 %v6556
  %6620 = vmatpush1.bf16.msra.mxu0 %v6555
  %6621 = vmatprep.subr.bf16.mxu0 %v6558
  %6622 = vmatpush1.bf16.msra.mxu0 %v6557
  %6623 = vmatprep.mubr.bf16.mxu0 %v5726
  %6624 = vmatmul.mubr.bf16.gmra.mrb[0].mxu0 %v5725
  %v6625 = vpop.f32.mrb[0].mxu0
  %v6626 = vadd.f32 %v6113, %v6625
  %v6627 = vpop.f32.mrb[0].mxu0
  %v6628 = vadd.f32 %v6115, %v6627
  %v6629 = vpop.f32.mrb[0].mxu0
  %v6630 = vadd.f32 %v6117, %v6629
  %v6631 = vpop.f32.mrb[0].mxu0
  %v6632 = vadd.f32 %v6119, %v6631
  %6633 = vmatprep.mubr.bf16.mxu0 %v5728
  %6634 = vmatmul.mubr.bf16.gmra.mrb[0].mxu0 %v5727
  %v6635 = vpop.f32.mrb[0].mxu0
  %v6636 = vadd.f32 %v6123, %v6635
  %v6637 = vpop.f32.mrb[0].mxu0
  %v6638 = vadd.f32 %v6125, %v6637
  %v6639 = vpop.f32.mrb[0].mxu0
  %v6640 = vadd.f32 %v6127, %v6639
  %v6641 = vpop.f32.mrb[0].mxu0
  %v6642 = vadd.f32 %v6129, %v6641
  %6643 = vmatprep.mubr.bf16.mxu0 %v5730
  %6644 = vmatmul.mubr.bf16.gmra.mrb[0].mxu0 %v5729
  %v6645 = vpop.f32.mrb[0].mxu0
  %v6646 = vadd.f32 %v6133, %v6645
  %v6647 = vpop.f32.mrb[0].mxu0
  %v6648 = vadd.f32 %v6135, %v6647
  %v6649 = vpop.f32.mrb[0].mxu0
  %v6650 = vadd.f32 %v6137, %v6649
  %v6651 = vpop.f32.mrb[0].mxu0
  %v6652 = vadd.f32 %v6139, %v6651
  %6653 = vmatprep.mubr.bf16.mxu0 %v5732
  %6654 = vmatmul.mubr.bf16.gmra.mrb[0].mxu0 %v5731
  %v6655 = vpop.f32.mrb[0].mxu0
  %v6656 = vadd.f32 %v6143, %v6655
  %v6657 = vpop.f32.mrb[0].mxu0
  %v6658 = vadd.f32 %v6145, %v6657
  %v6659 = vpop.f32.mrb[0].mxu0
  %v6660 = vadd.f32 %v6147, %v6659
  %v6661 = vpop.f32.mrb[0].mxu0
  %v6662 = vadd.f32 %v6149, %v6661
  %6663 = vmatprep.mubr.bf16.mxu0 %v5734
  %6664 = vmatmul.mubr.bf16.gmra.mrb[0].mxu0 %v5733
  %v6665 = vpop.f32.mrb[0].mxu0
  %v6666 = vadd.f32 %v6153, %v6665
  %v6667 = vpop.f32.mrb[0].mxu0
  %v6668 = vadd.f32 %v6155, %v6667
  %v6669 = vpop.f32.mrb[0].mxu0
  %v6670 = vadd.f32 %v6157, %v6669
  %v6671 = vpop.f32.mrb[0].mxu0
  %v6672 = vadd.f32 %v6159, %v6671
  %6673 = vmatprep.mubr.bf16.mxu0 %v5736
  %6674 = vmatmul.mubr.bf16.gmra.mrb[0].mxu0 %v5735
  %v6675 = vpop.f32.mrb[0].mxu0
  %v6676 = vadd.f32 %v6163, %v6675
  %v6677 = vpop.f32.mrb[0].mxu0
  %v6678 = vadd.f32 %v6165, %v6677
  %v6679 = vpop.f32.mrb[0].mxu0
  %v6680 = vadd.f32 %v6167, %v6679
  %v6681 = vpop.f32.mrb[0].mxu0
  %v6682 = vadd.f32 %v6169, %v6681
  %6683 = vmatprep.mubr.bf16.mxu0 %v5738
  %6684 = vmatmul.mubr.bf16.gmra.mrb[0].mxu0 %v5737
  %v6685 = vpop.f32.mrb[0].mxu0
  %v6686 = vadd.f32 %v6173, %v6685
  %v6687 = vpop.f32.mrb[0].mxu0
  %v6688 = vadd.f32 %v6175, %v6687
  %v6689 = vpop.f32.mrb[0].mxu0
  %v6690 = vadd.f32 %v6177, %v6689
  %v6691 = vpop.f32.mrb[0].mxu0
  %v6692 = vadd.f32 %v6179, %v6691
  %6693 = vmatprep.mubr.bf16.mxu0 %v5740
  %6694 = vmatmul.mubr.bf16.gmra.mrb[0].mxu0 %v5739
  %v6695 = vpop.f32.mrb[0].mxu0
  %v6696 = vadd.f32 %v6183, %v6695
  %v6697 = vpop.f32.mrb[0].mxu0
  %v6698 = vadd.f32 %v6185, %v6697
  %v6699 = vpop.f32.mrb[0].mxu0
  %v6700 = vadd.f32 %v6187, %v6699
  %v6701 = vpop.f32.mrb[0].mxu0
  %v6702 = vadd.f32 %v6189, %v6701
  %6703 = vmatprep.mubr.bf16.mxu0 %v5742
  %6704 = vmatmul.mubr.bf16.gmra.mrb[0].mxu0 %v5741
  %v6705 = vpop.f32.mrb[0].mxu0
  %v6706 = vadd.f32 %v6193, %v6705
  %v6707 = vpop.f32.mrb[0].mxu0
  %v6708 = vadd.f32 %v6195, %v6707
  %v6709 = vpop.f32.mrb[0].mxu0
  %v6710 = vadd.f32 %v6197, %v6709
  %v6711 = vpop.f32.mrb[0].mxu0
  %v6712 = vadd.f32 %v6199, %v6711
  %6713 = vmatprep.mubr.bf16.mxu0 %v5744
  %6714 = vmatmul.mubr.bf16.gmra.mrb[0].mxu0 %v5743
  %v6715 = vpop.f32.mrb[0].mxu0
  %v6716 = vadd.f32 %v6203, %v6715
  %v6717 = vpop.f32.mrb[0].mxu0
  %v6718 = vadd.f32 %v6205, %v6717
  %v6719 = vpop.f32.mrb[0].mxu0
  %v6720 = vadd.f32 %v6207, %v6719
  %v6721 = vpop.f32.mrb[0].mxu0
  %v6722 = vadd.f32 %v6209, %v6721
  %6723 = vmatprep.mubr.bf16.mxu0 %v5746
  %6724 = vmatmul.mubr.bf16.gmra.mrb[0].mxu0 %v5745
  %v6725 = vpop.f32.mrb[0].mxu0
  %v6726 = vadd.f32 %v6213, %v6725
  %v6727 = vpop.f32.mrb[0].mxu0
  %v6728 = vadd.f32 %v6215, %v6727
  %v6729 = vpop.f32.mrb[0].mxu0
  %v6730 = vadd.f32 %v6217, %v6729
  %v6731 = vpop.f32.mrb[0].mxu0
  %v6732 = vadd.f32 %v6219, %v6731
  %6733 = vmatprep.mubr.bf16.mxu0 %v5748
  %6734 = vmatmul.mubr.bf16.gmra.mrb[0].mxu0 %v5747
  %v6735 = vpop.f32.mrb[0].mxu0
  %v6736 = vadd.f32 %v6223, %v6735
  %v6737 = vpop.f32.mrb[0].mxu0
  %v6738 = vadd.f32 %v6225, %v6737
  %v6739 = vpop.f32.mrb[0].mxu0
  %v6740 = vadd.f32 %v6227, %v6739
  %v6741 = vpop.f32.mrb[0].mxu0
  %v6742 = vadd.f32 %v6229, %v6741
  %6743 = vmatprep.mubr.bf16.mxu0 %v5750
  %6744 = vmatmul.mubr.bf16.gmra.mrb[0].mxu0 %v5749
  %v6745 = vpop.f32.mrb[0].mxu0
  %v6746 = vadd.f32 %v6233, %v6745
  %v6747 = vpop.f32.mrb[0].mxu0
  %v6748 = vadd.f32 %v6235, %v6747
  %v6749 = vpop.f32.mrb[0].mxu0
  %v6750 = vadd.f32 %v6237, %v6749
  %v6751 = vpop.f32.mrb[0].mxu0
  %v6752 = vadd.f32 %v6239, %v6751
  %6753 = vmatprep.mubr.bf16.mxu0 %v5752
  %6754 = vmatmul.mubr.bf16.gmra.mrb[0].mxu0 %v5751
  %v6755 = vpop.f32.mrb[0].mxu0
  %v6756 = vadd.f32 %v6243, %v6755
  %v6757 = vpop.f32.mrb[0].mxu0
  %v6758 = vadd.f32 %v6245, %v6757
  %v6759 = vpop.f32.mrb[0].mxu0
  %v6760 = vadd.f32 %v6247, %v6759
  %v6761 = vpop.f32.mrb[0].mxu0
  %v6762 = vadd.f32 %v6249, %v6761
  %6763 = vmatprep.mubr.bf16.mxu0 %v5754
  %6764 = vmatmul.mubr.bf16.gmra.mrb[0].mxu0 %v5753
  %v6765 = vpop.f32.mrb[0].mxu0
  %v6766 = vadd.f32 %v6253, %v6765
  %v6767 = vpop.f32.mrb[0].mxu0
  %v6768 = vadd.f32 %v6255, %v6767
  %v6769 = vpop.f32.mrb[0].mxu0
  %v6770 = vadd.f32 %v6257, %v6769
  %v6771 = vpop.f32.mrb[0].mxu0
  %v6772 = vadd.f32 %v6259, %v6771
  %6773 = vmatprep.mubr.bf16.mxu0 %v5756
  %6774 = vmatmul.mubr.bf16.gmra.mrb[0].mxu0 %v5755
  %v6775 = vpop.f32.mrb[0].mxu0
  %v6776 = vadd.f32 %v6263, %v6775
  %v6777 = vpop.f32.mrb[0].mxu0
  %v6778 = vadd.f32 %v6265, %v6777
  %v6779 = vpop.f32.mrb[0].mxu0
  %v6780 = vadd.f32 %v6267, %v6779
  %v6781 = vpop.f32.mrb[0].mxu0
  %v6782 = vadd.f32 %v6269, %v6781
  %6783 = vmatprep.mubr.bf16.mxu0 %v5758
  %6784 = vmatmul.mubr.bf16.gmra.mrb[0].mxu0 %v5757
  %v6785 = vpop.f32.mrb[0].mxu0
  %v6786 = vadd.f32 %v6273, %v6785
  %v6787 = vpop.f32.mrb[0].mxu0
  %v6788 = vadd.f32 %v6275, %v6787
  %v6789 = vpop.f32.mrb[0].mxu0
  %v6790 = vadd.f32 %v6277, %v6789
  %v6791 = vpop.f32.mrb[0].mxu0
  %v6792 = vadd.f32 %v6279, %v6791
  %6793 = vmatprep.mubr.bf16.mxu0 %v5760
  %6794 = vmatmul.mubr.bf16.gmra.mrb[0].mxu0 %v5759
  %v6795 = vpop.f32.mrb[0].mxu0
  %v6796 = vadd.f32 %v6283, %v6795
  %v6797 = vpop.f32.mrb[0].mxu0
  %v6798 = vadd.f32 %v6285, %v6797
  %v6799 = vpop.f32.mrb[0].mxu0
  %v6800 = vadd.f32 %v6287, %v6799
  %v6801 = vpop.f32.mrb[0].mxu0
  %v6802 = vadd.f32 %v6289, %v6801
  %6803 = vmatprep.mubr.bf16.mxu0 %v5762
  %6804 = vmatmul.mubr.bf16.gmra.mrb[0].mxu0 %v5761
  %v6805 = vpop.f32.mrb[0].mxu0
  %v6806 = vadd.f32 %v6293, %v6805
  %v6807 = vpop.f32.mrb[0].mxu0
  %v6808 = vadd.f32 %v6295, %v6807
  %v6809 = vpop.f32.mrb[0].mxu0
  %v6810 = vadd.f32 %v6297, %v6809
  %v6811 = vpop.f32.mrb[0].mxu0
  %v6812 = vadd.f32 %v6299, %v6811
  %6813 = vmatprep.mubr.bf16.mxu0 %v5764
  %6814 = vmatmul.mubr.bf16.gmra.mrb[0].mxu0 %v5763
  %v6815 = vpop.f32.mrb[0].mxu0
  %v6816 = vadd.f32 %v6303, %v6815
  %v6817 = vpop.f32.mrb[0].mxu0
  %v6818 = vadd.f32 %v6305, %v6817
  %v6819 = vpop.f32.mrb[0].mxu0
  %v6820 = vadd.f32 %v6307, %v6819
  %v6821 = vpop.f32.mrb[0].mxu0
  %v6822 = vadd.f32 %v6309, %v6821
  %6823 = vmatprep.mubr.bf16.mxu0 %v5766
  %6824 = vmatmul.mubr.bf16.gmra.mrb[0].mxu0 %v5765
  %v6825 = vpop.f32.mrb[0].mxu0
  %v6826 = vadd.f32 %v6313, %v6825
  %v6827 = vpop.f32.mrb[0].mxu0
  %v6828 = vadd.f32 %v6315, %v6827
  %v6829 = vpop.f32.mrb[0].mxu0
  %v6830 = vadd.f32 %v6317, %v6829
  %v6831 = vpop.f32.mrb[0].mxu0
  %v6832 = vadd.f32 %v6319, %v6831
  %6833 = vmatprep.mubr.bf16.mxu0 %v5768
  %6834 = vmatmul.mubr.bf16.gmra.mrb[0].mxu0 %v5767
  %v6835 = vpop.f32.mrb[0].mxu0
  %v6836 = vadd.f32 %v6323, %v6835
  %v6837 = vpop.f32.mrb[0].mxu0
  %v6838 = vadd.f32 %v6325, %v6837
  %v6839 = vpop.f32.mrb[0].mxu0
  %v6840 = vadd.f32 %v6327, %v6839
  %v6841 = vpop.f32.mrb[0].mxu0
  %v6842 = vadd.f32 %v6329, %v6841
  %6843 = vmatprep.mubr.bf16.mxu0 %v5770
  %6844 = vmatmul.mubr.bf16.gmra.mrb[0].mxu0 %v5769
  %v6845 = vpop.f32.mrb[0].mxu0
  %v6846 = vadd.f32 %v6333, %v6845
  %v6847 = vpop.f32.mrb[0].mxu0
  %v6848 = vadd.f32 %v6335, %v6847
  %v6849 = vpop.f32.mrb[0].mxu0
  %v6850 = vadd.f32 %v6337, %v6849
  %v6851 = vpop.f32.mrb[0].mxu0
  %v6852 = vadd.f32 %v6339, %v6851
  %6853 = vmatprep.mubr.bf16.mxu0 %v5772
  %6854 = vmatmul.mubr.bf16.gmra.mrb[0].mxu0 %v5771
  %v6855 = vpop.f32.mrb[0].mxu0
  %v6856 = vadd.f32 %v6343, %v6855
  %v6857 = vpop.f32.mrb[0].mxu0
  %v6858 = vadd.f32 %v6345, %v6857
  %v6859 = vpop.f32.mrb[0].mxu0
  %v6860 = vadd.f32 %v6347, %v6859
  %v6861 = vpop.f32.mrb[0].mxu0
  %v6862 = vadd.f32 %v6349, %v6861
  %6863 = vmatprep.mubr.bf16.mxu0 %v5774
  %6864 = vmatmul.mubr.bf16.gmra.mrb[0].mxu0 %v5773
  %v6865 = vpop.f32.mrb[0].mxu0
  %v6866 = vadd.f32 %v6353, %v6865
  %v6867 = vpop.f32.mrb[0].mxu0
  %v6868 = vadd.f32 %v6355, %v6867
  %v6869 = vpop.f32.mrb[0].mxu0
  %v6870 = vadd.f32 %v6357, %v6869
  %v6871 = vpop.f32.mrb[0].mxu0
  %v6872 = vadd.f32 %v6359, %v6871
  %6873 = vmatprep.mubr.bf16.mxu0 %v5776
  %6874 = vmatmul.mubr.bf16.gmra.mrb[0].mxu0 %v5775
  %v6875 = vpop.f32.mrb[0].mxu0
  %v6876 = vadd.f32 %v6363, %v6875
  %v6877 = vpop.f32.mrb[0].mxu0
  %v6878 = vadd.f32 %v6365, %v6877
  %v6879 = vpop.f32.mrb[0].mxu0
  %v6880 = vadd.f32 %v6367, %v6879
  %v6881 = vpop.f32.mrb[0].mxu0
  %v6882 = vadd.f32 %v6369, %v6881
  %6883 = vmatprep.mubr.bf16.mxu0 %v5778
  %6884 = vmatmul.mubr.bf16.gmra.mrb[0].mxu0 %v5777
  %v6885 = vpop.f32.mrb[0].mxu0
  %v6886 = vadd.f32 %v6373, %v6885
  %v6887 = vpop.f32.mrb[0].mxu0
  %v6888 = vadd.f32 %v6375, %v6887
  %v6889 = vpop.f32.mrb[0].mxu0
  %v6890 = vadd.f32 %v6377, %v6889
  %v6891 = vpop.f32.mrb[0].mxu0
  %v6892 = vadd.f32 %v6379, %v6891
  %6893 = vmatprep.mubr.bf16.mxu0 %v5780
  %6894 = vmatmul.mubr.bf16.gmra.mrb[0].mxu0 %v5779
  %v6895 = vpop.f32.mrb[0].mxu0
  %v6896 = vadd.f32 %v6383, %v6895
  %v6897 = vpop.f32.mrb[0].mxu0
  %v6898 = vadd.f32 %v6385, %v6897
  %v6899 = vpop.f32.mrb[0].mxu0
  %v6900 = vadd.f32 %v6387, %v6899
  %v6901 = vpop.f32.mrb[0].mxu0
  %v6902 = vadd.f32 %v6389, %v6901
  %6903 = vmatprep.mubr.bf16.mxu0 %v5782
  %6904 = vmatmul.mubr.bf16.gmra.mrb[0].mxu0 %v5781
  %v6905 = vpop.f32.mrb[0].mxu0
  %v6906 = vadd.f32 %v6393, %v6905
  %v6907 = vpop.f32.mrb[0].mxu0
  %v6908 = vadd.f32 %v6395, %v6907
  %v6909 = vpop.f32.mrb[0].mxu0
  %v6910 = vadd.f32 %v6397, %v6909
  %v6911 = vpop.f32.mrb[0].mxu0
  %v6912 = vadd.f32 %v6399, %v6911
  %6913 = vmatprep.mubr.bf16.mxu0 %v5784
  %6914 = vmatmul.mubr.bf16.gmra.mrb[0].mxu0 %v5783
  %v6915 = vpop.f32.mrb[0].mxu0
  %v6916 = vadd.f32 %v6403, %v6915
  %v6917 = vpop.f32.mrb[0].mxu0
  %v6918 = vadd.f32 %v6405, %v6917
  %v6919 = vpop.f32.mrb[0].mxu0
  %v6920 = vadd.f32 %v6407, %v6919
  %v6921 = vpop.f32.mrb[0].mxu0
  %v6922 = vadd.f32 %v6409, %v6921
  %6923 = vmatprep.mubr.bf16.mxu0 %v5786
  %6924 = vmatmul.mubr.bf16.gmra.mrb[0].mxu0 %v5785
  %v6925 = vpop.f32.mrb[0].mxu0
  %v6926 = vadd.f32 %v6413, %v6925
  %v6927 = vpop.f32.mrb[0].mxu0
  %v6928 = vadd.f32 %v6415, %v6927
  %v6929 = vpop.f32.mrb[0].mxu0
  %v6930 = vadd.f32 %v6417, %v6929
  %v6931 = vpop.f32.mrb[0].mxu0
  %v6932 = vadd.f32 %v6419, %v6931
  %6933 = vmatprep.mubr.bf16.mxu0 %v5788
  %6934 = vmatmul.mubr.bf16.gmra.mrb[0].mxu0 %v5787
  %v6935 = vpop.f32.mrb[0].mxu0
  %v6936 = vadd.f32 %v6423, %v6935
  %v6937 = vpop.f32.mrb[0].mxu0
  %v6938 = vadd.f32 %v6425, %v6937
  %v6939 = vpop.f32.mrb[0].mxu0
  %v6940 = vadd.f32 %v6427, %v6939
  %v6941 = vpop.f32.mrb[0].mxu0
  %v6942 = vadd.f32 %v6429, %v6941
  %6943 = vdwg.mxu0
  %v6944 = vpack.c.bf16 %v5599, %v5597
  %v6945 = vpack.c.bf16 %v5600, %v5598
  %v6946 = vpack.c.bf16 %v5603, %v5601
  %v6947 = vpack.c.bf16 %v5604, %v5602
  %v6948 = vpack.c.bf16 %v5607, %v5605
  %v6949 = vpack.c.bf16 %v5608, %v5606
  %v6950 = vpack.c.bf16 %v5611, %v5609
  %v6951 = vpack.c.bf16 %v5612, %v5610
  %v6952 = vpack.c.bf16 %v5615, %v5613
  %v6953 = vpack.c.bf16 %v5616, %v5614
  %v6954 = vpack.c.bf16 %v5619, %v5617
  %v6955 = vpack.c.bf16 %v5620, %v5618
  %v6956 = vpack.c.bf16 %v5623, %v5621
  %v6957 = vpack.c.bf16 %v5624, %v5622
  %v6958 = vpack.c.bf16 %v5627, %v5625
  %v6959 = vpack.c.bf16 %v5628, %v5626
  %v6960 = vpack.c.bf16 %v5631, %v5629
  %v6961 = vpack.c.bf16 %v5632, %v5630
  %v6962 = vpack.c.bf16 %v5635, %v5633
  %v6963 = vpack.c.bf16 %v5636, %v5634
  %v6964 = vpack.c.bf16 %v5639, %v5637
  %v6965 = vpack.c.bf16 %v5640, %v5638
  %v6966 = vpack.c.bf16 %v5643, %v5641
  %v6967 = vpack.c.bf16 %v5644, %v5642
  %v6968 = vpack.c.bf16 %v5647, %v5645
  %v6969 = vpack.c.bf16 %v5648, %v5646
  %v6970 = vpack.c.bf16 %v5651, %v5649
  %v6971 = vpack.c.bf16 %v5652, %v5650
  %v6972 = vpack.c.bf16 %v5655, %v5653
  %v6973 = vpack.c.bf16 %v5656, %v5654
  %v6974 = vpack.c.bf16 %v5659, %v5657
  %v6975 = vpack.c.bf16 %v5660, %v5658
  %v6976 = vpack.c.bf16 %v5663, %v5661
  %v6977 = vpack.c.bf16 %v5664, %v5662
  %v6978 = vpack.c.bf16 %v5667, %v5665
  %v6979 = vpack.c.bf16 %v5668, %v5666
  %v6980 = vpack.c.bf16 %v5671, %v5669
  %v6981 = vpack.c.bf16 %v5672, %v5670
  %v6982 = vpack.c.bf16 %v5675, %v5673
  %v6983 = vpack.c.bf16 %v5676, %v5674
  %v6984 = vpack.c.bf16 %v5679, %v5677
  %v6985 = vpack.c.bf16 %v5680, %v5678
  %v6986 = vpack.c.bf16 %v5683, %v5681
  %v6987 = vpack.c.bf16 %v5684, %v5682
  %v6988 = vpack.c.bf16 %v5687, %v5685
  %v6989 = vpack.c.bf16 %v5688, %v5686
  %v6990 = vpack.c.bf16 %v5691, %v5689
  %v6991 = vpack.c.bf16 %v5692, %v5690
  %v6992 = vpack.c.bf16 %v5695, %v5693
  %v6993 = vpack.c.bf16 %v5696, %v5694
  %v6994 = vpack.c.bf16 %v5699, %v5697
  %v6995 = vpack.c.bf16 %v5700, %v5698
  %v6996 = vpack.c.bf16 %v5703, %v5701
  %v6997 = vpack.c.bf16 %v5704, %v5702
  %v6998 = vpack.c.bf16 %v5707, %v5705
  %v6999 = vpack.c.bf16 %v5708, %v5706
  %v7000 = vpack.c.bf16 %v5711, %v5709
  %v7001 = vpack.c.bf16 %v5712, %v5710
  %v7002 = vpack.c.bf16 %v5715, %v5713
  %v7003 = vpack.c.bf16 %v5716, %v5714
  %v7004 = vpack.c.bf16 %v5719, %v5717
  %v7005 = vpack.c.bf16 %v5720, %v5718
  %v7006 = vpack.c.bf16 %v5723, %v5721
  %v7007 = vpack.c.bf16 %v5724, %v5722
  %s7008 = scalar_lea.vmem %s6, 512
  %v7009 = vld [vmem:[%s7008] sm:$0xff]
  %v7010 = vld [vmem:[%s7008 + $0x8] sm:$0xff]
  %v7011 = vld [vmem:[%s7008 + $0x10] sm:$0xff]
  %v7012 = vld [vmem:[%s7008 + $0x18] sm:$0xff]
  %v7013 = vld [vmem:[%s7008 + $0x20] sm:$0xff]
  %v7014 = vld [vmem:[%s7008 + $0x28] sm:$0xff]
  %v7015 = vld [vmem:[%s7008 + $0x30] sm:$0xff]
  %v7016 = vld [vmem:[%s7008 + $0x38] sm:$0xff]
  %v7017 = vld [vmem:[%s7008 + $0x40] sm:$0xff]
  %v7018 = vld [vmem:[%s7008 + $0x48] sm:$0xff]
  %v7019 = vld [vmem:[%s7008 + $0x50] sm:$0xff]
  %v7020 = vld [vmem:[%s7008 + $0x58] sm:$0xff]
  %v7021 = vld [vmem:[%s7008 + $0x60] sm:$0xff]
  %v7022 = vld [vmem:[%s7008 + $0x68] sm:$0xff]
  %v7023 = vld [vmem:[%s7008 + $0x70] sm:$0xff]
  %v7024 = vld [vmem:[%s7008 + $0x78] sm:$0xff]
  %v7025 = vld [vmem:[%s7008 + $0x80] sm:$0xff]
  %v7026 = vld [vmem:[%s7008 + $0x88] sm:$0xff]
  %v7027 = vld [vmem:[%s7008 + $0x90] sm:$0xff]
  %v7028 = vld [vmem:[%s7008 + $0x98] sm:$0xff]
  %v7029 = vld [vmem:[%s7008 + $0xa0] sm:$0xff]
  %v7030 = vld [vmem:[%s7008 + $0xa8] sm:$0xff]
  %v7031 = vld [vmem:[%s7008 + $0xb0] sm:$0xff]
  %v7032 = vld [vmem:[%s7008 + $0xb8] sm:$0xff]
  %v7033 = vld [vmem:[%s7008 + $0xc0] sm:$0xff]
  %v7034 = vld [vmem:[%s7008 + $0xc8] sm:$0xff]
  %v7035 = vld [vmem:[%s7008 + $0xd0] sm:$0xff]
  %v7036 = vld [vmem:[%s7008 + $0xd8] sm:$0xff]
  %v7037 = vld [vmem:[%s7008 + $0xe0] sm:$0xff]
  %v7038 = vld [vmem:[%s7008 + $0xe8] sm:$0xff]
  %v7039 = vld [vmem:[%s7008 + $0xf0] sm:$0xff]
  %v7040 = vld [vmem:[%s7008 + $0xf8] sm:$0xff]
  %v7073 = vunpack.c.l.b16 %v7009
  %v7074 = vunpack.c.h.b16 %v7009
  %v7075 = vunpack.c.l.b16 %v7010
  %v7076 = vunpack.c.h.b16 %v7010
  %v7077 = vunpack.c.l.b16 %v7011
  %v7078 = vunpack.c.h.b16 %v7011
  %v7079 = vunpack.c.l.b16 %v7012
  %v7080 = vunpack.c.h.b16 %v7012
  %v7081 = vunpack.c.l.b16 %v7013
  %v7082 = vunpack.c.h.b16 %v7013
  %v7083 = vunpack.c.l.b16 %v7014
  %v7084 = vunpack.c.h.b16 %v7014
  %v7085 = vunpack.c.l.b16 %v7015
  %v7086 = vunpack.c.h.b16 %v7015
  %v7087 = vunpack.c.l.b16 %v7016
  %v7088 = vunpack.c.h.b16 %v7016
  %v7089 = vunpack.c.l.b16 %v7017
  %v7090 = vunpack.c.h.b16 %v7017
  %v7091 = vunpack.c.l.b16 %v7018
  %v7092 = vunpack.c.h.b16 %v7018
  %v7093 = vunpack.c.l.b16 %v7019
  %v7094 = vunpack.c.h.b16 %v7019
  %v7095 = vunpack.c.l.b16 %v7020
  %v7096 = vunpack.c.h.b16 %v7020
  %v7097 = vunpack.c.l.b16 %v7021
  %v7098 = vunpack.c.h.b16 %v7021
  %v7099 = vunpack.c.l.b16 %v7022
  %v7100 = vunpack.c.h.b16 %v7022
  %v7101 = vunpack.c.l.b16 %v7023
  %v7102 = vunpack.c.h.b16 %v7023
  %v7103 = vunpack.c.l.b16 %v7024
  %v7104 = vunpack.c.h.b16 %v7024
  %v7105 = vunpack.c.l.b16 %v7025
  %v7106 = vunpack.c.h.b16 %v7025
  %v7107 = vunpack.c.l.b16 %v7026
  %v7108 = vunpack.c.h.b16 %v7026
  %v7109 = vunpack.c.l.b16 %v7027
  %v7110 = vunpack.c.h.b16 %v7027
  %v7111 = vunpack.c.l.b16 %v7028
  %v7112 = vunpack.c.h.b16 %v7028
  %v7113 = vunpack.c.l.b16 %v7029
  %v7114 = vunpack.c.h.b16 %v7029
  %v7115 = vunpack.c.l.b16 %v7030
  %v7116 = vunpack.c.h.b16 %v7030
  %v7117 = vunpack.c.l.b16 %v7031
  %v7118 = vunpack.c.h.b16 %v7031
  %v7119 = vunpack.c.l.b16 %v7032
  %v7120 = vunpack.c.h.b16 %v7032
  %v7121 = vunpack.c.l.b16 %v7033
  %v7122 = vunpack.c.h.b16 %v7033
  %v7123 = vunpack.c.l.b16 %v7034
  %v7124 = vunpack.c.h.b16 %v7034
  %v7125 = vunpack.c.l.b16 %v7035
  %v7126 = vunpack.c.h.b16 %v7035
  %v7127 = vunpack.c.l.b16 %v7036
  %v7128 = vunpack.c.h.b16 %v7036
  %v7129 = vunpack.c.l.b16 %v7037
  %v7130 = vunpack.c.h.b16 %v7037
  %v7131 = vunpack.c.l.b16 %v7038
  %v7132 = vunpack.c.h.b16 %v7038
  %v7133 = vunpack.c.l.b16 %v7039
  %v7134 = vunpack.c.h.b16 %v7039
  %v7135 = vunpack.c.l.b16 %v7040
  %v7136 = vunpack.c.h.b16 %v7040
  %v7137 = vpack.c.b16 %v7075, %v7073
  %v7138 = vpack.c.b16 %v7076, %v7074
  %v7139 = vpack.c.b16 %v7079, %v7077
  %v7140 = vpack.c.b16 %v7080, %v7078
  %v7141 = vpack.c.b16 %v7083, %v7081
  %v7142 = vpack.c.b16 %v7084, %v7082
  %v7143 = vpack.c.b16 %v7087, %v7085
  %v7144 = vpack.c.b16 %v7088, %v7086
  %v7145 = vpack.c.b16 %v7091, %v7089
  %v7146 = vpack.c.b16 %v7092, %v7090
  %v7147 = vpack.c.b16 %v7095, %v7093
  %v7148 = vpack.c.b16 %v7096, %v7094
  %v7149 = vpack.c.b16 %v7099, %v7097
  %v7150 = vpack.c.b16 %v7100, %v7098
  %v7151 = vpack.c.b16 %v7103, %v7101
  %v7152 = vpack.c.b16 %v7104, %v7102
  %v7153 = vpack.c.b16 %v7107, %v7105
  %v7154 = vpack.c.b16 %v7108, %v7106
  %v7155 = vpack.c.b16 %v7111, %v7109
  %v7156 = vpack.c.b16 %v7112, %v7110
  %v7157 = vpack.c.b16 %v7115, %v7113
  %v7158 = vpack.c.b16 %v7116, %v7114
  %v7159 = vpack.c.b16 %v7119, %v7117
  %v7160 = vpack.c.b16 %v7120, %v7118
  %v7161 = vpack.c.b16 %v7123, %v7121
  %v7162 = vpack.c.b16 %v7124, %v7122
  %v7163 = vpack.c.b16 %v7127, %v7125
  %v7164 = vpack.c.b16 %v7128, %v7126
  %v7165 = vpack.c.b16 %v7131, %v7129
  %v7166 = vpack.c.b16 %v7132, %v7130
  %v7167 = vpack.c.b16 %v7135, %v7133
  %v7168 = vpack.c.b16 %v7136, %v7134
  %7201 = vmatprep.subr.bf16.mxu0 %v7138
  %7202 = vmatpush1.bf16.msra.mxu0 %v7137
  %7203 = vmatprep.subr.bf16.mxu0 %v7140
  %7204 = vmatpush1.bf16.msra.mxu0 %v7139
  %7205 = vmatprep.subr.bf16.mxu0 %v7142
  %7206 = vmatpush1.bf16.msra.mxu0 %v7141
  %7207 = vmatprep.subr.bf16.mxu0 %v7144
  %7208 = vmatpush1.bf16.msra.mxu0 %v7143
  %7209 = vmatprep.subr.bf16.mxu0 %v7146
  %7210 = vmatpush1.bf16.msra.mxu0 %v7145
  %7211 = vmatprep.subr.bf16.mxu0 %v7148
  %7212 = vmatpush1.bf16.msra.mxu0 %v7147
  %7213 = vmatprep.subr.bf16.mxu0 %v7150
  %7214 = vmatpush1.bf16.msra.mxu0 %v7149
  %7215 = vmatprep.subr.bf16.mxu0 %v7152
  %7216 = vmatpush1.bf16.msra.mxu0 %v7151
  %7217 = vmatprep.subr.bf16.mxu0 %v7154
  %7218 = vmatpush1.bf16.msra.mxu0 %v7153
  %7219 = vmatprep.subr.bf16.mxu0 %v7156
  %7220 = vmatpush1.bf16.msra.mxu0 %v7155
  %7221 = vmatprep.subr.bf16.mxu0 %v7158
  %7222 = vmatpush1.bf16.msra.mxu0 %v7157
  %7223 = vmatprep.subr.bf16.mxu0 %v7160
  %7224 = vmatpush1.bf16.msra.mxu0 %v7159
  %7225 = vmatprep.subr.bf16.mxu0 %v7162
  %7226 = vmatpush1.bf16.msra.mxu0 %v7161
  %7227 = vmatprep.subr.bf16.mxu0 %v7164
  %7228 = vmatpush1.bf16.msra.mxu0 %v7163
  %7229 = vmatprep.subr.bf16.mxu0 %v7166
  %7230 = vmatpush1.bf16.msra.mxu0 %v7165
  %7231 = vmatprep.subr.bf16.mxu0 %v7168
  %7232 = vmatpush1.bf16.msra.mxu0 %v7167
  %7233 = vmatprep.mubr.bf16.mxu0 %v6945
  %7234 = vmatmul.mubr.bf16.gmra.mrb[0].mxu0 %v6944
  %v7235 = vpop.f32.mrb[0].mxu0
  %v7236 = vadd.f32 0.0, %v7235
  %v7237 = vpop.f32.mrb[0].mxu0
  %v7238 = vadd.f32 0.0, %v7237
  %v7239 = vpop.f32.mrb[0].mxu0
  %v7240 = vadd.f32 0.0, %v7239
  %v7241 = vpop.f32.mrb[0].mxu0
  %v7242 = vadd.f32 0.0, %v7241
  %7243 = vmatprep.mubr.bf16.mxu0 %v6947
  %7244 = vmatmul.mubr.bf16.gmra.mrb[0].mxu0 %v6946
  %v7245 = vpop.f32.mrb[0].mxu0
  %v7246 = vadd.f32 0.0, %v7245
  %v7247 = vpop.f32.mrb[0].mxu0
  %v7248 = vadd.f32 0.0, %v7247
  %v7249 = vpop.f32.mrb[0].mxu0
  %v7250 = vadd.f32 0.0, %v7249
  %v7251 = vpop.f32.mrb[0].mxu0
  %v7252 = vadd.f32 0.0, %v7251
  %7253 = vmatprep.mubr.bf16.mxu0 %v6949
  %7254 = vmatmul.mubr.bf16.gmra.mrb[0].mxu0 %v6948
  %v7255 = vpop.f32.mrb[0].mxu0
  %v7256 = vadd.f32 0.0, %v7255
  %v7257 = vpop.f32.mrb[0].mxu0
  %v7258 = vadd.f32 0.0, %v7257
  %v7259 = vpop.f32.mrb[0].mxu0
  %v7260 = vadd.f32 0.0, %v7259
  %v7261 = vpop.f32.mrb[0].mxu0
  %v7262 = vadd.f32 0.0, %v7261
  %7263 = vmatprep.mubr.bf16.mxu0 %v6951
  %7264 = vmatmul.mubr.bf16.gmra.mrb[0].mxu0 %v6950
  %v7265 = vpop.f32.mrb[0].mxu0
  %v7266 = vadd.f32 0.0, %v7265
  %v7267 = vpop.f32.mrb[0].mxu0
  %v7268 = vadd.f32 0.0, %v7267
  %v7269 = vpop.f32.mrb[0].mxu0
  %v7270 = vadd.f32 0.0, %v7269
  %v7271 = vpop.f32.mrb[0].mxu0
  %v7272 = vadd.f32 0.0, %v7271
  %7273 = vmatprep.mubr.bf16.mxu0 %v6953
  %7274 = vmatmul.mubr.bf16.gmra.mrb[0].mxu0 %v6952
  %v7275 = vpop.f32.mrb[0].mxu0
  %v7276 = vadd.f32 0.0, %v7275
  %v7277 = vpop.f32.mrb[0].mxu0
  %v7278 = vadd.f32 0.0, %v7277
  %v7279 = vpop.f32.mrb[0].mxu0
  %v7280 = vadd.f32 0.0, %v7279
  %v7281 = vpop.f32.mrb[0].mxu0
  %v7282 = vadd.f32 0.0, %v7281
  %7283 = vmatprep.mubr.bf16.mxu0 %v6955
  %7284 = vmatmul.mubr.bf16.gmra.mrb[0].mxu0 %v6954
  %v7285 = vpop.f32.mrb[0].mxu0
  %v7286 = vadd.f32 0.0, %v7285
  %v7287 = vpop.f32.mrb[0].mxu0
  %v7288 = vadd.f32 0.0, %v7287
  %v7289 = vpop.f32.mrb[0].mxu0
  %v7290 = vadd.f32 0.0, %v7289
  %v7291 = vpop.f32.mrb[0].mxu0
  %v7292 = vadd.f32 0.0, %v7291
  %7293 = vmatprep.mubr.bf16.mxu0 %v6957
  %7294 = vmatmul.mubr.bf16.gmra.mrb[0].mxu0 %v6956
  %v7295 = vpop.f32.mrb[0].mxu0
  %v7296 = vadd.f32 0.0, %v7295
  %v7297 = vpop.f32.mrb[0].mxu0
  %v7298 = vadd.f32 0.0, %v7297
  %v7299 = vpop.f32.mrb[0].mxu0
  %v7300 = vadd.f32 0.0, %v7299
  %v7301 = vpop.f32.mrb[0].mxu0
  %v7302 = vadd.f32 0.0, %v7301
  %7303 = vmatprep.mubr.bf16.mxu0 %v6959
  %7304 = vmatmul.mubr.bf16.gmra.mrb[0].mxu0 %v6958
  %v7305 = vpop.f32.mrb[0].mxu0
  %v7306 = vadd.f32 0.0, %v7305
  %v7307 = vpop.f32.mrb[0].mxu0
  %v7308 = vadd.f32 0.0, %v7307
  %v7309 = vpop.f32.mrb[0].mxu0
  %v7310 = vadd.f32 0.0, %v7309
  %v7311 = vpop.f32.mrb[0].mxu0
  %v7312 = vadd.f32 0.0, %v7311
  %7313 = vmatprep.mubr.bf16.mxu0 %v6961
  %7314 = vmatmul.mubr.bf16.gmra.mrb[0].mxu0 %v6960
  %v7315 = vpop.f32.mrb[0].mxu0
  %v7316 = vadd.f32 0.0, %v7315
  %v7317 = vpop.f32.mrb[0].mxu0
  %v7318 = vadd.f32 0.0, %v7317
  %v7319 = vpop.f32.mrb[0].mxu0
  %v7320 = vadd.f32 0.0, %v7319
  %v7321 = vpop.f32.mrb[0].mxu0
  %v7322 = vadd.f32 0.0, %v7321
  %7323 = vmatprep.mubr.bf16.mxu0 %v6963
  %7324 = vmatmul.mubr.bf16.gmra.mrb[0].mxu0 %v6962
  %v7325 = vpop.f32.mrb[0].mxu0
  %v7326 = vadd.f32 0.0, %v7325
  %v7327 = vpop.f32.mrb[0].mxu0
  %v7328 = vadd.f32 0.0, %v7327
  %v7329 = vpop.f32.mrb[0].mxu0
  %v7330 = vadd.f32 0.0, %v7329
  %v7331 = vpop.f32.mrb[0].mxu0
  %v7332 = vadd.f32 0.0, %v7331
  %7333 = vmatprep.mubr.bf16.mxu0 %v6965
  %7334 = vmatmul.mubr.bf16.gmra.mrb[0].mxu0 %v6964
  %v7335 = vpop.f32.mrb[0].mxu0
  %v7336 = vadd.f32 0.0, %v7335
  %v7337 = vpop.f32.mrb[0].mxu0
  %v7338 = vadd.f32 0.0, %v7337
  %v7339 = vpop.f32.mrb[0].mxu0
  %v7340 = vadd.f32 0.0, %v7339
  %v7341 = vpop.f32.mrb[0].mxu0
  %v7342 = vadd.f32 0.0, %v7341
  %7343 = vmatprep.mubr.bf16.mxu0 %v6967
  %7344 = vmatmul.mubr.bf16.gmra.mrb[0].mxu0 %v6966
  %v7345 = vpop.f32.mrb[0].mxu0
  %v7346 = vadd.f32 0.0, %v7345
  %v7347 = vpop.f32.mrb[0].mxu0
  %v7348 = vadd.f32 0.0, %v7347
  %v7349 = vpop.f32.mrb[0].mxu0
  %v7350 = vadd.f32 0.0, %v7349
  %v7351 = vpop.f32.mrb[0].mxu0
  %v7352 = vadd.f32 0.0, %v7351
  %7353 = vmatprep.mubr.bf16.mxu0 %v6969
  %7354 = vmatmul.mubr.bf16.gmra.mrb[0].mxu0 %v6968
  %v7355 = vpop.f32.mrb[0].mxu0
  %v7356 = vadd.f32 0.0, %v7355
  %v7357 = vpop.f32.mrb[0].mxu0
  %v7358 = vadd.f32 0.0, %v7357
  %v7359 = vpop.f32.mrb[0].mxu0
  %v7360 = vadd.f32 0.0, %v7359
  %v7361 = vpop.f32.mrb[0].mxu0
  %v7362 = vadd.f32 0.0, %v7361
  %7363 = vmatprep.mubr.bf16.mxu0 %v6971
  %7364 = vmatmul.mubr.bf16.gmra.mrb[0].mxu0 %v6970
  %v7365 = vpop.f32.mrb[0].mxu0
  %v7366 = vadd.f32 0.0, %v7365
  %v7367 = vpop.f32.mrb[0].mxu0
  %v7368 = vadd.f32 0.0, %v7367
  %v7369 = vpop.f32.mrb[0].mxu0
  %v7370 = vadd.f32 0.0, %v7369
  %v7371 = vpop.f32.mrb[0].mxu0
  %v7372 = vadd.f32 0.0, %v7371
  %7373 = vmatprep.mubr.bf16.mxu0 %v6973
  %7374 = vmatmul.mubr.bf16.gmra.mrb[0].mxu0 %v6972
  %v7375 = vpop.f32.mrb[0].mxu0
  %v7376 = vadd.f32 0.0, %v7375
  %v7377 = vpop.f32.mrb[0].mxu0
  %v7378 = vadd.f32 0.0, %v7377
  %v7379 = vpop.f32.mrb[0].mxu0
  %v7380 = vadd.f32 0.0, %v7379
  %v7381 = vpop.f32.mrb[0].mxu0
  %v7382 = vadd.f32 0.0, %v7381
  %7383 = vmatprep.mubr.bf16.mxu0 %v6975
  %7384 = vmatmul.mubr.bf16.gmra.mrb[0].mxu0 %v6974
  %v7385 = vpop.f32.mrb[0].mxu0
  %v7386 = vadd.f32 0.0, %v7385
  %v7387 = vpop.f32.mrb[0].mxu0
  %v7388 = vadd.f32 0.0, %v7387
  %v7389 = vpop.f32.mrb[0].mxu0
  %v7390 = vadd.f32 0.0, %v7389
  %v7391 = vpop.f32.mrb[0].mxu0
  %v7392 = vadd.f32 0.0, %v7391
  %7393 = vmatprep.mubr.bf16.mxu0 %v6977
  %7394 = vmatmul.mubr.bf16.gmra.mrb[0].mxu0 %v6976
  %v7395 = vpop.f32.mrb[0].mxu0
  %v7396 = vadd.f32 0.0, %v7395
  %v7397 = vpop.f32.mrb[0].mxu0
  %v7398 = vadd.f32 0.0, %v7397
  %v7399 = vpop.f32.mrb[0].mxu0
  %v7400 = vadd.f32 0.0, %v7399
  %v7401 = vpop.f32.mrb[0].mxu0
  %v7402 = vadd.f32 0.0, %v7401
  %7403 = vmatprep.mubr.bf16.mxu0 %v6979
  %7404 = vmatmul.mubr.bf16.gmra.mrb[0].mxu0 %v6978
  %v7405 = vpop.f32.mrb[0].mxu0
  %v7406 = vadd.f32 0.0, %v7405
  %v7407 = vpop.f32.mrb[0].mxu0
  %v7408 = vadd.f32 0.0, %v7407
  %v7409 = vpop.f32.mrb[0].mxu0
  %v7410 = vadd.f32 0.0, %v7409
  %v7411 = vpop.f32.mrb[0].mxu0
  %v7412 = vadd.f32 0.0, %v7411
  %7413 = vmatprep.mubr.bf16.mxu0 %v6981
  %7414 = vmatmul.mubr.bf16.gmra.mrb[0].mxu0 %v6980
  %v7415 = vpop.f32.mrb[0].mxu0
  %v7416 = vadd.f32 0.0, %v7415
  %v7417 = vpop.f32.mrb[0].mxu0
  %v7418 = vadd.f32 0.0, %v7417
  %v7419 = vpop.f32.mrb[0].mxu0
  %v7420 = vadd.f32 0.0, %v7419
  %v7421 = vpop.f32.mrb[0].mxu0
  %v7422 = vadd.f32 0.0, %v7421
  %7423 = vmatprep.mubr.bf16.mxu0 %v6983
  %7424 = vmatmul.mubr.bf16.gmra.mrb[0].mxu0 %v6982
  %v7425 = vpop.f32.mrb[0].mxu0
  %v7426 = vadd.f32 0.0, %v7425
  %v7427 = vpop.f32.mrb[0].mxu0
  %v7428 = vadd.f32 0.0, %v7427
  %v7429 = vpop.f32.mrb[0].mxu0
  %v7430 = vadd.f32 0.0, %v7429
  %v7431 = vpop.f32.mrb[0].mxu0
  %v7432 = vadd.f32 0.0, %v7431
  %7433 = vmatprep.mubr.bf16.mxu0 %v6985
  %7434 = vmatmul.mubr.bf16.gmra.mrb[0].mxu0 %v6984
  %v7435 = vpop.f32.mrb[0].mxu0
  %v7436 = vadd.f32 0.0, %v7435
  %v7437 = vpop.f32.mrb[0].mxu0
  %v7438 = vadd.f32 0.0, %v7437
  %v7439 = vpop.f32.mrb[0].mxu0
  %v7440 = vadd.f32 0.0, %v7439
  %v7441 = vpop.f32.mrb[0].mxu0
  %v7442 = vadd.f32 0.0, %v7441
  %7443 = vmatprep.mubr.bf16.mxu0 %v6987
  %7444 = vmatmul.mubr.bf16.gmra.mrb[0].mxu0 %v6986
  %v7445 = vpop.f32.mrb[0].mxu0
  %v7446 = vadd.f32 0.0, %v7445
  %v7447 = vpop.f32.mrb[0].mxu0
  %v7448 = vadd.f32 0.0, %v7447
  %v7449 = vpop.f32.mrb[0].mxu0
  %v7450 = vadd.f32 0.0, %v7449
  %v7451 = vpop.f32.mrb[0].mxu0
  %v7452 = vadd.f32 0.0, %v7451
  %7453 = vmatprep.mubr.bf16.mxu0 %v6989
  %7454 = vmatmul.mubr.bf16.gmra.mrb[0].mxu0 %v6988
  %v7455 = vpop.f32.mrb[0].mxu0
  %v7456 = vadd.f32 0.0, %v7455
  %v7457 = vpop.f32.mrb[0].mxu0
  %v7458 = vadd.f32 0.0, %v7457
  %v7459 = vpop.f32.mrb[0].mxu0
  %v7460 = vadd.f32 0.0, %v7459
  %v7461 = vpop.f32.mrb[0].mxu0
  %v7462 = vadd.f32 0.0, %v7461
  %7463 = vmatprep.mubr.bf16.mxu0 %v6991
  %7464 = vmatmul.mubr.bf16.gmra.mrb[0].mxu0 %v6990
  %v7465 = vpop.f32.mrb[0].mxu0
  %v7466 = vadd.f32 0.0, %v7465
  %v7467 = vpop.f32.mrb[0].mxu0
  %v7468 = vadd.f32 0.0, %v7467
  %v7469 = vpop.f32.mrb[0].mxu0
  %v7470 = vadd.f32 0.0, %v7469
  %v7471 = vpop.f32.mrb[0].mxu0
  %v7472 = vadd.f32 0.0, %v7471
  %7473 = vmatprep.mubr.bf16.mxu0 %v6993
  %7474 = vmatmul.mubr.bf16.gmra.mrb[0].mxu0 %v6992
  %v7475 = vpop.f32.mrb[0].mxu0
  %v7476 = vadd.f32 0.0, %v7475
  %v7477 = vpop.f32.mrb[0].mxu0
  %v7478 = vadd.f32 0.0, %v7477
  %v7479 = vpop.f32.mrb[0].mxu0
  %v7480 = vadd.f32 0.0, %v7479
  %v7481 = vpop.f32.mrb[0].mxu0
  %v7482 = vadd.f32 0.0, %v7481
  %7483 = vmatprep.mubr.bf16.mxu0 %v6995
  %7484 = vmatmul.mubr.bf16.gmra.mrb[0].mxu0 %v6994
  %v7485 = vpop.f32.mrb[0].mxu0
  %v7486 = vadd.f32 0.0, %v7485
  %v7487 = vpop.f32.mrb[0].mxu0
  %v7488 = vadd.f32 0.0, %v7487
  %v7489 = vpop.f32.mrb[0].mxu0
  %v7490 = vadd.f32 0.0, %v7489
  %v7491 = vpop.f32.mrb[0].mxu0
  %v7492 = vadd.f32 0.0, %v7491
  %7493 = vmatprep.mubr.bf16.mxu0 %v6997
  %7494 = vmatmul.mubr.bf16.gmra.mrb[0].mxu0 %v6996
  %v7495 = vpop.f32.mrb[0].mxu0
  %v7496 = vadd.f32 0.0, %v7495
  %v7497 = vpop.f32.mrb[0].mxu0
  %v7498 = vadd.f32 0.0, %v7497
  %v7499 = vpop.f32.mrb[0].mxu0
  %v7500 = vadd.f32 0.0, %v7499
  %v7501 = vpop.f32.mrb[0].mxu0
  %v7502 = vadd.f32 0.0, %v7501
  %7503 = vmatprep.mubr.bf16.mxu0 %v6999
  %7504 = vmatmul.mubr.bf16.gmra.mrb[0].mxu0 %v6998
  %v7505 = vpop.f32.mrb[0].mxu0
  %v7506 = vadd.f32 0.0, %v7505
  %v7507 = vpop.f32.mrb[0].mxu0
  %v7508 = vadd.f32 0.0, %v7507
  %v7509 = vpop.f32.mrb[0].mxu0
  %v7510 = vadd.f32 0.0, %v7509
  %v7511 = vpop.f32.mrb[0].mxu0
  %v7512 = vadd.f32 0.0, %v7511
  %7513 = vmatprep.mubr.bf16.mxu0 %v7001
  %7514 = vmatmul.mubr.bf16.gmra.mrb[0].mxu0 %v7000
  %v7515 = vpop.f32.mrb[0].mxu0
  %v7516 = vadd.f32 0.0, %v7515
  %v7517 = vpop.f32.mrb[0].mxu0
  %v7518 = vadd.f32 0.0, %v7517
  %v7519 = vpop.f32.mrb[0].mxu0
  %v7520 = vadd.f32 0.0, %v7519
  %v7521 = vpop.f32.mrb[0].mxu0
  %v7522 = vadd.f32 0.0, %v7521
  %7523 = vmatprep.mubr.bf16.mxu0 %v7003
  %7524 = vmatmul.mubr.bf16.gmra.mrb[0].mxu0 %v7002
  %v7525 = vpop.f32.mrb[0].mxu0
  %v7526 = vadd.f32 0.0, %v7525
  %v7527 = vpop.f32.mrb[0].mxu0
  %v7528 = vadd.f32 0.0, %v7527
  %v7529 = vpop.f32.mrb[0].mxu0
  %v7530 = vadd.f32 0.0, %v7529
  %v7531 = vpop.f32.mrb[0].mxu0
  %v7532 = vadd.f32 0.0, %v7531
  %7533 = vmatprep.mubr.bf16.mxu0 %v7005
  %7534 = vmatmul.mubr.bf16.gmra.mrb[0].mxu0 %v7004
  %v7535 = vpop.f32.mrb[0].mxu0
  %v7536 = vadd.f32 0.0, %v7535
  %v7537 = vpop.f32.mrb[0].mxu0
  %v7538 = vadd.f32 0.0, %v7537
  %v7539 = vpop.f32.mrb[0].mxu0
  %v7540 = vadd.f32 0.0, %v7539
  %v7541 = vpop.f32.mrb[0].mxu0
  %v7542 = vadd.f32 0.0, %v7541
  %7543 = vmatprep.mubr.bf16.mxu0 %v7007
  %7544 = vmatmul.mubr.bf16.gmra.mrb[0].mxu0 %v7006
  %v7545 = vpop.f32.mrb[0].mxu0
  %v7546 = vadd.f32 0.0, %v7545
  %v7547 = vpop.f32.mrb[0].mxu0
  %v7548 = vadd.f32 0.0, %v7547
  %v7549 = vpop.f32.mrb[0].mxu0
  %v7550 = vadd.f32 0.0, %v7549
  %v7551 = vpop.f32.mrb[0].mxu0
  %v7552 = vadd.f32 0.0, %v7551
  %7553 = vdwg.mxu0
  %v7554 = vadd.f32 %v6626, %v7236
  %v7555 = vadd.f32 %v6628, %v7238
  %v7556 = vadd.f32 %v6630, %v7240
  %v7557 = vadd.f32 %v6632, %v7242
  %v7558 = vadd.f32 %v6636, %v7246
  %v7559 = vadd.f32 %v6638, %v7248
  %v7560 = vadd.f32 %v6640, %v7250
  %v7561 = vadd.f32 %v6642, %v7252
  %v7562 = vadd.f32 %v6646, %v7256
  %v7563 = vadd.f32 %v6648, %v7258
  %v7564 = vadd.f32 %v6650, %v7260
  %v7565 = vadd.f32 %v6652, %v7262
  %v7566 = vadd.f32 %v6656, %v7266
  %v7567 = vadd.f32 %v6658, %v7268
  %v7568 = vadd.f32 %v6660, %v7270
  %v7569 = vadd.f32 %v6662, %v7272
  %v7570 = vadd.f32 %v6666, %v7276
  %v7571 = vadd.f32 %v6668, %v7278
  %v7572 = vadd.f32 %v6670, %v7280
  %v7573 = vadd.f32 %v6672, %v7282
  %v7574 = vadd.f32 %v6676, %v7286
  %v7575 = vadd.f32 %v6678, %v7288
  %v7576 = vadd.f32 %v6680, %v7290
  %v7577 = vadd.f32 %v6682, %v7292
  %v7578 = vadd.f32 %v6686, %v7296
  %v7579 = vadd.f32 %v6688, %v7298
  %v7580 = vadd.f32 %v6690, %v7300
  %v7581 = vadd.f32 %v6692, %v7302
  %v7582 = vadd.f32 %v6696, %v7306
  %v7583 = vadd.f32 %v6698, %v7308
  %v7584 = vadd.f32 %v6700, %v7310
  %v7585 = vadd.f32 %v6702, %v7312
  %v7586 = vadd.f32 %v6706, %v7316
  %v7587 = vadd.f32 %v6708, %v7318
  %v7588 = vadd.f32 %v6710, %v7320
  %v7589 = vadd.f32 %v6712, %v7322
  %v7590 = vadd.f32 %v6716, %v7326
  %v7591 = vadd.f32 %v6718, %v7328
  %v7592 = vadd.f32 %v6720, %v7330
  %v7593 = vadd.f32 %v6722, %v7332
  %v7594 = vadd.f32 %v6726, %v7336
  %v7595 = vadd.f32 %v6728, %v7338
  %v7596 = vadd.f32 %v6730, %v7340
  %v7597 = vadd.f32 %v6732, %v7342
  %v7598 = vadd.f32 %v6736, %v7346
  %v7599 = vadd.f32 %v6738, %v7348
  %v7600 = vadd.f32 %v6740, %v7350
  %v7601 = vadd.f32 %v6742, %v7352
  %v7602 = vadd.f32 %v6746, %v7356
  %v7603 = vadd.f32 %v6748, %v7358
  %v7604 = vadd.f32 %v6750, %v7360
  %v7605 = vadd.f32 %v6752, %v7362
  %v7606 = vadd.f32 %v6756, %v7366
  %v7607 = vadd.f32 %v6758, %v7368
  %v7608 = vadd.f32 %v6760, %v7370
  %v7609 = vadd.f32 %v6762, %v7372
  %v7610 = vadd.f32 %v6766, %v7376
  %v7611 = vadd.f32 %v6768, %v7378
  %v7612 = vadd.f32 %v6770, %v7380
  %v7613 = vadd.f32 %v6772, %v7382
  %v7614 = vadd.f32 %v6776, %v7386
  %v7615 = vadd.f32 %v6778, %v7388
  %v7616 = vadd.f32 %v6780, %v7390
  %v7617 = vadd.f32 %v6782, %v7392
  %v7618 = vadd.f32 %v6786, %v7396
  %v7619 = vadd.f32 %v6788, %v7398
  %v7620 = vadd.f32 %v6790, %v7400
  %v7621 = vadd.f32 %v6792, %v7402
  %v7622 = vadd.f32 %v6796, %v7406
  %v7623 = vadd.f32 %v6798, %v7408
  %v7624 = vadd.f32 %v6800, %v7410
  %v7625 = vadd.f32 %v6802, %v7412
  %v7626 = vadd.f32 %v6806, %v7416
  %v7627 = vadd.f32 %v6808, %v7418
  %v7628 = vadd.f32 %v6810, %v7420
  %v7629 = vadd.f32 %v6812, %v7422
  %v7630 = vadd.f32 %v6816, %v7426
  %v7631 = vadd.f32 %v6818, %v7428
  %v7632 = vadd.f32 %v6820, %v7430
  %v7633 = vadd.f32 %v6822, %v7432
  %v7634 = vadd.f32 %v6826, %v7436
  %v7635 = vadd.f32 %v6828, %v7438
  %v7636 = vadd.f32 %v6830, %v7440
  %v7637 = vadd.f32 %v6832, %v7442
  %v7638 = vadd.f32 %v6836, %v7446
  %v7639 = vadd.f32 %v6838, %v7448
  %v7640 = vadd.f32 %v6840, %v7450
  %v7641 = vadd.f32 %v6842, %v7452
  %v7642 = vadd.f32 %v6846, %v7456
  %v7643 = vadd.f32 %v6848, %v7458
  %v7644 = vadd.f32 %v6850, %v7460
  %v7645 = vadd.f32 %v6852, %v7462
  %v7646 = vadd.f32 %v6856, %v7466
  %v7647 = vadd.f32 %v6858, %v7468
  %v7648 = vadd.f32 %v6860, %v7470
  %v7649 = vadd.f32 %v6862, %v7472
  %v7650 = vadd.f32 %v6866, %v7476
  %v7651 = vadd.f32 %v6868, %v7478
  %v7652 = vadd.f32 %v6870, %v7480
  %v7653 = vadd.f32 %v6872, %v7482
  %v7654 = vadd.f32 %v6876, %v7486
  %v7655 = vadd.f32 %v6878, %v7488
  %v7656 = vadd.f32 %v6880, %v7490
  %v7657 = vadd.f32 %v6882, %v7492
  %v7658 = vadd.f32 %v6886, %v7496
  %v7659 = vadd.f32 %v6888, %v7498
  %v7660 = vadd.f32 %v6890, %v7500
  %v7661 = vadd.f32 %v6892, %v7502
  %v7662 = vadd.f32 %v6896, %v7506
  %v7663 = vadd.f32 %v6898, %v7508
  %v7664 = vadd.f32 %v6900, %v7510
  %v7665 = vadd.f32 %v6902, %v7512
  %v7666 = vadd.f32 %v6906, %v7516
  %v7667 = vadd.f32 %v6908, %v7518
  %v7668 = vadd.f32 %v6910, %v7520
  %v7669 = vadd.f32 %v6912, %v7522
  %v7670 = vadd.f32 %v6916, %v7526
  %v7671 = vadd.f32 %v6918, %v7528
  %v7672 = vadd.f32 %v6920, %v7530
  %v7673 = vadd.f32 %v6922, %v7532
  %v7674 = vadd.f32 %v6926, %v7536
  %v7675 = vadd.f32 %v6928, %v7538
  %v7676 = vadd.f32 %v6930, %v7540
  %v7677 = vadd.f32 %v6932, %v7542
  %v7678 = vadd.f32 %v6936, %v7546
  %v7679 = vadd.f32 %v6938, %v7548
  %v7680 = vadd.f32 %v6940, %v7550
  %v7681 = vadd.f32 %v6942, %v7552
  %v7682 = vadd.f32 %v7554, %v283
  %v7683 = vadd.f32 %v7555, %v284
  %v7684 = vadd.f32 %v7556, %v285
  %v7685 = vadd.f32 %v7557, %v286
  %v7686 = vadd.f32 %v7558, %v287
  %v7687 = vadd.f32 %v7559, %v288
  %v7688 = vadd.f32 %v7560, %v289
  %v7689 = vadd.f32 %v7561, %v290
  %v7690 = vadd.f32 %v7562, %v291
  %v7691 = vadd.f32 %v7563, %v292
  %v7692 = vadd.f32 %v7564, %v293
  %v7693 = vadd.f32 %v7565, %v294
  %v7694 = vadd.f32 %v7566, %v295
  %v7695 = vadd.f32 %v7567, %v296
  %v7696 = vadd.f32 %v7568, %v297
  %v7697 = vadd.f32 %v7569, %v298
  %v7698 = vadd.f32 %v7570, %v299
  %v7699 = vadd.f32 %v7571, %v300
  %v7700 = vadd.f32 %v7572, %v301
  %v7701 = vadd.f32 %v7573, %v302
  %v7702 = vadd.f32 %v7574, %v303
  %v7703 = vadd.f32 %v7575, %v304
  %v7704 = vadd.f32 %v7576, %v305
  %v7705 = vadd.f32 %v7577, %v306
  %v7706 = vadd.f32 %v7578, %v307
  %v7707 = vadd.f32 %v7579, %v308
  %v7708 = vadd.f32 %v7580, %v309
  %v7709 = vadd.f32 %v7581, %v310
  %v7710 = vadd.f32 %v7582, %v311
  %v7711 = vadd.f32 %v7583, %v312
  %v7712 = vadd.f32 %v7584, %v313
  %v7713 = vadd.f32 %v7585, %v314
  %v7714 = vadd.f32 %v7586, %v315
  %v7715 = vadd.f32 %v7587, %v316
  %v7716 = vadd.f32 %v7588, %v317
  %v7717 = vadd.f32 %v7589, %v318
  %v7718 = vadd.f32 %v7590, %v319
  %v7719 = vadd.f32 %v7591, %v320
  %v7720 = vadd.f32 %v7592, %v321
  %v7721 = vadd.f32 %v7593, %v322
  %v7722 = vadd.f32 %v7594, %v323
  %v7723 = vadd.f32 %v7595, %v324
  %v7724 = vadd.f32 %v7596, %v325
  %v7725 = vadd.f32 %v7597, %v326
  %v7726 = vadd.f32 %v7598, %v327
  %v7727 = vadd.f32 %v7599, %v328
  %v7728 = vadd.f32 %v7600, %v329
  %v7729 = vadd.f32 %v7601, %v330
  %v7730 = vadd.f32 %v7602, %v331
  %v7731 = vadd.f32 %v7603, %v332
  %v7732 = vadd.f32 %v7604, %v333
  %v7733 = vadd.f32 %v7605, %v334
  %v7734 = vadd.f32 %v7606, %v335
  %v7735 = vadd.f32 %v7607, %v336
  %v7736 = vadd.f32 %v7608, %v337
  %v7737 = vadd.f32 %v7609, %v338
  %v7738 = vadd.f32 %v7610, %v339
  %v7739 = vadd.f32 %v7611, %v340
  %v7740 = vadd.f32 %v7612, %v341
  %v7741 = vadd.f32 %v7613, %v342
  %v7742 = vadd.f32 %v7614, %v343
  %v7743 = vadd.f32 %v7615, %v344
  %v7744 = vadd.f32 %v7616, %v345
  %v7745 = vadd.f32 %v7617, %v346
  %v7746 = vadd.f32 %v7618, %v347
  %v7747 = vadd.f32 %v7619, %v348
  %v7748 = vadd.f32 %v7620, %v349
  %v7749 = vadd.f32 %v7621, %v350
  %v7750 = vadd.f32 %v7622, %v351
  %v7751 = vadd.f32 %v7623, %v352
  %v7752 = vadd.f32 %v7624, %v353
  %v7753 = vadd.f32 %v7625, %v354
  %v7754 = vadd.f32 %v7626, %v355
  %v7755 = vadd.f32 %v7627, %v356
  %v7756 = vadd.f32 %v7628, %v357
  %v7757 = vadd.f32 %v7629, %v358
  %v7758 = vadd.f32 %v7630, %v359
  %v7759 = vadd.f32 %v7631, %v360
  %v7760 = vadd.f32 %v7632, %v361
  %v7761 = vadd.f32 %v7633, %v362
  %v7762 = vadd.f32 %v7634, %v363
  %v7763 = vadd.f32 %v7635, %v364
  %v7764 = vadd.f32 %v7636, %v365
  %v7765 = vadd.f32 %v7637, %v366
  %v7766 = vadd.f32 %v7638, %v367
  %v7767 = vadd.f32 %v7639, %v368
  %v7768 = vadd.f32 %v7640, %v369
  %v7769 = vadd.f32 %v7641, %v370
  %v7770 = vadd.f32 %v7642, %v371
  %v7771 = vadd.f32 %v7643, %v372
  %v7772 = vadd.f32 %v7644, %v373
  %v7773 = vadd.f32 %v7645, %v374
  %v7774 = vadd.f32 %v7646, %v375
  %v7775 = vadd.f32 %v7647, %v376
  %v7776 = vadd.f32 %v7648, %v377
  %v7777 = vadd.f32 %v7649, %v378
  %v7778 = vadd.f32 %v7650, %v379
  %v7779 = vadd.f32 %v7651, %v380
  %v7780 = vadd.f32 %v7652, %v381
  %v7781 = vadd.f32 %v7653, %v382
  %v7782 = vadd.f32 %v7654, %v383
  %v7783 = vadd.f32 %v7655, %v384
  %v7784 = vadd.f32 %v7656, %v385
  %v7785 = vadd.f32 %v7657, %v386
  %v7786 = vadd.f32 %v7658, %v387
  %v7787 = vadd.f32 %v7659, %v388
  %v7788 = vadd.f32 %v7660, %v389
  %v7789 = vadd.f32 %v7661, %v390
  %v7790 = vadd.f32 %v7662, %v391
  %v7791 = vadd.f32 %v7663, %v392
  %v7792 = vadd.f32 %v7664, %v393
  %v7793 = vadd.f32 %v7665, %v394
  %v7794 = vadd.f32 %v7666, %v395
  %v7795 = vadd.f32 %v7667, %v396
  %v7796 = vadd.f32 %v7668, %v397
  %v7797 = vadd.f32 %v7669, %v398
  %v7798 = vadd.f32 %v7670, %v399
  %v7799 = vadd.f32 %v7671, %v400
  %v7800 = vadd.f32 %v7672, %v401
  %v7801 = vadd.f32 %v7673, %v402
  %v7802 = vadd.f32 %v7674, %v403
  %v7803 = vadd.f32 %v7675, %v404
  %v7804 = vadd.f32 %v7676, %v405
  %v7805 = vadd.f32 %v7677, %v406
  %v7806 = vadd.f32 %v7678, %v407
  %v7807 = vadd.f32 %v7679, %v408
  %v7808 = vadd.f32 %v7680, %v409
  %v7809 = vadd.f32 %v7681, %v410
  %7810 = vst [vmem:[%s7] sm:$0xff] %v7682
  %7811 = vst [vmem:[%s7 + $0x8] sm:$0xff] %v7683
  %7812 = vst [vmem:[%s7 + $0x10] sm:$0xff] %v7684
  %7813 = vst [vmem:[%s7 + $0x18] sm:$0xff] %v7685
  %7814 = vst [vmem:[%s7 + $0x20] sm:$0xff] %v7686
  %7815 = vst [vmem:[%s7 + $0x28] sm:$0xff] %v7687
  %7816 = vst [vmem:[%s7 + $0x30] sm:$0xff] %v7688
  %7817 = vst [vmem:[%s7 + $0x38] sm:$0xff] %v7689
  %7818 = vst [vmem:[%s7 + $0x40] sm:$0xff] %v7690
  %7819 = vst [vmem:[%s7 + $0x48] sm:$0xff] %v7691
  %7820 = vst [vmem:[%s7 + $0x50] sm:$0xff] %v7692
  %7821 = vst [vmem:[%s7 + $0x58] sm:$0xff] %v7693
  %7822 = vst [vmem:[%s7 + $0x60] sm:$0xff] %v7694
  %7823 = vst [vmem:[%s7 + $0x68] sm:$0xff] %v7695
  %7824 = vst [vmem:[%s7 + $0x70] sm:$0xff] %v7696
  %7825 = vst [vmem:[%s7 + $0x78] sm:$0xff] %v7697
  %7826 = vst [vmem:[%s7 + $0x80] sm:$0xff] %v7698
  %7827 = vst [vmem:[%s7 + $0x88] sm:$0xff] %v7699
  %7828 = vst [vmem:[%s7 + $0x90] sm:$0xff] %v7700
  %7829 = vst [vmem:[%s7 + $0x98] sm:$0xff] %v7701
  %7830 = vst [vmem:[%s7 + $0xa0] sm:$0xff] %v7702
  %7831 = vst [vmem:[%s7 + $0xa8] sm:$0xff] %v7703
  %7832 = vst [vmem:[%s7 + $0xb0] sm:$0xff] %v7704
  %7833 = vst [vmem:[%s7 + $0xb8] sm:$0xff] %v7705
  %7834 = vst [vmem:[%s7 + $0xc0] sm:$0xff] %v7706
  %7835 = vst [vmem:[%s7 + $0xc8] sm:$0xff] %v7707
  %7836 = vst [vmem:[%s7 + $0xd0] sm:$0xff] %v7708
  %7837 = vst [vmem:[%s7 + $0xd8] sm:$0xff] %v7709
  %7838 = vst [vmem:[%s7 + $0xe0] sm:$0xff] %v7710
  %7839 = vst [vmem:[%s7 + $0xe8] sm:$0xff] %v7711
  %7840 = vst [vmem:[%s7 + $0xf0] sm:$0xff] %v7712
  %7841 = vst [vmem:[%s7 + $0xf8] sm:$0xff] %v7713
  %7842 = vst [vmem:[%s7 + $0x100] sm:$0xff] %v7714
  %7843 = vst [vmem:[%s7 + $0x108] sm:$0xff] %v7715
  %7844 = vst [vmem:[%s7 + $0x110] sm:$0xff] %v7716
  %7845 = vst [vmem:[%s7 + $0x118] sm:$0xff] %v7717
  %7846 = vst [vmem:[%s7 + $0x120] sm:$0xff] %v7718
  %7847 = vst [vmem:[%s7 + $0x128] sm:$0xff] %v7719
  %7848 = vst [vmem:[%s7 + $0x130] sm:$0xff] %v7720
  %7849 = vst [vmem:[%s7 + $0x138] sm:$0xff] %v7721
  %7850 = vst [vmem:[%s7 + $0x140] sm:$0xff] %v7722
  %7851 = vst [vmem:[%s7 + $0x148] sm:$0xff] %v7723
  %7852 = vst [vmem:[%s7 + $0x150] sm:$0xff] %v7724
  %7853 = vst [vmem:[%s7 + $0x158] sm:$0xff] %v7725
  %7854 = vst [vmem:[%s7 + $0x160] sm:$0xff] %v7726
  %7855 = vst [vmem:[%s7 + $0x168] sm:$0xff] %v7727
  %7856 = vst [vmem:[%s7 + $0x170] sm:$0xff] %v7728
  %7857 = vst [vmem:[%s7 + $0x178] sm:$0xff] %v7729
  %7858 = vst [vmem:[%s7 + $0x180] sm:$0xff] %v7730
  %7859 = vst [vmem:[%s7 + $0x188] sm:$0xff] %v7731
  %7860 = vst [vmem:[%s7 + $0x190] sm:$0xff] %v7732
  %7861 = vst [vmem:[%s7 + $0x198] sm:$0xff] %v7733
  %7862 = vst [vmem:[%s7 + $0x1a0] sm:$0xff] %v7734
  %7863 = vst [vmem:[%s7 + $0x1a8] sm:$0xff] %v7735
  %7864 = vst [vmem:[%s7 + $0x1b0] sm:$0xff] %v7736
  %7865 = vst [vmem:[%s7 + $0x1b8] sm:$0xff] %v7737
  %7866 = vst [vmem:[%s7 + $0x1c0] sm:$0xff] %v7738
  %7867 = vst [vmem:[%s7 + $0x1c8] sm:$0xff] %v7739
  %7868 = vst [vmem:[%s7 + $0x1d0] sm:$0xff] %v7740
  %7869 = vst [vmem:[%s7 + $0x1d8] sm:$0xff] %v7741
  %7870 = vst [vmem:[%s7 + $0x1e0] sm:$0xff] %v7742
  %7871 = vst [vmem:[%s7 + $0x1e8] sm:$0xff] %v7743
  %7872 = vst [vmem:[%s7 + $0x1f0] sm:$0xff] %v7744
  %7873 = vst [vmem:[%s7 + $0x1f8] sm:$0xff] %v7745
  %7874 = vst [vmem:[%s7 + $0x200] sm:$0xff] %v7746
  %7875 = vst [vmem:[%s7 + $0x208] sm:$0xff] %v7747
  %7876 = vst [vmem:[%s7 + $0x210] sm:$0xff] %v7748
  %7877 = vst [vmem:[%s7 + $0x218] sm:$0xff] %v7749
  %7878 = vst [vmem:[%s7 + $0x220] sm:$0xff] %v7750
  %7879 = vst [vmem:[%s7 + $0x228] sm:$0xff] %v7751
  %7880 = vst [vmem:[%s7 + $0x230] sm:$0xff] %v7752
  %7881 = vst [vmem:[%s7 + $0x238] sm:$0xff] %v7753
  %7882 = vst [vmem:[%s7 + $0x240] sm:$0xff] %v7754
  %7883 = vst [vmem:[%s7 + $0x248] sm:$0xff] %v7755
  %7884 = vst [vmem:[%s7 + $0x250] sm:$0xff] %v7756
  %7885 = vst [vmem:[%s7 + $0x258] sm:$0xff] %v7757
  %7886 = vst [vmem:[%s7 + $0x260] sm:$0xff] %v7758
  %7887 = vst [vmem:[%s7 + $0x268] sm:$0xff] %v7759
  %7888 = vst [vmem:[%s7 + $0x270] sm:$0xff] %v7760
  %7889 = vst [vmem:[%s7 + $0x278] sm:$0xff] %v7761
  %7890 = vst [vmem:[%s7 + $0x280] sm:$0xff] %v7762
  %7891 = vst [vmem:[%s7 + $0x288] sm:$0xff] %v7763
  %7892 = vst [vmem:[%s7 + $0x290] sm:$0xff] %v7764
  %7893 = vst [vmem:[%s7 + $0x298] sm:$0xff] %v7765
  %7894 = vst [vmem:[%s7 + $0x2a0] sm:$0xff] %v7766
  %7895 = vst [vmem:[%s7 + $0x2a8] sm:$0xff] %v7767
  %7896 = vst [vmem:[%s7 + $0x2b0] sm:$0xff] %v7768
  %7897 = vst [vmem:[%s7 + $0x2b8] sm:$0xff] %v7769
  %7898 = vst [vmem:[%s7 + $0x2c0] sm:$0xff] %v7770
  %7899 = vst [vmem:[%s7 + $0x2c8] sm:$0xff] %v7771
  %7900 = vst [vmem:[%s7 + $0x2d0] sm:$0xff] %v7772
  %7901 = vst [vmem:[%s7 + $0x2d8] sm:$0xff] %v7773
  %7902 = vst [vmem:[%s7 + $0x2e0] sm:$0xff] %v7774
  %7903 = vst [vmem:[%s7 + $0x2e8] sm:$0xff] %v7775
  %7904 = vst [vmem:[%s7 + $0x2f0] sm:$0xff] %v7776
  %7905 = vst [vmem:[%s7 + $0x2f8] sm:$0xff] %v7777
  %7906 = vst [vmem:[%s7 + $0x300] sm:$0xff] %v7778
  %7907 = vst [vmem:[%s7 + $0x308] sm:$0xff] %v7779
  %7908 = vst [vmem:[%s7 + $0x310] sm:$0xff] %v7780
  %7909 = vst [vmem:[%s7 + $0x318] sm:$0xff] %v7781
  %7910 = vst [vmem:[%s7 + $0x320] sm:$0xff] %v7782
  %7911 = vst [vmem:[%s7 + $0x328] sm:$0xff] %v7783
  %7912 = vst [vmem:[%s7 + $0x330] sm:$0xff] %v7784
  %7913 = vst [vmem:[%s7 + $0x338] sm:$0xff] %v7785
  %7914 = vst [vmem:[%s7 + $0x340] sm:$0xff] %v7786
  %7915 = vst [vmem:[%s7 + $0x348] sm:$0xff] %v7787
  %7916 = vst [vmem:[%s7 + $0x350] sm:$0xff] %v7788
  %7917 = vst [vmem:[%s7 + $0x358] sm:$0xff] %v7789
  %7918 = vst [vmem:[%s7 + $0x360] sm:$0xff] %v7790
  %7919 = vst [vmem:[%s7 + $0x368] sm:$0xff] %v7791
  %7920 = vst [vmem:[%s7 + $0x370] sm:$0xff] %v7792
  %7921 = vst [vmem:[%s7 + $0x378] sm:$0xff] %v7793
  %7922 = vst [vmem:[%s7 + $0x380] sm:$0xff] %v7794
  %7923 = vst [vmem:[%s7 + $0x388] sm:$0xff] %v7795
  %7924 = vst [vmem:[%s7 + $0x390] sm:$0xff] %v7796
  %7925 = vst [vmem:[%s7 + $0x398] sm:$0xff] %v7797
  %7926 = vst [vmem:[%s7 + $0x3a0] sm:$0xff] %v7798
  %7927 = vst [vmem:[%s7 + $0x3a8] sm:$0xff] %v7799
  %7928 = vst [vmem:[%s7 + $0x3b0] sm:$0xff] %v7800
  %7929 = vst [vmem:[%s7 + $0x3b8] sm:$0xff] %v7801
  %7930 = vst [vmem:[%s7 + $0x3c0] sm:$0xff] %v7802
  %7931 = vst [vmem:[%s7 + $0x3c8] sm:$0xff] %v7803
  %7932 = vst [vmem:[%s7 + $0x3d0] sm:$0xff] %v7804
  %7933 = vst [vmem:[%s7 + $0x3d8] sm:$0xff] %v7805
  %7934 = vst [vmem:[%s7 + $0x3e0] sm:$0xff] %v7806
  %7935 = vst [vmem:[%s7 + $0x3e8] sm:$0xff] %v7807
  %7936 = vst [vmem:[%s7 + $0x3f0] sm:$0xff] %v7808
  %7937 = vst [vmem:[%s7 + $0x3f8] sm:$0xff] %v7809
  // Predicated region
  $region30: #{basic_block_curve_forward.1} parent=0 // pred_check
    _
  $region31: #{basic_block_curve_forward.1} parent=0 // pred_check_branch
    %7939 = sbr.rel (0) target = $region33
  $region32: #{basic_block_curve_forward.1} parent=0 // pred_region
    _
  $region33: #{basic_block_curve_forward.1} parent=0 // pred_fallthru
    _
  // Predicated region
  $region34: #{basic_block_curve_forward.1} parent=0 // pred_check
    _
  $region35: #{basic_block_curve_forward.1} parent=0 // pred_check_branch
    %7941 = sbr.rel (0) target = $region37
  $region36: #{basic_block_curve_forward.1} parent=0 // pred_region
    _
  $region37: #{basic_block_curve_forward.1} parent=0 // pred_fallthru
    _

</llo_original>
